<compile_context>
chip_gen: v7x
topology: tpu7x:2x2x1
jax: 0.10.0
libtpu: 0.0.40
codegen_flags: <defaults>
</compile_context>

<pallas_src>
import functools
from collections import namedtuple

import jax
import jax.numpy as jnp
from jax import lax
from jax.experimental import pallas as pl
from jax.experimental.pallas import tpu as pltpu


def _round_up(x, m):
    return (x + m - 1) // m * m


# --------------------------------------------------------------------------
# Pallas kernel: ONE bidirectional LSTM layer.
#   grid = (2 directions, batch tiles, time blocks)  — time (sequential) last.
# Inputs:
#   gx_ref   : (T, Bt, 4Hp)  bf16  precomputed x @ W_ih^T for this block
#   len_ref  : (Bt, 1)       i32   per-batch valid lengths (padded rows = 0)
#   bias_ref : (Bt, 4Hp)     f32   b_ih + b_hh broadcast over batch
#   whh_ref  : (Hp, 4Hp)     bf16  recurrent weights (this direction)
# Outputs:
#   out_ref  : (T, Bt, Hp)   f32/bf16  per-step hidden states
#   hT_ref / cT_ref : (Bt, Hp) f32     final states of this direction
# --------------------------------------------------------------------------
def _bilstm_layer_kernel(gx_ref, len_ref, bias_ref, whh_ref,
                         out_ref, hT_ref, cT_ref,
                         h_sc, c_sc,
                         *, T, Hp, word_pad, unroll):
    d = pl.program_id(0)                      # 0 = forward, 1 = backward
    j = pl.program_id(2)                      # time-block counter (processing order)
    nb = pl.num_programs(2)

    # Re-initialize the state carry at the first time block of every
    # (direction, batch-tile): j is the innermost grid axis, so j == 0 fires
    # exactly once per (d, bt) pair.
    @pl.when(j == 0)
    def _():
        h_sc[...] = jnp.zeros_like(h_sc)
        c_sc[...] = jnp.zeros_like(c_sc)

    # Absolute time-block index (backward direction walks blocks in reverse).
    jb = (1 - 2 * d) * j + d * (nb - 1)
    base = jb * T
    sign = 1 - 2 * d                          # +1 fwd, -1 bwd
    off = d * (T - 1)                         # 0 fwd, T-1 bwd

    lens = len_ref[...]                       # (Bt, 1) — loaded once per block

    def step(s, carry):
        h, c = carry                          # f32 (Bt, Hp)
        tl = sign * s + off                   # local time index inside the block
        t_abs = base + tl                     # absolute time index

        # Read W_hh from VMEM inside the step (cheap vld; avoids pinning
        # Hp*4Hp/4096 vregs across the unrolled loop and the resulting spills).
        whh = whh_ref[...]                    # (Hp, 4Hp) bf16
        gates = (gx_ref[tl].astype(jnp.float32)
                 + bias_ref[...]
                 + jnp.dot(h.astype(whh.dtype), whh,
                           preferred_element_type=jnp.float32))
        # PyTorch gate order i, f, g, o; Hp % 128 == 0 so slices are lane-aligned.
        i_g = jax.nn.sigmoid(gates[:, 0 * Hp:1 * Hp])
        f_g = jax.nn.sigmoid(gates[:, 1 * Hp:2 * Hp])
        g_g = jnp.tanh(gates[:, 2 * Hp:3 * Hp])
        o_g = jax.nn.sigmoid(gates[:, 3 * Hp:4 * Hp])
        c_new = f_g * c + i_g * g_g
        h_new = o_g * jnp.tanh(c_new)

        valid = t_abs < lens                  # (Bt, 1) bool, broadcasts over Hp
        h = jnp.where(valid, h_new, h)        # freeze state past the sequence end
        c = jnp.where(valid, c_new, c)
        out_ref[tl] = jnp.where(
            valid, h_new, jnp.full_like(h_new, word_pad)).astype(out_ref.dtype)
        return h, c

    h, c = lax.fori_loop(0, T, step, (h_sc[...], c_sc[...]), unroll=unroll)
    h_sc[...] = h
    c_sc[...] = c

    @pl.when(j == nb - 1)
    def _():
        hT_ref[...] = h.astype(hT_ref.dtype)
        cT_ref[...] = c.astype(cT_ref.dtype)


def _run_bilstm_layer(gx, lengths_p, bias_b, whh_t, *, T, Bt, word_pad, out_dtype):
    """gx: (2, slen_p, Bp, 4Hp) bf16; lengths_p: (Bp, 1) i32;
    bias_b: (2, Bp, 4Hp) f32; whh_t: (2, Hp, 4Hp) bf16.
    Returns out (2, slen_p, Bp, Hp) out_dtype, hT (2, Bp, Hp) f32, cT (2, Bp, Hp) f32."""
    _, slen_p, Bp, H4p = gx.shape
    Hp = H4p // 4
    nb = slen_p // T
    nbt = Bp // Bt

    def t_map(d, bt, j):
        # block index in absolute time; backward direction runs blocks in reverse
        return (d, (1 - 2 * d) * j + d * (nb - 1), bt, 0)

    # W_hh's block index only depends on d; for large H single-buffer it to
    # reclaim VMEM for the bigger time blocks (v7x: 64 MiB per-TC budget).
    if Hp >= 512:
        whh_spec = pl.BlockSpec((None, Hp, H4p), lambda d, bt, j: (d, 0, 0),
                                pipeline_mode=pl.Buffered(1))
    else:
        whh_spec = pl.BlockSpec((None, Hp, H4p), lambda d, bt, j: (d, 0, 0))

    out_bytes = jnp.dtype(out_dtype).itemsize
    est = (2 * T * Bt * H4p * 2            # gx blocks (double-buffered, bf16)
           + 2 * T * Bt * Hp * out_bytes   # out blocks (double-buffered)
           + 2 * Hp * H4p * 2              # W_hh (<= 2 buffers, bf16)
           + 2 * Bt * H4p * 4              # bias
           + 6 * Bt * Hp * 4               # h/c scratch + hT/cT blocks
           + 2 * Bt * 128 * 4)             # lengths (padded)
    vmem_limit = None if est < (12 << 20) else int(min(est * 1.25 + (4 << 20),
                                                       100 << 20))

    kernel = functools.partial(_bilstm_layer_kernel, T=T, Hp=Hp,
                               word_pad=word_pad, unroll=min(8, T))

    out_shapes = (
        jax.ShapeDtypeStruct((2, slen_p, Bp, Hp), out_dtype),
        jax.ShapeDtypeStruct((2, Bp, Hp), jnp.float32),
        jax.ShapeDtypeStruct((2, Bp, Hp), jnp.float32),
    )

    return pl.pallas_call(
        kernel,
        out_shape=out_shapes,
        grid_spec=pltpu.PrefetchScalarGridSpec(
            num_scalar_prefetch=0,
            grid=(2, nbt, nb),
            in_specs=[
                pl.BlockSpec((None, T, Bt, H4p), t_map),                     # gx slab
                pl.BlockSpec((Bt, 1), lambda d, bt, j: (bt, 0)),             # lengths
                pl.BlockSpec((None, Bt, H4p), lambda d, bt, j: (d, bt, 0)),  # bias
                whh_spec,                                                    # W_hh^T
            ],
            out_specs=[
                pl.BlockSpec((None, T, Bt, Hp), t_map),                      # hidden slab
                pl.BlockSpec((None, Bt, Hp), lambda d, bt, j: (d, bt, 0)),   # final h
                pl.BlockSpec((None, Bt, Hp), lambda d, bt, j: (d, bt, 0)),   # final c
            ],
            scratch_shapes=[
                pltpu.VMEM((Bt, Hp), jnp.float32),                           # h carry
                pltpu.VMEM((Bt, Hp), jnp.float32),                           # c carry
            ],
        ),
        compiler_params=pltpu.CompilerParams(
            dimension_semantics=("parallel", "parallel", "arbitrary"),
            vmem_limit_bytes=vmem_limit),
    )(gx, lengths_p, bias_b, whh_t)


# --------------------------------------------------------------------------
# Module wrapper: parameters + layer stacking + hoisted input projections.
# --------------------------------------------------------------------------
Config = namedtuple("Config", ["lstm_hidden_size", "nlayers", "dropout", "word_pad"])


def init_bilstm_params(key, input_size, config):
    """PyTorch nn.LSTM-style params per (layer, direction):
    W_ih [4H, D_in], W_hh [4H, H], b_ih [4H], b_hh [4H]."""
    H = config.lstm_hidden_size
    bound = 1.0 / jnp.sqrt(jnp.float32(H))
    params = []
    for layer in range(config.nlayers):
        d_in = input_size if layer == 0 else 2 * H
        layer_params = []
        for _ in range(2):  # forward, backward
            key, k1, k2, k3, k4 = jax.random.split(key, 5)
            w_ih = jax.random.uniform(k1, (4 * H, d_in), jnp.float32, -bound, bound)
            w_hh = jax.random.uniform(k2, (4 * H, H), jnp.float32, -bound, bound)
            b_ih = jax.random.uniform(k3, (4 * H,), jnp.float32, -bound, bound)
            b_hh = jax.random.uniform(k4, (4 * H,), jnp.float32, -bound, bound)
            layer_params.append((w_ih, w_hh, b_ih, b_hh))
        params.append(layer_params)
    return params


def _pad_gates(arr, H, Hp):
    """arr: (..., 4H) -> (..., 4Hp), zero-padding each of the 4 gates from H to Hp."""
    lead = arr.shape[:-1]
    a = arr.reshape(lead + (4, H))
    a = jnp.pad(a, [(0, 0)] * len(lead) + [(0, 0), (0, Hp - H)])
    return a.reshape(lead + (4 * Hp,))


def _choose_time_block(slen, Bt, Hp, out_bytes):
    """Largest T (multiple of 8, <= 64) whose double-buffered gx + out blocks fit
    a ~24 MiB pipeline budget; never larger than the padded sequence length."""
    per_t = 2 * Bt * 4 * Hp * 2 + 2 * Bt * Hp * out_bytes
    tb = max(8, min(64, (24 << 20) // max(per_t, 1) // 8 * 8))
    return min(tb, _round_up(slen, 8))


def bilstm_forward(params, src, src_lengths, config):
    """
    src: [bsz, slen, input_size] (batch-first), src_lengths: [bsz] int32.
    Returns (outputs [bsz, slen, 2H], (h_t [bsz, 2H], c_t [bsz, 2H])).
    Dropout layers are eval-mode identities.
    """
    bsz, slen, _ = src.shape
    assert slen >= 1, "slen must be >= 1"
    H = config.lstm_hidden_size
    word_pad = float(config.word_pad)

    # TODO(synk): for production H < 64, benchmark packing the 4 gates into 4H
    # contiguous lanes instead of padding each gate to 128 (4x inflation here).
    Hp = _round_up(H, 128)          # lane-dense gate/hidden tiles, aligned slices
    if bsz <= 256:
        Bp = Bt = _round_up(bsz, 16)        # bf16 sublane-tile aligned batch
    else:
        Bt = 256                            # batch tile fills MXU rows
        Bp = _round_up(bsz, Bt)

    TB = _choose_time_block(slen, Bt, Hp, out_bytes=2)
    slen_p = _round_up(slen, TB)

    # Time-major, padded input; padded batch rows get length 0 (always masked).
    x_tm = jnp.transpose(src, (1, 0, 2)).astype(jnp.float32)           # (slen, B, Din)
    x_tm = jnp.pad(x_tm, ((0, slen_p - slen), (0, Bp - bsz), (0, 0)))  # (slen_p, Bp, Din)
    lengths_p = jnp.pad(src_lengths.astype(jnp.int32),
                        (0, Bp - bsz)).reshape(Bp, 1)

    layer0_in = x_tm.astype(jnp.bfloat16)
    prev_dirs = None                 # (2, slen_p, Bp, Hp) output of previous layer
    h_final = c_final = None

    for layer in range(config.nlayers):
        wih_ts, whh_ts, biases = [], [], []
        for d in range(2):
            w_ih, w_hh, b_ih, b_hh = params[layer][d]
            wih_ts.append(_pad_gates(jnp.transpose(w_ih), H, Hp))       # (Din_l, 4Hp)
            whh_p = _pad_gates(jnp.transpose(w_hh), H, Hp)              # (H, 4Hp)
            whh_ts.append(jnp.pad(whh_p, ((0, Hp - H), (0, 0))))        # (Hp, 4Hp)
            biases.append(_pad_gates(b_ih + b_hh, H, Hp))               # (4Hp,)
        bias = jnp.stack(biases)                                        # (2, 4Hp) f32
        bias_b = jnp.broadcast_to(bias[:, None, :], (2, Bp, 4 * Hp))    # added in-kernel
        whh_t = jnp.stack(whh_ts).astype(jnp.bfloat16)                  # (2, Hp, 4Hp)

        # Hoisted input projection: one big bf16 MXU matmul (f32 accumulation),
        # stored to HBM as bf16 (halves the dominant HBM stream).
        if layer == 0:
            wih = jnp.stack(wih_ts).astype(jnp.bfloat16)                # (2, Din, 4Hp)
            gx = jnp.einsum('tbi,dig->dtbg', layer0_in, wih,
                            preferred_element_type=jnp.float32)
        else:
            # Input is the previous layer's [fwd | bwd] halves (bf16): contract
            # directly over (direction, hidden) — no concatenate between layers.
            wih = jnp.stack([
                jnp.pad(w.reshape(2, H, 4 * Hp), ((0, 0), (0, Hp - H), (0, 0)))
                for w in wih_ts]).astype(jnp.bfloat16)                  # (2, 2, Hp, 4Hp)
            gx = jnp.einsum('dtbh,edhg->etbg', prev_dirs, wih,
                            preferred_element_type=jnp.float32)
        gx = gx.astype(jnp.bfloat16)                                    # (2, slen_p, Bp, 4Hp)

        is_last = layer == config.nlayers - 1
        out_dtype = jnp.float32 if is_last else jnp.bfloat16
        prev_dirs, hT, cT = _run_bilstm_layer(
            gx, lengths_p, bias_b, whh_t, T=TB, Bt=Bt,
            word_pad=word_pad, out_dtype=out_dtype)
        h_final, c_final = hT, cT                                       # last layer wins

    out = prev_dirs                                                     # (2, slen_p, Bp, Hp)
    outputs = jnp.concatenate([out[0, :slen, :bsz, :H],
                               out[1, :slen, :bsz, :H]], axis=-1)       # (slen, B, 2H)
    outputs = jnp.transpose(outputs, (1, 0, 2))                         # (B, slen, 2H)
    h_t = jnp.concatenate([h_final[0, :bsz, :H], h_final[1, :bsz, :H]], axis=-1)
    c_t = jnp.concatenate([c_final[0, :bsz, :H], c_final[1, :bsz, :H]], axis=-1)
    return outputs, (h_t, c_t)


if __name__ == "__main__":
    config = Config(lstm_hidden_size=32, nlayers=2, dropout=0.0, word_pad=0.0)
    bsz, slen, input_size = 2, 8, 16

    key = jax.random.PRNGKey(0)
    key, kx = jax.random.split(key)
    src = jax.random.normal(kx, (bsz, slen, input_size), jnp.float32)
    src_lengths = jnp.array([8, 5], dtype=jnp.int32)                    # max == slen

    params = init_bilstm_params(key, input_size, config)

    fwd = jax.jit(functools.partial(bilstm_forward, config=config))
    outputs, (h_t, c_t) = fwd(params, src, src_lengths)
    jax.block_until_ready((outputs, h_t, c_t))

    H = config.lstm_hidden_size
    assert outputs.shape == (bsz, slen, 2 * H)
    assert h_t.shape == (bsz, 2 * H)
    assert c_t.shape == (bsz, 2 * H)
    assert bool(jnp.all(jnp.isfinite(outputs)))
    # Padded timesteps of the shorter sequence must equal word_pad.
    assert bool(jnp.all(outputs[1, 5:] == config.word_pad))
    # Packed-sequence invariants: final fwd hidden == output at t = len-1 (fwd half);
    # final bwd hidden == output at t = 0 (bwd half).
    lens = [8, 5]
    for b in range(bsz):
        assert bool(jnp.allclose(outputs[b, lens[b] - 1, :H], h_t[b, :H], atol=1e-5))
        assert bool(jnp.allclose(outputs[b, 0, H:], h_t[b, H:], atol=1e-5))

    print("KERNEL_OK")
</pallas_src>

<mosaic_0001>
module attributes {stable_mosaic.version = 11 : i64} {
  func.func @_bilstm_layer_kernel(%arg0: i32, %arg1: i32, %arg2: i32, %arg3: memref<1x8x16x512xbf16, #tpu.memory_space<vmem>>, %arg4: memref<16x1xi32, #tpu.memory_space<vmem>>, %arg5: memref<1x16x512xf32, #tpu.memory_space<vmem>>, %arg6: memref<1x128x512xbf16, #tpu.memory_space<vmem>>, %arg7: memref<1x8x16x128xbf16, #tpu.memory_space<vmem>>, %arg8: memref<1x16x128xf32, #tpu.memory_space<vmem>>, %arg9: memref<1x16x128xf32, #tpu.memory_space<vmem>>, %arg10: memref<16x128xf32, #tpu.memory_space<vmem>>, %arg11: memref<16x128xf32, #tpu.memory_space<vmem>>) attributes {dimension_semantics = [#tpu.dimension_semantics<parallel>, #tpu.dimension_semantics<parallel>, #tpu.dimension_semantics<arbitrary>], iteration_bounds = array<i64: 2, 1, 1>, scalar_prefetch = 0 : i64, scratch_operands = 2 : i64, tpu.core_type = #tpu.core_type<tc>, window_params = [{transform_indices = @transform_0, window_bounds = array<i64: 1, 8, 16, 512>}, {transform_indices = @transform_1, window_bounds = array<i64: 16, 1>}, {transform_indices = @transform_2, window_bounds = array<i64: 1, 16, 512>}, {transform_indices = @transform_3, window_bounds = array<i64: 1, 128, 512>}, {transform_indices = @transform_4, window_bounds = array<i64: 1, 8, 16, 128>}, {transform_indices = @transform_5, window_bounds = array<i64: 1, 16, 128>}, {transform_indices = @transform_6, window_bounds = array<i64: 1, 16, 128>}]} {
    %c0_i32 = arith.constant 0 : i32
    %0 = arith.cmpi eq, %arg2, %c0_i32 : i32
    %1 = arith.extui %0 : i1 to i32
    %c0_i32_0 = arith.constant 0 : i32
    %2 = arith.cmpi ne, %1, %c0_i32_0 : i32
    scf.if %2 {
      %cst_155 = arith.constant 0.000000e+00 : f32
      %476 = vector.broadcast %cst_155 : f32 to vector<16x128xf32>
      %c0_156 = arith.constant 0 : index
      %c0_157 = arith.constant 0 : index
      %477 = vector.load %arg10[%c0_156, %c0_157] : memref<16x128xf32, #tpu.memory_space<vmem>>, vector<16x128xf32>
      tpu.vector_store %arg10[%c0_156, %c0_157], %476 {strides = array<i32>} : memref<16x128xf32, #tpu.memory_space<vmem>>, vector<16x128xf32>,
      %cst_158 = arith.constant 0.000000e+00 : f32
      %478 = vector.broadcast %cst_158 : f32 to vector<16x128xf32>
      %c0_159 = arith.constant 0 : index
      %c0_160 = arith.constant 0 : index
      %479 = vector.load %arg11[%c0_159, %c0_160] : memref<16x128xf32, #tpu.memory_space<vmem>>, vector<16x128xf32>
      tpu.vector_store %arg11[%c0_159, %c0_160], %478 {strides = array<i32>} : memref<16x128xf32, #tpu.memory_space<vmem>>, vector<16x128xf32>,
    } else {
    }
    %c2_i32 = arith.constant 2 : i32
    %3 = arith.muli %c2_i32, %arg0 : i32
    %c1_i32 = arith.constant 1 : i32
    %4 = arith.subi %c1_i32, %3 : i32
    %5 = arith.muli %4, %arg2 : i32
    %c0_i32_1 = arith.constant 0 : i32
    %6 = arith.muli %arg0, %c0_i32_1 : i32
    %7 = arith.addi %5, %6 : i32
    %c8_i32 = arith.constant 8 : i32
    %8 = arith.muli %7, %c8_i32 : i32
    %c2_i32_2 = arith.constant 2 : i32
    %9 = arith.muli %c2_i32_2, %arg0 : i32
    %c1_i32_3 = arith.constant 1 : i32
    %10 = arith.subi %c1_i32_3, %9 : i32
    %c7_i32 = arith.constant 7 : i32
    %11 = arith.muli %arg0, %c7_i32 : i32
    %c0 = arith.constant 0 : index
    %c0_4 = arith.constant 0 : index
    %12 = vector.load %arg4[%c0, %c0_4] : memref<16x1xi32, #tpu.memory_space<vmem>>, vector<16x1xi32>
    %c0_5 = arith.constant 0 : index
    %c0_6 = arith.constant 0 : index
    %13 = vector.load %arg10[%c0_5, %c0_6] : memref<16x128xf32, #tpu.memory_space<vmem>>, vector<16x128xf32>
    %c0_7 = arith.constant 0 : index
    %c0_8 = arith.constant 0 : index
    %14 = vector.load %arg11[%c0_7, %c0_8] : memref<16x128xf32, #tpu.memory_space<vmem>>, vector<16x128xf32>
    %c0_i32_9 = arith.constant 0 : i32
    %15 = arith.muli %10, %c0_i32_9 : i32
    %16 = arith.addi %15, %11 : i32
    %17 = arith.addi %8, %16 : i32
    %c0_10 = arith.constant 0 : index
    %c0_11 = arith.constant 0 : index
    %c0_12 = arith.constant 0 : index
    %18 = vector.load %arg6[%c0_10, %c0_11, %c0_12] : memref<1x128x512xbf16, #tpu.memory_space<vmem>>, vector<1x128x512xbf16>
    %19 = vector.shape_cast %18 : vector<1x128x512xbf16> to vector<128x512xbf16>
    %c0_13 = arith.constant 0 : index
    %20 = arith.index_cast %16 : i32 to index
    %c0_14 = arith.constant 0 : index
    %c0_15 = arith.constant 0 : index
    %21 = vector.load %arg3[%c0_13, %20, %c0_14, %c0_15] : memref<1x8x16x512xbf16, #tpu.memory_space<vmem>>, vector<1x1x16x512xbf16>
    %22 = vector.shape_cast %21 : vector<1x1x16x512xbf16> to vector<16x512xbf16>
    %23 = arith.extf %22 : vector<16x512xbf16> to vector<16x512xf32>
    %c0_16 = arith.constant 0 : index
    %c0_17 = arith.constant 0 : index
    %c0_18 = arith.constant 0 : index
    %24 = vector.load %arg5[%c0_16, %c0_17, %c0_18] : memref<1x16x512xf32, #tpu.memory_space<vmem>>, vector<1x16x512xf32>
    %25 = vector.shape_cast %24 : vector<1x16x512xf32> to vector<16x512xf32>
    %26 = arith.addf %23, %25 : vector<16x512xf32>
    %27 = arith.truncf %13 : vector<16x128xf32> to vector<16x128xbf16>
    %cst = arith.constant dense<0.000000e+00> : vector<16x512xf32>
    %28 = tpu.matmul %27, %19, %cst {dimension_numbers = #tpu.dot_dimension_numbers<[1], [0], [0], [1], [0, 0, 1, 1], [], []>} : vector<16x128xbf16>, vector<128x512xbf16>, vector<16x512xf32> -> vector<16x512xf32>
    %29 = arith.addf %26, %28 : vector<16x512xf32>
    %30 = vector.extract_strided_slice %29 {offsets = [0, 0], sizes = [16, 128], strides = [1, 1]} : vector<16x512xf32> to vector<16x128xf32>
    %31 = arith.negf %30 : vector<16x128xf32>
    %32 = math.exp %31 : vector<16x128xf32>
    %cst_19 = arith.constant 1.000000e+00 : f32
    %33 = vector.broadcast %cst_19 : f32 to vector<16x128xf32>
    %34 = arith.addf %33, %32 : vector<16x128xf32>
    %35 = arith.divf %33, %34 : vector<16x128xf32>
    %36 = vector.extract_strided_slice %29 {offsets = [0, 128], sizes = [16, 128], strides = [1, 1]} : vector<16x512xf32> to vector<16x128xf32>
    %37 = arith.negf %36 : vector<16x128xf32>
    %38 = math.exp %37 : vector<16x128xf32>
    %cst_20 = arith.constant 1.000000e+00 : f32
    %39 = vector.broadcast %cst_20 : f32 to vector<16x128xf32>
    %40 = arith.addf %39, %38 : vector<16x128xf32>
    %41 = arith.divf %39, %40 : vector<16x128xf32>
    %42 = vector.extract_strided_slice %29 {offsets = [0, 256], sizes = [16, 128], strides = [1, 1]} : vector<16x512xf32> to vector<16x128xf32>
    %43 = math.tanh %42 : vector<16x128xf32>
    %44 = vector.extract_strided_slice %29 {offsets = [0, 384], sizes = [16, 128], strides = [1, 1]} : vector<16x512xf32> to vector<16x128xf32>
    %45 = arith.negf %44 : vector<16x128xf32>
    %46 = math.exp %45 : vector<16x128xf32>
    %cst_21 = arith.constant 1.000000e+00 : f32
    %47 = vector.broadcast %cst_21 : f32 to vector<16x128xf32>
    %48 = arith.addf %47, %46 : vector<16x128xf32>
    %49 = arith.divf %47, %48 : vector<16x128xf32>
    %50 = arith.mulf %41, %14 : vector<16x128xf32>
    %51 = arith.mulf %35, %43 : vector<16x128xf32>
    %52 = arith.addf %50, %51 : vector<16x128xf32>
    %53 = math.tanh %52 : vector<16x128xf32>
    %54 = arith.mulf %49, %53 : vector<16x128xf32>
    %55 = vector.broadcast %17 : i32 to vector<16x1xi32>
    %56 = arith.cmpi slt, %55, %12 : vector<16x1xi32>
    %57 = vector.shape_cast %56 : vector<16x1xi1> to vector<16x1xi1>
    %58 = vector.broadcast %57 : vector<16x1xi1> to vector<16x128xi1>
    %59 = arith.select %58, %54, %13 : vector<16x128xi1>, vector<16x128xf32>
    %60 = vector.shape_cast %56 : vector<16x1xi1> to vector<16x1xi1>
    %61 = vector.broadcast %60 : vector<16x1xi1> to vector<16x128xi1>
    %62 = arith.select %61, %52, %14 : vector<16x128xi1>, vector<16x128xf32>
    %cst_22 = arith.constant 0.000000e+00 : f32
    %63 = vector.broadcast %cst_22 : f32 to vector<16x128xf32>
    %64 = vector.shape_cast %56 : vector<16x1xi1> to vector<16x1xi1>
    %65 = vector.broadcast %64 : vector<16x1xi1> to vector<16x128xi1>
    %66 = arith.select %65, %54, %63 : vector<16x128xi1>, vector<16x128xf32>
    %67 = arith.truncf %66 : vector<16x128xf32> to vector<16x128xbf16>
    %c0_23 = arith.constant 0 : index
    %68 = arith.index_cast %16 : i32 to index
    %c0_24 = arith.constant 0 : index
    %c0_25 = arith.constant 0 : index
    %69 = vector.load %arg7[%c0_23, %68, %c0_24, %c0_25] : memref<1x8x16x128xbf16, #tpu.memory_space<vmem>>, vector<1x1x16x128xbf16>
    %70 = vector.shape_cast %69 : vector<1x1x16x128xbf16> to vector<16x128xbf16>
    %71 = vector.shape_cast %67 : vector<16x128xbf16> to vector<1x1x16x128xbf16>
    tpu.vector_store %arg7[%c0_23, %68, %c0_24, %c0_25], %71 {strides = array<i32>} : memref<1x8x16x128xbf16, #tpu.memory_space<vmem>>, vector<1x1x16x128xbf16>,
    %c1_i32_26 = arith.constant 1 : i32
    %72 = arith.muli %10, %c1_i32_26 : i32
    %73 = arith.addi %72, %11 : i32
    %74 = arith.addi %8, %73 : i32
    %c0_27 = arith.constant 0 : index
    %c0_28 = arith.constant 0 : index
    %c0_29 = arith.constant 0 : index
    %75 = vector.load %arg6[%c0_27, %c0_28, %c0_29] : memref<1x128x512xbf16, #tpu.memory_space<vmem>>, vector<1x128x512xbf16>
    %76 = vector.shape_cast %75 : vector<1x128x512xbf16> to vector<128x512xbf16>
    %c0_30 = arith.constant 0 : index
    %77 = arith.index_cast %73 : i32 to index
    %c0_31 = arith.constant 0 : index
    %c0_32 = arith.constant 0 : index
    %78 = vector.load %arg3[%c0_30, %77, %c0_31, %c0_32] : memref<1x8x16x512xbf16, #tpu.memory_space<vmem>>, vector<1x1x16x512xbf16>
    %79 = vector.shape_cast %78 : vector<1x1x16x512xbf16> to vector<16x512xbf16>
    %80 = arith.extf %79 : vector<16x512xbf16> to vector<16x512xf32>
    %c0_33 = arith.constant 0 : index
    %c0_34 = arith.constant 0 : index
    %c0_35 = arith.constant 0 : index
    %81 = vector.load %arg5[%c0_33, %c0_34, %c0_35] : memref<1x16x512xf32, #tpu.memory_space<vmem>>, vector<1x16x512xf32>
    %82 = vector.shape_cast %81 : vector<1x16x512xf32> to vector<16x512xf32>
    %83 = arith.addf %80, %82 : vector<16x512xf32>
    %84 = arith.truncf %59 : vector<16x128xf32> to vector<16x128xbf16>
    %cst_36 = arith.constant dense<0.000000e+00> : vector<16x512xf32>
    %85 = tpu.matmul %84, %76, %cst_36 {dimension_numbers = #tpu.dot_dimension_numbers<[1], [0], [0], [1], [0, 0, 1, 1], [], []>} : vector<16x128xbf16>, vector<128x512xbf16>, vector<16x512xf32> -> vector<16x512xf32>
    %86 = arith.addf %83, %85 : vector<16x512xf32>
    %87 = vector.extract_strided_slice %86 {offsets = [0, 0], sizes = [16, 128], strides = [1, 1]} : vector<16x512xf32> to vector<16x128xf32>
    %88 = arith.negf %87 : vector<16x128xf32>
    %89 = math.exp %88 : vector<16x128xf32>
    %cst_37 = arith.constant 1.000000e+00 : f32
    %90 = vector.broadcast %cst_37 : f32 to vector<16x128xf32>
    %91 = arith.addf %90, %89 : vector<16x128xf32>
    %92 = arith.divf %90, %91 : vector<16x128xf32>
    %93 = vector.extract_strided_slice %86 {offsets = [0, 128], sizes = [16, 128], strides = [1, 1]} : vector<16x512xf32> to vector<16x128xf32>
    %94 = arith.negf %93 : vector<16x128xf32>
    %95 = math.exp %94 : vector<16x128xf32>
    %cst_38 = arith.constant 1.000000e+00 : f32
    %96 = vector.broadcast %cst_38 : f32 to vector<16x128xf32>
    %97 = arith.addf %96, %95 : vector<16x128xf32>
    %98 = arith.divf %96, %97 : vector<16x128xf32>
    %99 = vector.extract_strided_slice %86 {offsets = [0, 256], sizes = [16, 128], strides = [1, 1]} : vector<16x512xf32> to vector<16x128xf32>
    %100 = math.tanh %99 : vector<16x128xf32>
    %101 = vector.extract_strided_slice %86 {offsets = [0, 384], sizes = [16, 128], strides = [1, 1]} : vector<16x512xf32> to vector<16x128xf32>
    %102 = arith.negf %101 : vector<16x128xf32>
    %103 = math.exp %102 : vector<16x128xf32>
    %cst_39 = arith.constant 1.000000e+00 : f32
    %104 = vector.broadcast %cst_39 : f32 to vector<16x128xf32>
    %105 = arith.addf %104, %103 : vector<16x128xf32>
    %106 = arith.divf %104, %105 : vector<16x128xf32>
    %107 = arith.mulf %98, %62 : vector<16x128xf32>
    %108 = arith.mulf %92, %100 : vector<16x128xf32>
    %109 = arith.addf %107, %108 : vector<16x128xf32>
    %110 = math.tanh %109 : vector<16x128xf32>
    %111 = arith.mulf %106, %110 : vector<16x128xf32>
    %112 = vector.broadcast %74 : i32 to vector<16x1xi32>
    %113 = arith.cmpi slt, %112, %12 : vector<16x1xi32>
    %114 = vector.shape_cast %113 : vector<16x1xi1> to vector<16x1xi1>
    %115 = vector.broadcast %114 : vector<16x1xi1> to vector<16x128xi1>
    %116 = arith.select %115, %111, %59 : vector<16x128xi1>, vector<16x128xf32>
    %117 = vector.shape_cast %113 : vector<16x1xi1> to vector<16x1xi1>
    %118 = vector.broadcast %117 : vector<16x1xi1> to vector<16x128xi1>
    %119 = arith.select %118, %109, %62 : vector<16x128xi1>, vector<16x128xf32>
    %cst_40 = arith.constant 0.000000e+00 : f32
    %120 = vector.broadcast %cst_40 : f32 to vector<16x128xf32>
    %121 = vector.shape_cast %113 : vector<16x1xi1> to vector<16x1xi1>
    %122 = vector.broadcast %121 : vector<16x1xi1> to vector<16x128xi1>
    %123 = arith.select %122, %111, %120 : vector<16x128xi1>, vector<16x128xf32>
    %124 = arith.truncf %123 : vector<16x128xf32> to vector<16x128xbf16>
    %c0_41 = arith.constant 0 : index
    %125 = arith.index_cast %73 : i32 to index
    %c0_42 = arith.constant 0 : index
    %c0_43 = arith.constant 0 : index
    %126 = vector.load %arg7[%c0_41, %125, %c0_42, %c0_43] : memref<1x8x16x128xbf16, #tpu.memory_space<vmem>>, vector<1x1x16x128xbf16>
    %127 = vector.shape_cast %126 : vector<1x1x16x128xbf16> to vector<16x128xbf16>
    %128 = vector.shape_cast %124 : vector<16x128xbf16> to vector<1x1x16x128xbf16>
    tpu.vector_store %arg7[%c0_41, %125, %c0_42, %c0_43], %128 {strides = array<i32>} : memref<1x8x16x128xbf16, #tpu.memory_space<vmem>>, vector<1x1x16x128xbf16>,
    %c2_i32_44 = arith.constant 2 : i32
    %129 = arith.muli %10, %c2_i32_44 : i32
    %130 = arith.addi %129, %11 : i32
    %131 = arith.addi %8, %130 : i32
    %c0_45 = arith.constant 0 : index
    %c0_46 = arith.constant 0 : index
    %c0_47 = arith.constant 0 : index
    %132 = vector.load %arg6[%c0_45, %c0_46, %c0_47] : memref<1x128x512xbf16, #tpu.memory_space<vmem>>, vector<1x128x512xbf16>
    %133 = vector.shape_cast %132 : vector<1x128x512xbf16> to vector<128x512xbf16>
    %c0_48 = arith.constant 0 : index
    %134 = arith.index_cast %130 : i32 to index
    %c0_49 = arith.constant 0 : index
    %c0_50 = arith.constant 0 : index
    %135 = vector.load %arg3[%c0_48, %134, %c0_49, %c0_50] : memref<1x8x16x512xbf16, #tpu.memory_space<vmem>>, vector<1x1x16x512xbf16>
    %136 = vector.shape_cast %135 : vector<1x1x16x512xbf16> to vector<16x512xbf16>
    %137 = arith.extf %136 : vector<16x512xbf16> to vector<16x512xf32>
    %c0_51 = arith.constant 0 : index
    %c0_52 = arith.constant 0 : index
    %c0_53 = arith.constant 0 : index
    %138 = vector.load %arg5[%c0_51, %c0_52, %c0_53] : memref<1x16x512xf32, #tpu.memory_space<vmem>>, vector<1x16x512xf32>
    %139 = vector.shape_cast %138 : vector<1x16x512xf32> to vector<16x512xf32>
    %140 = arith.addf %137, %139 : vector<16x512xf32>
    %141 = arith.truncf %116 : vector<16x128xf32> to vector<16x128xbf16>
    %cst_54 = arith.constant dense<0.000000e+00> : vector<16x512xf32>
    %142 = tpu.matmul %141, %133, %cst_54 {dimension_numbers = #tpu.dot_dimension_numbers<[1], [0], [0], [1], [0, 0, 1, 1], [], []>} : vector<16x128xbf16>, vector<128x512xbf16>, vector<16x512xf32> -> vector<16x512xf32>
    %143 = arith.addf %140, %142 : vector<16x512xf32>
    %144 = vector.extract_strided_slice %143 {offsets = [0, 0], sizes = [16, 128], strides = [1, 1]} : vector<16x512xf32> to vector<16x128xf32>
    %145 = arith.negf %144 : vector<16x128xf32>
    %146 = math.exp %145 : vector<16x128xf32>
    %cst_55 = arith.constant 1.000000e+00 : f32
    %147 = vector.broadcast %cst_55 : f32 to vector<16x128xf32>
    %148 = arith.addf %147, %146 : vector<16x128xf32>
    %149 = arith.divf %147, %148 : vector<16x128xf32>
    %150 = vector.extract_strided_slice %143 {offsets = [0, 128], sizes = [16, 128], strides = [1, 1]} : vector<16x512xf32> to vector<16x128xf32>
    %151 = arith.negf %150 : vector<16x128xf32>
    %152 = math.exp %151 : vector<16x128xf32>
    %cst_56 = arith.constant 1.000000e+00 : f32
    %153 = vector.broadcast %cst_56 : f32 to vector<16x128xf32>
    %154 = arith.addf %153, %152 : vector<16x128xf32>
    %155 = arith.divf %153, %154 : vector<16x128xf32>
    %156 = vector.extract_strided_slice %143 {offsets = [0, 256], sizes = [16, 128], strides = [1, 1]} : vector<16x512xf32> to vector<16x128xf32>
    %157 = math.tanh %156 : vector<16x128xf32>
    %158 = vector.extract_strided_slice %143 {offsets = [0, 384], sizes = [16, 128], strides = [1, 1]} : vector<16x512xf32> to vector<16x128xf32>
    %159 = arith.negf %158 : vector<16x128xf32>
    %160 = math.exp %159 : vector<16x128xf32>
    %cst_57 = arith.constant 1.000000e+00 : f32
    %161 = vector.broadcast %cst_57 : f32 to vector<16x128xf32>
    %162 = arith.addf %161, %160 : vector<16x128xf32>
    %163 = arith.divf %161, %162 : vector<16x128xf32>
    %164 = arith.mulf %155, %119 : vector<16x128xf32>
    %165 = arith.mulf %149, %157 : vector<16x128xf32>
    %166 = arith.addf %164, %165 : vector<16x128xf32>
    %167 = math.tanh %166 : vector<16x128xf32>
    %168 = arith.mulf %163, %167 : vector<16x128xf32>
    %169 = vector.broadcast %131 : i32 to vector<16x1xi32>
    %170 = arith.cmpi slt, %169, %12 : vector<16x1xi32>
    %171 = vector.shape_cast %170 : vector<16x1xi1> to vector<16x1xi1>
    %172 = vector.broadcast %171 : vector<16x1xi1> to vector<16x128xi1>
    %173 = arith.select %172, %168, %116 : vector<16x128xi1>, vector<16x128xf32>
    %174 = vector.shape_cast %170 : vector<16x1xi1> to vector<16x1xi1>
    %175 = vector.broadcast %174 : vector<16x1xi1> to vector<16x128xi1>
    %176 = arith.select %175, %166, %119 : vector<16x128xi1>, vector<16x128xf32>
    %cst_58 = arith.constant 0.000000e+00 : f32
    %177 = vector.broadcast %cst_58 : f32 to vector<16x128xf32>
    %178 = vector.shape_cast %170 : vector<16x1xi1> to vector<16x1xi1>
    %179 = vector.broadcast %178 : vector<16x1xi1> to vector<16x128xi1>
    %180 = arith.select %179, %168, %177 : vector<16x128xi1>, vector<16x128xf32>
    %181 = arith.truncf %180 : vector<16x128xf32> to vector<16x128xbf16>
    %c0_59 = arith.constant 0 : index
    %182 = arith.index_cast %130 : i32 to index
    %c0_60 = arith.constant 0 : index
    %c0_61 = arith.constant 0 : index
    %183 = vector.load %arg7[%c0_59, %182, %c0_60, %c0_61] : memref<1x8x16x128xbf16, #tpu.memory_space<vmem>>, vector<1x1x16x128xbf16>
    %184 = vector.shape_cast %183 : vector<1x1x16x128xbf16> to vector<16x128xbf16>
    %185 = vector.shape_cast %181 : vector<16x128xbf16> to vector<1x1x16x128xbf16>
    tpu.vector_store %arg7[%c0_59, %182, %c0_60, %c0_61], %185 {strides = array<i32>} : memref<1x8x16x128xbf16, #tpu.memory_space<vmem>>, vector<1x1x16x128xbf16>,
    %c3_i32 = arith.constant 3 : i32
    %186 = arith.muli %10, %c3_i32 : i32
    %187 = arith.addi %186, %11 : i32
    %188 = arith.addi %8, %187 : i32
    %c0_62 = arith.constant 0 : index
    %c0_63 = arith.constant 0 : index
    %c0_64 = arith.constant 0 : index
    %189 = vector.load %arg6[%c0_62, %c0_63, %c0_64] : memref<1x128x512xbf16, #tpu.memory_space<vmem>>, vector<1x128x512xbf16>
    %190 = vector.shape_cast %189 : vector<1x128x512xbf16> to vector<128x512xbf16>
    %c0_65 = arith.constant 0 : index
    %191 = arith.index_cast %187 : i32 to index
    %c0_66 = arith.constant 0 : index
    %c0_67 = arith.constant 0 : index
    %192 = vector.load %arg3[%c0_65, %191, %c0_66, %c0_67] : memref<1x8x16x512xbf16, #tpu.memory_space<vmem>>, vector<1x1x16x512xbf16>
    %193 = vector.shape_cast %192 : vector<1x1x16x512xbf16> to vector<16x512xbf16>
    %194 = arith.extf %193 : vector<16x512xbf16> to vector<16x512xf32>
    %c0_68 = arith.constant 0 : index
    %c0_69 = arith.constant 0 : index
    %c0_70 = arith.constant 0 : index
    %195 = vector.load %arg5[%c0_68, %c0_69, %c0_70] : memref<1x16x512xf32, #tpu.memory_space<vmem>>, vector<1x16x512xf32>
    %196 = vector.shape_cast %195 : vector<1x16x512xf32> to vector<16x512xf32>
    %197 = arith.addf %194, %196 : vector<16x512xf32>
    %198 = arith.truncf %173 : vector<16x128xf32> to vector<16x128xbf16>
    %cst_71 = arith.constant dense<0.000000e+00> : vector<16x512xf32>
    %199 = tpu.matmul %198, %190, %cst_71 {dimension_numbers = #tpu.dot_dimension_numbers<[1], [0], [0], [1], [0, 0, 1, 1], [], []>} : vector<16x128xbf16>, vector<128x512xbf16>, vector<16x512xf32> -> vector<16x512xf32>
    %200 = arith.addf %197, %199 : vector<16x512xf32>
    %201 = vector.extract_strided_slice %200 {offsets = [0, 0], sizes = [16, 128], strides = [1, 1]} : vector<16x512xf32> to vector<16x128xf32>
    %202 = arith.negf %201 : vector<16x128xf32>
    %203 = math.exp %202 : vector<16x128xf32>
    %cst_72 = arith.constant 1.000000e+00 : f32
    %204 = vector.broadcast %cst_72 : f32 to vector<16x128xf32>
    %205 = arith.addf %204, %203 : vector<16x128xf32>
    %206 = arith.divf %204, %205 : vector<16x128xf32>
    %207 = vector.extract_strided_slice %200 {offsets = [0, 128], sizes = [16, 128], strides = [1, 1]} : vector<16x512xf32> to vector<16x128xf32>
    %208 = arith.negf %207 : vector<16x128xf32>
    %209 = math.exp %208 : vector<16x128xf32>
    %cst_73 = arith.constant 1.000000e+00 : f32
    %210 = vector.broadcast %cst_73 : f32 to vector<16x128xf32>
    %211 = arith.addf %210, %209 : vector<16x128xf32>
    %212 = arith.divf %210, %211 : vector<16x128xf32>
    %213 = vector.extract_strided_slice %200 {offsets = [0, 256], sizes = [16, 128], strides = [1, 1]} : vector<16x512xf32> to vector<16x128xf32>
    %214 = math.tanh %213 : vector<16x128xf32>
    %215 = vector.extract_strided_slice %200 {offsets = [0, 384], sizes = [16, 128], strides = [1, 1]} : vector<16x512xf32> to vector<16x128xf32>
    %216 = arith.negf %215 : vector<16x128xf32>
    %217 = math.exp %216 : vector<16x128xf32>
    %cst_74 = arith.constant 1.000000e+00 : f32
    %218 = vector.broadcast %cst_74 : f32 to vector<16x128xf32>
    %219 = arith.addf %218, %217 : vector<16x128xf32>
    %220 = arith.divf %218, %219 : vector<16x128xf32>
    %221 = arith.mulf %212, %176 : vector<16x128xf32>
    %222 = arith.mulf %206, %214 : vector<16x128xf32>
    %223 = arith.addf %221, %222 : vector<16x128xf32>
    %224 = math.tanh %223 : vector<16x128xf32>
    %225 = arith.mulf %220, %224 : vector<16x128xf32>
    %226 = vector.broadcast %188 : i32 to vector<16x1xi32>
    %227 = arith.cmpi slt, %226, %12 : vector<16x1xi32>
    %228 = vector.shape_cast %227 : vector<16x1xi1> to vector<16x1xi1>
    %229 = vector.broadcast %228 : vector<16x1xi1> to vector<16x128xi1>
    %230 = arith.select %229, %225, %173 : vector<16x128xi1>, vector<16x128xf32>
    %231 = vector.shape_cast %227 : vector<16x1xi1> to vector<16x1xi1>
    %232 = vector.broadcast %231 : vector<16x1xi1> to vector<16x128xi1>
    %233 = arith.select %232, %223, %176 : vector<16x128xi1>, vector<16x128xf32>
    %cst_75 = arith.constant 0.000000e+00 : f32
    %234 = vector.broadcast %cst_75 : f32 to vector<16x128xf32>
    %235 = vector.shape_cast %227 : vector<16x1xi1> to vector<16x1xi1>
    %236 = vector.broadcast %235 : vector<16x1xi1> to vector<16x128xi1>
    %237 = arith.select %236, %225, %234 : vector<16x128xi1>, vector<16x128xf32>
    %238 = arith.truncf %237 : vector<16x128xf32> to vector<16x128xbf16>
    %c0_76 = arith.constant 0 : index
    %239 = arith.index_cast %187 : i32 to index
    %c0_77 = arith.constant 0 : index
    %c0_78 = arith.constant 0 : index
    %240 = vector.load %arg7[%c0_76, %239, %c0_77, %c0_78] : memref<1x8x16x128xbf16, #tpu.memory_space<vmem>>, vector<1x1x16x128xbf16>
    %241 = vector.shape_cast %240 : vector<1x1x16x128xbf16> to vector<16x128xbf16>
    %242 = vector.shape_cast %238 : vector<16x128xbf16> to vector<1x1x16x128xbf16>
    tpu.vector_store %arg7[%c0_76, %239, %c0_77, %c0_78], %242 {strides = array<i32>} : memref<1x8x16x128xbf16, #tpu.memory_space<vmem>>, vector<1x1x16x128xbf16>,
    %c4_i32 = arith.constant 4 : i32
    %243 = arith.muli %10, %c4_i32 : i32
    %244 = arith.addi %243, %11 : i32
    %245 = arith.addi %8, %244 : i32
    %c0_79 = arith.constant 0 : index
    %c0_80 = arith.constant 0 : index
    %c0_81 = arith.constant 0 : index
    %246 = vector.load %arg6[%c0_79, %c0_80, %c0_81] : memref<1x128x512xbf16, #tpu.memory_space<vmem>>, vector<1x128x512xbf16>
    %247 = vector.shape_cast %246 : vector<1x128x512xbf16> to vector<128x512xbf16>
    %c0_82 = arith.constant 0 : index
    %248 = arith.index_cast %244 : i32 to index
    %c0_83 = arith.constant 0 : index
    %c0_84 = arith.constant 0 : index
    %249 = vector.load %arg3[%c0_82, %248, %c0_83, %c0_84] : memref<1x8x16x512xbf16, #tpu.memory_space<vmem>>, vector<1x1x16x512xbf16>
    %250 = vector.shape_cast %249 : vector<1x1x16x512xbf16> to vector<16x512xbf16>
    %251 = arith.extf %250 : vector<16x512xbf16> to vector<16x512xf32>
    %c0_85 = arith.constant 0 : index
    %c0_86 = arith.constant 0 : index
    %c0_87 = arith.constant 0 : index
    %252 = vector.load %arg5[%c0_85, %c0_86, %c0_87] : memref<1x16x512xf32, #tpu.memory_space<vmem>>, vector<1x16x512xf32>
    %253 = vector.shape_cast %252 : vector<1x16x512xf32> to vector<16x512xf32>
    %254 = arith.addf %251, %253 : vector<16x512xf32>
    %255 = arith.truncf %230 : vector<16x128xf32> to vector<16x128xbf16>
    %cst_88 = arith.constant dense<0.000000e+00> : vector<16x512xf32>
    %256 = tpu.matmul %255, %247, %cst_88 {dimension_numbers = #tpu.dot_dimension_numbers<[1], [0], [0], [1], [0, 0, 1, 1], [], []>} : vector<16x128xbf16>, vector<128x512xbf16>, vector<16x512xf32> -> vector<16x512xf32>
    %257 = arith.addf %254, %256 : vector<16x512xf32>
    %258 = vector.extract_strided_slice %257 {offsets = [0, 0], sizes = [16, 128], strides = [1, 1]} : vector<16x512xf32> to vector<16x128xf32>
    %259 = arith.negf %258 : vector<16x128xf32>
    %260 = math.exp %259 : vector<16x128xf32>
    %cst_89 = arith.constant 1.000000e+00 : f32
    %261 = vector.broadcast %cst_89 : f32 to vector<16x128xf32>
    %262 = arith.addf %261, %260 : vector<16x128xf32>
    %263 = arith.divf %261, %262 : vector<16x128xf32>
    %264 = vector.extract_strided_slice %257 {offsets = [0, 128], sizes = [16, 128], strides = [1, 1]} : vector<16x512xf32> to vector<16x128xf32>
    %265 = arith.negf %264 : vector<16x128xf32>
    %266 = math.exp %265 : vector<16x128xf32>
    %cst_90 = arith.constant 1.000000e+00 : f32
    %267 = vector.broadcast %cst_90 : f32 to vector<16x128xf32>
    %268 = arith.addf %267, %266 : vector<16x128xf32>
    %269 = arith.divf %267, %268 : vector<16x128xf32>
    %270 = vector.extract_strided_slice %257 {offsets = [0, 256], sizes = [16, 128], strides = [1, 1]} : vector<16x512xf32> to vector<16x128xf32>
    %271 = math.tanh %270 : vector<16x128xf32>
    %272 = vector.extract_strided_slice %257 {offsets = [0, 384], sizes = [16, 128], strides = [1, 1]} : vector<16x512xf32> to vector<16x128xf32>
    %273 = arith.negf %272 : vector<16x128xf32>
    %274 = math.exp %273 : vector<16x128xf32>
    %cst_91 = arith.constant 1.000000e+00 : f32
    %275 = vector.broadcast %cst_91 : f32 to vector<16x128xf32>
    %276 = arith.addf %275, %274 : vector<16x128xf32>
    %277 = arith.divf %275, %276 : vector<16x128xf32>
    %278 = arith.mulf %269, %233 : vector<16x128xf32>
    %279 = arith.mulf %263, %271 : vector<16x128xf32>
    %280 = arith.addf %278, %279 : vector<16x128xf32>
    %281 = math.tanh %280 : vector<16x128xf32>
    %282 = arith.mulf %277, %281 : vector<16x128xf32>
    %283 = vector.broadcast %245 : i32 to vector<16x1xi32>
    %284 = arith.cmpi slt, %283, %12 : vector<16x1xi32>
    %285 = vector.shape_cast %284 : vector<16x1xi1> to vector<16x1xi1>
    %286 = vector.broadcast %285 : vector<16x1xi1> to vector<16x128xi1>
    %287 = arith.select %286, %282, %230 : vector<16x128xi1>, vector<16x128xf32>
    %288 = vector.shape_cast %284 : vector<16x1xi1> to vector<16x1xi1>
    %289 = vector.broadcast %288 : vector<16x1xi1> to vector<16x128xi1>
    %290 = arith.select %289, %280, %233 : vector<16x128xi1>, vector<16x128xf32>
    %cst_92 = arith.constant 0.000000e+00 : f32
    %291 = vector.broadcast %cst_92 : f32 to vector<16x128xf32>
    %292 = vector.shape_cast %284 : vector<16x1xi1> to vector<16x1xi1>
    %293 = vector.broadcast %292 : vector<16x1xi1> to vector<16x128xi1>
    %294 = arith.select %293, %282, %291 : vector<16x128xi1>, vector<16x128xf32>
    %295 = arith.truncf %294 : vector<16x128xf32> to vector<16x128xbf16>
    %c0_93 = arith.constant 0 : index
    %296 = arith.index_cast %244 : i32 to index
    %c0_94 = arith.constant 0 : index
    %c0_95 = arith.constant 0 : index
    %297 = vector.load %arg7[%c0_93, %296, %c0_94, %c0_95] : memref<1x8x16x128xbf16, #tpu.memory_space<vmem>>, vector<1x1x16x128xbf16>
    %298 = vector.shape_cast %297 : vector<1x1x16x128xbf16> to vector<16x128xbf16>
    %299 = vector.shape_cast %295 : vector<16x128xbf16> to vector<1x1x16x128xbf16>
    tpu.vector_store %arg7[%c0_93, %296, %c0_94, %c0_95], %299 {strides = array<i32>} : memref<1x8x16x128xbf16, #tpu.memory_space<vmem>>, vector<1x1x16x128xbf16>,
    %c5_i32 = arith.constant 5 : i32
    %300 = arith.muli %10, %c5_i32 : i32
    %301 = arith.addi %300, %11 : i32
    %302 = arith.addi %8, %301 : i32
    %c0_96 = arith.constant 0 : index
    %c0_97 = arith.constant 0 : index
    %c0_98 = arith.constant 0 : index
    %303 = vector.load %arg6[%c0_96, %c0_97, %c0_98] : memref<1x128x512xbf16, #tpu.memory_space<vmem>>, vector<1x128x512xbf16>
    %304 = vector.shape_cast %303 : vector<1x128x512xbf16> to vector<128x512xbf16>
    %c0_99 = arith.constant 0 : index
    %305 = arith.index_cast %301 : i32 to index
    %c0_100 = arith.constant 0 : index
    %c0_101 = arith.constant 0 : index
    %306 = vector.load %arg3[%c0_99, %305, %c0_100, %c0_101] : memref<1x8x16x512xbf16, #tpu.memory_space<vmem>>, vector<1x1x16x512xbf16>
    %307 = vector.shape_cast %306 : vector<1x1x16x512xbf16> to vector<16x512xbf16>
    %308 = arith.extf %307 : vector<16x512xbf16> to vector<16x512xf32>
    %c0_102 = arith.constant 0 : index
    %c0_103 = arith.constant 0 : index
    %c0_104 = arith.constant 0 : index
    %309 = vector.load %arg5[%c0_102, %c0_103, %c0_104] : memref<1x16x512xf32, #tpu.memory_space<vmem>>, vector<1x16x512xf32>
    %310 = vector.shape_cast %309 : vector<1x16x512xf32> to vector<16x512xf32>
    %311 = arith.addf %308, %310 : vector<16x512xf32>
    %312 = arith.truncf %287 : vector<16x128xf32> to vector<16x128xbf16>
    %cst_105 = arith.constant dense<0.000000e+00> : vector<16x512xf32>
    %313 = tpu.matmul %312, %304, %cst_105 {dimension_numbers = #tpu.dot_dimension_numbers<[1], [0], [0], [1], [0, 0, 1, 1], [], []>} : vector<16x128xbf16>, vector<128x512xbf16>, vector<16x512xf32> -> vector<16x512xf32>
    %314 = arith.addf %311, %313 : vector<16x512xf32>
    %315 = vector.extract_strided_slice %314 {offsets = [0, 0], sizes = [16, 128], strides = [1, 1]} : vector<16x512xf32> to vector<16x128xf32>
    %316 = arith.negf %315 : vector<16x128xf32>
    %317 = math.exp %316 : vector<16x128xf32>
    %cst_106 = arith.constant 1.000000e+00 : f32
    %318 = vector.broadcast %cst_106 : f32 to vector<16x128xf32>
    %319 = arith.addf %318, %317 : vector<16x128xf32>
    %320 = arith.divf %318, %319 : vector<16x128xf32>
    %321 = vector.extract_strided_slice %314 {offsets = [0, 128], sizes = [16, 128], strides = [1, 1]} : vector<16x512xf32> to vector<16x128xf32>
    %322 = arith.negf %321 : vector<16x128xf32>
    %323 = math.exp %322 : vector<16x128xf32>
    %cst_107 = arith.constant 1.000000e+00 : f32
    %324 = vector.broadcast %cst_107 : f32 to vector<16x128xf32>
    %325 = arith.addf %324, %323 : vector<16x128xf32>
    %326 = arith.divf %324, %325 : vector<16x128xf32>
    %327 = vector.extract_strided_slice %314 {offsets = [0, 256], sizes = [16, 128], strides = [1, 1]} : vector<16x512xf32> to vector<16x128xf32>
    %328 = math.tanh %327 : vector<16x128xf32>
    %329 = vector.extract_strided_slice %314 {offsets = [0, 384], sizes = [16, 128], strides = [1, 1]} : vector<16x512xf32> to vector<16x128xf32>
    %330 = arith.negf %329 : vector<16x128xf32>
    %331 = math.exp %330 : vector<16x128xf32>
    %cst_108 = arith.constant 1.000000e+00 : f32
    %332 = vector.broadcast %cst_108 : f32 to vector<16x128xf32>
    %333 = arith.addf %332, %331 : vector<16x128xf32>
    %334 = arith.divf %332, %333 : vector<16x128xf32>
    %335 = arith.mulf %326, %290 : vector<16x128xf32>
    %336 = arith.mulf %320, %328 : vector<16x128xf32>
    %337 = arith.addf %335, %336 : vector<16x128xf32>
    %338 = math.tanh %337 : vector<16x128xf32>
    %339 = arith.mulf %334, %338 : vector<16x128xf32>
    %340 = vector.broadcast %302 : i32 to vector<16x1xi32>
    %341 = arith.cmpi slt, %340, %12 : vector<16x1xi32>
    %342 = vector.shape_cast %341 : vector<16x1xi1> to vector<16x1xi1>
    %343 = vector.broadcast %342 : vector<16x1xi1> to vector<16x128xi1>
    %344 = arith.select %343, %339, %287 : vector<16x128xi1>, vector<16x128xf32>
    %345 = vector.shape_cast %341 : vector<16x1xi1> to vector<16x1xi1>
    %346 = vector.broadcast %345 : vector<16x1xi1> to vector<16x128xi1>
    %347 = arith.select %346, %337, %290 : vector<16x128xi1>, vector<16x128xf32>
    %cst_109 = arith.constant 0.000000e+00 : f32
    %348 = vector.broadcast %cst_109 : f32 to vector<16x128xf32>
    %349 = vector.shape_cast %341 : vector<16x1xi1> to vector<16x1xi1>
    %350 = vector.broadcast %349 : vector<16x1xi1> to vector<16x128xi1>
    %351 = arith.select %350, %339, %348 : vector<16x128xi1>, vector<16x128xf32>
    %352 = arith.truncf %351 : vector<16x128xf32> to vector<16x128xbf16>
    %c0_110 = arith.constant 0 : index
    %353 = arith.index_cast %301 : i32 to index
    %c0_111 = arith.constant 0 : index
    %c0_112 = arith.constant 0 : index
    %354 = vector.load %arg7[%c0_110, %353, %c0_111, %c0_112] : memref<1x8x16x128xbf16, #tpu.memory_space<vmem>>, vector<1x1x16x128xbf16>
    %355 = vector.shape_cast %354 : vector<1x1x16x128xbf16> to vector<16x128xbf16>
    %356 = vector.shape_cast %352 : vector<16x128xbf16> to vector<1x1x16x128xbf16>
    tpu.vector_store %arg7[%c0_110, %353, %c0_111, %c0_112], %356 {strides = array<i32>} : memref<1x8x16x128xbf16, #tpu.memory_space<vmem>>, vector<1x1x16x128xbf16>,
    %c6_i32 = arith.constant 6 : i32
    %357 = arith.muli %10, %c6_i32 : i32
    %358 = arith.addi %357, %11 : i32
    %359 = arith.addi %8, %358 : i32
    %c0_113 = arith.constant 0 : index
    %c0_114 = arith.constant 0 : index
    %c0_115 = arith.constant 0 : index
    %360 = vector.load %arg6[%c0_113, %c0_114, %c0_115] : memref<1x128x512xbf16, #tpu.memory_space<vmem>>, vector<1x128x512xbf16>
    %361 = vector.shape_cast %360 : vector<1x128x512xbf16> to vector<128x512xbf16>
    %c0_116 = arith.constant 0 : index
    %362 = arith.index_cast %358 : i32 to index
    %c0_117 = arith.constant 0 : index
    %c0_118 = arith.constant 0 : index
    %363 = vector.load %arg3[%c0_116, %362, %c0_117, %c0_118] : memref<1x8x16x512xbf16, #tpu.memory_space<vmem>>, vector<1x1x16x512xbf16>
    %364 = vector.shape_cast %363 : vector<1x1x16x512xbf16> to vector<16x512xbf16>
    %365 = arith.extf %364 : vector<16x512xbf16> to vector<16x512xf32>
    %c0_119 = arith.constant 0 : index
    %c0_120 = arith.constant 0 : index
    %c0_121 = arith.constant 0 : index
    %366 = vector.load %arg5[%c0_119, %c0_120, %c0_121] : memref<1x16x512xf32, #tpu.memory_space<vmem>>, vector<1x16x512xf32>
    %367 = vector.shape_cast %366 : vector<1x16x512xf32> to vector<16x512xf32>
    %368 = arith.addf %365, %367 : vector<16x512xf32>
    %369 = arith.truncf %344 : vector<16x128xf32> to vector<16x128xbf16>
    %cst_122 = arith.constant dense<0.000000e+00> : vector<16x512xf32>
    %370 = tpu.matmul %369, %361, %cst_122 {dimension_numbers = #tpu.dot_dimension_numbers<[1], [0], [0], [1], [0, 0, 1, 1], [], []>} : vector<16x128xbf16>, vector<128x512xbf16>, vector<16x512xf32> -> vector<16x512xf32>
    %371 = arith.addf %368, %370 : vector<16x512xf32>
    %372 = vector.extract_strided_slice %371 {offsets = [0, 0], sizes = [16, 128], strides = [1, 1]} : vector<16x512xf32> to vector<16x128xf32>
    %373 = arith.negf %372 : vector<16x128xf32>
    %374 = math.exp %373 : vector<16x128xf32>
    %cst_123 = arith.constant 1.000000e+00 : f32
    %375 = vector.broadcast %cst_123 : f32 to vector<16x128xf32>
    %376 = arith.addf %375, %374 : vector<16x128xf32>
    %377 = arith.divf %375, %376 : vector<16x128xf32>
    %378 = vector.extract_strided_slice %371 {offsets = [0, 128], sizes = [16, 128], strides = [1, 1]} : vector<16x512xf32> to vector<16x128xf32>
    %379 = arith.negf %378 : vector<16x128xf32>
    %380 = math.exp %379 : vector<16x128xf32>
    %cst_124 = arith.constant 1.000000e+00 : f32
    %381 = vector.broadcast %cst_124 : f32 to vector<16x128xf32>
    %382 = arith.addf %381, %380 : vector<16x128xf32>
    %383 = arith.divf %381, %382 : vector<16x128xf32>
    %384 = vector.extract_strided_slice %371 {offsets = [0, 256], sizes = [16, 128], strides = [1, 1]} : vector<16x512xf32> to vector<16x128xf32>
    %385 = math.tanh %384 : vector<16x128xf32>
    %386 = vector.extract_strided_slice %371 {offsets = [0, 384], sizes = [16, 128], strides = [1, 1]} : vector<16x512xf32> to vector<16x128xf32>
    %387 = arith.negf %386 : vector<16x128xf32>
    %388 = math.exp %387 : vector<16x128xf32>
    %cst_125 = arith.constant 1.000000e+00 : f32
    %389 = vector.broadcast %cst_125 : f32 to vector<16x128xf32>
    %390 = arith.addf %389, %388 : vector<16x128xf32>
    %391 = arith.divf %389, %390 : vector<16x128xf32>
    %392 = arith.mulf %383, %347 : vector<16x128xf32>
    %393 = arith.mulf %377, %385 : vector<16x128xf32>
    %394 = arith.addf %392, %393 : vector<16x128xf32>
    %395 = math.tanh %394 : vector<16x128xf32>
    %396 = arith.mulf %391, %395 : vector<16x128xf32>
    %397 = vector.broadcast %359 : i32 to vector<16x1xi32>
    %398 = arith.cmpi slt, %397, %12 : vector<16x1xi32>
    %399 = vector.shape_cast %398 : vector<16x1xi1> to vector<16x1xi1>
    %400 = vector.broadcast %399 : vector<16x1xi1> to vector<16x128xi1>
    %401 = arith.select %400, %396, %344 : vector<16x128xi1>, vector<16x128xf32>
    %402 = vector.shape_cast %398 : vector<16x1xi1> to vector<16x1xi1>
    %403 = vector.broadcast %402 : vector<16x1xi1> to vector<16x128xi1>
    %404 = arith.select %403, %394, %347 : vector<16x128xi1>, vector<16x128xf32>
    %cst_126 = arith.constant 0.000000e+00 : f32
    %405 = vector.broadcast %cst_126 : f32 to vector<16x128xf32>
    %406 = vector.shape_cast %398 : vector<16x1xi1> to vector<16x1xi1>
    %407 = vector.broadcast %406 : vector<16x1xi1> to vector<16x128xi1>
    %408 = arith.select %407, %396, %405 : vector<16x128xi1>, vector<16x128xf32>
    %409 = arith.truncf %408 : vector<16x128xf32> to vector<16x128xbf16>
    %c0_127 = arith.constant 0 : index
    %410 = arith.index_cast %358 : i32 to index
    %c0_128 = arith.constant 0 : index
    %c0_129 = arith.constant 0 : index
    %411 = vector.load %arg7[%c0_127, %410, %c0_128, %c0_129] : memref<1x8x16x128xbf16, #tpu.memory_space<vmem>>, vector<1x1x16x128xbf16>
    %412 = vector.shape_cast %411 : vector<1x1x16x128xbf16> to vector<16x128xbf16>
    %413 = vector.shape_cast %409 : vector<16x128xbf16> to vector<1x1x16x128xbf16>
    tpu.vector_store %arg7[%c0_127, %410, %c0_128, %c0_129], %413 {strides = array<i32>} : memref<1x8x16x128xbf16, #tpu.memory_space<vmem>>, vector<1x1x16x128xbf16>,
    %c7_i32_130 = arith.constant 7 : i32
    %414 = arith.muli %10, %c7_i32_130 : i32
    %415 = arith.addi %414, %11 : i32
    %416 = arith.addi %8, %415 : i32
    %c0_131 = arith.constant 0 : index
    %c0_132 = arith.constant 0 : index
    %c0_133 = arith.constant 0 : index
    %417 = vector.load %arg6[%c0_131, %c0_132, %c0_133] : memref<1x128x512xbf16, #tpu.memory_space<vmem>>, vector<1x128x512xbf16>
    %418 = vector.shape_cast %417 : vector<1x128x512xbf16> to vector<128x512xbf16>
    %c0_134 = arith.constant 0 : index
    %419 = arith.index_cast %415 : i32 to index
    %c0_135 = arith.constant 0 : index
    %c0_136 = arith.constant 0 : index
    %420 = vector.load %arg3[%c0_134, %419, %c0_135, %c0_136] : memref<1x8x16x512xbf16, #tpu.memory_space<vmem>>, vector<1x1x16x512xbf16>
    %421 = vector.shape_cast %420 : vector<1x1x16x512xbf16> to vector<16x512xbf16>
    %422 = arith.extf %421 : vector<16x512xbf16> to vector<16x512xf32>
    %c0_137 = arith.constant 0 : index
    %c0_138 = arith.constant 0 : index
    %c0_139 = arith.constant 0 : index
    %423 = vector.load %arg5[%c0_137, %c0_138, %c0_139] : memref<1x16x512xf32, #tpu.memory_space<vmem>>, vector<1x16x512xf32>
    %424 = vector.shape_cast %423 : vector<1x16x512xf32> to vector<16x512xf32>
    %425 = arith.addf %422, %424 : vector<16x512xf32>
    %426 = arith.truncf %401 : vector<16x128xf32> to vector<16x128xbf16>
    %cst_140 = arith.constant dense<0.000000e+00> : vector<16x512xf32>
    %427 = tpu.matmul %426, %418, %cst_140 {dimension_numbers = #tpu.dot_dimension_numbers<[1], [0], [0], [1], [0, 0, 1, 1], [], []>} : vector<16x128xbf16>, vector<128x512xbf16>, vector<16x512xf32> -> vector<16x512xf32>
    %428 = arith.addf %425, %427 : vector<16x512xf32>
    %429 = vector.extract_strided_slice %428 {offsets = [0, 0], sizes = [16, 128], strides = [1, 1]} : vector<16x512xf32> to vector<16x128xf32>
    %430 = arith.negf %429 : vector<16x128xf32>
    %431 = math.exp %430 : vector<16x128xf32>
    %cst_141 = arith.constant 1.000000e+00 : f32
    %432 = vector.broadcast %cst_141 : f32 to vector<16x128xf32>
    %433 = arith.addf %432, %431 : vector<16x128xf32>
    %434 = arith.divf %432, %433 : vector<16x128xf32>
    %435 = vector.extract_strided_slice %428 {offsets = [0, 128], sizes = [16, 128], strides = [1, 1]} : vector<16x512xf32> to vector<16x128xf32>
    %436 = arith.negf %435 : vector<16x128xf32>
    %437 = math.exp %436 : vector<16x128xf32>
    %cst_142 = arith.constant 1.000000e+00 : f32
    %438 = vector.broadcast %cst_142 : f32 to vector<16x128xf32>
    %439 = arith.addf %438, %437 : vector<16x128xf32>
    %440 = arith.divf %438, %439 : vector<16x128xf32>
    %441 = vector.extract_strided_slice %428 {offsets = [0, 256], sizes = [16, 128], strides = [1, 1]} : vector<16x512xf32> to vector<16x128xf32>
    %442 = math.tanh %441 : vector<16x128xf32>
    %443 = vector.extract_strided_slice %428 {offsets = [0, 384], sizes = [16, 128], strides = [1, 1]} : vector<16x512xf32> to vector<16x128xf32>
    %444 = arith.negf %443 : vector<16x128xf32>
    %445 = math.exp %444 : vector<16x128xf32>
    %cst_143 = arith.constant 1.000000e+00 : f32
    %446 = vector.broadcast %cst_143 : f32 to vector<16x128xf32>
    %447 = arith.addf %446, %445 : vector<16x128xf32>
    %448 = arith.divf %446, %447 : vector<16x128xf32>
    %449 = arith.mulf %440, %404 : vector<16x128xf32>
    %450 = arith.mulf %434, %442 : vector<16x128xf32>
    %451 = arith.addf %449, %450 : vector<16x128xf32>
    %452 = math.tanh %451 : vector<16x128xf32>
    %453 = arith.mulf %448, %452 : vector<16x128xf32>
    %454 = vector.broadcast %416 : i32 to vector<16x1xi32>
    %455 = arith.cmpi slt, %454, %12 : vector<16x1xi32>
    %456 = vector.shape_cast %455 : vector<16x1xi1> to vector<16x1xi1>
    %457 = vector.broadcast %456 : vector<16x1xi1> to vector<16x128xi1>
    %458 = arith.select %457, %453, %401 : vector<16x128xi1>, vector<16x128xf32>
    %459 = vector.shape_cast %455 : vector<16x1xi1> to vector<16x1xi1>
    %460 = vector.broadcast %459 : vector<16x1xi1> to vector<16x128xi1>
    %461 = arith.select %460, %451, %404 : vector<16x128xi1>, vector<16x128xf32>
    %cst_144 = arith.constant 0.000000e+00 : f32
    %462 = vector.broadcast %cst_144 : f32 to vector<16x128xf32>
    %463 = vector.shape_cast %455 : vector<16x1xi1> to vector<16x1xi1>
    %464 = vector.broadcast %463 : vector<16x1xi1> to vector<16x128xi1>
    %465 = arith.select %464, %453, %462 : vector<16x128xi1>, vector<16x128xf32>
    %466 = arith.truncf %465 : vector<16x128xf32> to vector<16x128xbf16>
    %c0_145 = arith.constant 0 : index
    %467 = arith.index_cast %415 : i32 to index
    %c0_146 = arith.constant 0 : index
    %c0_147 = arith.constant 0 : index
    %468 = vector.load %arg7[%c0_145, %467, %c0_146, %c0_147] : memref<1x8x16x128xbf16, #tpu.memory_space<vmem>>, vector<1x1x16x128xbf16>
    %469 = vector.shape_cast %468 : vector<1x1x16x128xbf16> to vector<16x128xbf16>
    %470 = vector.shape_cast %466 : vector<16x128xbf16> to vector<1x1x16x128xbf16>
    tpu.vector_store %arg7[%c0_145, %467, %c0_146, %c0_147], %470 {strides = array<i32>} : memref<1x8x16x128xbf16, #tpu.memory_space<vmem>>, vector<1x1x16x128xbf16>,
    %c8_i32_148 = arith.constant 8 : i32
    %c0_149 = arith.constant 0 : index
    %c0_150 = arith.constant 0 : index
    %471 = vector.load %arg10[%c0_149, %c0_150] : memref<16x128xf32, #tpu.memory_space<vmem>>, vector<16x128xf32>
    tpu.vector_store %arg10[%c0_149, %c0_150], %458 {strides = array<i32>} : memref<16x128xf32, #tpu.memory_space<vmem>>, vector<16x128xf32>,
    %c0_151 = arith.constant 0 : index
    %c0_152 = arith.constant 0 : index
    %472 = vector.load %arg11[%c0_151, %c0_152] : memref<16x128xf32, #tpu.memory_space<vmem>>, vector<16x128xf32>
    tpu.vector_store %arg11[%c0_151, %c0_152], %461 {strides = array<i32>} : memref<16x128xf32, #tpu.memory_space<vmem>>, vector<16x128xf32>,
    %c0_i32_153 = arith.constant 0 : i32
    %473 = arith.cmpi eq, %arg2, %c0_i32_153 : i32
    %474 = arith.extui %473 : i1 to i32
    %c0_i32_154 = arith.constant 0 : i32
    %475 = arith.cmpi ne, %474, %c0_i32_154 : i32
    scf.if %475 {
      %c0_155 = arith.constant 0 : index
      %c0_156 = arith.constant 0 : index
      %c0_157 = arith.constant 0 : index
      %476 = vector.load %arg8[%c0_155, %c0_156, %c0_157] : memref<1x16x128xf32, #tpu.memory_space<vmem>>, vector<1x16x128xf32>
      %477 = vector.shape_cast %476 : vector<1x16x128xf32> to vector<16x128xf32>
      %478 = vector.shape_cast %458 : vector<16x128xf32> to vector<1x16x128xf32>
      tpu.vector_store %arg8[%c0_155, %c0_156, %c0_157], %478 {strides = array<i32>} : memref<1x16x128xf32, #tpu.memory_space<vmem>>, vector<1x16x128xf32>,
      %c0_158 = arith.constant 0 : index
      %c0_159 = arith.constant 0 : index
      %c0_160 = arith.constant 0 : index
      %479 = vector.load %arg9[%c0_158, %c0_159, %c0_160] : memref<1x16x128xf32, #tpu.memory_space<vmem>>, vector<1x16x128xf32>
      %480 = vector.shape_cast %479 : vector<1x16x128xf32> to vector<16x128xf32>
      %481 = vector.shape_cast %461 : vector<16x128xf32> to vector<1x16x128xf32>
      tpu.vector_store %arg9[%c0_158, %c0_159, %c0_160], %481 {strides = array<i32>} : memref<1x16x128xf32, #tpu.memory_space<vmem>>, vector<1x16x128xf32>,
    } else {
    }
    return
  }
  func.func @transform_0(%arg0: i32, %arg1: i32, %arg2: i32) -> (i32, i32, i32, i32) {
    %c2_i32 = arith.constant 2 : i32
    %0 = arith.muli %c2_i32, %arg0 : i32
    %c1_i32 = arith.constant 1 : i32
    %1 = arith.subi %c1_i32, %0 : i32
    %2 = arith.muli %1, %arg2 : i32
    %c0_i32 = arith.constant 0 : i32
    %3 = arith.muli %arg0, %c0_i32 : i32
    %4 = arith.addi %2, %3 : i32
    %c0_i32_0 = arith.constant 0 : i32
    %c0_i32_1 = arith.constant 0 : i32
    return %arg0, %4, %arg1, %c0_i32_0 : i32, i32, i32, i32
  }
  func.func @transform_1(%arg0: i32, %arg1: i32, %arg2: i32) -> (i32, i32) {
    %c0_i32 = arith.constant 0 : i32
    %c0_i32_0 = arith.constant 0 : i32
    return %arg1, %c0_i32 : i32, i32
  }
  func.func @transform_2(%arg0: i32, %arg1: i32, %arg2: i32) -> (i32, i32, i32) {
    %c0_i32 = arith.constant 0 : i32
    %c0_i32_0 = arith.constant 0 : i32
    return %arg0, %arg1, %c0_i32 : i32, i32, i32
  }
  func.func @transform_3(%arg0: i32, %arg1: i32, %arg2: i32) -> (i32, i32, i32) {
    %c0_i32 = arith.constant 0 : i32
    %c0_i32_0 = arith.constant 0 : i32
    %c0_i32_1 = arith.constant 0 : i32
    return %arg0, %c0_i32, %c0_i32_0 : i32, i32, i32
  }
  func.func @transform_4(%arg0: i32, %arg1: i32, %arg2: i32) -> (i32, i32, i32, i32) {
    %c2_i32 = arith.constant 2 : i32
    %0 = arith.muli %c2_i32, %arg0 : i32
    %c1_i32 = arith.constant 1 : i32
    %1 = arith.subi %c1_i32, %0 : i32
    %2 = arith.muli %1, %arg2 : i32
    %c0_i32 = arith.constant 0 : i32
    %3 = arith.muli %arg0, %c0_i32 : i32
    %4 = arith.addi %2, %3 : i32
    %c0_i32_0 = arith.constant 0 : i32
    %c0_i32_1 = arith.constant 0 : i32
    return %arg0, %4, %arg1, %c0_i32_0 : i32, i32, i32, i32
  }
  func.func @transform_5(%arg0: i32, %arg1: i32, %arg2: i32) -> (i32, i32, i32) {
    %c0_i32 = arith.constant 0 : i32
    %c0_i32_0 = arith.constant 0 : i32
    return %arg0, %arg1, %c0_i32 : i32, i32, i32
  }
  func.func @transform_6(%arg0: i32, %arg1: i32, %arg2: i32) -> (i32, i32, i32) {
    %c0_i32 = arith.constant 0 : i32
    %c0_i32_0 = arith.constant 0 : i32
    return %arg0, %arg1, %c0_i32 : i32, i32, i32
  }
}

module attributes {stable_mosaic.version = 11 : i64} {
  func.func @_bilstm_layer_kernel(%arg0: i32, %arg1: i32, %arg2: i32, %arg3: memref<1x8x16x512xbf16, #tpu.memory_space<vmem>>, %arg4: memref<16x1xi32, #tpu.memory_space<vmem>>, %arg5: memref<1x16x512xf32, #tpu.memory_space<vmem>>, %arg6: memref<1x128x512xbf16, #tpu.memory_space<vmem>>, %arg7: memref<1x8x16x128xf32, #tpu.memory_space<vmem>>, %arg8: memref<1x16x128xf32, #tpu.memory_space<vmem>>, %arg9: memref<1x16x128xf32, #tpu.memory_space<vmem>>, %arg10: memref<16x128xf32, #tpu.memory_space<vmem>>, %arg11: memref<16x128xf32, #tpu.memory_space<vmem>>) attributes {dimension_semantics = [#tpu.dimension_semantics<parallel>, #tpu.dimension_semantics<parallel>, #tpu.dimension_semantics<arbitrary>], iteration_bounds = array<i64: 2, 1, 1>, scalar_prefetch = 0 : i64, scratch_operands = 2 : i64, tpu.core_type = #tpu.core_type<tc>, window_params = [{transform_indices = @transform_0, window_bounds = array<i64: 1, 8, 16, 512>}, {transform_indices = @transform_1, window_bounds = array<i64: 16, 1>}, {transform_indices = @transform_2, window_bounds = array<i64: 1, 16, 512>}, {transform_indices = @transform_3, window_bounds = array<i64: 1, 128, 512>}, {transform_indices = @transform_4, window_bounds = array<i64: 1, 8, 16, 128>}, {transform_indices = @transform_5, window_bounds = array<i64: 1, 16, 128>}, {transform_indices = @transform_6, window_bounds = array<i64: 1, 16, 128>}]} {
    %c0_i32 = arith.constant 0 : i32
    %0 = arith.cmpi eq, %arg2, %c0_i32 : i32
    %1 = arith.extui %0 : i1 to i32
    %c0_i32_0 = arith.constant 0 : i32
    %2 = arith.cmpi ne, %1, %c0_i32_0 : i32
    scf.if %2 {
      %cst_155 = arith.constant 0.000000e+00 : f32
      %468 = vector.broadcast %cst_155 : f32 to vector<16x128xf32>
      %c0_156 = arith.constant 0 : index
      %c0_157 = arith.constant 0 : index
      %469 = vector.load %arg10[%c0_156, %c0_157] : memref<16x128xf32, #tpu.memory_space<vmem>>, vector<16x128xf32>
      tpu.vector_store %arg10[%c0_156, %c0_157], %468 {strides = array<i32>} : memref<16x128xf32, #tpu.memory_space<vmem>>, vector<16x128xf32>,
      %cst_158 = arith.constant 0.000000e+00 : f32
      %470 = vector.broadcast %cst_158 : f32 to vector<16x128xf32>
      %c0_159 = arith.constant 0 : index
      %c0_160 = arith.constant 0 : index
      %471 = vector.load %arg11[%c0_159, %c0_160] : memref<16x128xf32, #tpu.memory_space<vmem>>, vector<16x128xf32>
      tpu.vector_store %arg11[%c0_159, %c0_160], %470 {strides = array<i32>} : memref<16x128xf32, #tpu.memory_space<vmem>>, vector<16x128xf32>,
    } else {
    }
    %c2_i32 = arith.constant 2 : i32
    %3 = arith.muli %c2_i32, %arg0 : i32
    %c1_i32 = arith.constant 1 : i32
    %4 = arith.subi %c1_i32, %3 : i32
    %5 = arith.muli %4, %arg2 : i32
    %c0_i32_1 = arith.constant 0 : i32
    %6 = arith.muli %arg0, %c0_i32_1 : i32
    %7 = arith.addi %5, %6 : i32
    %c8_i32 = arith.constant 8 : i32
    %8 = arith.muli %7, %c8_i32 : i32
    %c2_i32_2 = arith.constant 2 : i32
    %9 = arith.muli %c2_i32_2, %arg0 : i32
    %c1_i32_3 = arith.constant 1 : i32
    %10 = arith.subi %c1_i32_3, %9 : i32
    %c7_i32 = arith.constant 7 : i32
    %11 = arith.muli %arg0, %c7_i32 : i32
    %c0 = arith.constant 0 : index
    %c0_4 = arith.constant 0 : index
    %12 = vector.load %arg4[%c0, %c0_4] : memref<16x1xi32, #tpu.memory_space<vmem>>, vector<16x1xi32>
    %c0_5 = arith.constant 0 : index
    %c0_6 = arith.constant 0 : index
    %13 = vector.load %arg10[%c0_5, %c0_6] : memref<16x128xf32, #tpu.memory_space<vmem>>, vector<16x128xf32>
    %c0_7 = arith.constant 0 : index
    %c0_8 = arith.constant 0 : index
    %14 = vector.load %arg11[%c0_7, %c0_8] : memref<16x128xf32, #tpu.memory_space<vmem>>, vector<16x128xf32>
    %c0_i32_9 = arith.constant 0 : i32
    %15 = arith.muli %10, %c0_i32_9 : i32
    %16 = arith.addi %15, %11 : i32
    %17 = arith.addi %8, %16 : i32
    %c0_10 = arith.constant 0 : index
    %c0_11 = arith.constant 0 : index
    %c0_12 = arith.constant 0 : index
    %18 = vector.load %arg6[%c0_10, %c0_11, %c0_12] : memref<1x128x512xbf16, #tpu.memory_space<vmem>>, vector<1x128x512xbf16>
    %19 = vector.shape_cast %18 : vector<1x128x512xbf16> to vector<128x512xbf16>
    %c0_13 = arith.constant 0 : index
    %20 = arith.index_cast %16 : i32 to index
    %c0_14 = arith.constant 0 : index
    %c0_15 = arith.constant 0 : index
    %21 = vector.load %arg3[%c0_13, %20, %c0_14, %c0_15] : memref<1x8x16x512xbf16, #tpu.memory_space<vmem>>, vector<1x1x16x512xbf16>
    %22 = vector.shape_cast %21 : vector<1x1x16x512xbf16> to vector<16x512xbf16>
    %23 = arith.extf %22 : vector<16x512xbf16> to vector<16x512xf32>
    %c0_16 = arith.constant 0 : index
    %c0_17 = arith.constant 0 : index
    %c0_18 = arith.constant 0 : index
    %24 = vector.load %arg5[%c0_16, %c0_17, %c0_18] : memref<1x16x512xf32, #tpu.memory_space<vmem>>, vector<1x16x512xf32>
    %25 = vector.shape_cast %24 : vector<1x16x512xf32> to vector<16x512xf32>
    %26 = arith.addf %23, %25 : vector<16x512xf32>
    %27 = arith.truncf %13 : vector<16x128xf32> to vector<16x128xbf16>
    %cst = arith.constant dense<0.000000e+00> : vector<16x512xf32>
    %28 = tpu.matmul %27, %19, %cst {dimension_numbers = #tpu.dot_dimension_numbers<[1], [0], [0], [1], [0, 0, 1, 1], [], []>} : vector<16x128xbf16>, vector<128x512xbf16>, vector<16x512xf32> -> vector<16x512xf32>
    %29 = arith.addf %26, %28 : vector<16x512xf32>
    %30 = vector.extract_strided_slice %29 {offsets = [0, 0], sizes = [16, 128], strides = [1, 1]} : vector<16x512xf32> to vector<16x128xf32>
    %31 = arith.negf %30 : vector<16x128xf32>
    %32 = math.exp %31 : vector<16x128xf32>
    %cst_19 = arith.constant 1.000000e+00 : f32
    %33 = vector.broadcast %cst_19 : f32 to vector<16x128xf32>
    %34 = arith.addf %33, %32 : vector<16x128xf32>
    %35 = arith.divf %33, %34 : vector<16x128xf32>
    %36 = vector.extract_strided_slice %29 {offsets = [0, 128], sizes = [16, 128], strides = [1, 1]} : vector<16x512xf32> to vector<16x128xf32>
    %37 = arith.negf %36 : vector<16x128xf32>
    %38 = math.exp %37 : vector<16x128xf32>
    %cst_20 = arith.constant 1.000000e+00 : f32
    %39 = vector.broadcast %cst_20 : f32 to vector<16x128xf32>
    %40 = arith.addf %39, %38 : vector<16x128xf32>
    %41 = arith.divf %39, %40 : vector<16x128xf32>
    %42 = vector.extract_strided_slice %29 {offsets = [0, 256], sizes = [16, 128], strides = [1, 1]} : vector<16x512xf32> to vector<16x128xf32>
    %43 = math.tanh %42 : vector<16x128xf32>
    %44 = vector.extract_strided_slice %29 {offsets = [0, 384], sizes = [16, 128], strides = [1, 1]} : vector<16x512xf32> to vector<16x128xf32>
    %45 = arith.negf %44 : vector<16x128xf32>
    %46 = math.exp %45 : vector<16x128xf32>
    %cst_21 = arith.constant 1.000000e+00 : f32
    %47 = vector.broadcast %cst_21 : f32 to vector<16x128xf32>
    %48 = arith.addf %47, %46 : vector<16x128xf32>
    %49 = arith.divf %47, %48 : vector<16x128xf32>
    %50 = arith.mulf %41, %14 : vector<16x128xf32>
    %51 = arith.mulf %35, %43 : vector<16x128xf32>
    %52 = arith.addf %50, %51 : vector<16x128xf32>
    %53 = math.tanh %52 : vector<16x128xf32>
    %54 = arith.mulf %49, %53 : vector<16x128xf32>
    %55 = vector.broadcast %17 : i32 to vector<16x1xi32>
    %56 = arith.cmpi slt, %55, %12 : vector<16x1xi32>
    %57 = vector.shape_cast %56 : vector<16x1xi1> to vector<16x1xi1>
    %58 = vector.broadcast %57 : vector<16x1xi1> to vector<16x128xi1>
    %59 = arith.select %58, %54, %13 : vector<16x128xi1>, vector<16x128xf32>
    %60 = vector.shape_cast %56 : vector<16x1xi1> to vector<16x1xi1>
    %61 = vector.broadcast %60 : vector<16x1xi1> to vector<16x128xi1>
    %62 = arith.select %61, %52, %14 : vector<16x128xi1>, vector<16x128xf32>
    %cst_22 = arith.constant 0.000000e+00 : f32
    %63 = vector.broadcast %cst_22 : f32 to vector<16x128xf32>
    %64 = vector.shape_cast %56 : vector<16x1xi1> to vector<16x1xi1>
    %65 = vector.broadcast %64 : vector<16x1xi1> to vector<16x128xi1>
    %66 = arith.select %65, %54, %63 : vector<16x128xi1>, vector<16x128xf32>
    %c0_23 = arith.constant 0 : index
    %67 = arith.index_cast %16 : i32 to index
    %c0_24 = arith.constant 0 : index
    %c0_25 = arith.constant 0 : index
    %68 = vector.load %arg7[%c0_23, %67, %c0_24, %c0_25] : memref<1x8x16x128xf32, #tpu.memory_space<vmem>>, vector<1x1x16x128xf32>
    %69 = vector.shape_cast %68 : vector<1x1x16x128xf32> to vector<16x128xf32>
    %70 = vector.shape_cast %66 : vector<16x128xf32> to vector<1x1x16x128xf32>
    tpu.vector_store %arg7[%c0_23, %67, %c0_24, %c0_25], %70 {strides = array<i32>} : memref<1x8x16x128xf32, #tpu.memory_space<vmem>>, vector<1x1x16x128xf32>,
    %c1_i32_26 = arith.constant 1 : i32
    %71 = arith.muli %10, %c1_i32_26 : i32
    %72 = arith.addi %71, %11 : i32
    %73 = arith.addi %8, %72 : i32
    %c0_27 = arith.constant 0 : index
    %c0_28 = arith.constant 0 : index
    %c0_29 = arith.constant 0 : index
    %74 = vector.load %arg6[%c0_27, %c0_28, %c0_29] : memref<1x128x512xbf16, #tpu.memory_space<vmem>>, vector<1x128x512xbf16>
    %75 = vector.shape_cast %74 : vector<1x128x512xbf16> to vector<128x512xbf16>
    %c0_30 = arith.constant 0 : index
    %76 = arith.index_cast %72 : i32 to index
    %c0_31 = arith.constant 0 : index
    %c0_32 = arith.constant 0 : index
    %77 = vector.load %arg3[%c0_30, %76, %c0_31, %c0_32] : memref<1x8x16x512xbf16, #tpu.memory_space<vmem>>, vector<1x1x16x512xbf16>
    %78 = vector.shape_cast %77 : vector<1x1x16x512xbf16> to vector<16x512xbf16>
    %79 = arith.extf %78 : vector<16x512xbf16> to vector<16x512xf32>
    %c0_33 = arith.constant 0 : index
    %c0_34 = arith.constant 0 : index
    %c0_35 = arith.constant 0 : index
    %80 = vector.load %arg5[%c0_33, %c0_34, %c0_35] : memref<1x16x512xf32, #tpu.memory_space<vmem>>, vector<1x16x512xf32>
    %81 = vector.shape_cast %80 : vector<1x16x512xf32> to vector<16x512xf32>
    %82 = arith.addf %79, %81 : vector<16x512xf32>
    %83 = arith.truncf %59 : vector<16x128xf32> to vector<16x128xbf16>
    %cst_36 = arith.constant dense<0.000000e+00> : vector<16x512xf32>
    %84 = tpu.matmul %83, %75, %cst_36 {dimension_numbers = #tpu.dot_dimension_numbers<[1], [0], [0], [1], [0, 0, 1, 1], [], []>} : vector<16x128xbf16>, vector<128x512xbf16>, vector<16x512xf32> -> vector<16x512xf32>
    %85 = arith.addf %82, %84 : vector<16x512xf32>
    %86 = vector.extract_strided_slice %85 {offsets = [0, 0], sizes = [16, 128], strides = [1, 1]} : vector<16x512xf32> to vector<16x128xf32>
    %87 = arith.negf %86 : vector<16x128xf32>
    %88 = math.exp %87 : vector<16x128xf32>
    %cst_37 = arith.constant 1.000000e+00 : f32
    %89 = vector.broadcast %cst_37 : f32 to vector<16x128xf32>
    %90 = arith.addf %89, %88 : vector<16x128xf32>
    %91 = arith.divf %89, %90 : vector<16x128xf32>
    %92 = vector.extract_strided_slice %85 {offsets = [0, 128], sizes = [16, 128], strides = [1, 1]} : vector<16x512xf32> to vector<16x128xf32>
    %93 = arith.negf %92 : vector<16x128xf32>
    %94 = math.exp %93 : vector<16x128xf32>
    %cst_38 = arith.constant 1.000000e+00 : f32
    %95 = vector.broadcast %cst_38 : f32 to vector<16x128xf32>
    %96 = arith.addf %95, %94 : vector<16x128xf32>
    %97 = arith.divf %95, %96 : vector<16x128xf32>
    %98 = vector.extract_strided_slice %85 {offsets = [0, 256], sizes = [16, 128], strides = [1, 1]} : vector<16x512xf32> to vector<16x128xf32>
    %99 = math.tanh %98 : vector<16x128xf32>
    %100 = vector.extract_strided_slice %85 {offsets = [0, 384], sizes = [16, 128], strides = [1, 1]} : vector<16x512xf32> to vector<16x128xf32>
    %101 = arith.negf %100 : vector<16x128xf32>
    %102 = math.exp %101 : vector<16x128xf32>
    %cst_39 = arith.constant 1.000000e+00 : f32
    %103 = vector.broadcast %cst_39 : f32 to vector<16x128xf32>
    %104 = arith.addf %103, %102 : vector<16x128xf32>
    %105 = arith.divf %103, %104 : vector<16x128xf32>
    %106 = arith.mulf %97, %62 : vector<16x128xf32>
    %107 = arith.mulf %91, %99 : vector<16x128xf32>
    %108 = arith.addf %106, %107 : vector<16x128xf32>
    %109 = math.tanh %108 : vector<16x128xf32>
    %110 = arith.mulf %105, %109 : vector<16x128xf32>
    %111 = vector.broadcast %73 : i32 to vector<16x1xi32>
    %112 = arith.cmpi slt, %111, %12 : vector<16x1xi32>
    %113 = vector.shape_cast %112 : vector<16x1xi1> to vector<16x1xi1>
    %114 = vector.broadcast %113 : vector<16x1xi1> to vector<16x128xi1>
    %115 = arith.select %114, %110, %59 : vector<16x128xi1>, vector<16x128xf32>
    %116 = vector.shape_cast %112 : vector<16x1xi1> to vector<16x1xi1>
    %117 = vector.broadcast %116 : vector<16x1xi1> to vector<16x128xi1>
    %118 = arith.select %117, %108, %62 : vector<16x128xi1>, vector<16x128xf32>
    %cst_40 = arith.constant 0.000000e+00 : f32
    %119 = vector.broadcast %cst_40 : f32 to vector<16x128xf32>
    %120 = vector.shape_cast %112 : vector<16x1xi1> to vector<16x1xi1>
    %121 = vector.broadcast %120 : vector<16x1xi1> to vector<16x128xi1>
    %122 = arith.select %121, %110, %119 : vector<16x128xi1>, vector<16x128xf32>
    %c0_41 = arith.constant 0 : index
    %123 = arith.index_cast %72 : i32 to index
    %c0_42 = arith.constant 0 : index
    %c0_43 = arith.constant 0 : index
    %124 = vector.load %arg7[%c0_41, %123, %c0_42, %c0_43] : memref<1x8x16x128xf32, #tpu.memory_space<vmem>>, vector<1x1x16x128xf32>
    %125 = vector.shape_cast %124 : vector<1x1x16x128xf32> to vector<16x128xf32>
    %126 = vector.shape_cast %122 : vector<16x128xf32> to vector<1x1x16x128xf32>
    tpu.vector_store %arg7[%c0_41, %123, %c0_42, %c0_43], %126 {strides = array<i32>} : memref<1x8x16x128xf32, #tpu.memory_space<vmem>>, vector<1x1x16x128xf32>,
    %c2_i32_44 = arith.constant 2 : i32
    %127 = arith.muli %10, %c2_i32_44 : i32
    %128 = arith.addi %127, %11 : i32
    %129 = arith.addi %8, %128 : i32
    %c0_45 = arith.constant 0 : index
    %c0_46 = arith.constant 0 : index
    %c0_47 = arith.constant 0 : index
    %130 = vector.load %arg6[%c0_45, %c0_46, %c0_47] : memref<1x128x512xbf16, #tpu.memory_space<vmem>>, vector<1x128x512xbf16>
    %131 = vector.shape_cast %130 : vector<1x128x512xbf16> to vector<128x512xbf16>
    %c0_48 = arith.constant 0 : index
    %132 = arith.index_cast %128 : i32 to index
    %c0_49 = arith.constant 0 : index
    %c0_50 = arith.constant 0 : index
    %133 = vector.load %arg3[%c0_48, %132, %c0_49, %c0_50] : memref<1x8x16x512xbf16, #tpu.memory_space<vmem>>, vector<1x1x16x512xbf16>
    %134 = vector.shape_cast %133 : vector<1x1x16x512xbf16> to vector<16x512xbf16>
    %135 = arith.extf %134 : vector<16x512xbf16> to vector<16x512xf32>
    %c0_51 = arith.constant 0 : index
    %c0_52 = arith.constant 0 : index
    %c0_53 = arith.constant 0 : index
    %136 = vector.load %arg5[%c0_51, %c0_52, %c0_53] : memref<1x16x512xf32, #tpu.memory_space<vmem>>, vector<1x16x512xf32>
    %137 = vector.shape_cast %136 : vector<1x16x512xf32> to vector<16x512xf32>
    %138 = arith.addf %135, %137 : vector<16x512xf32>
    %139 = arith.truncf %115 : vector<16x128xf32> to vector<16x128xbf16>
    %cst_54 = arith.constant dense<0.000000e+00> : vector<16x512xf32>
    %140 = tpu.matmul %139, %131, %cst_54 {dimension_numbers = #tpu.dot_dimension_numbers<[1], [0], [0], [1], [0, 0, 1, 1], [], []>} : vector<16x128xbf16>, vector<128x512xbf16>, vector<16x512xf32> -> vector<16x512xf32>
    %141 = arith.addf %138, %140 : vector<16x512xf32>
    %142 = vector.extract_strided_slice %141 {offsets = [0, 0], sizes = [16, 128], strides = [1, 1]} : vector<16x512xf32> to vector<16x128xf32>
    %143 = arith.negf %142 : vector<16x128xf32>
    %144 = math.exp %143 : vector<16x128xf32>
    %cst_55 = arith.constant 1.000000e+00 : f32
    %145 = vector.broadcast %cst_55 : f32 to vector<16x128xf32>
    %146 = arith.addf %145, %144 : vector<16x128xf32>
    %147 = arith.divf %145, %146 : vector<16x128xf32>
    %148 = vector.extract_strided_slice %141 {offsets = [0, 128], sizes = [16, 128], strides = [1, 1]} : vector<16x512xf32> to vector<16x128xf32>
    %149 = arith.negf %148 : vector<16x128xf32>
    %150 = math.exp %149 : vector<16x128xf32>
    %cst_56 = arith.constant 1.000000e+00 : f32
    %151 = vector.broadcast %cst_56 : f32 to vector<16x128xf32>
    %152 = arith.addf %151, %150 : vector<16x128xf32>
    %153 = arith.divf %151, %152 : vector<16x128xf32>
    %154 = vector.extract_strided_slice %141 {offsets = [0, 256], sizes = [16, 128], strides = [1, 1]} : vector<16x512xf32> to vector<16x128xf32>
    %155 = math.tanh %154 : vector<16x128xf32>
    %156 = vector.extract_strided_slice %141 {offsets = [0, 384], sizes = [16, 128], strides = [1, 1]} : vector<16x512xf32> to vector<16x128xf32>
    %157 = arith.negf %156 : vector<16x128xf32>
    %158 = math.exp %157 : vector<16x128xf32>
    %cst_57 = arith.constant 1.000000e+00 : f32
    %159 = vector.broadcast %cst_57 : f32 to vector<16x128xf32>
    %160 = arith.addf %159, %158 : vector<16x128xf32>
    %161 = arith.divf %159, %160 : vector<16x128xf32>
    %162 = arith.mulf %153, %118 : vector<16x128xf32>
    %163 = arith.mulf %147, %155 : vector<16x128xf32>
    %164 = arith.addf %162, %163 : vector<16x128xf32>
    %165 = math.tanh %164 : vector<16x128xf32>
    %166 = arith.mulf %161, %165 : vector<16x128xf32>
    %167 = vector.broadcast %129 : i32 to vector<16x1xi32>
    %168 = arith.cmpi slt, %167, %12 : vector<16x1xi32>
    %169 = vector.shape_cast %168 : vector<16x1xi1> to vector<16x1xi1>
    %170 = vector.broadcast %169 : vector<16x1xi1> to vector<16x128xi1>
    %171 = arith.select %170, %166, %115 : vector<16x128xi1>, vector<16x128xf32>
    %172 = vector.shape_cast %168 : vector<16x1xi1> to vector<16x1xi1>
    %173 = vector.broadcast %172 : vector<16x1xi1> to vector<16x128xi1>
    %174 = arith.select %173, %164, %118 : vector<16x128xi1>, vector<16x128xf32>
    %cst_58 = arith.constant 0.000000e+00 : f32
    %175 = vector.broadcast %cst_58 : f32 to vector<16x128xf32>
    %176 = vector.shape_cast %168 : vector<16x1xi1> to vector<16x1xi1>
    %177 = vector.broadcast %176 : vector<16x1xi1> to vector<16x128xi1>
    %178 = arith.select %177, %166, %175 : vector<16x128xi1>, vector<16x128xf32>
    %c0_59 = arith.constant 0 : index
    %179 = arith.index_cast %128 : i32 to index
    %c0_60 = arith.constant 0 : index
    %c0_61 = arith.constant 0 : index
    %180 = vector.load %arg7[%c0_59, %179, %c0_60, %c0_61] : memref<1x8x16x128xf32, #tpu.memory_space<vmem>>, vector<1x1x16x128xf32>
    %181 = vector.shape_cast %180 : vector<1x1x16x128xf32> to vector<16x128xf32>
    %182 = vector.shape_cast %178 : vector<16x128xf32> to vector<1x1x16x128xf32>
    tpu.vector_store %arg7[%c0_59, %179, %c0_60, %c0_61], %182 {strides = array<i32>} : memref<1x8x16x128xf32, #tpu.memory_space<vmem>>, vector<1x1x16x128xf32>,
    %c3_i32 = arith.constant 3 : i32
    %183 = arith.muli %10, %c3_i32 : i32
    %184 = arith.addi %183, %11 : i32
    %185 = arith.addi %8, %184 : i32
    %c0_62 = arith.constant 0 : index
    %c0_63 = arith.constant 0 : index
    %c0_64 = arith.constant 0 : index
    %186 = vector.load %arg6[%c0_62, %c0_63, %c0_64] : memref<1x128x512xbf16, #tpu.memory_space<vmem>>, vector<1x128x512xbf16>
    %187 = vector.shape_cast %186 : vector<1x128x512xbf16> to vector<128x512xbf16>
    %c0_65 = arith.constant 0 : index
    %188 = arith.index_cast %184 : i32 to index
    %c0_66 = arith.constant 0 : index
    %c0_67 = arith.constant 0 : index
    %189 = vector.load %arg3[%c0_65, %188, %c0_66, %c0_67] : memref<1x8x16x512xbf16, #tpu.memory_space<vmem>>, vector<1x1x16x512xbf16>
    %190 = vector.shape_cast %189 : vector<1x1x16x512xbf16> to vector<16x512xbf16>
    %191 = arith.extf %190 : vector<16x512xbf16> to vector<16x512xf32>
    %c0_68 = arith.constant 0 : index
    %c0_69 = arith.constant 0 : index
    %c0_70 = arith.constant 0 : index
    %192 = vector.load %arg5[%c0_68, %c0_69, %c0_70] : memref<1x16x512xf32, #tpu.memory_space<vmem>>, vector<1x16x512xf32>
    %193 = vector.shape_cast %192 : vector<1x16x512xf32> to vector<16x512xf32>
    %194 = arith.addf %191, %193 : vector<16x512xf32>
    %195 = arith.truncf %171 : vector<16x128xf32> to vector<16x128xbf16>
    %cst_71 = arith.constant dense<0.000000e+00> : vector<16x512xf32>
    %196 = tpu.matmul %195, %187, %cst_71 {dimension_numbers = #tpu.dot_dimension_numbers<[1], [0], [0], [1], [0, 0, 1, 1], [], []>} : vector<16x128xbf16>, vector<128x512xbf16>, vector<16x512xf32> -> vector<16x512xf32>
    %197 = arith.addf %194, %196 : vector<16x512xf32>
    %198 = vector.extract_strided_slice %197 {offsets = [0, 0], sizes = [16, 128], strides = [1, 1]} : vector<16x512xf32> to vector<16x128xf32>
    %199 = arith.negf %198 : vector<16x128xf32>
    %200 = math.exp %199 : vector<16x128xf32>
    %cst_72 = arith.constant 1.000000e+00 : f32
    %201 = vector.broadcast %cst_72 : f32 to vector<16x128xf32>
    %202 = arith.addf %201, %200 : vector<16x128xf32>
    %203 = arith.divf %201, %202 : vector<16x128xf32>
    %204 = vector.extract_strided_slice %197 {offsets = [0, 128], sizes = [16, 128], strides = [1, 1]} : vector<16x512xf32> to vector<16x128xf32>
    %205 = arith.negf %204 : vector<16x128xf32>
    %206 = math.exp %205 : vector<16x128xf32>
    %cst_73 = arith.constant 1.000000e+00 : f32
    %207 = vector.broadcast %cst_73 : f32 to vector<16x128xf32>
    %208 = arith.addf %207, %206 : vector<16x128xf32>
    %209 = arith.divf %207, %208 : vector<16x128xf32>
    %210 = vector.extract_strided_slice %197 {offsets = [0, 256], sizes = [16, 128], strides = [1, 1]} : vector<16x512xf32> to vector<16x128xf32>
    %211 = math.tanh %210 : vector<16x128xf32>
    %212 = vector.extract_strided_slice %197 {offsets = [0, 384], sizes = [16, 128], strides = [1, 1]} : vector<16x512xf32> to vector<16x128xf32>
    %213 = arith.negf %212 : vector<16x128xf32>
    %214 = math.exp %213 : vector<16x128xf32>
    %cst_74 = arith.constant 1.000000e+00 : f32
    %215 = vector.broadcast %cst_74 : f32 to vector<16x128xf32>
    %216 = arith.addf %215, %214 : vector<16x128xf32>
    %217 = arith.divf %215, %216 : vector<16x128xf32>
    %218 = arith.mulf %209, %174 : vector<16x128xf32>
    %219 = arith.mulf %203, %211 : vector<16x128xf32>
    %220 = arith.addf %218, %219 : vector<16x128xf32>
    %221 = math.tanh %220 : vector<16x128xf32>
    %222 = arith.mulf %217, %221 : vector<16x128xf32>
    %223 = vector.broadcast %185 : i32 to vector<16x1xi32>
    %224 = arith.cmpi slt, %223, %12 : vector<16x1xi32>
    %225 = vector.shape_cast %224 : vector<16x1xi1> to vector<16x1xi1>
    %226 = vector.broadcast %225 : vector<16x1xi1> to vector<16x128xi1>
    %227 = arith.select %226, %222, %171 : vector<16x128xi1>, vector<16x128xf32>
    %228 = vector.shape_cast %224 : vector<16x1xi1> to vector<16x1xi1>
    %229 = vector.broadcast %228 : vector<16x1xi1> to vector<16x128xi1>
    %230 = arith.select %229, %220, %174 : vector<16x128xi1>, vector<16x128xf32>
    %cst_75 = arith.constant 0.000000e+00 : f32
    %231 = vector.broadcast %cst_75 : f32 to vector<16x128xf32>
    %232 = vector.shape_cast %224 : vector<16x1xi1> to vector<16x1xi1>
    %233 = vector.broadcast %232 : vector<16x1xi1> to vector<16x128xi1>
    %234 = arith.select %233, %222, %231 : vector<16x128xi1>, vector<16x128xf32>
    %c0_76 = arith.constant 0 : index
    %235 = arith.index_cast %184 : i32 to index
    %c0_77 = arith.constant 0 : index
    %c0_78 = arith.constant 0 : index
    %236 = vector.load %arg7[%c0_76, %235, %c0_77, %c0_78] : memref<1x8x16x128xf32, #tpu.memory_space<vmem>>, vector<1x1x16x128xf32>
    %237 = vector.shape_cast %236 : vector<1x1x16x128xf32> to vector<16x128xf32>
    %238 = vector.shape_cast %234 : vector<16x128xf32> to vector<1x1x16x128xf32>
    tpu.vector_store %arg7[%c0_76, %235, %c0_77, %c0_78], %238 {strides = array<i32>} : memref<1x8x16x128xf32, #tpu.memory_space<vmem>>, vector<1x1x16x128xf32>,
    %c4_i32 = arith.constant 4 : i32
    %239 = arith.muli %10, %c4_i32 : i32
    %240 = arith.addi %239, %11 : i32
    %241 = arith.addi %8, %240 : i32
    %c0_79 = arith.constant 0 : index
    %c0_80 = arith.constant 0 : index
    %c0_81 = arith.constant 0 : index
    %242 = vector.load %arg6[%c0_79, %c0_80, %c0_81] : memref<1x128x512xbf16, #tpu.memory_space<vmem>>, vector<1x128x512xbf16>
    %243 = vector.shape_cast %242 : vector<1x128x512xbf16> to vector<128x512xbf16>
    %c0_82 = arith.constant 0 : index
    %244 = arith.index_cast %240 : i32 to index
    %c0_83 = arith.constant 0 : index
    %c0_84 = arith.constant 0 : index
    %245 = vector.load %arg3[%c0_82, %244, %c0_83, %c0_84] : memref<1x8x16x512xbf16, #tpu.memory_space<vmem>>, vector<1x1x16x512xbf16>
    %246 = vector.shape_cast %245 : vector<1x1x16x512xbf16> to vector<16x512xbf16>
    %247 = arith.extf %246 : vector<16x512xbf16> to vector<16x512xf32>
    %c0_85 = arith.constant 0 : index
    %c0_86 = arith.constant 0 : index
    %c0_87 = arith.constant 0 : index
    %248 = vector.load %arg5[%c0_85, %c0_86, %c0_87] : memref<1x16x512xf32, #tpu.memory_space<vmem>>, vector<1x16x512xf32>
    %249 = vector.shape_cast %248 : vector<1x16x512xf32> to vector<16x512xf32>
    %250 = arith.addf %247, %249 : vector<16x512xf32>
    %251 = arith.truncf %227 : vector<16x128xf32> to vector<16x128xbf16>
    %cst_88 = arith.constant dense<0.000000e+00> : vector<16x512xf32>
    %252 = tpu.matmul %251, %243, %cst_88 {dimension_numbers = #tpu.dot_dimension_numbers<[1], [0], [0], [1], [0, 0, 1, 1], [], []>} : vector<16x128xbf16>, vector<128x512xbf16>, vector<16x512xf32> -> vector<16x512xf32>
    %253 = arith.addf %250, %252 : vector<16x512xf32>
    %254 = vector.extract_strided_slice %253 {offsets = [0, 0], sizes = [16, 128], strides = [1, 1]} : vector<16x512xf32> to vector<16x128xf32>
    %255 = arith.negf %254 : vector<16x128xf32>
    %256 = math.exp %255 : vector<16x128xf32>
    %cst_89 = arith.constant 1.000000e+00 : f32
    %257 = vector.broadcast %cst_89 : f32 to vector<16x128xf32>
    %258 = arith.addf %257, %256 : vector<16x128xf32>
    %259 = arith.divf %257, %258 : vector<16x128xf32>
    %260 = vector.extract_strided_slice %253 {offsets = [0, 128], sizes = [16, 128], strides = [1, 1]} : vector<16x512xf32> to vector<16x128xf32>
    %261 = arith.negf %260 : vector<16x128xf32>
    %262 = math.exp %261 : vector<16x128xf32>
    %cst_90 = arith.constant 1.000000e+00 : f32
    %263 = vector.broadcast %cst_90 : f32 to vector<16x128xf32>
    %264 = arith.addf %263, %262 : vector<16x128xf32>
    %265 = arith.divf %263, %264 : vector<16x128xf32>
    %266 = vector.extract_strided_slice %253 {offsets = [0, 256], sizes = [16, 128], strides = [1, 1]} : vector<16x512xf32> to vector<16x128xf32>
    %267 = math.tanh %266 : vector<16x128xf32>
    %268 = vector.extract_strided_slice %253 {offsets = [0, 384], sizes = [16, 128], strides = [1, 1]} : vector<16x512xf32> to vector<16x128xf32>
    %269 = arith.negf %268 : vector<16x128xf32>
    %270 = math.exp %269 : vector<16x128xf32>
    %cst_91 = arith.constant 1.000000e+00 : f32
    %271 = vector.broadcast %cst_91 : f32 to vector<16x128xf32>
    %272 = arith.addf %271, %270 : vector<16x128xf32>
    %273 = arith.divf %271, %272 : vector<16x128xf32>
    %274 = arith.mulf %265, %230 : vector<16x128xf32>
    %275 = arith.mulf %259, %267 : vector<16x128xf32>
    %276 = arith.addf %274, %275 : vector<16x128xf32>
    %277 = math.tanh %276 : vector<16x128xf32>
    %278 = arith.mulf %273, %277 : vector<16x128xf32>
    %279 = vector.broadcast %241 : i32 to vector<16x1xi32>
    %280 = arith.cmpi slt, %279, %12 : vector<16x1xi32>
    %281 = vector.shape_cast %280 : vector<16x1xi1> to vector<16x1xi1>
    %282 = vector.broadcast %281 : vector<16x1xi1> to vector<16x128xi1>
    %283 = arith.select %282, %278, %227 : vector<16x128xi1>, vector<16x128xf32>
    %284 = vector.shape_cast %280 : vector<16x1xi1> to vector<16x1xi1>
    %285 = vector.broadcast %284 : vector<16x1xi1> to vector<16x128xi1>
    %286 = arith.select %285, %276, %230 : vector<16x128xi1>, vector<16x128xf32>
    %cst_92 = arith.constant 0.000000e+00 : f32
    %287 = vector.broadcast %cst_92 : f32 to vector<16x128xf32>
    %288 = vector.shape_cast %280 : vector<16x1xi1> to vector<16x1xi1>
    %289 = vector.broadcast %288 : vector<16x1xi1> to vector<16x128xi1>
    %290 = arith.select %289, %278, %287 : vector<16x128xi1>, vector<16x128xf32>
    %c0_93 = arith.constant 0 : index
    %291 = arith.index_cast %240 : i32 to index
    %c0_94 = arith.constant 0 : index
    %c0_95 = arith.constant 0 : index
    %292 = vector.load %arg7[%c0_93, %291, %c0_94, %c0_95] : memref<1x8x16x128xf32, #tpu.memory_space<vmem>>, vector<1x1x16x128xf32>
    %293 = vector.shape_cast %292 : vector<1x1x16x128xf32> to vector<16x128xf32>
    %294 = vector.shape_cast %290 : vector<16x128xf32> to vector<1x1x16x128xf32>
    tpu.vector_store %arg7[%c0_93, %291, %c0_94, %c0_95], %294 {strides = array<i32>} : memref<1x8x16x128xf32, #tpu.memory_space<vmem>>, vector<1x1x16x128xf32>,
    %c5_i32 = arith.constant 5 : i32
    %295 = arith.muli %10, %c5_i32 : i32
    %296 = arith.addi %295, %11 : i32
    %297 = arith.addi %8, %296 : i32
    %c0_96 = arith.constant 0 : index
    %c0_97 = arith.constant 0 : index
    %c0_98 = arith.constant 0 : index
    %298 = vector.load %arg6[%c0_96, %c0_97, %c0_98] : memref<1x128x512xbf16, #tpu.memory_space<vmem>>, vector<1x128x512xbf16>
    %299 = vector.shape_cast %298 : vector<1x128x512xbf16> to vector<128x512xbf16>
    %c0_99 = arith.constant 0 : index
    %300 = arith.index_cast %296 : i32 to index
    %c0_100 = arith.constant 0 : index
    %c0_101 = arith.constant 0 : index
    %301 = vector.load %arg3[%c0_99, %300, %c0_100, %c0_101] : memref<1x8x16x512xbf16, #tpu.memory_space<vmem>>, vector<1x1x16x512xbf16>
    %302 = vector.shape_cast %301 : vector<1x1x16x512xbf16> to vector<16x512xbf16>
    %303 = arith.extf %302 : vector<16x512xbf16> to vector<16x512xf32>
    %c0_102 = arith.constant 0 : index
    %c0_103 = arith.constant 0 : index
    %c0_104 = arith.constant 0 : index
    %304 = vector.load %arg5[%c0_102, %c0_103, %c0_104] : memref<1x16x512xf32, #tpu.memory_space<vmem>>, vector<1x16x512xf32>
    %305 = vector.shape_cast %304 : vector<1x16x512xf32> to vector<16x512xf32>
    %306 = arith.addf %303, %305 : vector<16x512xf32>
    %307 = arith.truncf %283 : vector<16x128xf32> to vector<16x128xbf16>
    %cst_105 = arith.constant dense<0.000000e+00> : vector<16x512xf32>
    %308 = tpu.matmul %307, %299, %cst_105 {dimension_numbers = #tpu.dot_dimension_numbers<[1], [0], [0], [1], [0, 0, 1, 1], [], []>} : vector<16x128xbf16>, vector<128x512xbf16>, vector<16x512xf32> -> vector<16x512xf32>
    %309 = arith.addf %306, %308 : vector<16x512xf32>
    %310 = vector.extract_strided_slice %309 {offsets = [0, 0], sizes = [16, 128], strides = [1, 1]} : vector<16x512xf32> to vector<16x128xf32>
    %311 = arith.negf %310 : vector<16x128xf32>
    %312 = math.exp %311 : vector<16x128xf32>
    %cst_106 = arith.constant 1.000000e+00 : f32
    %313 = vector.broadcast %cst_106 : f32 to vector<16x128xf32>
    %314 = arith.addf %313, %312 : vector<16x128xf32>
    %315 = arith.divf %313, %314 : vector<16x128xf32>
    %316 = vector.extract_strided_slice %309 {offsets = [0, 128], sizes = [16, 128], strides = [1, 1]} : vector<16x512xf32> to vector<16x128xf32>
    %317 = arith.negf %316 : vector<16x128xf32>
    %318 = math.exp %317 : vector<16x128xf32>
    %cst_107 = arith.constant 1.000000e+00 : f32
    %319 = vector.broadcast %cst_107 : f32 to vector<16x128xf32>
    %320 = arith.addf %319, %318 : vector<16x128xf32>
    %321 = arith.divf %319, %320 : vector<16x128xf32>
    %322 = vector.extract_strided_slice %309 {offsets = [0, 256], sizes = [16, 128], strides = [1, 1]} : vector<16x512xf32> to vector<16x128xf32>
    %323 = math.tanh %322 : vector<16x128xf32>
    %324 = vector.extract_strided_slice %309 {offsets = [0, 384], sizes = [16, 128], strides = [1, 1]} : vector<16x512xf32> to vector<16x128xf32>
    %325 = arith.negf %324 : vector<16x128xf32>
    %326 = math.exp %325 : vector<16x128xf32>
    %cst_108 = arith.constant 1.000000e+00 : f32
    %327 = vector.broadcast %cst_108 : f32 to vector<16x128xf32>
    %328 = arith.addf %327, %326 : vector<16x128xf32>
    %329 = arith.divf %327, %328 : vector<16x128xf32>
    %330 = arith.mulf %321, %286 : vector<16x128xf32>
    %331 = arith.mulf %315, %323 : vector<16x128xf32>
    %332 = arith.addf %330, %331 : vector<16x128xf32>
    %333 = math.tanh %332 : vector<16x128xf32>
    %334 = arith.mulf %329, %333 : vector<16x128xf32>
    %335 = vector.broadcast %297 : i32 to vector<16x1xi32>
    %336 = arith.cmpi slt, %335, %12 : vector<16x1xi32>
    %337 = vector.shape_cast %336 : vector<16x1xi1> to vector<16x1xi1>
    %338 = vector.broadcast %337 : vector<16x1xi1> to vector<16x128xi1>
    %339 = arith.select %338, %334, %283 : vector<16x128xi1>, vector<16x128xf32>
    %340 = vector.shape_cast %336 : vector<16x1xi1> to vector<16x1xi1>
    %341 = vector.broadcast %340 : vector<16x1xi1> to vector<16x128xi1>
    %342 = arith.select %341, %332, %286 : vector<16x128xi1>, vector<16x128xf32>
    %cst_109 = arith.constant 0.000000e+00 : f32
    %343 = vector.broadcast %cst_109 : f32 to vector<16x128xf32>
    %344 = vector.shape_cast %336 : vector<16x1xi1> to vector<16x1xi1>
    %345 = vector.broadcast %344 : vector<16x1xi1> to vector<16x128xi1>
    %346 = arith.select %345, %334, %343 : vector<16x128xi1>, vector<16x128xf32>
    %c0_110 = arith.constant 0 : index
    %347 = arith.index_cast %296 : i32 to index
    %c0_111 = arith.constant 0 : index
    %c0_112 = arith.constant 0 : index
    %348 = vector.load %arg7[%c0_110, %347, %c0_111, %c0_112] : memref<1x8x16x128xf32, #tpu.memory_space<vmem>>, vector<1x1x16x128xf32>
    %349 = vector.shape_cast %348 : vector<1x1x16x128xf32> to vector<16x128xf32>
    %350 = vector.shape_cast %346 : vector<16x128xf32> to vector<1x1x16x128xf32>
    tpu.vector_store %arg7[%c0_110, %347, %c0_111, %c0_112], %350 {strides = array<i32>} : memref<1x8x16x128xf32, #tpu.memory_space<vmem>>, vector<1x1x16x128xf32>,
    %c6_i32 = arith.constant 6 : i32
    %351 = arith.muli %10, %c6_i32 : i32
    %352 = arith.addi %351, %11 : i32
    %353 = arith.addi %8, %352 : i32
    %c0_113 = arith.constant 0 : index
    %c0_114 = arith.constant 0 : index
    %c0_115 = arith.constant 0 : index
    %354 = vector.load %arg6[%c0_113, %c0_114, %c0_115] : memref<1x128x512xbf16, #tpu.memory_space<vmem>>, vector<1x128x512xbf16>
    %355 = vector.shape_cast %354 : vector<1x128x512xbf16> to vector<128x512xbf16>
    %c0_116 = arith.constant 0 : index
    %356 = arith.index_cast %352 : i32 to index
    %c0_117 = arith.constant 0 : index
    %c0_118 = arith.constant 0 : index
    %357 = vector.load %arg3[%c0_116, %356, %c0_117, %c0_118] : memref<1x8x16x512xbf16, #tpu.memory_space<vmem>>, vector<1x1x16x512xbf16>
    %358 = vector.shape_cast %357 : vector<1x1x16x512xbf16> to vector<16x512xbf16>
    %359 = arith.extf %358 : vector<16x512xbf16> to vector<16x512xf32>
    %c0_119 = arith.constant 0 : index
    %c0_120 = arith.constant 0 : index
    %c0_121 = arith.constant 0 : index
    %360 = vector.load %arg5[%c0_119, %c0_120, %c0_121] : memref<1x16x512xf32, #tpu.memory_space<vmem>>, vector<1x16x512xf32>
    %361 = vector.shape_cast %360 : vector<1x16x512xf32> to vector<16x512xf32>
    %362 = arith.addf %359, %361 : vector<16x512xf32>
    %363 = arith.truncf %339 : vector<16x128xf32> to vector<16x128xbf16>
    %cst_122 = arith.constant dense<0.000000e+00> : vector<16x512xf32>
    %364 = tpu.matmul %363, %355, %cst_122 {dimension_numbers = #tpu.dot_dimension_numbers<[1], [0], [0], [1], [0, 0, 1, 1], [], []>} : vector<16x128xbf16>, vector<128x512xbf16>, vector<16x512xf32> -> vector<16x512xf32>
    %365 = arith.addf %362, %364 : vector<16x512xf32>
    %366 = vector.extract_strided_slice %365 {offsets = [0, 0], sizes = [16, 128], strides = [1, 1]} : vector<16x512xf32> to vector<16x128xf32>
    %367 = arith.negf %366 : vector<16x128xf32>
    %368 = math.exp %367 : vector<16x128xf32>
    %cst_123 = arith.constant 1.000000e+00 : f32
    %369 = vector.broadcast %cst_123 : f32 to vector<16x128xf32>
    %370 = arith.addf %369, %368 : vector<16x128xf32>
    %371 = arith.divf %369, %370 : vector<16x128xf32>
    %372 = vector.extract_strided_slice %365 {offsets = [0, 128], sizes = [16, 128], strides = [1, 1]} : vector<16x512xf32> to vector<16x128xf32>
    %373 = arith.negf %372 : vector<16x128xf32>
    %374 = math.exp %373 : vector<16x128xf32>
    %cst_124 = arith.constant 1.000000e+00 : f32
    %375 = vector.broadcast %cst_124 : f32 to vector<16x128xf32>
    %376 = arith.addf %375, %374 : vector<16x128xf32>
    %377 = arith.divf %375, %376 : vector<16x128xf32>
    %378 = vector.extract_strided_slice %365 {offsets = [0, 256], sizes = [16, 128], strides = [1, 1]} : vector<16x512xf32> to vector<16x128xf32>
    %379 = math.tanh %378 : vector<16x128xf32>
    %380 = vector.extract_strided_slice %365 {offsets = [0, 384], sizes = [16, 128], strides = [1, 1]} : vector<16x512xf32> to vector<16x128xf32>
    %381 = arith.negf %380 : vector<16x128xf32>
    %382 = math.exp %381 : vector<16x128xf32>
    %cst_125 = arith.constant 1.000000e+00 : f32
    %383 = vector.broadcast %cst_125 : f32 to vector<16x128xf32>
    %384 = arith.addf %383, %382 : vector<16x128xf32>
    %385 = arith.divf %383, %384 : vector<16x128xf32>
    %386 = arith.mulf %377, %342 : vector<16x128xf32>
    %387 = arith.mulf %371, %379 : vector<16x128xf32>
    %388 = arith.addf %386, %387 : vector<16x128xf32>
    %389 = math.tanh %388 : vector<16x128xf32>
    %390 = arith.mulf %385, %389 : vector<16x128xf32>
    %391 = vector.broadcast %353 : i32 to vector<16x1xi32>
    %392 = arith.cmpi slt, %391, %12 : vector<16x1xi32>
    %393 = vector.shape_cast %392 : vector<16x1xi1> to vector<16x1xi1>
    %394 = vector.broadcast %393 : vector<16x1xi1> to vector<16x128xi1>
    %395 = arith.select %394, %390, %339 : vector<16x128xi1>, vector<16x128xf32>
    %396 = vector.shape_cast %392 : vector<16x1xi1> to vector<16x1xi1>
    %397 = vector.broadcast %396 : vector<16x1xi1> to vector<16x128xi1>
    %398 = arith.select %397, %388, %342 : vector<16x128xi1>, vector<16x128xf32>
    %cst_126 = arith.constant 0.000000e+00 : f32
    %399 = vector.broadcast %cst_126 : f32 to vector<16x128xf32>
    %400 = vector.shape_cast %392 : vector<16x1xi1> to vector<16x1xi1>
    %401 = vector.broadcast %400 : vector<16x1xi1> to vector<16x128xi1>
    %402 = arith.select %401, %390, %399 : vector<16x128xi1>, vector<16x128xf32>
    %c0_127 = arith.constant 0 : index
    %403 = arith.index_cast %352 : i32 to index
    %c0_128 = arith.constant 0 : index
    %c0_129 = arith.constant 0 : index
    %404 = vector.load %arg7[%c0_127, %403, %c0_128, %c0_129] : memref<1x8x16x128xf32, #tpu.memory_space<vmem>>, vector<1x1x16x128xf32>
    %405 = vector.shape_cast %404 : vector<1x1x16x128xf32> to vector<16x128xf32>
    %406 = vector.shape_cast %402 : vector<16x128xf32> to vector<1x1x16x128xf32>
    tpu.vector_store %arg7[%c0_127, %403, %c0_128, %c0_129], %406 {strides = array<i32>} : memref<1x8x16x128xf32, #tpu.memory_space<vmem>>, vector<1x1x16x128xf32>,
    %c7_i32_130 = arith.constant 7 : i32
    %407 = arith.muli %10, %c7_i32_130 : i32
    %408 = arith.addi %407, %11 : i32
    %409 = arith.addi %8, %408 : i32
    %c0_131 = arith.constant 0 : index
    %c0_132 = arith.constant 0 : index
    %c0_133 = arith.constant 0 : index
    %410 = vector.load %arg6[%c0_131, %c0_132, %c0_133] : memref<1x128x512xbf16, #tpu.memory_space<vmem>>, vector<1x128x512xbf16>
    %411 = vector.shape_cast %410 : vector<1x128x512xbf16> to vector<128x512xbf16>
    %c0_134 = arith.constant 0 : index
    %412 = arith.index_cast %408 : i32 to index
    %c0_135 = arith.constant 0 : index
    %c0_136 = arith.constant 0 : index
    %413 = vector.load %arg3[%c0_134, %412, %c0_135, %c0_136] : memref<1x8x16x512xbf16, #tpu.memory_space<vmem>>, vector<1x1x16x512xbf16>
    %414 = vector.shape_cast %413 : vector<1x1x16x512xbf16> to vector<16x512xbf16>
    %415 = arith.extf %414 : vector<16x512xbf16> to vector<16x512xf32>
    %c0_137 = arith.constant 0 : index
    %c0_138 = arith.constant 0 : index
    %c0_139 = arith.constant 0 : index
    %416 = vector.load %arg5[%c0_137, %c0_138, %c0_139] : memref<1x16x512xf32, #tpu.memory_space<vmem>>, vector<1x16x512xf32>
    %417 = vector.shape_cast %416 : vector<1x16x512xf32> to vector<16x512xf32>
    %418 = arith.addf %415, %417 : vector<16x512xf32>
    %419 = arith.truncf %395 : vector<16x128xf32> to vector<16x128xbf16>
    %cst_140 = arith.constant dense<0.000000e+00> : vector<16x512xf32>
    %420 = tpu.matmul %419, %411, %cst_140 {dimension_numbers = #tpu.dot_dimension_numbers<[1], [0], [0], [1], [0, 0, 1, 1], [], []>} : vector<16x128xbf16>, vector<128x512xbf16>, vector<16x512xf32> -> vector<16x512xf32>
    %421 = arith.addf %418, %420 : vector<16x512xf32>
    %422 = vector.extract_strided_slice %421 {offsets = [0, 0], sizes = [16, 128], strides = [1, 1]} : vector<16x512xf32> to vector<16x128xf32>
    %423 = arith.negf %422 : vector<16x128xf32>
    %424 = math.exp %423 : vector<16x128xf32>
    %cst_141 = arith.constant 1.000000e+00 : f32
    %425 = vector.broadcast %cst_141 : f32 to vector<16x128xf32>
    %426 = arith.addf %425, %424 : vector<16x128xf32>
    %427 = arith.divf %425, %426 : vector<16x128xf32>
    %428 = vector.extract_strided_slice %421 {offsets = [0, 128], sizes = [16, 128], strides = [1, 1]} : vector<16x512xf32> to vector<16x128xf32>
    %429 = arith.negf %428 : vector<16x128xf32>
    %430 = math.exp %429 : vector<16x128xf32>
    %cst_142 = arith.constant 1.000000e+00 : f32
    %431 = vector.broadcast %cst_142 : f32 to vector<16x128xf32>
    %432 = arith.addf %431, %430 : vector<16x128xf32>
    %433 = arith.divf %431, %432 : vector<16x128xf32>
    %434 = vector.extract_strided_slice %421 {offsets = [0, 256], sizes = [16, 128], strides = [1, 1]} : vector<16x512xf32> to vector<16x128xf32>
    %435 = math.tanh %434 : vector<16x128xf32>
    %436 = vector.extract_strided_slice %421 {offsets = [0, 384], sizes = [16, 128], strides = [1, 1]} : vector<16x512xf32> to vector<16x128xf32>
    %437 = arith.negf %436 : vector<16x128xf32>
    %438 = math.exp %437 : vector<16x128xf32>
    %cst_143 = arith.constant 1.000000e+00 : f32
    %439 = vector.broadcast %cst_143 : f32 to vector<16x128xf32>
    %440 = arith.addf %439, %438 : vector<16x128xf32>
    %441 = arith.divf %439, %440 : vector<16x128xf32>
    %442 = arith.mulf %433, %398 : vector<16x128xf32>
    %443 = arith.mulf %427, %435 : vector<16x128xf32>
    %444 = arith.addf %442, %443 : vector<16x128xf32>
    %445 = math.tanh %444 : vector<16x128xf32>
    %446 = arith.mulf %441, %445 : vector<16x128xf32>
    %447 = vector.broadcast %409 : i32 to vector<16x1xi32>
    %448 = arith.cmpi slt, %447, %12 : vector<16x1xi32>
    %449 = vector.shape_cast %448 : vector<16x1xi1> to vector<16x1xi1>
    %450 = vector.broadcast %449 : vector<16x1xi1> to vector<16x128xi1>
    %451 = arith.select %450, %446, %395 : vector<16x128xi1>, vector<16x128xf32>
    %452 = vector.shape_cast %448 : vector<16x1xi1> to vector<16x1xi1>
    %453 = vector.broadcast %452 : vector<16x1xi1> to vector<16x128xi1>
    %454 = arith.select %453, %444, %398 : vector<16x128xi1>, vector<16x128xf32>
    %cst_144 = arith.constant 0.000000e+00 : f32
    %455 = vector.broadcast %cst_144 : f32 to vector<16x128xf32>
    %456 = vector.shape_cast %448 : vector<16x1xi1> to vector<16x1xi1>
    %457 = vector.broadcast %456 : vector<16x1xi1> to vector<16x128xi1>
    %458 = arith.select %457, %446, %455 : vector<16x128xi1>, vector<16x128xf32>
    %c0_145 = arith.constant 0 : index
    %459 = arith.index_cast %408 : i32 to index
    %c0_146 = arith.constant 0 : index
    %c0_147 = arith.constant 0 : index
    %460 = vector.load %arg7[%c0_145, %459, %c0_146, %c0_147] : memref<1x8x16x128xf32, #tpu.memory_space<vmem>>, vector<1x1x16x128xf32>
    %461 = vector.shape_cast %460 : vector<1x1x16x128xf32> to vector<16x128xf32>
    %462 = vector.shape_cast %458 : vector<16x128xf32> to vector<1x1x16x128xf32>
    tpu.vector_store %arg7[%c0_145, %459, %c0_146, %c0_147], %462 {strides = array<i32>} : memref<1x8x16x128xf32, #tpu.memory_space<vmem>>, vector<1x1x16x128xf32>,
    %c8_i32_148 = arith.constant 8 : i32
    %c0_149 = arith.constant 0 : index
    %c0_150 = arith.constant 0 : index
    %463 = vector.load %arg10[%c0_149, %c0_150] : memref<16x128xf32, #tpu.memory_space<vmem>>, vector<16x128xf32>
    tpu.vector_store %arg10[%c0_149, %c0_150], %451 {strides = array<i32>} : memref<16x128xf32, #tpu.memory_space<vmem>>, vector<16x128xf32>,
    %c0_151 = arith.constant 0 : index
    %c0_152 = arith.constant 0 : index
    %464 = vector.load %arg11[%c0_151, %c0_152] : memref<16x128xf32, #tpu.memory_space<vmem>>, vector<16x128xf32>
    tpu.vector_store %arg11[%c0_151, %c0_152], %454 {strides = array<i32>} : memref<16x128xf32, #tpu.memory_space<vmem>>, vector<16x128xf32>,
    %c0_i32_153 = arith.constant 0 : i32
    %465 = arith.cmpi eq, %arg2, %c0_i32_153 : i32
    %466 = arith.extui %465 : i1 to i32
    %c0_i32_154 = arith.constant 0 : i32
    %467 = arith.cmpi ne, %466, %c0_i32_154 : i32
    scf.if %467 {
      %c0_155 = arith.constant 0 : index
      %c0_156 = arith.constant 0 : index
      %c0_157 = arith.constant 0 : index
      %468 = vector.load %arg8[%c0_155, %c0_156, %c0_157] : memref<1x16x128xf32, #tpu.memory_space<vmem>>, vector<1x16x128xf32>
      %469 = vector.shape_cast %468 : vector<1x16x128xf32> to vector<16x128xf32>
      %470 = vector.shape_cast %451 : vector<16x128xf32> to vector<1x16x128xf32>
      tpu.vector_store %arg8[%c0_155, %c0_156, %c0_157], %470 {strides = array<i32>} : memref<1x16x128xf32, #tpu.memory_space<vmem>>, vector<1x16x128xf32>,
      %c0_158 = arith.constant 0 : index
      %c0_159 = arith.constant 0 : index
      %c0_160 = arith.constant 0 : index
      %471 = vector.load %arg9[%c0_158, %c0_159, %c0_160] : memref<1x16x128xf32, #tpu.memory_space<vmem>>, vector<1x16x128xf32>
      %472 = vector.shape_cast %471 : vector<1x16x128xf32> to vector<16x128xf32>
      %473 = vector.shape_cast %454 : vector<16x128xf32> to vector<1x16x128xf32>
      tpu.vector_store %arg9[%c0_158, %c0_159, %c0_160], %473 {strides = array<i32>} : memref<1x16x128xf32, #tpu.memory_space<vmem>>, vector<1x16x128xf32>,
    } else {
    }
    return
  }
  func.func @transform_0(%arg0: i32, %arg1: i32, %arg2: i32) -> (i32, i32, i32, i32) {
    %c2_i32 = arith.constant 2 : i32
    %0 = arith.muli %c2_i32, %arg0 : i32
    %c1_i32 = arith.constant 1 : i32
    %1 = arith.subi %c1_i32, %0 : i32
    %2 = arith.muli %1, %arg2 : i32
    %c0_i32 = arith.constant 0 : i32
    %3 = arith.muli %arg0, %c0_i32 : i32
    %4 = arith.addi %2, %3 : i32
    %c0_i32_0 = arith.constant 0 : i32
    %c0_i32_1 = arith.constant 0 : i32
    return %arg0, %4, %arg1, %c0_i32_0 : i32, i32, i32, i32
  }
  func.func @transform_1(%arg0: i32, %arg1: i32, %arg2: i32) -> (i32, i32) {
    %c0_i32 = arith.constant 0 : i32
    %c0_i32_0 = arith.constant 0 : i32
    return %arg1, %c0_i32 : i32, i32
  }
  func.func @transform_2(%arg0: i32, %arg1: i32, %arg2: i32) -> (i32, i32, i32) {
    %c0_i32 = arith.constant 0 : i32
    %c0_i32_0 = arith.constant 0 : i32
    return %arg0, %arg1, %c0_i32 : i32, i32, i32
  }
  func.func @transform_3(%arg0: i32, %arg1: i32, %arg2: i32) -> (i32, i32, i32) {
    %c0_i32 = arith.constant 0 : i32
    %c0_i32_0 = arith.constant 0 : i32
    %c0_i32_1 = arith.constant 0 : i32
    return %arg0, %c0_i32, %c0_i32_0 : i32, i32, i32
  }
  func.func @transform_4(%arg0: i32, %arg1: i32, %arg2: i32) -> (i32, i32, i32, i32) {
    %c2_i32 = arith.constant 2 : i32
    %0 = arith.muli %c2_i32, %arg0 : i32
    %c1_i32 = arith.constant 1 : i32
    %1 = arith.subi %c1_i32, %0 : i32
    %2 = arith.muli %1, %arg2 : i32
    %c0_i32 = arith.constant 0 : i32
    %3 = arith.muli %arg0, %c0_i32 : i32
    %4 = arith.addi %2, %3 : i32
    %c0_i32_0 = arith.constant 0 : i32
    %c0_i32_1 = arith.constant 0 : i32
    return %arg0, %4, %arg1, %c0_i32_0 : i32, i32, i32, i32
  }
  func.func @transform_5(%arg0: i32, %arg1: i32, %arg2: i32) -> (i32, i32, i32) {
    %c0_i32 = arith.constant 0 : i32
    %c0_i32_0 = arith.constant 0 : i32
    return %arg0, %arg1, %c0_i32 : i32, i32, i32
  }
  func.func @transform_6(%arg0: i32, %arg1: i32, %arg2: i32) -> (i32, i32, i32) {
    %c0_i32 = arith.constant 0 : i32
    %c0_i32_0 = arith.constant 0 : i32
    return %arg0, %arg1, %c0_i32 : i32, i32, i32
  }
}

</mosaic_0001>

<llo_original>
// kernel: bilstm_forward.3
$region0: #{bilstm_forward.3}
  #allocation0 [shape = 'u32[]', space=smem, size = 0x4, offset = 0x4, fixed_abs, tag = 'smem constant byte address 0x4 - core index']
  #allocation1 [shape = 'u32[144,128]{1,0:T(1,128)}', space=vmem, size = 0x12000, scoped, tag = 'internal scratch']
  #allocation2 [shape = 'f32[16,128]{1,0:T(8,128)}', space=vmem, size = 0x2000, scoped, tag = 'scratch operand']
  #allocation3 [shape = 'f32[16,128]{1,0:T(8,128)}', space=vmem, size = 0x2000, scoped, tag = 'scratch operand']
  %s0 = inlined_call_operand.vmem [shape: bf16[2,8,16,512], index: 0, kind: input, shape index: {}]
  %s1 = inlined_call_operand.vmem [shape: s32[16,1], index: 1, kind: input, shape index: {}]
  %s2 = inlined_call_operand.vmem [shape: f32[2,16,512], index: 2, kind: input, shape index: {}]
  %s3 = inlined_call_operand.vmem [shape: bf16[2,128,512], index: 3, kind: input, shape index: {}]
  %s4 = inlined_call_operand.vmem [shape: f32[2,8,16,128], index: 4, kind: output, shape index: {0}]
  %s5 = inlined_call_operand.vmem [shape: f32[2,16,128], index: 5, kind: output, shape index: {1}]
  %s6 = inlined_call_operand.vmem [shape: f32[2,16,128], index: 6, kind: output, shape index: {2}]
  %7 = xla_tuple %s4, %s5, %s6
  %s8 = sld [smem:[#allocation0]]
  $region73: #{bilstm_forward.3} parent=0
    _
  %s10 = ssub.s32 1, %s8
  %s11 = scalar_select 0, %s10, %s8
  loop: start=0, step=1, limit=4
  $region2: #{bilstm_forward.3} parent=0 // loop_pre_header
    _
  $region3: #{bilstm_forward.3} parent=0 // loop_header
    %s13 = sphi 0, %s17
    %p14 = scmp.ge.s32.totalorder %s13, 4
    %s20 = sphi 0, %s39
    %s21 = sphi 0, %s35
    %s22 = sphi 0, %s31
    %s23 = sphi 0, %s20
    %s24 = sphi 0, %s21
    %s25 = sphi 0, %s22
    %s26 = sphi 0, %s23
    %s27 = sphi 0, %s24
    %s28 = sphi 0, %s25
    %s52 = sphi 0, %s54
    %s55 = sphi 0, %s52
    %s56 = sphi 0, %s55
    %s72 = sphi 0, %s56
    %s78 = sphi 0, %s80
    %s81 = sphi 0, %s78
    %s82 = sphi 0, %s81
    %s98 = sphi 0, %s82
    %s106 = sphi 0, %s108
    %s109 = sphi 0, %s106
    %s110 = sphi 0, %s109
    %s126 = sphi 0, %s110
    %s132 = sphi 0, %s134
    %s135 = sphi 0, %s132
    %s136 = sphi 0, %s135
    %s152 = sphi 0, %s136
    %s168 = sphi 0, %s170
    %s171 = sphi 0, %s168
    %s172 = sphi 0, %s171
    %s188 = sphi 0, %s172
    %s196 = sphi 0, %s198
    %s199 = sphi 0, %s196
    %s200 = sphi 0, %s199
    %s216 = sphi 0, %s200
    %s224 = sphi 0, %s226
    %s227 = sphi 0, %s224
    %s228 = sphi 0, %s227
    %s244 = sphi 0, %s228
  $region4: #{bilstm_forward.3} parent=0 // loop_header_branch
    %16 = sbr.rel (%p14) target = $region8
  $region5: #{bilstm_forward.3} parent=0 // loop_body
    %s18 = ssub.s32 %s13, 1
    %s19 = ssub.s32 %s13, 2
    %s29 = sadd.s32 1, %s22
    %p30 = scmp.ge.s32.totalorder %s29, 1
    %s31 = scalar_select %p30, 0, %s29
    %s32 = sadd.s32 1, %s21
    %s33 = scalar_select %p30, %s32, %s21
    %p34 = scmp.ge.s32.totalorder %s33, 1
    %s35 = scalar_select %p34, 0, %s33
    %s36 = sadd.s32 1, %s20
    %s37 = scalar_select %p34, %s36, %s20
    %p38 = scmp.ge.s32.totalorder %s37, 2
    %s39 = scalar_select %p38, 0, %s37
    %s40 = smul.u32 %s20, 2
    %s41 = ssub.s32 1, %s40
    %s42 = smul.u32 %s41, %s22
    %s43 = smul.u32 %s39, 2
    %s44 = ssub.s32 1, %s43
    %s45 = smul.u32 %s44, %s31
    %s46 = ssub.s32 %s20, %s39
    %s47 = ssub.s32 %s42, %s45
    %s48 = sor.u32 %s46, %s47
    %s49 = ssub.s32 %s21, %s35
    %s50 = sor.u32 %s48, %s49
    %p51 = scmp.eq.s32.totalorder %s50, 0
    %s53 = sadd.s32 %s52, 1
    %s54 = scalar_select %p51, %s52, %s53
    %p57 = pneg %p51
    %p58 = scmp.eq.s32.totalorder %s13, 1
    %p59 = por %p57, %p58
    %p60 = scmp.ne.s32.totalorder %s52, %s55
    %p61 = scmp.eq.s32.totalorder %s13, 0
    %p62 = por %p60, %p61
    %p63 = scmp.ne.s32.totalorder %s52, %s55
    %p64 = scmp.eq.s32.totalorder %s18, 1
    %p65 = por %p63, %p64
    %p66 = scmp.ne.s32.totalorder %s55, %s56
    %p67 = scmp.eq.s32.totalorder %s18, 0
    %p68 = por %p66, %p67
    %p69 = scmp.ne.s32.totalorder %s55, %s56
    %p70 = scmp.eq.s32.totalorder %s19, 1
    %p71 = por %p69, %p70
    %p73 = scmp.ne.s32.totalorder %s56, %s72
    %p74 = scmp.eq.s32.totalorder %s19, 0
    %p75 = por %p73, %p74
    %s76 = ssub.s32 %s21, %s35
    %p77 = scmp.eq.s32.totalorder %s76, 0
    %s79 = sadd.s32 %s78, 1
    %s80 = scalar_select %p77, %s78, %s79
    %p83 = pneg %p77
    %p84 = scmp.eq.s32.totalorder %s13, 1
    %p85 = por %p83, %p84
    %p86 = scmp.ne.s32.totalorder %s78, %s81
    %p87 = scmp.eq.s32.totalorder %s13, 0
    %p88 = por %p86, %p87
    %p89 = scmp.ne.s32.totalorder %s78, %s81
    %p90 = scmp.eq.s32.totalorder %s18, 1
    %p91 = por %p89, %p90
    %p92 = scmp.ne.s32.totalorder %s81, %s82
    %p93 = scmp.eq.s32.totalorder %s18, 0
    %p94 = por %p92, %p93
    %p95 = scmp.ne.s32.totalorder %s81, %s82
    %p96 = scmp.eq.s32.totalorder %s19, 1
    %p97 = por %p95, %p96
    %p99 = scmp.ne.s32.totalorder %s82, %s98
    %p100 = scmp.eq.s32.totalorder %s19, 0
    %p101 = por %p99, %p100
    %s102 = ssub.s32 %s20, %s39
    %s103 = ssub.s32 %s21, %s35
    %s104 = sor.u32 %s102, %s103
    %p105 = scmp.eq.s32.totalorder %s104, 0
    %s107 = sadd.s32 %s106, 1
    %s108 = scalar_select %p105, %s106, %s107
    %p111 = pneg %p105
    %p112 = scmp.eq.s32.totalorder %s13, 1
    %p113 = por %p111, %p112
    %p114 = scmp.ne.s32.totalorder %s106, %s109
    %p115 = scmp.eq.s32.totalorder %s13, 0
    %p116 = por %p114, %p115
    %p117 = scmp.ne.s32.totalorder %s106, %s109
    %p118 = scmp.eq.s32.totalorder %s18, 1
    %p119 = por %p117, %p118
    %p120 = scmp.ne.s32.totalorder %s109, %s110
    %p121 = scmp.eq.s32.totalorder %s18, 0
    %p122 = por %p120, %p121
    %p123 = scmp.ne.s32.totalorder %s109, %s110
    %p124 = scmp.eq.s32.totalorder %s19, 1
    %p125 = por %p123, %p124
    %p127 = scmp.ne.s32.totalorder %s110, %s126
    %p128 = scmp.eq.s32.totalorder %s19, 0
    %p129 = por %p127, %p128
    %s130 = ssub.s32 %s20, %s39
    %p131 = scmp.eq.s32.totalorder %s130, 0
    %s133 = sadd.s32 %s132, 1
    %s134 = scalar_select %p131, %s132, %s133
    %p137 = pneg %p131
    %p138 = scmp.eq.s32.totalorder %s13, 1
    %p139 = por %p137, %p138
    %p140 = scmp.ne.s32.totalorder %s132, %s135
    %p141 = scmp.eq.s32.totalorder %s13, 0
    %p142 = por %p140, %p141
    %p143 = scmp.ne.s32.totalorder %s132, %s135
    %p144 = scmp.eq.s32.totalorder %s18, 1
    %p145 = por %p143, %p144
    %p146 = scmp.ne.s32.totalorder %s135, %s136
    %p147 = scmp.eq.s32.totalorder %s18, 0
    %p148 = por %p146, %p147
    %p149 = scmp.ne.s32.totalorder %s135, %s136
    %p150 = scmp.eq.s32.totalorder %s19, 1
    %p151 = por %p149, %p150
    %p153 = scmp.ne.s32.totalorder %s136, %s152
    %p154 = scmp.eq.s32.totalorder %s19, 0
    %p155 = por %p153, %p154
    %s156 = smul.u32 %s20, 2
    %s157 = ssub.s32 1, %s156
    %s158 = smul.u32 %s157, %s22
    %s159 = smul.u32 %s39, 2
    %s160 = ssub.s32 1, %s159
    %s161 = smul.u32 %s160, %s31
    %s162 = ssub.s32 %s20, %s39
    %s163 = ssub.s32 %s158, %s161
    %s164 = sor.u32 %s162, %s163
    %s165 = ssub.s32 %s21, %s35
    %s166 = sor.u32 %s164, %s165
    %p167 = scmp.eq.s32.totalorder %s166, 0
    %s169 = sadd.s32 %s168, 1
    %s170 = scalar_select %p167, %s168, %s169
    %p173 = pneg %p167
    %p174 = scmp.eq.s32.totalorder %s13, 1
    %p175 = por %p173, %p174
    %p176 = scmp.ne.s32.totalorder %s168, %s171
    %p177 = scmp.eq.s32.totalorder %s13, 0
    %p178 = por %p176, %p177
    %p179 = scmp.ne.s32.totalorder %s168, %s171
    %p180 = scmp.eq.s32.totalorder %s18, 1
    %p181 = por %p179, %p180
    %p182 = scmp.ne.s32.totalorder %s171, %s172
    %p183 = scmp.eq.s32.totalorder %s18, 0
    %p184 = por %p182, %p183
    %p185 = scmp.ne.s32.totalorder %s171, %s172
    %p186 = scmp.eq.s32.totalorder %s19, 1
    %p187 = por %p185, %p186
    %p189 = scmp.ne.s32.totalorder %s172, %s188
    %p190 = scmp.eq.s32.totalorder %s19, 0
    %p191 = por %p189, %p190
    %s192 = ssub.s32 %s20, %s39
    %s193 = ssub.s32 %s21, %s35
    %s194 = sor.u32 %s192, %s193
    %p195 = scmp.eq.s32.totalorder %s194, 0
    %s197 = sadd.s32 %s196, 1
    %s198 = scalar_select %p195, %s196, %s197
    %p201 = pneg %p195
    %p202 = scmp.eq.s32.totalorder %s13, 1
    %p203 = por %p201, %p202
    %p204 = scmp.ne.s32.totalorder %s196, %s199
    %p205 = scmp.eq.s32.totalorder %s13, 0
    %p206 = por %p204, %p205
    %p207 = scmp.ne.s32.totalorder %s196, %s199
    %p208 = scmp.eq.s32.totalorder %s18, 1
    %p209 = por %p207, %p208
    %p210 = scmp.ne.s32.totalorder %s199, %s200
    %p211 = scmp.eq.s32.totalorder %s18, 0
    %p212 = por %p210, %p211
    %p213 = scmp.ne.s32.totalorder %s199, %s200
    %p214 = scmp.eq.s32.totalorder %s19, 1
    %p215 = por %p213, %p214
    %p217 = scmp.ne.s32.totalorder %s200, %s216
    %p218 = scmp.eq.s32.totalorder %s19, 0
    %p219 = por %p217, %p218
    %s220 = ssub.s32 %s20, %s39
    %s221 = ssub.s32 %s21, %s35
    %s222 = sor.u32 %s220, %s221
    %p223 = scmp.eq.s32.totalorder %s222, 0
    %s225 = sadd.s32 %s224, 1
    %s226 = scalar_select %p223, %s224, %s225
    %p229 = pneg %p223
    %p230 = scmp.eq.s32.totalorder %s13, 1
    %p231 = por %p229, %p230
    %p232 = scmp.ne.s32.totalorder %s224, %s227
    %p233 = scmp.eq.s32.totalorder %s13, 0
    %p234 = por %p232, %p233
    %p235 = scmp.ne.s32.totalorder %s224, %s227
    %p236 = scmp.eq.s32.totalorder %s18, 1
    %p237 = por %p235, %p236
    %p238 = scmp.ne.s32.totalorder %s227, %s228
    %p239 = scmp.eq.s32.totalorder %s18, 0
    %p240 = por %p238, %p239
    %p241 = scmp.ne.s32.totalorder %s227, %s228
    %p242 = scmp.eq.s32.totalorder %s19, 1
    %p243 = por %p241, %p242
    %p245 = scmp.ne.s32.totalorder %s228, %s244
    %p246 = scmp.eq.s32.totalorder %s19, 0
    %p247 = por %p245, %p246
    %p248 = scmp.le.s32.totalorder 1, %s13
    %p249 = scmp.lt.s32.totalorder %s13, 3
    %p250 = pnand %p248, %p249
    %p251 = pneg %p250
    // Predicated region
    $region9: #{bilstm_forward.3} parent=5 // pred_check
      _
    $region10: #{bilstm_forward.3} parent=5 // pred_check_branch
      %253 = sbr.rel (%p250) target = $region12
    $region11: #{bilstm_forward.3} parent=5 // pred_region
      %s254 = ssub.s32 %s13, 1
      // Predicated region
      $region13: #{bilstm_forward.3} parent=11 // pred_check
        %p255 = pneg %p94
      $region14: #{bilstm_forward.3} parent=11 // pred_check_branch
        %257 = sbr.rel (%p255) target = $region16
      $region15: #{bilstm_forward.3} parent=11 // pred_region
        %s258 = smul.u32 2, %s24
        %p259 = scmp.lt.s32.totalorder %s258, 1
        %s260 = scalar_select %p259, %s258, 1
        %s261 = smul.addr %s260, 8
        %s262 = scalar_lea.vmem %s1, %s261
        %s263 = smul.u32 2, %s24
      $region16: #{bilstm_forward.3} parent=11 // pred_fallthru
        _
    $region12: #{bilstm_forward.3} parent=5 // pred_fallthru
      _
    %p264 = scmp.lt.s32.totalorder %s13, 2
    // Predicated region
    $region17: #{bilstm_forward.3} parent=5 // pred_check
      %p265 = pneg %p264
    $region18: #{bilstm_forward.3} parent=5 // pred_check_branch
      %267 = sbr.rel (%p265) target = $region20
    $region19: #{bilstm_forward.3} parent=5 // pred_region
      // Predicated region
      $region21: #{bilstm_forward.3} parent=19 // pred_check
        %p268 = pneg %p62
      $region22: #{bilstm_forward.3} parent=19 // pred_check_branch
        %270 = sbr.rel (%p268) target = $region24
      $region23: #{bilstm_forward.3} parent=19 // pred_region
        %s271 = smul.u32 %s20, 2
        %s272 = ssub.s32 1, %s271
        %s273 = smul.u32 %s272, %s22
        %s274 = smul.u32 8, %s273
        %s275 = smul.u32 2, %s21
        %p276 = scmp.lt.s32.totalorder %s20, 1
        %s277 = scalar_select %p276, %s20, 1
        %p278 = scmp.lt.s32.totalorder %s274, 7
        %s279 = scalar_select %p278, %s274, 7
        %p280 = scmp.lt.s32.totalorder %s275, 1
        %s281 = scalar_select %p280, %s275, 1
        %s282 = smul.addr %s281, 4
        %s283 = smul.addr %s279, 8
        %s284 = sadd.s32 %s282, %s283
        %s285 = smul.addr %s277, 64
        %s286 = sadd.s32 %s284, %s285
        %s287 = smul.addr %s286, 4
        %s288 = scalar_lea.vmem %s0, %s287
        %s289 = smul.u32 %s20, 2
        %s290 = ssub.s32 1, %s289
        %s291 = smul.u32 %s290, %s22
        %s292 = smul.u32 8, %s291
        %s293 = smul.u32 2, %s21
      $region24: #{bilstm_forward.3} parent=19 // pred_fallthru
        _
      // Predicated region
      $region25: #{bilstm_forward.3} parent=19 // pred_check
        %p294 = pneg %p116
      $region26: #{bilstm_forward.3} parent=19 // pred_check_branch
        %296 = sbr.rel (%p294) target = $region28
      $region27: #{bilstm_forward.3} parent=19 // pred_region
        %s297 = smul.u32 2, %s21
        %p298 = scmp.lt.s32.totalorder %s20, 1
        %s299 = scalar_select %p298, %s20, 1
        %p300 = scmp.lt.s32.totalorder %s297, 1
        %s301 = scalar_select %p300, %s297, 1
        %s302 = smul.addr %s301, 4
        %s303 = smul.addr %s299, 8
        %s304 = sadd.s32 %s302, %s303
        %s305 = smul.addr %s304, 8
        %s306 = scalar_lea.vmem %s2, %s305
        %s307 = smul.u32 2, %s21
      $region28: #{bilstm_forward.3} parent=19 // pred_fallthru
        _
      // Predicated region
      $region29: #{bilstm_forward.3} parent=19 // pred_check
        %p308 = pneg %p142
      $region30: #{bilstm_forward.3} parent=19 // pred_check_branch
        %310 = sbr.rel (%p308) target = $region32
      $region31: #{bilstm_forward.3} parent=19 // pred_region
        %p311 = scmp.lt.s32.totalorder %s20, 1
        %s312 = scalar_select %p311, %s20, 1
        %s313 = smul.addr %s312, 64
        %s314 = smul.addr %s313, 4
        %s315 = scalar_lea.vmem %s3, %s314
      $region32: #{bilstm_forward.3} parent=19 // pred_fallthru
        _
    $region20: #{bilstm_forward.3} parent=5 // pred_fallthru
      _
    %p316 = scmp.le.s32.totalorder 1, %s13
    %p317 = scmp.lt.s32.totalorder %s13, 3
    %p318 = pnand %p316, %p317
    %p319 = pneg %p318
    // Predicated region
    $region33: #{bilstm_forward.3} parent=5 // pred_check
      _
    $region34: #{bilstm_forward.3} parent=5 // pred_check_branch
      %321 = sbr.rel (%p318) target = $region36
    $region35: #{bilstm_forward.3} parent=5 // pred_region
      %s322 = ssub.s32 %s13, 1
      %s323 = smul.u32 %s23, 2
      %s324 = ssub.s32 1, %s323
      %s325 = smul.u32 %s324, %s25
      %s326 = smul.u32 8, %s325
      %s327 = smul.u32 2, %s24
      %p328 = scmp.lt.s32.totalorder %s23, 1
      %s329 = scalar_select %p328, %s23, 1
      %p330 = scmp.lt.s32.totalorder %s326, 7
      %s331 = scalar_select %p330, %s326, 7
      %p332 = scmp.lt.s32.totalorder %s327, 1
      %s333 = scalar_select %p332, %s327, 1
      %s334 = smul.addr %s333, 4
      %s335 = smul.addr %s331, 8
      %s336 = sadd.s32 %s334, %s335
      %s337 = smul.addr %s329, 64
      %s338 = sadd.s32 %s336, %s337
      %s339 = smul.addr %s338, 4
      %s340 = scalar_lea.vmem %s0, %s339
      %p341 = pneg %p68
      %p342 = pneg %p65
      %s343 = smul.u32 2, %s24
      %p344 = scmp.lt.s32.totalorder %s343, 1
      %s345 = scalar_select %p344, %s343, 1
      %s346 = smul.addr %s345, 8
      %s347 = scalar_lea.vmem %s1, %s346
      %p348 = pneg %p94
      %p349 = pneg %p91
      %s350 = smul.u32 2, %s24
      %p351 = scmp.lt.s32.totalorder %s23, 1
      %s352 = scalar_select %p351, %s23, 1
      %p353 = scmp.lt.s32.totalorder %s350, 1
      %s354 = scalar_select %p353, %s350, 1
      %s355 = smul.addr %s354, 4
      %s356 = smul.addr %s352, 8
      %s357 = sadd.s32 %s355, %s356
      %s358 = smul.addr %s357, 8
      %s359 = scalar_lea.vmem %s2, %s358
      %p360 = pneg %p122
      %p361 = pneg %p119
      %p362 = scmp.lt.s32.totalorder %s23, 1
      %s363 = scalar_select %p362, %s23, 1
      %s364 = smul.addr %s363, 64
      %s365 = smul.addr %s364, 4
      %s366 = scalar_lea.vmem %s3, %s365
      %p367 = pneg %p148
      %p368 = pneg %p145
      %p369 = pneg %p184
      %p370 = pneg %p181
      %s371 = smul.u32 %s23, 2
      %s372 = ssub.s32 1, %s371
      %s373 = smul.u32 %s372, %s25
      %s374 = smul.u32 8, %s373
      %s375 = smul.u32 2, %s24
      %p376 = scmp.lt.s32.totalorder %s23, 1
      %s377 = scalar_select %p376, %s23, 1
      %p378 = scmp.lt.s32.totalorder %s374, 7
      %s379 = scalar_select %p378, %s374, 7
      %p380 = scmp.lt.s32.totalorder %s375, 1
      %s381 = scalar_select %p380, %s375, 1
      %s382 = smul.addr %s379, 2
      %s383 = sadd.s32 %s381, %s382
      %s384 = smul.addr %s377, 16
      %s385 = sadd.s32 %s383, %s384
      %s386 = smul.addr %s385, 8
      %s387 = scalar_lea.vmem %s4, %s386
      %p388 = pneg %p212
      %p389 = pneg %p209
      %s390 = smul.u32 2, %s24
      %p391 = scmp.lt.s32.totalorder %s23, 1
      %s392 = scalar_select %p391, %s23, 1
      %p393 = scmp.lt.s32.totalorder %s390, 1
      %s394 = scalar_select %p393, %s390, 1
      %s395 = smul.addr %s392, 2
      %s396 = sadd.s32 %s394, %s395
      %s397 = smul.addr %s396, 8
      %s398 = scalar_lea.vmem %s5, %s397
      %p399 = pneg %p240
      %p400 = pneg %p237
      %s401 = smul.u32 2, %s24
      %p402 = scmp.lt.s32.totalorder %s23, 1
      %s403 = scalar_select %p402, %s23, 1
      %p404 = scmp.lt.s32.totalorder %s401, 1
      %s405 = scalar_select %p404, %s401, 1
      %s406 = smul.addr %s403, 2
      %s407 = sadd.s32 %s405, %s406
      %s408 = smul.addr %s407, 8
      %s409 = scalar_lea.vmem %s6, %s408
      %s410 = smul.u32 %s23, 2
      %s411 = ssub.s32 1, %s410
      %s412 = smul.u32 %s411, %s25
      %s413 = smul.u32 8, %s412
      %s414 = smul.u32 2, %s24
      %p415 = scmp.lt.s32.totalorder %s23, 1
      %s416 = scalar_select %p415, %s23, 1
      %p417 = scmp.lt.s32.totalorder %s413, 7
      %s418 = scalar_select %p417, %s413, 7
      %p419 = scmp.lt.s32.totalorder %s414, 1
      %s420 = scalar_select %p419, %s414, 1
      %s421 = smul.addr %s420, 4
      %s422 = smul.addr %s418, 8
      %s423 = sadd.s32 %s421, %s422
      %s424 = smul.addr %s416, 64
      %s425 = sadd.s32 %s423, %s424
      %s426 = smul.addr %s425, 4
      %s427 = scalar_lea.vmem %s0, %s426
      %s428 = smul.u32 %s23, 2
      %s429 = ssub.s32 1, %s428
      %s430 = smul.u32 %s429, %s25
      %s431 = smul.u32 8, %s430
      %s432 = smul.u32 2, %s24
      %s433 = smul.u32 2, %s24
      %p434 = scmp.lt.s32.totalorder %s433, 1
      %s435 = scalar_select %p434, %s433, 1
      %s436 = smul.addr %s435, 8
      %s437 = scalar_lea.vmem %s1, %s436
      %s438 = smul.u32 2, %s24
      %s439 = smul.u32 2, %s24
      %p440 = scmp.lt.s32.totalorder %s23, 1
      %s441 = scalar_select %p440, %s23, 1
      %p442 = scmp.lt.s32.totalorder %s439, 1
      %s443 = scalar_select %p442, %s439, 1
      %s444 = smul.addr %s443, 4
      %s445 = smul.addr %s441, 8
      %s446 = sadd.s32 %s444, %s445
      %s447 = smul.addr %s446, 8
      %s448 = scalar_lea.vmem %s2, %s447
      %s449 = smul.u32 2, %s24
      %p450 = scmp.lt.s32.totalorder %s23, 1
      %s451 = scalar_select %p450, %s23, 1
      %s452 = smul.addr %s451, 64
      %s453 = smul.addr %s452, 4
      %s454 = scalar_lea.vmem %s3, %s453
      %s455 = smul.u32 %s23, 2
      %s456 = ssub.s32 1, %s455
      %s457 = smul.u32 %s456, %s25
      %s458 = smul.u32 8, %s457
      %s459 = smul.u32 2, %s24
      %p460 = scmp.lt.s32.totalorder %s23, 1
      %s461 = scalar_select %p460, %s23, 1
      %p462 = scmp.lt.s32.totalorder %s458, 7
      %s463 = scalar_select %p462, %s458, 7
      %p464 = scmp.lt.s32.totalorder %s459, 1
      %s465 = scalar_select %p464, %s459, 1
      %s466 = smul.addr %s463, 2
      %s467 = sadd.s32 %s465, %s466
      %s468 = smul.addr %s461, 16
      %s469 = sadd.s32 %s467, %s468
      %s470 = smul.addr %s469, 8
      %s471 = scalar_lea.vmem %s4, %s470
      %s472 = smul.u32 %s23, 2
      %s473 = ssub.s32 1, %s472
      %s474 = smul.u32 %s473, %s25
      %s475 = smul.u32 8, %s474
      %s476 = smul.u32 2, %s24
      %s477 = smul.u32 2, %s24
      %p478 = scmp.lt.s32.totalorder %s23, 1
      %s479 = scalar_select %p478, %s23, 1
      %p480 = scmp.lt.s32.totalorder %s477, 1
      %s481 = scalar_select %p480, %s477, 1
      %s482 = smul.addr %s479, 2
      %s483 = sadd.s32 %s481, %s482
      %s484 = smul.addr %s483, 8
      %s485 = scalar_lea.vmem %s5, %s484
      %s486 = smul.u32 2, %s24
      %s487 = smul.u32 2, %s24
      %p488 = scmp.lt.s32.totalorder %s23, 1
      %s489 = scalar_select %p488, %s23, 1
      %p490 = scmp.lt.s32.totalorder %s487, 1
      %s491 = scalar_select %p490, %s487, 1
      %s492 = smul.addr %s489, 2
      %s493 = sadd.s32 %s491, %s492
      %s494 = smul.addr %s493, 8
      %s495 = scalar_lea.vmem %s6, %s494
      %s496 = smul.u32 2, %s24
      %p498 = scmp.eq.s32.totalorder %s25, 0
      // Predicated region
      $region37: #{bilstm_forward.3} parent=35 // pred_check
        %p499 = pneg %p498
      $region38: #{bilstm_forward.3} parent=35 // pred_check_branch
        %501 = sbr.rel (%p499) target = $region40
      $region39: #{bilstm_forward.3} parent=35 // pred_region
        %502 = vst [vmem:[#allocation2] sm:$0xff] 0.0
        %503 = vst [vmem:[#allocation2 + $0x8] sm:$0xff] 0.0
        %504 = vst [vmem:[#allocation3] sm:$0xff] 0.0
        %505 = vst [vmem:[#allocation3 + $0x8] sm:$0xff] 0.0
      $region40: #{bilstm_forward.3} parent=35 // pred_fallthru
        _
      %s506 = smul.u32 %s23, 2
      %s507 = ssub.s32 1, %s506
      %s508 = smul.u32 %s507, %s25
      %s509 = smul.u32 %s508, 8
      %s510 = smul.u32 %s23, 7
      %v511 = vld [vmem:[%s437] sm:$0xff]
      %v512 = vld [vmem:[%s437 + $0x8] sm:$0xff]
      %v513 = vld [vmem:[#allocation2] sm:$0xff]
      %v514 = vld [vmem:[#allocation2 + $0x8] sm:$0xff]
      %v515 = vld [vmem:[#allocation3] sm:$0xff]
      %v516 = vld [vmem:[#allocation3 + $0x8] sm:$0xff]
      %s517 = sadd.s32 %s509, %s510
      %v518 = vld [vmem:[%s454] sm:$0xff]
      %v519 = vld [vmem:[%s454 + $0x8] sm:$0xff]
      %v520 = vld [vmem:[%s454 + $0x10] sm:$0xff]
      %v521 = vld [vmem:[%s454 + $0x18] sm:$0xff]
      %v522 = vld [vmem:[%s454 + $0x20] sm:$0xff]
      %v523 = vld [vmem:[%s454 + $0x28] sm:$0xff]
      %v524 = vld [vmem:[%s454 + $0x30] sm:$0xff]
      %v525 = vld [vmem:[%s454 + $0x38] sm:$0xff]
      %v526 = vld [vmem:[%s454 + $0x40] sm:$0xff]
      %v527 = vld [vmem:[%s454 + $0x48] sm:$0xff]
      %v528 = vld [vmem:[%s454 + $0x50] sm:$0xff]
      %v529 = vld [vmem:[%s454 + $0x58] sm:$0xff]
      %v530 = vld [vmem:[%s454 + $0x60] sm:$0xff]
      %v531 = vld [vmem:[%s454 + $0x68] sm:$0xff]
      %v532 = vld [vmem:[%s454 + $0x70] sm:$0xff]
      %v533 = vld [vmem:[%s454 + $0x78] sm:$0xff]
      %v534 = vld [vmem:[%s454 + $0x80] sm:$0xff]
      %v535 = vld [vmem:[%s454 + $0x88] sm:$0xff]
      %v536 = vld [vmem:[%s454 + $0x90] sm:$0xff]
      %v537 = vld [vmem:[%s454 + $0x98] sm:$0xff]
      %v538 = vld [vmem:[%s454 + $0xa0] sm:$0xff]
      %v539 = vld [vmem:[%s454 + $0xa8] sm:$0xff]
      %v540 = vld [vmem:[%s454 + $0xb0] sm:$0xff]
      %v541 = vld [vmem:[%s454 + $0xb8] sm:$0xff]
      %v542 = vld [vmem:[%s454 + $0xc0] sm:$0xff]
      %v543 = vld [vmem:[%s454 + $0xc8] sm:$0xff]
      %v544 = vld [vmem:[%s454 + $0xd0] sm:$0xff]
      %v545 = vld [vmem:[%s454 + $0xd8] sm:$0xff]
      %v546 = vld [vmem:[%s454 + $0xe0] sm:$0xff]
      %v547 = vld [vmem:[%s454 + $0xe8] sm:$0xff]
      %v548 = vld [vmem:[%s454 + $0xf0] sm:$0xff]
      %v549 = vld [vmem:[%s454 + $0xf8] sm:$0xff]
      %s550 = smul.u32 %s510, 8
      %s551 = smul.addr %s550, 4
      %s552 = scalar_lea.vmem %s427, %s551
      %v553 = vld [vmem:[%s552] sm:$0xff]
      %v554 = vld [vmem:[%s552 + $0x8] sm:$0xff]
      %v555 = vld [vmem:[%s552 + $0x10] sm:$0xff]
      %v556 = vld [vmem:[%s552 + $0x18] sm:$0xff]
      %v557 = vunpack.c.l.bf16 %v553
      %v558 = vunpack.c.h.bf16 %v553
      %v559 = vunpack.c.l.bf16 %v554
      %v560 = vunpack.c.h.bf16 %v554
      %v561 = vunpack.c.l.bf16 %v555
      %v562 = vunpack.c.h.bf16 %v555
      %v563 = vunpack.c.l.bf16 %v556
      %v564 = vunpack.c.h.bf16 %v556
      %v565 = vld [vmem:[%s448] sm:$0xff]
      %v566 = vld [vmem:[%s448 + $0x8] sm:$0xff]
      %v567 = vld [vmem:[%s448 + $0x10] sm:$0xff]
      %v568 = vld [vmem:[%s448 + $0x18] sm:$0xff]
      %v569 = vld [vmem:[%s448 + $0x20] sm:$0xff]
      %v570 = vld [vmem:[%s448 + $0x28] sm:$0xff]
      %v571 = vld [vmem:[%s448 + $0x30] sm:$0xff]
      %v572 = vld [vmem:[%s448 + $0x38] sm:$0xff]
      %v573 = vadd.f32 %v557, %v565
      %v574 = vadd.f32 %v558, %v566
      %v575 = vadd.f32 %v559, %v567
      %v576 = vadd.f32 %v560, %v568
      %v577 = vadd.f32 %v561, %v569
      %v578 = vadd.f32 %v562, %v570
      %v579 = vadd.f32 %v563, %v571
      %v580 = vadd.f32 %v564, %v572
      %v581 = vpack.c.bf16 %v514, %v513
      %v614 = vunpack.c.l.b16 %v518
      %v615 = vunpack.c.h.b16 %v518
      %v616 = vunpack.c.l.b16 %v519
      %v617 = vunpack.c.h.b16 %v519
      %v618 = vunpack.c.l.b16 %v520
      %v619 = vunpack.c.h.b16 %v520
      %v620 = vunpack.c.l.b16 %v521
      %v621 = vunpack.c.h.b16 %v521
      %v622 = vunpack.c.l.b16 %v522
      %v623 = vunpack.c.h.b16 %v522
      %v624 = vunpack.c.l.b16 %v523
      %v625 = vunpack.c.h.b16 %v523
      %v626 = vunpack.c.l.b16 %v524
      %v627 = vunpack.c.h.b16 %v524
      %v628 = vunpack.c.l.b16 %v525
      %v629 = vunpack.c.h.b16 %v525
      %v630 = vunpack.c.l.b16 %v526
      %v631 = vunpack.c.h.b16 %v526
      %v632 = vunpack.c.l.b16 %v527
      %v633 = vunpack.c.h.b16 %v527
      %v634 = vunpack.c.l.b16 %v528
      %v635 = vunpack.c.h.b16 %v528
      %v636 = vunpack.c.l.b16 %v529
      %v637 = vunpack.c.h.b16 %v529
      %v638 = vunpack.c.l.b16 %v530
      %v639 = vunpack.c.h.b16 %v530
      %v640 = vunpack.c.l.b16 %v531
      %v641 = vunpack.c.h.b16 %v531
      %v642 = vunpack.c.l.b16 %v532
      %v643 = vunpack.c.h.b16 %v532
      %v644 = vunpack.c.l.b16 %v533
      %v645 = vunpack.c.h.b16 %v533
      %v646 = vunpack.c.l.b16 %v534
      %v647 = vunpack.c.h.b16 %v534
      %v648 = vunpack.c.l.b16 %v535
      %v649 = vunpack.c.h.b16 %v535
      %v650 = vunpack.c.l.b16 %v536
      %v651 = vunpack.c.h.b16 %v536
      %v652 = vunpack.c.l.b16 %v537
      %v653 = vunpack.c.h.b16 %v537
      %v654 = vunpack.c.l.b16 %v538
      %v655 = vunpack.c.h.b16 %v538
      %v656 = vunpack.c.l.b16 %v539
      %v657 = vunpack.c.h.b16 %v539
      %v658 = vunpack.c.l.b16 %v540
      %v659 = vunpack.c.h.b16 %v540
      %v660 = vunpack.c.l.b16 %v541
      %v661 = vunpack.c.h.b16 %v541
      %v662 = vunpack.c.l.b16 %v542
      %v663 = vunpack.c.h.b16 %v542
      %v664 = vunpack.c.l.b16 %v543
      %v665 = vunpack.c.h.b16 %v543
      %v666 = vunpack.c.l.b16 %v544
      %v667 = vunpack.c.h.b16 %v544
      %v668 = vunpack.c.l.b16 %v545
      %v669 = vunpack.c.h.b16 %v545
      %v670 = vunpack.c.l.b16 %v546
      %v671 = vunpack.c.h.b16 %v546
      %v672 = vunpack.c.l.b16 %v547
      %v673 = vunpack.c.h.b16 %v547
      %v674 = vunpack.c.l.b16 %v548
      %v675 = vunpack.c.h.b16 %v548
      %v676 = vunpack.c.l.b16 %v549
      %v677 = vunpack.c.h.b16 %v549
      %v678 = vpack.c.b16 %v618, %v614
      %v679 = vpack.c.b16 %v619, %v615
      %v680 = vpack.c.b16 %v620, %v616
      %v681 = vpack.c.b16 %v621, %v617
      %v682 = vpack.c.b16 %v626, %v622
      %v683 = vpack.c.b16 %v627, %v623
      %v684 = vpack.c.b16 %v628, %v624
      %v685 = vpack.c.b16 %v629, %v625
      %v686 = vpack.c.b16 %v634, %v630
      %v687 = vpack.c.b16 %v635, %v631
      %v688 = vpack.c.b16 %v636, %v632
      %v689 = vpack.c.b16 %v637, %v633
      %v690 = vpack.c.b16 %v642, %v638
      %v691 = vpack.c.b16 %v643, %v639
      %v692 = vpack.c.b16 %v644, %v640
      %v693 = vpack.c.b16 %v645, %v641
      %v694 = vpack.c.b16 %v650, %v646
      %v695 = vpack.c.b16 %v651, %v647
      %v696 = vpack.c.b16 %v652, %v648
      %v697 = vpack.c.b16 %v653, %v649
      %v698 = vpack.c.b16 %v658, %v654
      %v699 = vpack.c.b16 %v659, %v655
      %v700 = vpack.c.b16 %v660, %v656
      %v701 = vpack.c.b16 %v661, %v657
      %v702 = vpack.c.b16 %v666, %v662
      %v703 = vpack.c.b16 %v667, %v663
      %v704 = vpack.c.b16 %v668, %v664
      %v705 = vpack.c.b16 %v669, %v665
      %v706 = vpack.c.b16 %v674, %v670
      %v707 = vpack.c.b16 %v675, %v671
      %v708 = vpack.c.b16 %v676, %v672
      %v709 = vpack.c.b16 %v677, %v673
      %742 = vmatprep.subr.bf16.mxu0 %v679
      %743 = vmatpush1.bf16.msra.mxu0 %v678
      %744 = vmatprep.subr.bf16.mxu0 %v683
      %745 = vmatpush1.bf16.msra.mxu0 %v682
      %746 = vmatprep.subr.bf16.mxu0 %v687
      %747 = vmatpush1.bf16.msra.mxu0 %v686
      %748 = vmatprep.subr.bf16.mxu0 %v691
      %749 = vmatpush1.bf16.msra.mxu0 %v690
      %750 = vmatprep.subr.bf16.mxu0 %v695
      %751 = vmatpush1.bf16.msra.mxu0 %v694
      %752 = vmatprep.subr.bf16.mxu0 %v699
      %753 = vmatpush1.bf16.msra.mxu0 %v698
      %754 = vmatprep.subr.bf16.mxu0 %v703
      %755 = vmatpush1.bf16.msra.mxu0 %v702
      %756 = vmatprep.subr.bf16.mxu0 %v707
      %757 = vmatpush1.bf16.msra.mxu0 %v706
      %758 = vmatprep.subr.bf16.mxu0 0
      %759 = vmatpush1.bf16.msra.mxu0 0
      %760 = vmatprep.subr.bf16.mxu0 0
      %761 = vmatpush1.bf16.msra.mxu0 0
      %762 = vmatprep.subr.bf16.mxu0 0
      %763 = vmatpush1.bf16.msra.mxu0 0
      %764 = vmatprep.subr.bf16.mxu0 0
      %765 = vmatpush1.bf16.msra.mxu0 0
      %766 = vmatprep.subr.bf16.mxu0 0
      %767 = vmatpush1.bf16.msra.mxu0 0
      %768 = vmatprep.subr.bf16.mxu0 0
      %769 = vmatpush1.bf16.msra.mxu0 0
      %770 = vmatprep.subr.bf16.mxu0 0
      %771 = vmatpush1.bf16.msra.mxu0 0
      %772 = vmatprep.subr.bf16.mxu0 0
      %773 = vmatpush1.bf16.msra.mxu0 0
      %774 = vmatprep.mubr.bf16.mxu0 0
      %775 = vmatmul.mubr.bf16.gmra.mrb[0].mxu0 %v581
      %v776 = vpop.f32.mrb[0].mxu0
      %v777 = vadd.f32 0.0, %v776
      %v778 = vpop.f32.mrb[0].mxu0
      %v779 = vadd.f32 0.0, %v778
      %v780 = vpop.f32.mrb[0].mxu0
      %v781 = vadd.f32 0.0, %v780
      %v782 = vpop.f32.mrb[0].mxu0
      %v783 = vadd.f32 0.0, %v782
      %784 = vdwg.mxu0
      %785 = vmatprep.subr.bf16.mxu0 %v681
      %786 = vmatpush1.bf16.msra.mxu0 %v680
      %787 = vmatprep.subr.bf16.mxu0 %v685
      %788 = vmatpush1.bf16.msra.mxu0 %v684
      %789 = vmatprep.subr.bf16.mxu0 %v689
      %790 = vmatpush1.bf16.msra.mxu0 %v688
      %791 = vmatprep.subr.bf16.mxu0 %v693
      %792 = vmatpush1.bf16.msra.mxu0 %v692
      %793 = vmatprep.subr.bf16.mxu0 %v697
      %794 = vmatpush1.bf16.msra.mxu0 %v696
      %795 = vmatprep.subr.bf16.mxu0 %v701
      %796 = vmatpush1.bf16.msra.mxu0 %v700
      %797 = vmatprep.subr.bf16.mxu0 %v705
      %798 = vmatpush1.bf16.msra.mxu0 %v704
      %799 = vmatprep.subr.bf16.mxu0 %v709
      %800 = vmatpush1.bf16.msra.mxu0 %v708
      %801 = vmatprep.subr.bf16.mxu0 0
      %802 = vmatpush1.bf16.msra.mxu0 0
      %803 = vmatprep.subr.bf16.mxu0 0
      %804 = vmatpush1.bf16.msra.mxu0 0
      %805 = vmatprep.subr.bf16.mxu0 0
      %806 = vmatpush1.bf16.msra.mxu0 0
      %807 = vmatprep.subr.bf16.mxu0 0
      %808 = vmatpush1.bf16.msra.mxu0 0
      %809 = vmatprep.subr.bf16.mxu0 0
      %810 = vmatpush1.bf16.msra.mxu0 0
      %811 = vmatprep.subr.bf16.mxu0 0
      %812 = vmatpush1.bf16.msra.mxu0 0
      %813 = vmatprep.subr.bf16.mxu0 0
      %814 = vmatpush1.bf16.msra.mxu0 0
      %815 = vmatprep.subr.bf16.mxu0 0
      %816 = vmatpush1.bf16.msra.mxu0 0
      %817 = vmatprep.mubr.bf16.mxu0 0
      %818 = vmatmul.mubr.bf16.gmra.mrb[0].mxu0 %v581
      %v819 = vpop.f32.mrb[0].mxu0
      %v820 = vadd.f32 0.0, %v819
      %v821 = vpop.f32.mrb[0].mxu0
      %v822 = vadd.f32 0.0, %v821
      %v823 = vpop.f32.mrb[0].mxu0
      %v824 = vadd.f32 0.0, %v823
      %v825 = vpop.f32.mrb[0].mxu0
      %v826 = vadd.f32 0.0, %v825
      %827 = vdwg.mxu0
      %v828 = vadd.f32 %v573, %v777
      %v829 = vadd.f32 %v574, %v779
      %v830 = vadd.f32 %v575, %v820
      %v831 = vadd.f32 %v576, %v822
      %v832 = vadd.f32 %v577, %v781
      %v833 = vadd.f32 %v578, %v783
      %v834 = vadd.f32 %v579, %v824
      %v835 = vadd.f32 %v580, %v826
      %v836 = vxor.u32 %v828, 2147483648
      %v837 = vxor.u32 %v832, 2147483648
      %v838 = vmul.f32 %v836, 1.442695
      %v839 = vpow.pop %v838
      %v840 = vmul.f32 %v837, 1.442695
      %v841 = vpow.pop %v840
      %v842 = vadd.f32 %v839, 1.0
      %v843 = vadd.f32 %v841, 1.0
      %v844 = vrcp.pop %v842
      %v845 = vmul.f32 1.0, %v844
      %v846 = vrcp.pop %v843
      %v847 = vmul.f32 1.0, %v846
      %v848 = vxor.u32 %v829, 2147483648
      %v849 = vxor.u32 %v833, 2147483648
      %v850 = vmul.f32 %v848, 1.442695
      %v851 = vpow.pop %v850
      %v852 = vmul.f32 %v849, 1.442695
      %v853 = vpow.pop %v852
      %v854 = vadd.f32 %v851, 1.0
      %v855 = vadd.f32 %v853, 1.0
      %v856 = vrcp.pop %v854
      %v857 = vmul.f32 1.0, %v856
      %v858 = vrcp.pop %v855
      %v859 = vmul.f32 1.0, %v858
      %v860 = vtanh.pop %v830
      %v861 = vtanh.pop %v834
      %v862 = vxor.u32 %v831, 2147483648
      %v863 = vxor.u32 %v835, 2147483648
      %v864 = vmul.f32 %v862, 1.442695
      %v865 = vpow.pop %v864
      %v866 = vmul.f32 %v863, 1.442695
      %v867 = vpow.pop %v866
      %v868 = vadd.f32 %v865, 1.0
      %v869 = vadd.f32 %v867, 1.0
      %v870 = vrcp.pop %v868
      %v871 = vmul.f32 1.0, %v870
      %v872 = vrcp.pop %v869
      %v873 = vmul.f32 1.0, %v872
      %v874 = vmul.f32 %v857, %v515
      %v875 = vmul.f32 %v859, %v516
      %v876 = vmul.f32 %v845, %v860
      %v877 = vmul.f32 %v847, %v861
      %v878 = vadd.f32 %v874, %v876
      %v879 = vadd.f32 %v875, %v877
      %v880 = vtanh.pop %v878
      %v881 = vtanh.pop %v879
      %v882 = vmul.f32 %v871, %v880
      %v883 = vmul.f32 %v873, %v881
      %v884 = vstv %s517
      %vm885 = vcmp.lt.s32.totalorder %v884, %v511
      %vm886 = vcmp.lt.s32.totalorder %v884, %v512
      %v887 = vsel %vm885, 1, 0
      %v888 = vsel %vm886, 1, 0
      %889 = vset.pattern.permute.xlu0 0
      %890 = vperm.xlu0 %889, %v887
      %v891 = vpop.permute.xlu0 %890
      %892 = vset.pattern.permute.xlu0 0
      %893 = vperm.xlu0 %892, %v888
      %v894 = vpop.permute.xlu0 %893
      %vm895 = vcmp.eq.s32.totalorder %v891, 1
      %vm896 = vcmp.eq.s32.totalorder %v894, 1
      %v897 = vsel %vm895, %v882, %v513
      %v898 = vsel %vm896, %v883, %v514
      %v899 = vsel %vm895, %v878, %v515
      %v900 = vsel %vm896, %v879, %v516
      %v901 = vsel %vm895, %v882, 0.0
      %v902 = vsel %vm896, %v883, 0.0
      %s903 = smul.u32 %s510, 16
      %s904 = scalar_lea.vmem %s471, %s903
      %905 = vst [vmem:[%s904] sm:$0xff] %v901
      %906 = vst [vmem:[%s904 + $0x8] sm:$0xff] %v902
      %s907 = sadd.s32 %s507, %s510
      %s908 = sadd.s32 %s509, %s907
      %v909 = vld [vmem:[%s454] sm:$0xff]
      %v910 = vld [vmem:[%s454 + $0x8] sm:$0xff]
      %v911 = vld [vmem:[%s454 + $0x10] sm:$0xff]
      %v912 = vld [vmem:[%s454 + $0x18] sm:$0xff]
      %v913 = vld [vmem:[%s454 + $0x20] sm:$0xff]
      %v914 = vld [vmem:[%s454 + $0x28] sm:$0xff]
      %v915 = vld [vmem:[%s454 + $0x30] sm:$0xff]
      %v916 = vld [vmem:[%s454 + $0x38] sm:$0xff]
      %v917 = vld [vmem:[%s454 + $0x40] sm:$0xff]
      %v918 = vld [vmem:[%s454 + $0x48] sm:$0xff]
      %v919 = vld [vmem:[%s454 + $0x50] sm:$0xff]
      %v920 = vld [vmem:[%s454 + $0x58] sm:$0xff]
      %v921 = vld [vmem:[%s454 + $0x60] sm:$0xff]
      %v922 = vld [vmem:[%s454 + $0x68] sm:$0xff]
      %v923 = vld [vmem:[%s454 + $0x70] sm:$0xff]
      %v924 = vld [vmem:[%s454 + $0x78] sm:$0xff]
      %v925 = vld [vmem:[%s454 + $0x80] sm:$0xff]
      %v926 = vld [vmem:[%s454 + $0x88] sm:$0xff]
      %v927 = vld [vmem:[%s454 + $0x90] sm:$0xff]
      %v928 = vld [vmem:[%s454 + $0x98] sm:$0xff]
      %v929 = vld [vmem:[%s454 + $0xa0] sm:$0xff]
      %v930 = vld [vmem:[%s454 + $0xa8] sm:$0xff]
      %v931 = vld [vmem:[%s454 + $0xb0] sm:$0xff]
      %v932 = vld [vmem:[%s454 + $0xb8] sm:$0xff]
      %v933 = vld [vmem:[%s454 + $0xc0] sm:$0xff]
      %v934 = vld [vmem:[%s454 + $0xc8] sm:$0xff]
      %v935 = vld [vmem:[%s454 + $0xd0] sm:$0xff]
      %v936 = vld [vmem:[%s454 + $0xd8] sm:$0xff]
      %v937 = vld [vmem:[%s454 + $0xe0] sm:$0xff]
      %v938 = vld [vmem:[%s454 + $0xe8] sm:$0xff]
      %v939 = vld [vmem:[%s454 + $0xf0] sm:$0xff]
      %v940 = vld [vmem:[%s454 + $0xf8] sm:$0xff]
      %s941 = smul.u32 %s907, 8
      %s942 = smul.addr %s941, 4
      %s943 = scalar_lea.vmem %s427, %s942
      %v944 = vld [vmem:[%s943] sm:$0xff]
      %v945 = vld [vmem:[%s943 + $0x8] sm:$0xff]
      %v946 = vld [vmem:[%s943 + $0x10] sm:$0xff]
      %v947 = vld [vmem:[%s943 + $0x18] sm:$0xff]
      %v948 = vunpack.c.l.bf16 %v944
      %v949 = vunpack.c.h.bf16 %v944
      %v950 = vunpack.c.l.bf16 %v945
      %v951 = vunpack.c.h.bf16 %v945
      %v952 = vunpack.c.l.bf16 %v946
      %v953 = vunpack.c.h.bf16 %v946
      %v954 = vunpack.c.l.bf16 %v947
      %v955 = vunpack.c.h.bf16 %v947
      %v956 = vld [vmem:[%s448] sm:$0xff]
      %v957 = vld [vmem:[%s448 + $0x8] sm:$0xff]
      %v958 = vld [vmem:[%s448 + $0x10] sm:$0xff]
      %v959 = vld [vmem:[%s448 + $0x18] sm:$0xff]
      %v960 = vld [vmem:[%s448 + $0x20] sm:$0xff]
      %v961 = vld [vmem:[%s448 + $0x28] sm:$0xff]
      %v962 = vld [vmem:[%s448 + $0x30] sm:$0xff]
      %v963 = vld [vmem:[%s448 + $0x38] sm:$0xff]
      %v964 = vadd.f32 %v948, %v956
      %v965 = vadd.f32 %v949, %v957
      %v966 = vadd.f32 %v950, %v958
      %v967 = vadd.f32 %v951, %v959
      %v968 = vadd.f32 %v952, %v960
      %v969 = vadd.f32 %v953, %v961
      %v970 = vadd.f32 %v954, %v962
      %v971 = vadd.f32 %v955, %v963
      %v972 = vpack.c.bf16 %v898, %v897
      %v1005 = vunpack.c.l.b16 %v909
      %v1006 = vunpack.c.h.b16 %v909
      %v1007 = vunpack.c.l.b16 %v910
      %v1008 = vunpack.c.h.b16 %v910
      %v1009 = vunpack.c.l.b16 %v911
      %v1010 = vunpack.c.h.b16 %v911
      %v1011 = vunpack.c.l.b16 %v912
      %v1012 = vunpack.c.h.b16 %v912
      %v1013 = vunpack.c.l.b16 %v913
      %v1014 = vunpack.c.h.b16 %v913
      %v1015 = vunpack.c.l.b16 %v914
      %v1016 = vunpack.c.h.b16 %v914
      %v1017 = vunpack.c.l.b16 %v915
      %v1018 = vunpack.c.h.b16 %v915
      %v1019 = vunpack.c.l.b16 %v916
      %v1020 = vunpack.c.h.b16 %v916
      %v1021 = vunpack.c.l.b16 %v917
      %v1022 = vunpack.c.h.b16 %v917
      %v1023 = vunpack.c.l.b16 %v918
      %v1024 = vunpack.c.h.b16 %v918
      %v1025 = vunpack.c.l.b16 %v919
      %v1026 = vunpack.c.h.b16 %v919
      %v1027 = vunpack.c.l.b16 %v920
      %v1028 = vunpack.c.h.b16 %v920
      %v1029 = vunpack.c.l.b16 %v921
      %v1030 = vunpack.c.h.b16 %v921
      %v1031 = vunpack.c.l.b16 %v922
      %v1032 = vunpack.c.h.b16 %v922
      %v1033 = vunpack.c.l.b16 %v923
      %v1034 = vunpack.c.h.b16 %v923
      %v1035 = vunpack.c.l.b16 %v924
      %v1036 = vunpack.c.h.b16 %v924
      %v1037 = vunpack.c.l.b16 %v925
      %v1038 = vunpack.c.h.b16 %v925
      %v1039 = vunpack.c.l.b16 %v926
      %v1040 = vunpack.c.h.b16 %v926
      %v1041 = vunpack.c.l.b16 %v927
      %v1042 = vunpack.c.h.b16 %v927
      %v1043 = vunpack.c.l.b16 %v928
      %v1044 = vunpack.c.h.b16 %v928
      %v1045 = vunpack.c.l.b16 %v929
      %v1046 = vunpack.c.h.b16 %v929
      %v1047 = vunpack.c.l.b16 %v930
      %v1048 = vunpack.c.h.b16 %v930
      %v1049 = vunpack.c.l.b16 %v931
      %v1050 = vunpack.c.h.b16 %v931
      %v1051 = vunpack.c.l.b16 %v932
      %v1052 = vunpack.c.h.b16 %v932
      %v1053 = vunpack.c.l.b16 %v933
      %v1054 = vunpack.c.h.b16 %v933
      %v1055 = vunpack.c.l.b16 %v934
      %v1056 = vunpack.c.h.b16 %v934
      %v1057 = vunpack.c.l.b16 %v935
      %v1058 = vunpack.c.h.b16 %v935
      %v1059 = vunpack.c.l.b16 %v936
      %v1060 = vunpack.c.h.b16 %v936
      %v1061 = vunpack.c.l.b16 %v937
      %v1062 = vunpack.c.h.b16 %v937
      %v1063 = vunpack.c.l.b16 %v938
      %v1064 = vunpack.c.h.b16 %v938
      %v1065 = vunpack.c.l.b16 %v939
      %v1066 = vunpack.c.h.b16 %v939
      %v1067 = vunpack.c.l.b16 %v940
      %v1068 = vunpack.c.h.b16 %v940
      %v1069 = vpack.c.b16 %v1009, %v1005
      %v1070 = vpack.c.b16 %v1010, %v1006
      %v1071 = vpack.c.b16 %v1011, %v1007
      %v1072 = vpack.c.b16 %v1012, %v1008
      %v1073 = vpack.c.b16 %v1017, %v1013
      %v1074 = vpack.c.b16 %v1018, %v1014
      %v1075 = vpack.c.b16 %v1019, %v1015
      %v1076 = vpack.c.b16 %v1020, %v1016
      %v1077 = vpack.c.b16 %v1025, %v1021
      %v1078 = vpack.c.b16 %v1026, %v1022
      %v1079 = vpack.c.b16 %v1027, %v1023
      %v1080 = vpack.c.b16 %v1028, %v1024
      %v1081 = vpack.c.b16 %v1033, %v1029
      %v1082 = vpack.c.b16 %v1034, %v1030
      %v1083 = vpack.c.b16 %v1035, %v1031
      %v1084 = vpack.c.b16 %v1036, %v1032
      %v1085 = vpack.c.b16 %v1041, %v1037
      %v1086 = vpack.c.b16 %v1042, %v1038
      %v1087 = vpack.c.b16 %v1043, %v1039
      %v1088 = vpack.c.b16 %v1044, %v1040
      %v1089 = vpack.c.b16 %v1049, %v1045
      %v1090 = vpack.c.b16 %v1050, %v1046
      %v1091 = vpack.c.b16 %v1051, %v1047
      %v1092 = vpack.c.b16 %v1052, %v1048
      %v1093 = vpack.c.b16 %v1057, %v1053
      %v1094 = vpack.c.b16 %v1058, %v1054
      %v1095 = vpack.c.b16 %v1059, %v1055
      %v1096 = vpack.c.b16 %v1060, %v1056
      %v1097 = vpack.c.b16 %v1065, %v1061
      %v1098 = vpack.c.b16 %v1066, %v1062
      %v1099 = vpack.c.b16 %v1067, %v1063
      %v1100 = vpack.c.b16 %v1068, %v1064
      %1133 = vmatprep.subr.bf16.mxu0 %v1070
      %1134 = vmatpush1.bf16.msra.mxu0 %v1069
      %1135 = vmatprep.subr.bf16.mxu0 %v1074
      %1136 = vmatpush1.bf16.msra.mxu0 %v1073
      %1137 = vmatprep.subr.bf16.mxu0 %v1078
      %1138 = vmatpush1.bf16.msra.mxu0 %v1077
      %1139 = vmatprep.subr.bf16.mxu0 %v1082
      %1140 = vmatpush1.bf16.msra.mxu0 %v1081
      %1141 = vmatprep.subr.bf16.mxu0 %v1086
      %1142 = vmatpush1.bf16.msra.mxu0 %v1085
      %1143 = vmatprep.subr.bf16.mxu0 %v1090
      %1144 = vmatpush1.bf16.msra.mxu0 %v1089
      %1145 = vmatprep.subr.bf16.mxu0 %v1094
      %1146 = vmatpush1.bf16.msra.mxu0 %v1093
      %1147 = vmatprep.subr.bf16.mxu0 %v1098
      %1148 = vmatpush1.bf16.msra.mxu0 %v1097
      %1149 = vmatprep.subr.bf16.mxu0 0
      %1150 = vmatpush1.bf16.msra.mxu0 0
      %1151 = vmatprep.subr.bf16.mxu0 0
      %1152 = vmatpush1.bf16.msra.mxu0 0
      %1153 = vmatprep.subr.bf16.mxu0 0
      %1154 = vmatpush1.bf16.msra.mxu0 0
      %1155 = vmatprep.subr.bf16.mxu0 0
      %1156 = vmatpush1.bf16.msra.mxu0 0
      %1157 = vmatprep.subr.bf16.mxu0 0
      %1158 = vmatpush1.bf16.msra.mxu0 0
      %1159 = vmatprep.subr.bf16.mxu0 0
      %1160 = vmatpush1.bf16.msra.mxu0 0
      %1161 = vmatprep.subr.bf16.mxu0 0
      %1162 = vmatpush1.bf16.msra.mxu0 0
      %1163 = vmatprep.subr.bf16.mxu0 0
      %1164 = vmatpush1.bf16.msra.mxu0 0
      %1165 = vmatprep.mubr.bf16.mxu0 0
      %1166 = vmatmul.mubr.bf16.gmra.mrb[0].mxu0 %v972
      %v1167 = vpop.f32.mrb[0].mxu0
      %v1168 = vadd.f32 0.0, %v1167
      %v1169 = vpop.f32.mrb[0].mxu0
      %v1170 = vadd.f32 0.0, %v1169
      %v1171 = vpop.f32.mrb[0].mxu0
      %v1172 = vadd.f32 0.0, %v1171
      %v1173 = vpop.f32.mrb[0].mxu0
      %v1174 = vadd.f32 0.0, %v1173
      %1175 = vdwg.mxu0
      %1176 = vmatprep.subr.bf16.mxu0 %v1072
      %1177 = vmatpush1.bf16.msra.mxu0 %v1071
      %1178 = vmatprep.subr.bf16.mxu0 %v1076
      %1179 = vmatpush1.bf16.msra.mxu0 %v1075
      %1180 = vmatprep.subr.bf16.mxu0 %v1080
      %1181 = vmatpush1.bf16.msra.mxu0 %v1079
      %1182 = vmatprep.subr.bf16.mxu0 %v1084
      %1183 = vmatpush1.bf16.msra.mxu0 %v1083
      %1184 = vmatprep.subr.bf16.mxu0 %v1088
      %1185 = vmatpush1.bf16.msra.mxu0 %v1087
      %1186 = vmatprep.subr.bf16.mxu0 %v1092
      %1187 = vmatpush1.bf16.msra.mxu0 %v1091
      %1188 = vmatprep.subr.bf16.mxu0 %v1096
      %1189 = vmatpush1.bf16.msra.mxu0 %v1095
      %1190 = vmatprep.subr.bf16.mxu0 %v1100
      %1191 = vmatpush1.bf16.msra.mxu0 %v1099
      %1192 = vmatprep.subr.bf16.mxu0 0
      %1193 = vmatpush1.bf16.msra.mxu0 0
      %1194 = vmatprep.subr.bf16.mxu0 0
      %1195 = vmatpush1.bf16.msra.mxu0 0
      %1196 = vmatprep.subr.bf16.mxu0 0
      %1197 = vmatpush1.bf16.msra.mxu0 0
      %1198 = vmatprep.subr.bf16.mxu0 0
      %1199 = vmatpush1.bf16.msra.mxu0 0
      %1200 = vmatprep.subr.bf16.mxu0 0
      %1201 = vmatpush1.bf16.msra.mxu0 0
      %1202 = vmatprep.subr.bf16.mxu0 0
      %1203 = vmatpush1.bf16.msra.mxu0 0
      %1204 = vmatprep.subr.bf16.mxu0 0
      %1205 = vmatpush1.bf16.msra.mxu0 0
      %1206 = vmatprep.subr.bf16.mxu0 0
      %1207 = vmatpush1.bf16.msra.mxu0 0
      %1208 = vmatprep.mubr.bf16.mxu0 0
      %1209 = vmatmul.mubr.bf16.gmra.mrb[0].mxu0 %v972
      %v1210 = vpop.f32.mrb[0].mxu0
      %v1211 = vadd.f32 0.0, %v1210
      %v1212 = vpop.f32.mrb[0].mxu0
      %v1213 = vadd.f32 0.0, %v1212
      %v1214 = vpop.f32.mrb[0].mxu0
      %v1215 = vadd.f32 0.0, %v1214
      %v1216 = vpop.f32.mrb[0].mxu0
      %v1217 = vadd.f32 0.0, %v1216
      %1218 = vdwg.mxu0
      %v1219 = vadd.f32 %v964, %v1168
      %v1220 = vadd.f32 %v965, %v1170
      %v1221 = vadd.f32 %v966, %v1211
      %v1222 = vadd.f32 %v967, %v1213
      %v1223 = vadd.f32 %v968, %v1172
      %v1224 = vadd.f32 %v969, %v1174
      %v1225 = vadd.f32 %v970, %v1215
      %v1226 = vadd.f32 %v971, %v1217
      %v1227 = vxor.u32 %v1219, 2147483648
      %v1228 = vxor.u32 %v1223, 2147483648
      %v1229 = vmul.f32 %v1227, 1.442695
      %v1230 = vpow.pop %v1229
      %v1231 = vmul.f32 %v1228, 1.442695
      %v1232 = vpow.pop %v1231
      %v1233 = vadd.f32 %v1230, 1.0
      %v1234 = vadd.f32 %v1232, 1.0
      %v1235 = vrcp.pop %v1233
      %v1236 = vmul.f32 1.0, %v1235
      %v1237 = vrcp.pop %v1234
      %v1238 = vmul.f32 1.0, %v1237
      %v1239 = vxor.u32 %v1220, 2147483648
      %v1240 = vxor.u32 %v1224, 2147483648
      %v1241 = vmul.f32 %v1239, 1.442695
      %v1242 = vpow.pop %v1241
      %v1243 = vmul.f32 %v1240, 1.442695
      %v1244 = vpow.pop %v1243
      %v1245 = vadd.f32 %v1242, 1.0
      %v1246 = vadd.f32 %v1244, 1.0
      %v1247 = vrcp.pop %v1245
      %v1248 = vmul.f32 1.0, %v1247
      %v1249 = vrcp.pop %v1246
      %v1250 = vmul.f32 1.0, %v1249
      %v1251 = vtanh.pop %v1221
      %v1252 = vtanh.pop %v1225
      %v1253 = vxor.u32 %v1222, 2147483648
      %v1254 = vxor.u32 %v1226, 2147483648
      %v1255 = vmul.f32 %v1253, 1.442695
      %v1256 = vpow.pop %v1255
      %v1257 = vmul.f32 %v1254, 1.442695
      %v1258 = vpow.pop %v1257
      %v1259 = vadd.f32 %v1256, 1.0
      %v1260 = vadd.f32 %v1258, 1.0
      %v1261 = vrcp.pop %v1259
      %v1262 = vmul.f32 1.0, %v1261
      %v1263 = vrcp.pop %v1260
      %v1264 = vmul.f32 1.0, %v1263
      %v1265 = vmul.f32 %v1248, %v899
      %v1266 = vmul.f32 %v1250, %v900
      %v1267 = vmul.f32 %v1236, %v1251
      %v1268 = vmul.f32 %v1238, %v1252
      %v1269 = vadd.f32 %v1265, %v1267
      %v1270 = vadd.f32 %v1266, %v1268
      %v1271 = vtanh.pop %v1269
      %v1272 = vtanh.pop %v1270
      %v1273 = vmul.f32 %v1262, %v1271
      %v1274 = vmul.f32 %v1264, %v1272
      %v1275 = vstv %s908
      %vm1276 = vcmp.lt.s32.totalorder %v1275, %v511
      %vm1277 = vcmp.lt.s32.totalorder %v1275, %v512
      %v1278 = vsel %vm1276, 1, 0
      %v1279 = vsel %vm1277, 1, 0
      %1280 = vset.pattern.permute.xlu0 0
      %1281 = vperm.xlu0 %1280, %v1278
      %v1282 = vpop.permute.xlu0 %1281
      %1283 = vset.pattern.permute.xlu0 0
      %1284 = vperm.xlu0 %1283, %v1279
      %v1285 = vpop.permute.xlu0 %1284
      %vm1286 = vcmp.eq.s32.totalorder %v1282, 1
      %vm1287 = vcmp.eq.s32.totalorder %v1285, 1
      %v1288 = vsel %vm1286, %v1273, %v897
      %v1289 = vsel %vm1287, %v1274, %v898
      %v1290 = vsel %vm1286, %v1269, %v899
      %v1291 = vsel %vm1287, %v1270, %v900
      %v1292 = vsel %vm1286, %v1273, 0.0
      %v1293 = vsel %vm1287, %v1274, 0.0
      %s1294 = smul.u32 %s907, 16
      %s1295 = scalar_lea.vmem %s471, %s1294
      %1296 = vst [vmem:[%s1295] sm:$0xff] %v1292
      %1297 = vst [vmem:[%s1295 + $0x8] sm:$0xff] %v1293
      %s1298 = smul.u32 %s507, 2
      %s1299 = sadd.s32 %s1298, %s510
      %s1300 = sadd.s32 %s509, %s1299
      %v1301 = vld [vmem:[%s454] sm:$0xff]
      %v1302 = vld [vmem:[%s454 + $0x8] sm:$0xff]
      %v1303 = vld [vmem:[%s454 + $0x10] sm:$0xff]
      %v1304 = vld [vmem:[%s454 + $0x18] sm:$0xff]
      %v1305 = vld [vmem:[%s454 + $0x20] sm:$0xff]
      %v1306 = vld [vmem:[%s454 + $0x28] sm:$0xff]
      %v1307 = vld [vmem:[%s454 + $0x30] sm:$0xff]
      %v1308 = vld [vmem:[%s454 + $0x38] sm:$0xff]
      %v1309 = vld [vmem:[%s454 + $0x40] sm:$0xff]
      %v1310 = vld [vmem:[%s454 + $0x48] sm:$0xff]
      %v1311 = vld [vmem:[%s454 + $0x50] sm:$0xff]
      %v1312 = vld [vmem:[%s454 + $0x58] sm:$0xff]
      %v1313 = vld [vmem:[%s454 + $0x60] sm:$0xff]
      %v1314 = vld [vmem:[%s454 + $0x68] sm:$0xff]
      %v1315 = vld [vmem:[%s454 + $0x70] sm:$0xff]
      %v1316 = vld [vmem:[%s454 + $0x78] sm:$0xff]
      %v1317 = vld [vmem:[%s454 + $0x80] sm:$0xff]
      %v1318 = vld [vmem:[%s454 + $0x88] sm:$0xff]
      %v1319 = vld [vmem:[%s454 + $0x90] sm:$0xff]
      %v1320 = vld [vmem:[%s454 + $0x98] sm:$0xff]
      %v1321 = vld [vmem:[%s454 + $0xa0] sm:$0xff]
      %v1322 = vld [vmem:[%s454 + $0xa8] sm:$0xff]
      %v1323 = vld [vmem:[%s454 + $0xb0] sm:$0xff]
      %v1324 = vld [vmem:[%s454 + $0xb8] sm:$0xff]
      %v1325 = vld [vmem:[%s454 + $0xc0] sm:$0xff]
      %v1326 = vld [vmem:[%s454 + $0xc8] sm:$0xff]
      %v1327 = vld [vmem:[%s454 + $0xd0] sm:$0xff]
      %v1328 = vld [vmem:[%s454 + $0xd8] sm:$0xff]
      %v1329 = vld [vmem:[%s454 + $0xe0] sm:$0xff]
      %v1330 = vld [vmem:[%s454 + $0xe8] sm:$0xff]
      %v1331 = vld [vmem:[%s454 + $0xf0] sm:$0xff]
      %v1332 = vld [vmem:[%s454 + $0xf8] sm:$0xff]
      %s1333 = smul.u32 %s1299, 8
      %s1334 = smul.addr %s1333, 4
      %s1335 = scalar_lea.vmem %s427, %s1334
      %v1336 = vld [vmem:[%s1335] sm:$0xff]
      %v1337 = vld [vmem:[%s1335 + $0x8] sm:$0xff]
      %v1338 = vld [vmem:[%s1335 + $0x10] sm:$0xff]
      %v1339 = vld [vmem:[%s1335 + $0x18] sm:$0xff]
      %v1340 = vunpack.c.l.bf16 %v1336
      %v1341 = vunpack.c.h.bf16 %v1336
      %v1342 = vunpack.c.l.bf16 %v1337
      %v1343 = vunpack.c.h.bf16 %v1337
      %v1344 = vunpack.c.l.bf16 %v1338
      %v1345 = vunpack.c.h.bf16 %v1338
      %v1346 = vunpack.c.l.bf16 %v1339
      %v1347 = vunpack.c.h.bf16 %v1339
      %v1348 = vld [vmem:[%s448] sm:$0xff]
      %v1349 = vld [vmem:[%s448 + $0x8] sm:$0xff]
      %v1350 = vld [vmem:[%s448 + $0x10] sm:$0xff]
      %v1351 = vld [vmem:[%s448 + $0x18] sm:$0xff]
      %v1352 = vld [vmem:[%s448 + $0x20] sm:$0xff]
      %v1353 = vld [vmem:[%s448 + $0x28] sm:$0xff]
      %v1354 = vld [vmem:[%s448 + $0x30] sm:$0xff]
      %v1355 = vld [vmem:[%s448 + $0x38] sm:$0xff]
      %v1356 = vadd.f32 %v1340, %v1348
      %v1357 = vadd.f32 %v1341, %v1349
      %v1358 = vadd.f32 %v1342, %v1350
      %v1359 = vadd.f32 %v1343, %v1351
      %v1360 = vadd.f32 %v1344, %v1352
      %v1361 = vadd.f32 %v1345, %v1353
      %v1362 = vadd.f32 %v1346, %v1354
      %v1363 = vadd.f32 %v1347, %v1355
      %v1364 = vpack.c.bf16 %v1289, %v1288
      %v1397 = vunpack.c.l.b16 %v1301
      %v1398 = vunpack.c.h.b16 %v1301
      %v1399 = vunpack.c.l.b16 %v1302
      %v1400 = vunpack.c.h.b16 %v1302
      %v1401 = vunpack.c.l.b16 %v1303
      %v1402 = vunpack.c.h.b16 %v1303
      %v1403 = vunpack.c.l.b16 %v1304
      %v1404 = vunpack.c.h.b16 %v1304
      %v1405 = vunpack.c.l.b16 %v1305
      %v1406 = vunpack.c.h.b16 %v1305
      %v1407 = vunpack.c.l.b16 %v1306
      %v1408 = vunpack.c.h.b16 %v1306
      %v1409 = vunpack.c.l.b16 %v1307
      %v1410 = vunpack.c.h.b16 %v1307
      %v1411 = vunpack.c.l.b16 %v1308
      %v1412 = vunpack.c.h.b16 %v1308
      %v1413 = vunpack.c.l.b16 %v1309
      %v1414 = vunpack.c.h.b16 %v1309
      %v1415 = vunpack.c.l.b16 %v1310
      %v1416 = vunpack.c.h.b16 %v1310
      %v1417 = vunpack.c.l.b16 %v1311
      %v1418 = vunpack.c.h.b16 %v1311
      %v1419 = vunpack.c.l.b16 %v1312
      %v1420 = vunpack.c.h.b16 %v1312
      %v1421 = vunpack.c.l.b16 %v1313
      %v1422 = vunpack.c.h.b16 %v1313
      %v1423 = vunpack.c.l.b16 %v1314
      %v1424 = vunpack.c.h.b16 %v1314
      %v1425 = vunpack.c.l.b16 %v1315
      %v1426 = vunpack.c.h.b16 %v1315
      %v1427 = vunpack.c.l.b16 %v1316
      %v1428 = vunpack.c.h.b16 %v1316
      %v1429 = vunpack.c.l.b16 %v1317
      %v1430 = vunpack.c.h.b16 %v1317
      %v1431 = vunpack.c.l.b16 %v1318
      %v1432 = vunpack.c.h.b16 %v1318
      %v1433 = vunpack.c.l.b16 %v1319
      %v1434 = vunpack.c.h.b16 %v1319
      %v1435 = vunpack.c.l.b16 %v1320
      %v1436 = vunpack.c.h.b16 %v1320
      %v1437 = vunpack.c.l.b16 %v1321
      %v1438 = vunpack.c.h.b16 %v1321
      %v1439 = vunpack.c.l.b16 %v1322
      %v1440 = vunpack.c.h.b16 %v1322
      %v1441 = vunpack.c.l.b16 %v1323
      %v1442 = vunpack.c.h.b16 %v1323
      %v1443 = vunpack.c.l.b16 %v1324
      %v1444 = vunpack.c.h.b16 %v1324
      %v1445 = vunpack.c.l.b16 %v1325
      %v1446 = vunpack.c.h.b16 %v1325
      %v1447 = vunpack.c.l.b16 %v1326
      %v1448 = vunpack.c.h.b16 %v1326
      %v1449 = vunpack.c.l.b16 %v1327
      %v1450 = vunpack.c.h.b16 %v1327
      %v1451 = vunpack.c.l.b16 %v1328
      %v1452 = vunpack.c.h.b16 %v1328
      %v1453 = vunpack.c.l.b16 %v1329
      %v1454 = vunpack.c.h.b16 %v1329
      %v1455 = vunpack.c.l.b16 %v1330
      %v1456 = vunpack.c.h.b16 %v1330
      %v1457 = vunpack.c.l.b16 %v1331
      %v1458 = vunpack.c.h.b16 %v1331
      %v1459 = vunpack.c.l.b16 %v1332
      %v1460 = vunpack.c.h.b16 %v1332
      %v1461 = vpack.c.b16 %v1401, %v1397
      %v1462 = vpack.c.b16 %v1402, %v1398
      %v1463 = vpack.c.b16 %v1403, %v1399
      %v1464 = vpack.c.b16 %v1404, %v1400
      %v1465 = vpack.c.b16 %v1409, %v1405
      %v1466 = vpack.c.b16 %v1410, %v1406
      %v1467 = vpack.c.b16 %v1411, %v1407
      %v1468 = vpack.c.b16 %v1412, %v1408
      %v1469 = vpack.c.b16 %v1417, %v1413
      %v1470 = vpack.c.b16 %v1418, %v1414
      %v1471 = vpack.c.b16 %v1419, %v1415
      %v1472 = vpack.c.b16 %v1420, %v1416
      %v1473 = vpack.c.b16 %v1425, %v1421
      %v1474 = vpack.c.b16 %v1426, %v1422
      %v1475 = vpack.c.b16 %v1427, %v1423
      %v1476 = vpack.c.b16 %v1428, %v1424
      %v1477 = vpack.c.b16 %v1433, %v1429
      %v1478 = vpack.c.b16 %v1434, %v1430
      %v1479 = vpack.c.b16 %v1435, %v1431
      %v1480 = vpack.c.b16 %v1436, %v1432
      %v1481 = vpack.c.b16 %v1441, %v1437
      %v1482 = vpack.c.b16 %v1442, %v1438
      %v1483 = vpack.c.b16 %v1443, %v1439
      %v1484 = vpack.c.b16 %v1444, %v1440
      %v1485 = vpack.c.b16 %v1449, %v1445
      %v1486 = vpack.c.b16 %v1450, %v1446
      %v1487 = vpack.c.b16 %v1451, %v1447
      %v1488 = vpack.c.b16 %v1452, %v1448
      %v1489 = vpack.c.b16 %v1457, %v1453
      %v1490 = vpack.c.b16 %v1458, %v1454
      %v1491 = vpack.c.b16 %v1459, %v1455
      %v1492 = vpack.c.b16 %v1460, %v1456
      %1525 = vmatprep.subr.bf16.mxu0 %v1462
      %1526 = vmatpush1.bf16.msra.mxu0 %v1461
      %1527 = vmatprep.subr.bf16.mxu0 %v1466
      %1528 = vmatpush1.bf16.msra.mxu0 %v1465
      %1529 = vmatprep.subr.bf16.mxu0 %v1470
      %1530 = vmatpush1.bf16.msra.mxu0 %v1469
      %1531 = vmatprep.subr.bf16.mxu0 %v1474
      %1532 = vmatpush1.bf16.msra.mxu0 %v1473
      %1533 = vmatprep.subr.bf16.mxu0 %v1478
      %1534 = vmatpush1.bf16.msra.mxu0 %v1477
      %1535 = vmatprep.subr.bf16.mxu0 %v1482
      %1536 = vmatpush1.bf16.msra.mxu0 %v1481
      %1537 = vmatprep.subr.bf16.mxu0 %v1486
      %1538 = vmatpush1.bf16.msra.mxu0 %v1485
      %1539 = vmatprep.subr.bf16.mxu0 %v1490
      %1540 = vmatpush1.bf16.msra.mxu0 %v1489
      %1541 = vmatprep.subr.bf16.mxu0 0
      %1542 = vmatpush1.bf16.msra.mxu0 0
      %1543 = vmatprep.subr.bf16.mxu0 0
      %1544 = vmatpush1.bf16.msra.mxu0 0
      %1545 = vmatprep.subr.bf16.mxu0 0
      %1546 = vmatpush1.bf16.msra.mxu0 0
      %1547 = vmatprep.subr.bf16.mxu0 0
      %1548 = vmatpush1.bf16.msra.mxu0 0
      %1549 = vmatprep.subr.bf16.mxu0 0
      %1550 = vmatpush1.bf16.msra.mxu0 0
      %1551 = vmatprep.subr.bf16.mxu0 0
      %1552 = vmatpush1.bf16.msra.mxu0 0
      %1553 = vmatprep.subr.bf16.mxu0 0
      %1554 = vmatpush1.bf16.msra.mxu0 0
      %1555 = vmatprep.subr.bf16.mxu0 0
      %1556 = vmatpush1.bf16.msra.mxu0 0
      %1557 = vmatprep.mubr.bf16.mxu0 0
      %1558 = vmatmul.mubr.bf16.gmra.mrb[0].mxu0 %v1364
      %v1559 = vpop.f32.mrb[0].mxu0
      %v1560 = vadd.f32 0.0, %v1559
      %v1561 = vpop.f32.mrb[0].mxu0
      %v1562 = vadd.f32 0.0, %v1561
      %v1563 = vpop.f32.mrb[0].mxu0
      %v1564 = vadd.f32 0.0, %v1563
      %v1565 = vpop.f32.mrb[0].mxu0
      %v1566 = vadd.f32 0.0, %v1565
      %1567 = vdwg.mxu0
      %1568 = vmatprep.subr.bf16.mxu0 %v1464
      %1569 = vmatpush1.bf16.msra.mxu0 %v1463
      %1570 = vmatprep.subr.bf16.mxu0 %v1468
      %1571 = vmatpush1.bf16.msra.mxu0 %v1467
      %1572 = vmatprep.subr.bf16.mxu0 %v1472
      %1573 = vmatpush1.bf16.msra.mxu0 %v1471
      %1574 = vmatprep.subr.bf16.mxu0 %v1476
      %1575 = vmatpush1.bf16.msra.mxu0 %v1475
      %1576 = vmatprep.subr.bf16.mxu0 %v1480
      %1577 = vmatpush1.bf16.msra.mxu0 %v1479
      %1578 = vmatprep.subr.bf16.mxu0 %v1484
      %1579 = vmatpush1.bf16.msra.mxu0 %v1483
      %1580 = vmatprep.subr.bf16.mxu0 %v1488
      %1581 = vmatpush1.bf16.msra.mxu0 %v1487
      %1582 = vmatprep.subr.bf16.mxu0 %v1492
      %1583 = vmatpush1.bf16.msra.mxu0 %v1491
      %1584 = vmatprep.subr.bf16.mxu0 0
      %1585 = vmatpush1.bf16.msra.mxu0 0
      %1586 = vmatprep.subr.bf16.mxu0 0
      %1587 = vmatpush1.bf16.msra.mxu0 0
      %1588 = vmatprep.subr.bf16.mxu0 0
      %1589 = vmatpush1.bf16.msra.mxu0 0
      %1590 = vmatprep.subr.bf16.mxu0 0
      %1591 = vmatpush1.bf16.msra.mxu0 0
      %1592 = vmatprep.subr.bf16.mxu0 0
      %1593 = vmatpush1.bf16.msra.mxu0 0
      %1594 = vmatprep.subr.bf16.mxu0 0
      %1595 = vmatpush1.bf16.msra.mxu0 0
      %1596 = vmatprep.subr.bf16.mxu0 0
      %1597 = vmatpush1.bf16.msra.mxu0 0
      %1598 = vmatprep.subr.bf16.mxu0 0
      %1599 = vmatpush1.bf16.msra.mxu0 0
      %1600 = vmatprep.mubr.bf16.mxu0 0
      %1601 = vmatmul.mubr.bf16.gmra.mrb[0].mxu0 %v1364
      %v1602 = vpop.f32.mrb[0].mxu0
      %v1603 = vadd.f32 0.0, %v1602
      %v1604 = vpop.f32.mrb[0].mxu0
      %v1605 = vadd.f32 0.0, %v1604
      %v1606 = vpop.f32.mrb[0].mxu0
      %v1607 = vadd.f32 0.0, %v1606
      %v1608 = vpop.f32.mrb[0].mxu0
      %v1609 = vadd.f32 0.0, %v1608
      %1610 = vdwg.mxu0
      %v1611 = vadd.f32 %v1356, %v1560
      %v1612 = vadd.f32 %v1357, %v1562
      %v1613 = vadd.f32 %v1358, %v1603
      %v1614 = vadd.f32 %v1359, %v1605
      %v1615 = vadd.f32 %v1360, %v1564
      %v1616 = vadd.f32 %v1361, %v1566
      %v1617 = vadd.f32 %v1362, %v1607
      %v1618 = vadd.f32 %v1363, %v1609
      %v1619 = vxor.u32 %v1611, 2147483648
      %v1620 = vxor.u32 %v1615, 2147483648
      %v1621 = vmul.f32 %v1619, 1.442695
      %v1622 = vpow.pop %v1621
      %v1623 = vmul.f32 %v1620, 1.442695
      %v1624 = vpow.pop %v1623
      %v1625 = vadd.f32 %v1622, 1.0
      %v1626 = vadd.f32 %v1624, 1.0
      %v1627 = vrcp.pop %v1625
      %v1628 = vmul.f32 1.0, %v1627
      %v1629 = vrcp.pop %v1626
      %v1630 = vmul.f32 1.0, %v1629
      %v1631 = vxor.u32 %v1612, 2147483648
      %v1632 = vxor.u32 %v1616, 2147483648
      %v1633 = vmul.f32 %v1631, 1.442695
      %v1634 = vpow.pop %v1633
      %v1635 = vmul.f32 %v1632, 1.442695
      %v1636 = vpow.pop %v1635
      %v1637 = vadd.f32 %v1634, 1.0
      %v1638 = vadd.f32 %v1636, 1.0
      %v1639 = vrcp.pop %v1637
      %v1640 = vmul.f32 1.0, %v1639
      %v1641 = vrcp.pop %v1638
      %v1642 = vmul.f32 1.0, %v1641
      %v1643 = vtanh.pop %v1613
      %v1644 = vtanh.pop %v1617
      %v1645 = vxor.u32 %v1614, 2147483648
      %v1646 = vxor.u32 %v1618, 2147483648
      %v1647 = vmul.f32 %v1645, 1.442695
      %v1648 = vpow.pop %v1647
      %v1649 = vmul.f32 %v1646, 1.442695
      %v1650 = vpow.pop %v1649
      %v1651 = vadd.f32 %v1648, 1.0
      %v1652 = vadd.f32 %v1650, 1.0
      %v1653 = vrcp.pop %v1651
      %v1654 = vmul.f32 1.0, %v1653
      %v1655 = vrcp.pop %v1652
      %v1656 = vmul.f32 1.0, %v1655
      %v1657 = vmul.f32 %v1640, %v1290
      %v1658 = vmul.f32 %v1642, %v1291
      %v1659 = vmul.f32 %v1628, %v1643
      %v1660 = vmul.f32 %v1630, %v1644
      %v1661 = vadd.f32 %v1657, %v1659
      %v1662 = vadd.f32 %v1658, %v1660
      %v1663 = vtanh.pop %v1661
      %v1664 = vtanh.pop %v1662
      %v1665 = vmul.f32 %v1654, %v1663
      %v1666 = vmul.f32 %v1656, %v1664
      %v1667 = vstv %s1300
      %vm1668 = vcmp.lt.s32.totalorder %v1667, %v511
      %vm1669 = vcmp.lt.s32.totalorder %v1667, %v512
      %v1670 = vsel %vm1668, 1, 0
      %v1671 = vsel %vm1669, 1, 0
      %1672 = vset.pattern.permute.xlu0 0
      %1673 = vperm.xlu0 %1672, %v1670
      %v1674 = vpop.permute.xlu0 %1673
      %1675 = vset.pattern.permute.xlu0 0
      %1676 = vperm.xlu0 %1675, %v1671
      %v1677 = vpop.permute.xlu0 %1676
      %vm1678 = vcmp.eq.s32.totalorder %v1674, 1
      %vm1679 = vcmp.eq.s32.totalorder %v1677, 1
      %v1680 = vsel %vm1678, %v1665, %v1288
      %v1681 = vsel %vm1679, %v1666, %v1289
      %v1682 = vsel %vm1678, %v1661, %v1290
      %v1683 = vsel %vm1679, %v1662, %v1291
      %v1684 = vsel %vm1678, %v1665, 0.0
      %v1685 = vsel %vm1679, %v1666, 0.0
      %s1686 = smul.u32 %s1299, 16
      %s1687 = scalar_lea.vmem %s471, %s1686
      %1688 = vst [vmem:[%s1687] sm:$0xff] %v1684
      %1689 = vst [vmem:[%s1687 + $0x8] sm:$0xff] %v1685
      %s1690 = smul.u32 %s507, 3
      %s1691 = sadd.s32 %s1690, %s510
      %s1692 = sadd.s32 %s509, %s1691
      %v1693 = vld [vmem:[%s454] sm:$0xff]
      %v1694 = vld [vmem:[%s454 + $0x8] sm:$0xff]
      %v1695 = vld [vmem:[%s454 + $0x10] sm:$0xff]
      %v1696 = vld [vmem:[%s454 + $0x18] sm:$0xff]
      %v1697 = vld [vmem:[%s454 + $0x20] sm:$0xff]
      %v1698 = vld [vmem:[%s454 + $0x28] sm:$0xff]
      %v1699 = vld [vmem:[%s454 + $0x30] sm:$0xff]
      %v1700 = vld [vmem:[%s454 + $0x38] sm:$0xff]
      %v1701 = vld [vmem:[%s454 + $0x40] sm:$0xff]
      %v1702 = vld [vmem:[%s454 + $0x48] sm:$0xff]
      %v1703 = vld [vmem:[%s454 + $0x50] sm:$0xff]
      %v1704 = vld [vmem:[%s454 + $0x58] sm:$0xff]
      %v1705 = vld [vmem:[%s454 + $0x60] sm:$0xff]
      %v1706 = vld [vmem:[%s454 + $0x68] sm:$0xff]
      %v1707 = vld [vmem:[%s454 + $0x70] sm:$0xff]
      %v1708 = vld [vmem:[%s454 + $0x78] sm:$0xff]
      %v1709 = vld [vmem:[%s454 + $0x80] sm:$0xff]
      %v1710 = vld [vmem:[%s454 + $0x88] sm:$0xff]
      %v1711 = vld [vmem:[%s454 + $0x90] sm:$0xff]
      %v1712 = vld [vmem:[%s454 + $0x98] sm:$0xff]
      %v1713 = vld [vmem:[%s454 + $0xa0] sm:$0xff]
      %v1714 = vld [vmem:[%s454 + $0xa8] sm:$0xff]
      %v1715 = vld [vmem:[%s454 + $0xb0] sm:$0xff]
      %v1716 = vld [vmem:[%s454 + $0xb8] sm:$0xff]
      %v1717 = vld [vmem:[%s454 + $0xc0] sm:$0xff]
      %v1718 = vld [vmem:[%s454 + $0xc8] sm:$0xff]
      %v1719 = vld [vmem:[%s454 + $0xd0] sm:$0xff]
      %v1720 = vld [vmem:[%s454 + $0xd8] sm:$0xff]
      %v1721 = vld [vmem:[%s454 + $0xe0] sm:$0xff]
      %v1722 = vld [vmem:[%s454 + $0xe8] sm:$0xff]
      %v1723 = vld [vmem:[%s454 + $0xf0] sm:$0xff]
      %v1724 = vld [vmem:[%s454 + $0xf8] sm:$0xff]
      %s1725 = smul.u32 %s1691, 8
      %s1726 = smul.addr %s1725, 4
      %s1727 = scalar_lea.vmem %s427, %s1726
      %v1728 = vld [vmem:[%s1727] sm:$0xff]
      %v1729 = vld [vmem:[%s1727 + $0x8] sm:$0xff]
      %v1730 = vld [vmem:[%s1727 + $0x10] sm:$0xff]
      %v1731 = vld [vmem:[%s1727 + $0x18] sm:$0xff]
      %v1732 = vunpack.c.l.bf16 %v1728
      %v1733 = vunpack.c.h.bf16 %v1728
      %v1734 = vunpack.c.l.bf16 %v1729
      %v1735 = vunpack.c.h.bf16 %v1729
      %v1736 = vunpack.c.l.bf16 %v1730
      %v1737 = vunpack.c.h.bf16 %v1730
      %v1738 = vunpack.c.l.bf16 %v1731
      %v1739 = vunpack.c.h.bf16 %v1731
      %v1740 = vld [vmem:[%s448] sm:$0xff]
      %v1741 = vld [vmem:[%s448 + $0x8] sm:$0xff]
      %v1742 = vld [vmem:[%s448 + $0x10] sm:$0xff]
      %v1743 = vld [vmem:[%s448 + $0x18] sm:$0xff]
      %v1744 = vld [vmem:[%s448 + $0x20] sm:$0xff]
      %v1745 = vld [vmem:[%s448 + $0x28] sm:$0xff]
      %v1746 = vld [vmem:[%s448 + $0x30] sm:$0xff]
      %v1747 = vld [vmem:[%s448 + $0x38] sm:$0xff]
      %v1748 = vadd.f32 %v1732, %v1740
      %v1749 = vadd.f32 %v1733, %v1741
      %v1750 = vadd.f32 %v1734, %v1742
      %v1751 = vadd.f32 %v1735, %v1743
      %v1752 = vadd.f32 %v1736, %v1744
      %v1753 = vadd.f32 %v1737, %v1745
      %v1754 = vadd.f32 %v1738, %v1746
      %v1755 = vadd.f32 %v1739, %v1747
      %v1756 = vpack.c.bf16 %v1681, %v1680
      %v1789 = vunpack.c.l.b16 %v1693
      %v1790 = vunpack.c.h.b16 %v1693
      %v1791 = vunpack.c.l.b16 %v1694
      %v1792 = vunpack.c.h.b16 %v1694
      %v1793 = vunpack.c.l.b16 %v1695
      %v1794 = vunpack.c.h.b16 %v1695
      %v1795 = vunpack.c.l.b16 %v1696
      %v1796 = vunpack.c.h.b16 %v1696
      %v1797 = vunpack.c.l.b16 %v1697
      %v1798 = vunpack.c.h.b16 %v1697
      %v1799 = vunpack.c.l.b16 %v1698
      %v1800 = vunpack.c.h.b16 %v1698
      %v1801 = vunpack.c.l.b16 %v1699
      %v1802 = vunpack.c.h.b16 %v1699
      %v1803 = vunpack.c.l.b16 %v1700
      %v1804 = vunpack.c.h.b16 %v1700
      %v1805 = vunpack.c.l.b16 %v1701
      %v1806 = vunpack.c.h.b16 %v1701
      %v1807 = vunpack.c.l.b16 %v1702
      %v1808 = vunpack.c.h.b16 %v1702
      %v1809 = vunpack.c.l.b16 %v1703
      %v1810 = vunpack.c.h.b16 %v1703
      %v1811 = vunpack.c.l.b16 %v1704
      %v1812 = vunpack.c.h.b16 %v1704
      %v1813 = vunpack.c.l.b16 %v1705
      %v1814 = vunpack.c.h.b16 %v1705
      %v1815 = vunpack.c.l.b16 %v1706
      %v1816 = vunpack.c.h.b16 %v1706
      %v1817 = vunpack.c.l.b16 %v1707
      %v1818 = vunpack.c.h.b16 %v1707
      %v1819 = vunpack.c.l.b16 %v1708
      %v1820 = vunpack.c.h.b16 %v1708
      %v1821 = vunpack.c.l.b16 %v1709
      %v1822 = vunpack.c.h.b16 %v1709
      %v1823 = vunpack.c.l.b16 %v1710
      %v1824 = vunpack.c.h.b16 %v1710
      %v1825 = vunpack.c.l.b16 %v1711
      %v1826 = vunpack.c.h.b16 %v1711
      %v1827 = vunpack.c.l.b16 %v1712
      %v1828 = vunpack.c.h.b16 %v1712
      %v1829 = vunpack.c.l.b16 %v1713
      %v1830 = vunpack.c.h.b16 %v1713
      %v1831 = vunpack.c.l.b16 %v1714
      %v1832 = vunpack.c.h.b16 %v1714
      %v1833 = vunpack.c.l.b16 %v1715
      %v1834 = vunpack.c.h.b16 %v1715
      %v1835 = vunpack.c.l.b16 %v1716
      %v1836 = vunpack.c.h.b16 %v1716
      %v1837 = vunpack.c.l.b16 %v1717
      %v1838 = vunpack.c.h.b16 %v1717
      %v1839 = vunpack.c.l.b16 %v1718
      %v1840 = vunpack.c.h.b16 %v1718
      %v1841 = vunpack.c.l.b16 %v1719
      %v1842 = vunpack.c.h.b16 %v1719
      %v1843 = vunpack.c.l.b16 %v1720
      %v1844 = vunpack.c.h.b16 %v1720
      %v1845 = vunpack.c.l.b16 %v1721
      %v1846 = vunpack.c.h.b16 %v1721
      %v1847 = vunpack.c.l.b16 %v1722
      %v1848 = vunpack.c.h.b16 %v1722
      %v1849 = vunpack.c.l.b16 %v1723
      %v1850 = vunpack.c.h.b16 %v1723
      %v1851 = vunpack.c.l.b16 %v1724
      %v1852 = vunpack.c.h.b16 %v1724
      %v1853 = vpack.c.b16 %v1793, %v1789
      %v1854 = vpack.c.b16 %v1794, %v1790
      %v1855 = vpack.c.b16 %v1795, %v1791
      %v1856 = vpack.c.b16 %v1796, %v1792
      %v1857 = vpack.c.b16 %v1801, %v1797
      %v1858 = vpack.c.b16 %v1802, %v1798
      %v1859 = vpack.c.b16 %v1803, %v1799
      %v1860 = vpack.c.b16 %v1804, %v1800
      %v1861 = vpack.c.b16 %v1809, %v1805
      %v1862 = vpack.c.b16 %v1810, %v1806
      %v1863 = vpack.c.b16 %v1811, %v1807
      %v1864 = vpack.c.b16 %v1812, %v1808
      %v1865 = vpack.c.b16 %v1817, %v1813
      %v1866 = vpack.c.b16 %v1818, %v1814
      %v1867 = vpack.c.b16 %v1819, %v1815
      %v1868 = vpack.c.b16 %v1820, %v1816
      %v1869 = vpack.c.b16 %v1825, %v1821
      %v1870 = vpack.c.b16 %v1826, %v1822
      %v1871 = vpack.c.b16 %v1827, %v1823
      %v1872 = vpack.c.b16 %v1828, %v1824
      %v1873 = vpack.c.b16 %v1833, %v1829
      %v1874 = vpack.c.b16 %v1834, %v1830
      %v1875 = vpack.c.b16 %v1835, %v1831
      %v1876 = vpack.c.b16 %v1836, %v1832
      %v1877 = vpack.c.b16 %v1841, %v1837
      %v1878 = vpack.c.b16 %v1842, %v1838
      %v1879 = vpack.c.b16 %v1843, %v1839
      %v1880 = vpack.c.b16 %v1844, %v1840
      %v1881 = vpack.c.b16 %v1849, %v1845
      %v1882 = vpack.c.b16 %v1850, %v1846
      %v1883 = vpack.c.b16 %v1851, %v1847
      %v1884 = vpack.c.b16 %v1852, %v1848
      %1917 = vmatprep.subr.bf16.mxu0 %v1854
      %1918 = vmatpush1.bf16.msra.mxu0 %v1853
      %1919 = vmatprep.subr.bf16.mxu0 %v1858
      %1920 = vmatpush1.bf16.msra.mxu0 %v1857
      %1921 = vmatprep.subr.bf16.mxu0 %v1862
      %1922 = vmatpush1.bf16.msra.mxu0 %v1861
      %1923 = vmatprep.subr.bf16.mxu0 %v1866
      %1924 = vmatpush1.bf16.msra.mxu0 %v1865
      %1925 = vmatprep.subr.bf16.mxu0 %v1870
      %1926 = vmatpush1.bf16.msra.mxu0 %v1869
      %1927 = vmatprep.subr.bf16.mxu0 %v1874
      %1928 = vmatpush1.bf16.msra.mxu0 %v1873
      %1929 = vmatprep.subr.bf16.mxu0 %v1878
      %1930 = vmatpush1.bf16.msra.mxu0 %v1877
      %1931 = vmatprep.subr.bf16.mxu0 %v1882
      %1932 = vmatpush1.bf16.msra.mxu0 %v1881
      %1933 = vmatprep.subr.bf16.mxu0 0
      %1934 = vmatpush1.bf16.msra.mxu0 0
      %1935 = vmatprep.subr.bf16.mxu0 0
      %1936 = vmatpush1.bf16.msra.mxu0 0
      %1937 = vmatprep.subr.bf16.mxu0 0
      %1938 = vmatpush1.bf16.msra.mxu0 0
      %1939 = vmatprep.subr.bf16.mxu0 0
      %1940 = vmatpush1.bf16.msra.mxu0 0
      %1941 = vmatprep.subr.bf16.mxu0 0
      %1942 = vmatpush1.bf16.msra.mxu0 0
      %1943 = vmatprep.subr.bf16.mxu0 0
      %1944 = vmatpush1.bf16.msra.mxu0 0
      %1945 = vmatprep.subr.bf16.mxu0 0
      %1946 = vmatpush1.bf16.msra.mxu0 0
      %1947 = vmatprep.subr.bf16.mxu0 0
      %1948 = vmatpush1.bf16.msra.mxu0 0
      %1949 = vmatprep.mubr.bf16.mxu0 0
      %1950 = vmatmul.mubr.bf16.gmra.mrb[0].mxu0 %v1756
      %v1951 = vpop.f32.mrb[0].mxu0
      %v1952 = vadd.f32 0.0, %v1951
      %v1953 = vpop.f32.mrb[0].mxu0
      %v1954 = vadd.f32 0.0, %v1953
      %v1955 = vpop.f32.mrb[0].mxu0
      %v1956 = vadd.f32 0.0, %v1955
      %v1957 = vpop.f32.mrb[0].mxu0
      %v1958 = vadd.f32 0.0, %v1957
      %1959 = vdwg.mxu0
      %1960 = vmatprep.subr.bf16.mxu0 %v1856
      %1961 = vmatpush1.bf16.msra.mxu0 %v1855
      %1962 = vmatprep.subr.bf16.mxu0 %v1860
      %1963 = vmatpush1.bf16.msra.mxu0 %v1859
      %1964 = vmatprep.subr.bf16.mxu0 %v1864
      %1965 = vmatpush1.bf16.msra.mxu0 %v1863
      %1966 = vmatprep.subr.bf16.mxu0 %v1868
      %1967 = vmatpush1.bf16.msra.mxu0 %v1867
      %1968 = vmatprep.subr.bf16.mxu0 %v1872
      %1969 = vmatpush1.bf16.msra.mxu0 %v1871
      %1970 = vmatprep.subr.bf16.mxu0 %v1876
      %1971 = vmatpush1.bf16.msra.mxu0 %v1875
      %1972 = vmatprep.subr.bf16.mxu0 %v1880
      %1973 = vmatpush1.bf16.msra.mxu0 %v1879
      %1974 = vmatprep.subr.bf16.mxu0 %v1884
      %1975 = vmatpush1.bf16.msra.mxu0 %v1883
      %1976 = vmatprep.subr.bf16.mxu0 0
      %1977 = vmatpush1.bf16.msra.mxu0 0
      %1978 = vmatprep.subr.bf16.mxu0 0
      %1979 = vmatpush1.bf16.msra.mxu0 0
      %1980 = vmatprep.subr.bf16.mxu0 0
      %1981 = vmatpush1.bf16.msra.mxu0 0
      %1982 = vmatprep.subr.bf16.mxu0 0
      %1983 = vmatpush1.bf16.msra.mxu0 0
      %1984 = vmatprep.subr.bf16.mxu0 0
      %1985 = vmatpush1.bf16.msra.mxu0 0
      %1986 = vmatprep.subr.bf16.mxu0 0
      %1987 = vmatpush1.bf16.msra.mxu0 0
      %1988 = vmatprep.subr.bf16.mxu0 0
      %1989 = vmatpush1.bf16.msra.mxu0 0
      %1990 = vmatprep.subr.bf16.mxu0 0
      %1991 = vmatpush1.bf16.msra.mxu0 0
      %1992 = vmatprep.mubr.bf16.mxu0 0
      %1993 = vmatmul.mubr.bf16.gmra.mrb[0].mxu0 %v1756
      %v1994 = vpop.f32.mrb[0].mxu0
      %v1995 = vadd.f32 0.0, %v1994
      %v1996 = vpop.f32.mrb[0].mxu0
      %v1997 = vadd.f32 0.0, %v1996
      %v1998 = vpop.f32.mrb[0].mxu0
      %v1999 = vadd.f32 0.0, %v1998
      %v2000 = vpop.f32.mrb[0].mxu0
      %v2001 = vadd.f32 0.0, %v2000
      %2002 = vdwg.mxu0
      %v2003 = vadd.f32 %v1748, %v1952
      %v2004 = vadd.f32 %v1749, %v1954
      %v2005 = vadd.f32 %v1750, %v1995
      %v2006 = vadd.f32 %v1751, %v1997
      %v2007 = vadd.f32 %v1752, %v1956
      %v2008 = vadd.f32 %v1753, %v1958
      %v2009 = vadd.f32 %v1754, %v1999
      %v2010 = vadd.f32 %v1755, %v2001
      %v2011 = vxor.u32 %v2003, 2147483648
      %v2012 = vxor.u32 %v2007, 2147483648
      %v2013 = vmul.f32 %v2011, 1.442695
      %v2014 = vpow.pop %v2013
      %v2015 = vmul.f32 %v2012, 1.442695
      %v2016 = vpow.pop %v2015
      %v2017 = vadd.f32 %v2014, 1.0
      %v2018 = vadd.f32 %v2016, 1.0
      %v2019 = vrcp.pop %v2017
      %v2020 = vmul.f32 1.0, %v2019
      %v2021 = vrcp.pop %v2018
      %v2022 = vmul.f32 1.0, %v2021
      %v2023 = vxor.u32 %v2004, 2147483648
      %v2024 = vxor.u32 %v2008, 2147483648
      %v2025 = vmul.f32 %v2023, 1.442695
      %v2026 = vpow.pop %v2025
      %v2027 = vmul.f32 %v2024, 1.442695
      %v2028 = vpow.pop %v2027
      %v2029 = vadd.f32 %v2026, 1.0
      %v2030 = vadd.f32 %v2028, 1.0
      %v2031 = vrcp.pop %v2029
      %v2032 = vmul.f32 1.0, %v2031
      %v2033 = vrcp.pop %v2030
      %v2034 = vmul.f32 1.0, %v2033
      %v2035 = vtanh.pop %v2005
      %v2036 = vtanh.pop %v2009
      %v2037 = vxor.u32 %v2006, 2147483648
      %v2038 = vxor.u32 %v2010, 2147483648
      %v2039 = vmul.f32 %v2037, 1.442695
      %v2040 = vpow.pop %v2039
      %v2041 = vmul.f32 %v2038, 1.442695
      %v2042 = vpow.pop %v2041
      %v2043 = vadd.f32 %v2040, 1.0
      %v2044 = vadd.f32 %v2042, 1.0
      %v2045 = vrcp.pop %v2043
      %v2046 = vmul.f32 1.0, %v2045
      %v2047 = vrcp.pop %v2044
      %v2048 = vmul.f32 1.0, %v2047
      %v2049 = vmul.f32 %v2032, %v1682
      %v2050 = vmul.f32 %v2034, %v1683
      %v2051 = vmul.f32 %v2020, %v2035
      %v2052 = vmul.f32 %v2022, %v2036
      %v2053 = vadd.f32 %v2049, %v2051
      %v2054 = vadd.f32 %v2050, %v2052
      %v2055 = vtanh.pop %v2053
      %v2056 = vtanh.pop %v2054
      %v2057 = vmul.f32 %v2046, %v2055
      %v2058 = vmul.f32 %v2048, %v2056
      %v2059 = vstv %s1692
      %vm2060 = vcmp.lt.s32.totalorder %v2059, %v511
      %vm2061 = vcmp.lt.s32.totalorder %v2059, %v512
      %v2062 = vsel %vm2060, 1, 0
      %v2063 = vsel %vm2061, 1, 0
      %2064 = vset.pattern.permute.xlu0 0
      %2065 = vperm.xlu0 %2064, %v2062
      %v2066 = vpop.permute.xlu0 %2065
      %2067 = vset.pattern.permute.xlu0 0
      %2068 = vperm.xlu0 %2067, %v2063
      %v2069 = vpop.permute.xlu0 %2068
      %vm2070 = vcmp.eq.s32.totalorder %v2066, 1
      %vm2071 = vcmp.eq.s32.totalorder %v2069, 1
      %v2072 = vsel %vm2070, %v2057, %v1680
      %v2073 = vsel %vm2071, %v2058, %v1681
      %v2074 = vsel %vm2070, %v2053, %v1682
      %v2075 = vsel %vm2071, %v2054, %v1683
      %v2076 = vsel %vm2070, %v2057, 0.0
      %v2077 = vsel %vm2071, %v2058, 0.0
      %s2078 = smul.u32 %s1691, 16
      %s2079 = scalar_lea.vmem %s471, %s2078
      %2080 = vst [vmem:[%s2079] sm:$0xff] %v2076
      %2081 = vst [vmem:[%s2079 + $0x8] sm:$0xff] %v2077
      %s2082 = smul.u32 %s507, 4
      %s2083 = sadd.s32 %s2082, %s510
      %s2084 = sadd.s32 %s509, %s2083
      %v2085 = vld [vmem:[%s454] sm:$0xff]
      %v2086 = vld [vmem:[%s454 + $0x8] sm:$0xff]
      %v2087 = vld [vmem:[%s454 + $0x10] sm:$0xff]
      %v2088 = vld [vmem:[%s454 + $0x18] sm:$0xff]
      %v2089 = vld [vmem:[%s454 + $0x20] sm:$0xff]
      %v2090 = vld [vmem:[%s454 + $0x28] sm:$0xff]
      %v2091 = vld [vmem:[%s454 + $0x30] sm:$0xff]
      %v2092 = vld [vmem:[%s454 + $0x38] sm:$0xff]
      %v2093 = vld [vmem:[%s454 + $0x40] sm:$0xff]
      %v2094 = vld [vmem:[%s454 + $0x48] sm:$0xff]
      %v2095 = vld [vmem:[%s454 + $0x50] sm:$0xff]
      %v2096 = vld [vmem:[%s454 + $0x58] sm:$0xff]
      %v2097 = vld [vmem:[%s454 + $0x60] sm:$0xff]
      %v2098 = vld [vmem:[%s454 + $0x68] sm:$0xff]
      %v2099 = vld [vmem:[%s454 + $0x70] sm:$0xff]
      %v2100 = vld [vmem:[%s454 + $0x78] sm:$0xff]
      %v2101 = vld [vmem:[%s454 + $0x80] sm:$0xff]
      %v2102 = vld [vmem:[%s454 + $0x88] sm:$0xff]
      %v2103 = vld [vmem:[%s454 + $0x90] sm:$0xff]
      %v2104 = vld [vmem:[%s454 + $0x98] sm:$0xff]
      %v2105 = vld [vmem:[%s454 + $0xa0] sm:$0xff]
      %v2106 = vld [vmem:[%s454 + $0xa8] sm:$0xff]
      %v2107 = vld [vmem:[%s454 + $0xb0] sm:$0xff]
      %v2108 = vld [vmem:[%s454 + $0xb8] sm:$0xff]
      %v2109 = vld [vmem:[%s454 + $0xc0] sm:$0xff]
      %v2110 = vld [vmem:[%s454 + $0xc8] sm:$0xff]
      %v2111 = vld [vmem:[%s454 + $0xd0] sm:$0xff]
      %v2112 = vld [vmem:[%s454 + $0xd8] sm:$0xff]
      %v2113 = vld [vmem:[%s454 + $0xe0] sm:$0xff]
      %v2114 = vld [vmem:[%s454 + $0xe8] sm:$0xff]
      %v2115 = vld [vmem:[%s454 + $0xf0] sm:$0xff]
      %v2116 = vld [vmem:[%s454 + $0xf8] sm:$0xff]
      %s2117 = smul.u32 %s2083, 8
      %s2118 = smul.addr %s2117, 4
      %s2119 = scalar_lea.vmem %s427, %s2118
      %v2120 = vld [vmem:[%s2119] sm:$0xff]
      %v2121 = vld [vmem:[%s2119 + $0x8] sm:$0xff]
      %v2122 = vld [vmem:[%s2119 + $0x10] sm:$0xff]
      %v2123 = vld [vmem:[%s2119 + $0x18] sm:$0xff]
      %v2124 = vunpack.c.l.bf16 %v2120
      %v2125 = vunpack.c.h.bf16 %v2120
      %v2126 = vunpack.c.l.bf16 %v2121
      %v2127 = vunpack.c.h.bf16 %v2121
      %v2128 = vunpack.c.l.bf16 %v2122
      %v2129 = vunpack.c.h.bf16 %v2122
      %v2130 = vunpack.c.l.bf16 %v2123
      %v2131 = vunpack.c.h.bf16 %v2123
      %v2132 = vld [vmem:[%s448] sm:$0xff]
      %v2133 = vld [vmem:[%s448 + $0x8] sm:$0xff]
      %v2134 = vld [vmem:[%s448 + $0x10] sm:$0xff]
      %v2135 = vld [vmem:[%s448 + $0x18] sm:$0xff]
      %v2136 = vld [vmem:[%s448 + $0x20] sm:$0xff]
      %v2137 = vld [vmem:[%s448 + $0x28] sm:$0xff]
      %v2138 = vld [vmem:[%s448 + $0x30] sm:$0xff]
      %v2139 = vld [vmem:[%s448 + $0x38] sm:$0xff]
      %v2140 = vadd.f32 %v2124, %v2132
      %v2141 = vadd.f32 %v2125, %v2133
      %v2142 = vadd.f32 %v2126, %v2134
      %v2143 = vadd.f32 %v2127, %v2135
      %v2144 = vadd.f32 %v2128, %v2136
      %v2145 = vadd.f32 %v2129, %v2137
      %v2146 = vadd.f32 %v2130, %v2138
      %v2147 = vadd.f32 %v2131, %v2139
      %v2148 = vpack.c.bf16 %v2073, %v2072
      %v2181 = vunpack.c.l.b16 %v2085
      %v2182 = vunpack.c.h.b16 %v2085
      %v2183 = vunpack.c.l.b16 %v2086
      %v2184 = vunpack.c.h.b16 %v2086
      %v2185 = vunpack.c.l.b16 %v2087
      %v2186 = vunpack.c.h.b16 %v2087
      %v2187 = vunpack.c.l.b16 %v2088
      %v2188 = vunpack.c.h.b16 %v2088
      %v2189 = vunpack.c.l.b16 %v2089
      %v2190 = vunpack.c.h.b16 %v2089
      %v2191 = vunpack.c.l.b16 %v2090
      %v2192 = vunpack.c.h.b16 %v2090
      %v2193 = vunpack.c.l.b16 %v2091
      %v2194 = vunpack.c.h.b16 %v2091
      %v2195 = vunpack.c.l.b16 %v2092
      %v2196 = vunpack.c.h.b16 %v2092
      %v2197 = vunpack.c.l.b16 %v2093
      %v2198 = vunpack.c.h.b16 %v2093
      %v2199 = vunpack.c.l.b16 %v2094
      %v2200 = vunpack.c.h.b16 %v2094
      %v2201 = vunpack.c.l.b16 %v2095
      %v2202 = vunpack.c.h.b16 %v2095
      %v2203 = vunpack.c.l.b16 %v2096
      %v2204 = vunpack.c.h.b16 %v2096
      %v2205 = vunpack.c.l.b16 %v2097
      %v2206 = vunpack.c.h.b16 %v2097
      %v2207 = vunpack.c.l.b16 %v2098
      %v2208 = vunpack.c.h.b16 %v2098
      %v2209 = vunpack.c.l.b16 %v2099
      %v2210 = vunpack.c.h.b16 %v2099
      %v2211 = vunpack.c.l.b16 %v2100
      %v2212 = vunpack.c.h.b16 %v2100
      %v2213 = vunpack.c.l.b16 %v2101
      %v2214 = vunpack.c.h.b16 %v2101
      %v2215 = vunpack.c.l.b16 %v2102
      %v2216 = vunpack.c.h.b16 %v2102
      %v2217 = vunpack.c.l.b16 %v2103
      %v2218 = vunpack.c.h.b16 %v2103
      %v2219 = vunpack.c.l.b16 %v2104
      %v2220 = vunpack.c.h.b16 %v2104
      %v2221 = vunpack.c.l.b16 %v2105
      %v2222 = vunpack.c.h.b16 %v2105
      %v2223 = vunpack.c.l.b16 %v2106
      %v2224 = vunpack.c.h.b16 %v2106
      %v2225 = vunpack.c.l.b16 %v2107
      %v2226 = vunpack.c.h.b16 %v2107
      %v2227 = vunpack.c.l.b16 %v2108
      %v2228 = vunpack.c.h.b16 %v2108
      %v2229 = vunpack.c.l.b16 %v2109
      %v2230 = vunpack.c.h.b16 %v2109
      %v2231 = vunpack.c.l.b16 %v2110
      %v2232 = vunpack.c.h.b16 %v2110
      %v2233 = vunpack.c.l.b16 %v2111
      %v2234 = vunpack.c.h.b16 %v2111
      %v2235 = vunpack.c.l.b16 %v2112
      %v2236 = vunpack.c.h.b16 %v2112
      %v2237 = vunpack.c.l.b16 %v2113
      %v2238 = vunpack.c.h.b16 %v2113
      %v2239 = vunpack.c.l.b16 %v2114
      %v2240 = vunpack.c.h.b16 %v2114
      %v2241 = vunpack.c.l.b16 %v2115
      %v2242 = vunpack.c.h.b16 %v2115
      %v2243 = vunpack.c.l.b16 %v2116
      %v2244 = vunpack.c.h.b16 %v2116
      %v2245 = vpack.c.b16 %v2185, %v2181
      %v2246 = vpack.c.b16 %v2186, %v2182
      %v2247 = vpack.c.b16 %v2187, %v2183
      %v2248 = vpack.c.b16 %v2188, %v2184
      %v2249 = vpack.c.b16 %v2193, %v2189
      %v2250 = vpack.c.b16 %v2194, %v2190
      %v2251 = vpack.c.b16 %v2195, %v2191
      %v2252 = vpack.c.b16 %v2196, %v2192
      %v2253 = vpack.c.b16 %v2201, %v2197
      %v2254 = vpack.c.b16 %v2202, %v2198
      %v2255 = vpack.c.b16 %v2203, %v2199
      %v2256 = vpack.c.b16 %v2204, %v2200
      %v2257 = vpack.c.b16 %v2209, %v2205
      %v2258 = vpack.c.b16 %v2210, %v2206
      %v2259 = vpack.c.b16 %v2211, %v2207
      %v2260 = vpack.c.b16 %v2212, %v2208
      %v2261 = vpack.c.b16 %v2217, %v2213
      %v2262 = vpack.c.b16 %v2218, %v2214
      %v2263 = vpack.c.b16 %v2219, %v2215
      %v2264 = vpack.c.b16 %v2220, %v2216
      %v2265 = vpack.c.b16 %v2225, %v2221
      %v2266 = vpack.c.b16 %v2226, %v2222
      %v2267 = vpack.c.b16 %v2227, %v2223
      %v2268 = vpack.c.b16 %v2228, %v2224
      %v2269 = vpack.c.b16 %v2233, %v2229
      %v2270 = vpack.c.b16 %v2234, %v2230
      %v2271 = vpack.c.b16 %v2235, %v2231
      %v2272 = vpack.c.b16 %v2236, %v2232
      %v2273 = vpack.c.b16 %v2241, %v2237
      %v2274 = vpack.c.b16 %v2242, %v2238
      %v2275 = vpack.c.b16 %v2243, %v2239
      %v2276 = vpack.c.b16 %v2244, %v2240
      %2309 = vmatprep.subr.bf16.mxu0 %v2246
      %2310 = vmatpush1.bf16.msra.mxu0 %v2245
      %2311 = vmatprep.subr.bf16.mxu0 %v2250
      %2312 = vmatpush1.bf16.msra.mxu0 %v2249
      %2313 = vmatprep.subr.bf16.mxu0 %v2254
      %2314 = vmatpush1.bf16.msra.mxu0 %v2253
      %2315 = vmatprep.subr.bf16.mxu0 %v2258
      %2316 = vmatpush1.bf16.msra.mxu0 %v2257
      %2317 = vmatprep.subr.bf16.mxu0 %v2262
      %2318 = vmatpush1.bf16.msra.mxu0 %v2261
      %2319 = vmatprep.subr.bf16.mxu0 %v2266
      %2320 = vmatpush1.bf16.msra.mxu0 %v2265
      %2321 = vmatprep.subr.bf16.mxu0 %v2270
      %2322 = vmatpush1.bf16.msra.mxu0 %v2269
      %2323 = vmatprep.subr.bf16.mxu0 %v2274
      %2324 = vmatpush1.bf16.msra.mxu0 %v2273
      %2325 = vmatprep.subr.bf16.mxu0 0
      %2326 = vmatpush1.bf16.msra.mxu0 0
      %2327 = vmatprep.subr.bf16.mxu0 0
      %2328 = vmatpush1.bf16.msra.mxu0 0
      %2329 = vmatprep.subr.bf16.mxu0 0
      %2330 = vmatpush1.bf16.msra.mxu0 0
      %2331 = vmatprep.subr.bf16.mxu0 0
      %2332 = vmatpush1.bf16.msra.mxu0 0
      %2333 = vmatprep.subr.bf16.mxu0 0
      %2334 = vmatpush1.bf16.msra.mxu0 0
      %2335 = vmatprep.subr.bf16.mxu0 0
      %2336 = vmatpush1.bf16.msra.mxu0 0
      %2337 = vmatprep.subr.bf16.mxu0 0
      %2338 = vmatpush1.bf16.msra.mxu0 0
      %2339 = vmatprep.subr.bf16.mxu0 0
      %2340 = vmatpush1.bf16.msra.mxu0 0
      %2341 = vmatprep.mubr.bf16.mxu0 0
      %2342 = vmatmul.mubr.bf16.gmra.mrb[0].mxu0 %v2148
      %v2343 = vpop.f32.mrb[0].mxu0
      %v2344 = vadd.f32 0.0, %v2343
      %v2345 = vpop.f32.mrb[0].mxu0
      %v2346 = vadd.f32 0.0, %v2345
      %v2347 = vpop.f32.mrb[0].mxu0
      %v2348 = vadd.f32 0.0, %v2347
      %v2349 = vpop.f32.mrb[0].mxu0
      %v2350 = vadd.f32 0.0, %v2349
      %2351 = vdwg.mxu0
      %2352 = vmatprep.subr.bf16.mxu0 %v2248
      %2353 = vmatpush1.bf16.msra.mxu0 %v2247
      %2354 = vmatprep.subr.bf16.mxu0 %v2252
      %2355 = vmatpush1.bf16.msra.mxu0 %v2251
      %2356 = vmatprep.subr.bf16.mxu0 %v2256
      %2357 = vmatpush1.bf16.msra.mxu0 %v2255
      %2358 = vmatprep.subr.bf16.mxu0 %v2260
      %2359 = vmatpush1.bf16.msra.mxu0 %v2259
      %2360 = vmatprep.subr.bf16.mxu0 %v2264
      %2361 = vmatpush1.bf16.msra.mxu0 %v2263
      %2362 = vmatprep.subr.bf16.mxu0 %v2268
      %2363 = vmatpush1.bf16.msra.mxu0 %v2267
      %2364 = vmatprep.subr.bf16.mxu0 %v2272
      %2365 = vmatpush1.bf16.msra.mxu0 %v2271
      %2366 = vmatprep.subr.bf16.mxu0 %v2276
      %2367 = vmatpush1.bf16.msra.mxu0 %v2275
      %2368 = vmatprep.subr.bf16.mxu0 0
      %2369 = vmatpush1.bf16.msra.mxu0 0
      %2370 = vmatprep.subr.bf16.mxu0 0
      %2371 = vmatpush1.bf16.msra.mxu0 0
      %2372 = vmatprep.subr.bf16.mxu0 0
      %2373 = vmatpush1.bf16.msra.mxu0 0
      %2374 = vmatprep.subr.bf16.mxu0 0
      %2375 = vmatpush1.bf16.msra.mxu0 0
      %2376 = vmatprep.subr.bf16.mxu0 0
      %2377 = vmatpush1.bf16.msra.mxu0 0
      %2378 = vmatprep.subr.bf16.mxu0 0
      %2379 = vmatpush1.bf16.msra.mxu0 0
      %2380 = vmatprep.subr.bf16.mxu0 0
      %2381 = vmatpush1.bf16.msra.mxu0 0
      %2382 = vmatprep.subr.bf16.mxu0 0
      %2383 = vmatpush1.bf16.msra.mxu0 0
      %2384 = vmatprep.mubr.bf16.mxu0 0
      %2385 = vmatmul.mubr.bf16.gmra.mrb[0].mxu0 %v2148
      %v2386 = vpop.f32.mrb[0].mxu0
      %v2387 = vadd.f32 0.0, %v2386
      %v2388 = vpop.f32.mrb[0].mxu0
      %v2389 = vadd.f32 0.0, %v2388
      %v2390 = vpop.f32.mrb[0].mxu0
      %v2391 = vadd.f32 0.0, %v2390
      %v2392 = vpop.f32.mrb[0].mxu0
      %v2393 = vadd.f32 0.0, %v2392
      %2394 = vdwg.mxu0
      %v2395 = vadd.f32 %v2140, %v2344
      %v2396 = vadd.f32 %v2141, %v2346
      %v2397 = vadd.f32 %v2142, %v2387
      %v2398 = vadd.f32 %v2143, %v2389
      %v2399 = vadd.f32 %v2144, %v2348
      %v2400 = vadd.f32 %v2145, %v2350
      %v2401 = vadd.f32 %v2146, %v2391
      %v2402 = vadd.f32 %v2147, %v2393
      %v2403 = vxor.u32 %v2395, 2147483648
      %v2404 = vxor.u32 %v2399, 2147483648
      %v2405 = vmul.f32 %v2403, 1.442695
      %v2406 = vpow.pop %v2405
      %v2407 = vmul.f32 %v2404, 1.442695
      %v2408 = vpow.pop %v2407
      %v2409 = vadd.f32 %v2406, 1.0
      %v2410 = vadd.f32 %v2408, 1.0
      %v2411 = vrcp.pop %v2409
      %v2412 = vmul.f32 1.0, %v2411
      %v2413 = vrcp.pop %v2410
      %v2414 = vmul.f32 1.0, %v2413
      %v2415 = vxor.u32 %v2396, 2147483648
      %v2416 = vxor.u32 %v2400, 2147483648
      %v2417 = vmul.f32 %v2415, 1.442695
      %v2418 = vpow.pop %v2417
      %v2419 = vmul.f32 %v2416, 1.442695
      %v2420 = vpow.pop %v2419
      %v2421 = vadd.f32 %v2418, 1.0
      %v2422 = vadd.f32 %v2420, 1.0
      %v2423 = vrcp.pop %v2421
      %v2424 = vmul.f32 1.0, %v2423
      %v2425 = vrcp.pop %v2422
      %v2426 = vmul.f32 1.0, %v2425
      %v2427 = vtanh.pop %v2397
      %v2428 = vtanh.pop %v2401
      %v2429 = vxor.u32 %v2398, 2147483648
      %v2430 = vxor.u32 %v2402, 2147483648
      %v2431 = vmul.f32 %v2429, 1.442695
      %v2432 = vpow.pop %v2431
      %v2433 = vmul.f32 %v2430, 1.442695
      %v2434 = vpow.pop %v2433
      %v2435 = vadd.f32 %v2432, 1.0
      %v2436 = vadd.f32 %v2434, 1.0
      %v2437 = vrcp.pop %v2435
      %v2438 = vmul.f32 1.0, %v2437
      %v2439 = vrcp.pop %v2436
      %v2440 = vmul.f32 1.0, %v2439
      %v2441 = vmul.f32 %v2424, %v2074
      %v2442 = vmul.f32 %v2426, %v2075
      %v2443 = vmul.f32 %v2412, %v2427
      %v2444 = vmul.f32 %v2414, %v2428
      %v2445 = vadd.f32 %v2441, %v2443
      %v2446 = vadd.f32 %v2442, %v2444
      %v2447 = vtanh.pop %v2445
      %v2448 = vtanh.pop %v2446
      %v2449 = vmul.f32 %v2438, %v2447
      %v2450 = vmul.f32 %v2440, %v2448
      %v2451 = vstv %s2084
      %vm2452 = vcmp.lt.s32.totalorder %v2451, %v511
      %vm2453 = vcmp.lt.s32.totalorder %v2451, %v512
      %v2454 = vsel %vm2452, 1, 0
      %v2455 = vsel %vm2453, 1, 0
      %2456 = vset.pattern.permute.xlu0 0
      %2457 = vperm.xlu0 %2456, %v2454
      %v2458 = vpop.permute.xlu0 %2457
      %2459 = vset.pattern.permute.xlu0 0
      %2460 = vperm.xlu0 %2459, %v2455
      %v2461 = vpop.permute.xlu0 %2460
      %vm2462 = vcmp.eq.s32.totalorder %v2458, 1
      %vm2463 = vcmp.eq.s32.totalorder %v2461, 1
      %v2464 = vsel %vm2462, %v2449, %v2072
      %v2465 = vsel %vm2463, %v2450, %v2073
      %v2466 = vsel %vm2462, %v2445, %v2074
      %v2467 = vsel %vm2463, %v2446, %v2075
      %v2468 = vsel %vm2462, %v2449, 0.0
      %v2469 = vsel %vm2463, %v2450, 0.0
      %s2470 = smul.u32 %s2083, 16
      %s2471 = scalar_lea.vmem %s471, %s2470
      %2472 = vst [vmem:[%s2471] sm:$0xff] %v2468
      %2473 = vst [vmem:[%s2471 + $0x8] sm:$0xff] %v2469
      %s2474 = smul.u32 %s507, 5
      %s2475 = sadd.s32 %s2474, %s510
      %s2476 = sadd.s32 %s509, %s2475
      %v2477 = vld [vmem:[%s454] sm:$0xff]
      %v2478 = vld [vmem:[%s454 + $0x8] sm:$0xff]
      %v2479 = vld [vmem:[%s454 + $0x10] sm:$0xff]
      %v2480 = vld [vmem:[%s454 + $0x18] sm:$0xff]
      %v2481 = vld [vmem:[%s454 + $0x20] sm:$0xff]
      %v2482 = vld [vmem:[%s454 + $0x28] sm:$0xff]
      %v2483 = vld [vmem:[%s454 + $0x30] sm:$0xff]
      %v2484 = vld [vmem:[%s454 + $0x38] sm:$0xff]
      %v2485 = vld [vmem:[%s454 + $0x40] sm:$0xff]
      %v2486 = vld [vmem:[%s454 + $0x48] sm:$0xff]
      %v2487 = vld [vmem:[%s454 + $0x50] sm:$0xff]
      %v2488 = vld [vmem:[%s454 + $0x58] sm:$0xff]
      %v2489 = vld [vmem:[%s454 + $0x60] sm:$0xff]
      %v2490 = vld [vmem:[%s454 + $0x68] sm:$0xff]
      %v2491 = vld [vmem:[%s454 + $0x70] sm:$0xff]
      %v2492 = vld [vmem:[%s454 + $0x78] sm:$0xff]
      %v2493 = vld [vmem:[%s454 + $0x80] sm:$0xff]
      %v2494 = vld [vmem:[%s454 + $0x88] sm:$0xff]
      %v2495 = vld [vmem:[%s454 + $0x90] sm:$0xff]
      %v2496 = vld [vmem:[%s454 + $0x98] sm:$0xff]
      %v2497 = vld [vmem:[%s454 + $0xa0] sm:$0xff]
      %v2498 = vld [vmem:[%s454 + $0xa8] sm:$0xff]
      %v2499 = vld [vmem:[%s454 + $0xb0] sm:$0xff]
      %v2500 = vld [vmem:[%s454 + $0xb8] sm:$0xff]
      %v2501 = vld [vmem:[%s454 + $0xc0] sm:$0xff]
      %v2502 = vld [vmem:[%s454 + $0xc8] sm:$0xff]
      %v2503 = vld [vmem:[%s454 + $0xd0] sm:$0xff]
      %v2504 = vld [vmem:[%s454 + $0xd8] sm:$0xff]
      %v2505 = vld [vmem:[%s454 + $0xe0] sm:$0xff]
      %v2506 = vld [vmem:[%s454 + $0xe8] sm:$0xff]
      %v2507 = vld [vmem:[%s454 + $0xf0] sm:$0xff]
      %v2508 = vld [vmem:[%s454 + $0xf8] sm:$0xff]
      %s2509 = smul.u32 %s2475, 8
      %s2510 = smul.addr %s2509, 4
      %s2511 = scalar_lea.vmem %s427, %s2510
      %v2512 = vld [vmem:[%s2511] sm:$0xff]
      %v2513 = vld [vmem:[%s2511 + $0x8] sm:$0xff]
      %v2514 = vld [vmem:[%s2511 + $0x10] sm:$0xff]
      %v2515 = vld [vmem:[%s2511 + $0x18] sm:$0xff]
      %v2516 = vunpack.c.l.bf16 %v2512
      %v2517 = vunpack.c.h.bf16 %v2512
      %v2518 = vunpack.c.l.bf16 %v2513
      %v2519 = vunpack.c.h.bf16 %v2513
      %v2520 = vunpack.c.l.bf16 %v2514
      %v2521 = vunpack.c.h.bf16 %v2514
      %v2522 = vunpack.c.l.bf16 %v2515
      %v2523 = vunpack.c.h.bf16 %v2515
      %v2524 = vld [vmem:[%s448] sm:$0xff]
      %v2525 = vld [vmem:[%s448 + $0x8] sm:$0xff]
      %v2526 = vld [vmem:[%s448 + $0x10] sm:$0xff]
      %v2527 = vld [vmem:[%s448 + $0x18] sm:$0xff]
      %v2528 = vld [vmem:[%s448 + $0x20] sm:$0xff]
      %v2529 = vld [vmem:[%s448 + $0x28] sm:$0xff]
      %v2530 = vld [vmem:[%s448 + $0x30] sm:$0xff]
      %v2531 = vld [vmem:[%s448 + $0x38] sm:$0xff]
      %v2532 = vadd.f32 %v2516, %v2524
      %v2533 = vadd.f32 %v2517, %v2525
      %v2534 = vadd.f32 %v2518, %v2526
      %v2535 = vadd.f32 %v2519, %v2527
      %v2536 = vadd.f32 %v2520, %v2528
      %v2537 = vadd.f32 %v2521, %v2529
      %v2538 = vadd.f32 %v2522, %v2530
      %v2539 = vadd.f32 %v2523, %v2531
      %v2540 = vpack.c.bf16 %v2465, %v2464
      %v2573 = vunpack.c.l.b16 %v2477
      %v2574 = vunpack.c.h.b16 %v2477
      %v2575 = vunpack.c.l.b16 %v2478
      %v2576 = vunpack.c.h.b16 %v2478
      %v2577 = vunpack.c.l.b16 %v2479
      %v2578 = vunpack.c.h.b16 %v2479
      %v2579 = vunpack.c.l.b16 %v2480
      %v2580 = vunpack.c.h.b16 %v2480
      %v2581 = vunpack.c.l.b16 %v2481
      %v2582 = vunpack.c.h.b16 %v2481
      %v2583 = vunpack.c.l.b16 %v2482
      %v2584 = vunpack.c.h.b16 %v2482
      %v2585 = vunpack.c.l.b16 %v2483
      %v2586 = vunpack.c.h.b16 %v2483
      %v2587 = vunpack.c.l.b16 %v2484
      %v2588 = vunpack.c.h.b16 %v2484
      %v2589 = vunpack.c.l.b16 %v2485
      %v2590 = vunpack.c.h.b16 %v2485
      %v2591 = vunpack.c.l.b16 %v2486
      %v2592 = vunpack.c.h.b16 %v2486
      %v2593 = vunpack.c.l.b16 %v2487
      %v2594 = vunpack.c.h.b16 %v2487
      %v2595 = vunpack.c.l.b16 %v2488
      %v2596 = vunpack.c.h.b16 %v2488
      %v2597 = vunpack.c.l.b16 %v2489
      %v2598 = vunpack.c.h.b16 %v2489
      %v2599 = vunpack.c.l.b16 %v2490
      %v2600 = vunpack.c.h.b16 %v2490
      %v2601 = vunpack.c.l.b16 %v2491
      %v2602 = vunpack.c.h.b16 %v2491
      %v2603 = vunpack.c.l.b16 %v2492
      %v2604 = vunpack.c.h.b16 %v2492
      %v2605 = vunpack.c.l.b16 %v2493
      %v2606 = vunpack.c.h.b16 %v2493
      %v2607 = vunpack.c.l.b16 %v2494
      %v2608 = vunpack.c.h.b16 %v2494
      %v2609 = vunpack.c.l.b16 %v2495
      %v2610 = vunpack.c.h.b16 %v2495
      %v2611 = vunpack.c.l.b16 %v2496
      %v2612 = vunpack.c.h.b16 %v2496
      %v2613 = vunpack.c.l.b16 %v2497
      %v2614 = vunpack.c.h.b16 %v2497
      %v2615 = vunpack.c.l.b16 %v2498
      %v2616 = vunpack.c.h.b16 %v2498
      %v2617 = vunpack.c.l.b16 %v2499
      %v2618 = vunpack.c.h.b16 %v2499
      %v2619 = vunpack.c.l.b16 %v2500
      %v2620 = vunpack.c.h.b16 %v2500
      %v2621 = vunpack.c.l.b16 %v2501
      %v2622 = vunpack.c.h.b16 %v2501
      %v2623 = vunpack.c.l.b16 %v2502
      %v2624 = vunpack.c.h.b16 %v2502
      %v2625 = vunpack.c.l.b16 %v2503
      %v2626 = vunpack.c.h.b16 %v2503
      %v2627 = vunpack.c.l.b16 %v2504
      %v2628 = vunpack.c.h.b16 %v2504
      %v2629 = vunpack.c.l.b16 %v2505
      %v2630 = vunpack.c.h.b16 %v2505
      %v2631 = vunpack.c.l.b16 %v2506
      %v2632 = vunpack.c.h.b16 %v2506
      %v2633 = vunpack.c.l.b16 %v2507
      %v2634 = vunpack.c.h.b16 %v2507
      %v2635 = vunpack.c.l.b16 %v2508
      %v2636 = vunpack.c.h.b16 %v2508
      %v2637 = vpack.c.b16 %v2577, %v2573
      %v2638 = vpack.c.b16 %v2578, %v2574
      %v2639 = vpack.c.b16 %v2579, %v2575
      %v2640 = vpack.c.b16 %v2580, %v2576
      %v2641 = vpack.c.b16 %v2585, %v2581
      %v2642 = vpack.c.b16 %v2586, %v2582
      %v2643 = vpack.c.b16 %v2587, %v2583
      %v2644 = vpack.c.b16 %v2588, %v2584
      %v2645 = vpack.c.b16 %v2593, %v2589
      %v2646 = vpack.c.b16 %v2594, %v2590
      %v2647 = vpack.c.b16 %v2595, %v2591
      %v2648 = vpack.c.b16 %v2596, %v2592
      %v2649 = vpack.c.b16 %v2601, %v2597
      %v2650 = vpack.c.b16 %v2602, %v2598
      %v2651 = vpack.c.b16 %v2603, %v2599
      %v2652 = vpack.c.b16 %v2604, %v2600
      %v2653 = vpack.c.b16 %v2609, %v2605
      %v2654 = vpack.c.b16 %v2610, %v2606
      %v2655 = vpack.c.b16 %v2611, %v2607
      %v2656 = vpack.c.b16 %v2612, %v2608
      %v2657 = vpack.c.b16 %v2617, %v2613
      %v2658 = vpack.c.b16 %v2618, %v2614
      %v2659 = vpack.c.b16 %v2619, %v2615
      %v2660 = vpack.c.b16 %v2620, %v2616
      %v2661 = vpack.c.b16 %v2625, %v2621
      %v2662 = vpack.c.b16 %v2626, %v2622
      %v2663 = vpack.c.b16 %v2627, %v2623
      %v2664 = vpack.c.b16 %v2628, %v2624
      %v2665 = vpack.c.b16 %v2633, %v2629
      %v2666 = vpack.c.b16 %v2634, %v2630
      %v2667 = vpack.c.b16 %v2635, %v2631
      %v2668 = vpack.c.b16 %v2636, %v2632
      %2701 = vmatprep.subr.bf16.mxu0 %v2638
      %2702 = vmatpush1.bf16.msra.mxu0 %v2637
      %2703 = vmatprep.subr.bf16.mxu0 %v2642
      %2704 = vmatpush1.bf16.msra.mxu0 %v2641
      %2705 = vmatprep.subr.bf16.mxu0 %v2646
      %2706 = vmatpush1.bf16.msra.mxu0 %v2645
      %2707 = vmatprep.subr.bf16.mxu0 %v2650
      %2708 = vmatpush1.bf16.msra.mxu0 %v2649
      %2709 = vmatprep.subr.bf16.mxu0 %v2654
      %2710 = vmatpush1.bf16.msra.mxu0 %v2653
      %2711 = vmatprep.subr.bf16.mxu0 %v2658
      %2712 = vmatpush1.bf16.msra.mxu0 %v2657
      %2713 = vmatprep.subr.bf16.mxu0 %v2662
      %2714 = vmatpush1.bf16.msra.mxu0 %v2661
      %2715 = vmatprep.subr.bf16.mxu0 %v2666
      %2716 = vmatpush1.bf16.msra.mxu0 %v2665
      %2717 = vmatprep.subr.bf16.mxu0 0
      %2718 = vmatpush1.bf16.msra.mxu0 0
      %2719 = vmatprep.subr.bf16.mxu0 0
      %2720 = vmatpush1.bf16.msra.mxu0 0
      %2721 = vmatprep.subr.bf16.mxu0 0
      %2722 = vmatpush1.bf16.msra.mxu0 0
      %2723 = vmatprep.subr.bf16.mxu0 0
      %2724 = vmatpush1.bf16.msra.mxu0 0
      %2725 = vmatprep.subr.bf16.mxu0 0
      %2726 = vmatpush1.bf16.msra.mxu0 0
      %2727 = vmatprep.subr.bf16.mxu0 0
      %2728 = vmatpush1.bf16.msra.mxu0 0
      %2729 = vmatprep.subr.bf16.mxu0 0
      %2730 = vmatpush1.bf16.msra.mxu0 0
      %2731 = vmatprep.subr.bf16.mxu0 0
      %2732 = vmatpush1.bf16.msra.mxu0 0
      %2733 = vmatprep.mubr.bf16.mxu0 0
      %2734 = vmatmul.mubr.bf16.gmra.mrb[0].mxu0 %v2540
      %v2735 = vpop.f32.mrb[0].mxu0
      %v2736 = vadd.f32 0.0, %v2735
      %v2737 = vpop.f32.mrb[0].mxu0
      %v2738 = vadd.f32 0.0, %v2737
      %v2739 = vpop.f32.mrb[0].mxu0
      %v2740 = vadd.f32 0.0, %v2739
      %v2741 = vpop.f32.mrb[0].mxu0
      %v2742 = vadd.f32 0.0, %v2741
      %2743 = vdwg.mxu0
      %2744 = vmatprep.subr.bf16.mxu0 %v2640
      %2745 = vmatpush1.bf16.msra.mxu0 %v2639
      %2746 = vmatprep.subr.bf16.mxu0 %v2644
      %2747 = vmatpush1.bf16.msra.mxu0 %v2643
      %2748 = vmatprep.subr.bf16.mxu0 %v2648
      %2749 = vmatpush1.bf16.msra.mxu0 %v2647
      %2750 = vmatprep.subr.bf16.mxu0 %v2652
      %2751 = vmatpush1.bf16.msra.mxu0 %v2651
      %2752 = vmatprep.subr.bf16.mxu0 %v2656
      %2753 = vmatpush1.bf16.msra.mxu0 %v2655
      %2754 = vmatprep.subr.bf16.mxu0 %v2660
      %2755 = vmatpush1.bf16.msra.mxu0 %v2659
      %2756 = vmatprep.subr.bf16.mxu0 %v2664
      %2757 = vmatpush1.bf16.msra.mxu0 %v2663
      %2758 = vmatprep.subr.bf16.mxu0 %v2668
      %2759 = vmatpush1.bf16.msra.mxu0 %v2667
      %2760 = vmatprep.subr.bf16.mxu0 0
      %2761 = vmatpush1.bf16.msra.mxu0 0
      %2762 = vmatprep.subr.bf16.mxu0 0
      %2763 = vmatpush1.bf16.msra.mxu0 0
      %2764 = vmatprep.subr.bf16.mxu0 0
      %2765 = vmatpush1.bf16.msra.mxu0 0
      %2766 = vmatprep.subr.bf16.mxu0 0
      %2767 = vmatpush1.bf16.msra.mxu0 0
      %2768 = vmatprep.subr.bf16.mxu0 0
      %2769 = vmatpush1.bf16.msra.mxu0 0
      %2770 = vmatprep.subr.bf16.mxu0 0
      %2771 = vmatpush1.bf16.msra.mxu0 0
      %2772 = vmatprep.subr.bf16.mxu0 0
      %2773 = vmatpush1.bf16.msra.mxu0 0
      %2774 = vmatprep.subr.bf16.mxu0 0
      %2775 = vmatpush1.bf16.msra.mxu0 0
      %2776 = vmatprep.mubr.bf16.mxu0 0
      %2777 = vmatmul.mubr.bf16.gmra.mrb[0].mxu0 %v2540
      %v2778 = vpop.f32.mrb[0].mxu0
      %v2779 = vadd.f32 0.0, %v2778
      %v2780 = vpop.f32.mrb[0].mxu0
      %v2781 = vadd.f32 0.0, %v2780
      %v2782 = vpop.f32.mrb[0].mxu0
      %v2783 = vadd.f32 0.0, %v2782
      %v2784 = vpop.f32.mrb[0].mxu0
      %v2785 = vadd.f32 0.0, %v2784
      %2786 = vdwg.mxu0
      %v2787 = vadd.f32 %v2532, %v2736
      %v2788 = vadd.f32 %v2533, %v2738
      %v2789 = vadd.f32 %v2534, %v2779
      %v2790 = vadd.f32 %v2535, %v2781
      %v2791 = vadd.f32 %v2536, %v2740
      %v2792 = vadd.f32 %v2537, %v2742
      %v2793 = vadd.f32 %v2538, %v2783
      %v2794 = vadd.f32 %v2539, %v2785
      %v2795 = vxor.u32 %v2787, 2147483648
      %v2796 = vxor.u32 %v2791, 2147483648
      %v2797 = vmul.f32 %v2795, 1.442695
      %v2798 = vpow.pop %v2797
      %v2799 = vmul.f32 %v2796, 1.442695
      %v2800 = vpow.pop %v2799
      %v2801 = vadd.f32 %v2798, 1.0
      %v2802 = vadd.f32 %v2800, 1.0
      %v2803 = vrcp.pop %v2801
      %v2804 = vmul.f32 1.0, %v2803
      %v2805 = vrcp.pop %v2802
      %v2806 = vmul.f32 1.0, %v2805
      %v2807 = vxor.u32 %v2788, 2147483648
      %v2808 = vxor.u32 %v2792, 2147483648
      %v2809 = vmul.f32 %v2807, 1.442695
      %v2810 = vpow.pop %v2809
      %v2811 = vmul.f32 %v2808, 1.442695
      %v2812 = vpow.pop %v2811
      %v2813 = vadd.f32 %v2810, 1.0
      %v2814 = vadd.f32 %v2812, 1.0
      %v2815 = vrcp.pop %v2813
      %v2816 = vmul.f32 1.0, %v2815
      %v2817 = vrcp.pop %v2814
      %v2818 = vmul.f32 1.0, %v2817
      %v2819 = vtanh.pop %v2789
      %v2820 = vtanh.pop %v2793
      %v2821 = vxor.u32 %v2790, 2147483648
      %v2822 = vxor.u32 %v2794, 2147483648
      %v2823 = vmul.f32 %v2821, 1.442695
      %v2824 = vpow.pop %v2823
      %v2825 = vmul.f32 %v2822, 1.442695
      %v2826 = vpow.pop %v2825
      %v2827 = vadd.f32 %v2824, 1.0
      %v2828 = vadd.f32 %v2826, 1.0
      %v2829 = vrcp.pop %v2827
      %v2830 = vmul.f32 1.0, %v2829
      %v2831 = vrcp.pop %v2828
      %v2832 = vmul.f32 1.0, %v2831
      %v2833 = vmul.f32 %v2816, %v2466
      %v2834 = vmul.f32 %v2818, %v2467
      %v2835 = vmul.f32 %v2804, %v2819
      %v2836 = vmul.f32 %v2806, %v2820
      %v2837 = vadd.f32 %v2833, %v2835
      %v2838 = vadd.f32 %v2834, %v2836
      %v2839 = vtanh.pop %v2837
      %v2840 = vtanh.pop %v2838
      %v2841 = vmul.f32 %v2830, %v2839
      %v2842 = vmul.f32 %v2832, %v2840
      %v2843 = vstv %s2476
      %vm2844 = vcmp.lt.s32.totalorder %v2843, %v511
      %vm2845 = vcmp.lt.s32.totalorder %v2843, %v512
      %v2846 = vsel %vm2844, 1, 0
      %v2847 = vsel %vm2845, 1, 0
      %2848 = vset.pattern.permute.xlu0 0
      %2849 = vperm.xlu0 %2848, %v2846
      %v2850 = vpop.permute.xlu0 %2849
      %2851 = vset.pattern.permute.xlu0 0
      %2852 = vperm.xlu0 %2851, %v2847
      %v2853 = vpop.permute.xlu0 %2852
      %vm2854 = vcmp.eq.s32.totalorder %v2850, 1
      %vm2855 = vcmp.eq.s32.totalorder %v2853, 1
      %v2856 = vsel %vm2854, %v2841, %v2464
      %v2857 = vsel %vm2855, %v2842, %v2465
      %v2858 = vsel %vm2854, %v2837, %v2466
      %v2859 = vsel %vm2855, %v2838, %v2467
      %v2860 = vsel %vm2854, %v2841, 0.0
      %v2861 = vsel %vm2855, %v2842, 0.0
      %s2862 = smul.u32 %s2475, 16
      %s2863 = scalar_lea.vmem %s471, %s2862
      %2864 = vst [vmem:[%s2863] sm:$0xff] %v2860
      %2865 = vst [vmem:[%s2863 + $0x8] sm:$0xff] %v2861
      %s2866 = smul.u32 %s507, 6
      %s2867 = sadd.s32 %s2866, %s510
      %s2868 = sadd.s32 %s509, %s2867
      %v2869 = vld [vmem:[%s454] sm:$0xff]
      %v2870 = vld [vmem:[%s454 + $0x8] sm:$0xff]
      %v2871 = vld [vmem:[%s454 + $0x10] sm:$0xff]
      %v2872 = vld [vmem:[%s454 + $0x18] sm:$0xff]
      %v2873 = vld [vmem:[%s454 + $0x20] sm:$0xff]
      %v2874 = vld [vmem:[%s454 + $0x28] sm:$0xff]
      %v2875 = vld [vmem:[%s454 + $0x30] sm:$0xff]
      %v2876 = vld [vmem:[%s454 + $0x38] sm:$0xff]
      %v2877 = vld [vmem:[%s454 + $0x40] sm:$0xff]
      %v2878 = vld [vmem:[%s454 + $0x48] sm:$0xff]
      %v2879 = vld [vmem:[%s454 + $0x50] sm:$0xff]
      %v2880 = vld [vmem:[%s454 + $0x58] sm:$0xff]
      %v2881 = vld [vmem:[%s454 + $0x60] sm:$0xff]
      %v2882 = vld [vmem:[%s454 + $0x68] sm:$0xff]
      %v2883 = vld [vmem:[%s454 + $0x70] sm:$0xff]
      %v2884 = vld [vmem:[%s454 + $0x78] sm:$0xff]
      %v2885 = vld [vmem:[%s454 + $0x80] sm:$0xff]
      %v2886 = vld [vmem:[%s454 + $0x88] sm:$0xff]
      %v2887 = vld [vmem:[%s454 + $0x90] sm:$0xff]
      %v2888 = vld [vmem:[%s454 + $0x98] sm:$0xff]
      %v2889 = vld [vmem:[%s454 + $0xa0] sm:$0xff]
      %v2890 = vld [vmem:[%s454 + $0xa8] sm:$0xff]
      %v2891 = vld [vmem:[%s454 + $0xb0] sm:$0xff]
      %v2892 = vld [vmem:[%s454 + $0xb8] sm:$0xff]
      %v2893 = vld [vmem:[%s454 + $0xc0] sm:$0xff]
      %v2894 = vld [vmem:[%s454 + $0xc8] sm:$0xff]
      %v2895 = vld [vmem:[%s454 + $0xd0] sm:$0xff]
      %v2896 = vld [vmem:[%s454 + $0xd8] sm:$0xff]
      %v2897 = vld [vmem:[%s454 + $0xe0] sm:$0xff]
      %v2898 = vld [vmem:[%s454 + $0xe8] sm:$0xff]
      %v2899 = vld [vmem:[%s454 + $0xf0] sm:$0xff]
      %v2900 = vld [vmem:[%s454 + $0xf8] sm:$0xff]
      %s2901 = smul.u32 %s2867, 8
      %s2902 = smul.addr %s2901, 4
      %s2903 = scalar_lea.vmem %s427, %s2902
      %v2904 = vld [vmem:[%s2903] sm:$0xff]
      %v2905 = vld [vmem:[%s2903 + $0x8] sm:$0xff]
      %v2906 = vld [vmem:[%s2903 + $0x10] sm:$0xff]
      %v2907 = vld [vmem:[%s2903 + $0x18] sm:$0xff]
      %v2908 = vunpack.c.l.bf16 %v2904
      %v2909 = vunpack.c.h.bf16 %v2904
      %v2910 = vunpack.c.l.bf16 %v2905
      %v2911 = vunpack.c.h.bf16 %v2905
      %v2912 = vunpack.c.l.bf16 %v2906
      %v2913 = vunpack.c.h.bf16 %v2906
      %v2914 = vunpack.c.l.bf16 %v2907
      %v2915 = vunpack.c.h.bf16 %v2907
      %v2916 = vld [vmem:[%s448] sm:$0xff]
      %v2917 = vld [vmem:[%s448 + $0x8] sm:$0xff]
      %v2918 = vld [vmem:[%s448 + $0x10] sm:$0xff]
      %v2919 = vld [vmem:[%s448 + $0x18] sm:$0xff]
      %v2920 = vld [vmem:[%s448 + $0x20] sm:$0xff]
      %v2921 = vld [vmem:[%s448 + $0x28] sm:$0xff]
      %v2922 = vld [vmem:[%s448 + $0x30] sm:$0xff]
      %v2923 = vld [vmem:[%s448 + $0x38] sm:$0xff]
      %v2924 = vadd.f32 %v2908, %v2916
      %v2925 = vadd.f32 %v2909, %v2917
      %v2926 = vadd.f32 %v2910, %v2918
      %v2927 = vadd.f32 %v2911, %v2919
      %v2928 = vadd.f32 %v2912, %v2920
      %v2929 = vadd.f32 %v2913, %v2921
      %v2930 = vadd.f32 %v2914, %v2922
      %v2931 = vadd.f32 %v2915, %v2923
      %v2932 = vpack.c.bf16 %v2857, %v2856
      %v2965 = vunpack.c.l.b16 %v2869
      %v2966 = vunpack.c.h.b16 %v2869
      %v2967 = vunpack.c.l.b16 %v2870
      %v2968 = vunpack.c.h.b16 %v2870
      %v2969 = vunpack.c.l.b16 %v2871
      %v2970 = vunpack.c.h.b16 %v2871
      %v2971 = vunpack.c.l.b16 %v2872
      %v2972 = vunpack.c.h.b16 %v2872
      %v2973 = vunpack.c.l.b16 %v2873
      %v2974 = vunpack.c.h.b16 %v2873
      %v2975 = vunpack.c.l.b16 %v2874
      %v2976 = vunpack.c.h.b16 %v2874
      %v2977 = vunpack.c.l.b16 %v2875
      %v2978 = vunpack.c.h.b16 %v2875
      %v2979 = vunpack.c.l.b16 %v2876
      %v2980 = vunpack.c.h.b16 %v2876
      %v2981 = vunpack.c.l.b16 %v2877
      %v2982 = vunpack.c.h.b16 %v2877
      %v2983 = vunpack.c.l.b16 %v2878
      %v2984 = vunpack.c.h.b16 %v2878
      %v2985 = vunpack.c.l.b16 %v2879
      %v2986 = vunpack.c.h.b16 %v2879
      %v2987 = vunpack.c.l.b16 %v2880
      %v2988 = vunpack.c.h.b16 %v2880
      %v2989 = vunpack.c.l.b16 %v2881
      %v2990 = vunpack.c.h.b16 %v2881
      %v2991 = vunpack.c.l.b16 %v2882
      %v2992 = vunpack.c.h.b16 %v2882
      %v2993 = vunpack.c.l.b16 %v2883
      %v2994 = vunpack.c.h.b16 %v2883
      %v2995 = vunpack.c.l.b16 %v2884
      %v2996 = vunpack.c.h.b16 %v2884
      %v2997 = vunpack.c.l.b16 %v2885
      %v2998 = vunpack.c.h.b16 %v2885
      %v2999 = vunpack.c.l.b16 %v2886
      %v3000 = vunpack.c.h.b16 %v2886
      %v3001 = vunpack.c.l.b16 %v2887
      %v3002 = vunpack.c.h.b16 %v2887
      %v3003 = vunpack.c.l.b16 %v2888
      %v3004 = vunpack.c.h.b16 %v2888
      %v3005 = vunpack.c.l.b16 %v2889
      %v3006 = vunpack.c.h.b16 %v2889
      %v3007 = vunpack.c.l.b16 %v2890
      %v3008 = vunpack.c.h.b16 %v2890
      %v3009 = vunpack.c.l.b16 %v2891
      %v3010 = vunpack.c.h.b16 %v2891
      %v3011 = vunpack.c.l.b16 %v2892
      %v3012 = vunpack.c.h.b16 %v2892
      %v3013 = vunpack.c.l.b16 %v2893
      %v3014 = vunpack.c.h.b16 %v2893
      %v3015 = vunpack.c.l.b16 %v2894
      %v3016 = vunpack.c.h.b16 %v2894
      %v3017 = vunpack.c.l.b16 %v2895
      %v3018 = vunpack.c.h.b16 %v2895
      %v3019 = vunpack.c.l.b16 %v2896
      %v3020 = vunpack.c.h.b16 %v2896
      %v3021 = vunpack.c.l.b16 %v2897
      %v3022 = vunpack.c.h.b16 %v2897
      %v3023 = vunpack.c.l.b16 %v2898
      %v3024 = vunpack.c.h.b16 %v2898
      %v3025 = vunpack.c.l.b16 %v2899
      %v3026 = vunpack.c.h.b16 %v2899
      %v3027 = vunpack.c.l.b16 %v2900
      %v3028 = vunpack.c.h.b16 %v2900
      %v3029 = vpack.c.b16 %v2969, %v2965
      %v3030 = vpack.c.b16 %v2970, %v2966
      %v3031 = vpack.c.b16 %v2971, %v2967
      %v3032 = vpack.c.b16 %v2972, %v2968
      %v3033 = vpack.c.b16 %v2977, %v2973
      %v3034 = vpack.c.b16 %v2978, %v2974
      %v3035 = vpack.c.b16 %v2979, %v2975
      %v3036 = vpack.c.b16 %v2980, %v2976
      %v3037 = vpack.c.b16 %v2985, %v2981
      %v3038 = vpack.c.b16 %v2986, %v2982
      %v3039 = vpack.c.b16 %v2987, %v2983
      %v3040 = vpack.c.b16 %v2988, %v2984
      %v3041 = vpack.c.b16 %v2993, %v2989
      %v3042 = vpack.c.b16 %v2994, %v2990
      %v3043 = vpack.c.b16 %v2995, %v2991
      %v3044 = vpack.c.b16 %v2996, %v2992
      %v3045 = vpack.c.b16 %v3001, %v2997
      %v3046 = vpack.c.b16 %v3002, %v2998
      %v3047 = vpack.c.b16 %v3003, %v2999
      %v3048 = vpack.c.b16 %v3004, %v3000
      %v3049 = vpack.c.b16 %v3009, %v3005
      %v3050 = vpack.c.b16 %v3010, %v3006
      %v3051 = vpack.c.b16 %v3011, %v3007
      %v3052 = vpack.c.b16 %v3012, %v3008
      %v3053 = vpack.c.b16 %v3017, %v3013
      %v3054 = vpack.c.b16 %v3018, %v3014
      %v3055 = vpack.c.b16 %v3019, %v3015
      %v3056 = vpack.c.b16 %v3020, %v3016
      %v3057 = vpack.c.b16 %v3025, %v3021
      %v3058 = vpack.c.b16 %v3026, %v3022
      %v3059 = vpack.c.b16 %v3027, %v3023
      %v3060 = vpack.c.b16 %v3028, %v3024
      %3093 = vmatprep.subr.bf16.mxu0 %v3030
      %3094 = vmatpush1.bf16.msra.mxu0 %v3029
      %3095 = vmatprep.subr.bf16.mxu0 %v3034
      %3096 = vmatpush1.bf16.msra.mxu0 %v3033
      %3097 = vmatprep.subr.bf16.mxu0 %v3038
      %3098 = vmatpush1.bf16.msra.mxu0 %v3037
      %3099 = vmatprep.subr.bf16.mxu0 %v3042
      %3100 = vmatpush1.bf16.msra.mxu0 %v3041
      %3101 = vmatprep.subr.bf16.mxu0 %v3046
      %3102 = vmatpush1.bf16.msra.mxu0 %v3045
      %3103 = vmatprep.subr.bf16.mxu0 %v3050
      %3104 = vmatpush1.bf16.msra.mxu0 %v3049
      %3105 = vmatprep.subr.bf16.mxu0 %v3054
      %3106 = vmatpush1.bf16.msra.mxu0 %v3053
      %3107 = vmatprep.subr.bf16.mxu0 %v3058
      %3108 = vmatpush1.bf16.msra.mxu0 %v3057
      %3109 = vmatprep.subr.bf16.mxu0 0
      %3110 = vmatpush1.bf16.msra.mxu0 0
      %3111 = vmatprep.subr.bf16.mxu0 0
      %3112 = vmatpush1.bf16.msra.mxu0 0
      %3113 = vmatprep.subr.bf16.mxu0 0
      %3114 = vmatpush1.bf16.msra.mxu0 0
      %3115 = vmatprep.subr.bf16.mxu0 0
      %3116 = vmatpush1.bf16.msra.mxu0 0
      %3117 = vmatprep.subr.bf16.mxu0 0
      %3118 = vmatpush1.bf16.msra.mxu0 0
      %3119 = vmatprep.subr.bf16.mxu0 0
      %3120 = vmatpush1.bf16.msra.mxu0 0
      %3121 = vmatprep.subr.bf16.mxu0 0
      %3122 = vmatpush1.bf16.msra.mxu0 0
      %3123 = vmatprep.subr.bf16.mxu0 0
      %3124 = vmatpush1.bf16.msra.mxu0 0
      %3125 = vmatprep.mubr.bf16.mxu0 0
      %3126 = vmatmul.mubr.bf16.gmra.mrb[0].mxu0 %v2932
      %v3127 = vpop.f32.mrb[0].mxu0
      %v3128 = vadd.f32 0.0, %v3127
      %v3129 = vpop.f32.mrb[0].mxu0
      %v3130 = vadd.f32 0.0, %v3129
      %v3131 = vpop.f32.mrb[0].mxu0
      %v3132 = vadd.f32 0.0, %v3131
      %v3133 = vpop.f32.mrb[0].mxu0
      %v3134 = vadd.f32 0.0, %v3133
      %3135 = vdwg.mxu0
      %3136 = vmatprep.subr.bf16.mxu0 %v3032
      %3137 = vmatpush1.bf16.msra.mxu0 %v3031
      %3138 = vmatprep.subr.bf16.mxu0 %v3036
      %3139 = vmatpush1.bf16.msra.mxu0 %v3035
      %3140 = vmatprep.subr.bf16.mxu0 %v3040
      %3141 = vmatpush1.bf16.msra.mxu0 %v3039
      %3142 = vmatprep.subr.bf16.mxu0 %v3044
      %3143 = vmatpush1.bf16.msra.mxu0 %v3043
      %3144 = vmatprep.subr.bf16.mxu0 %v3048
      %3145 = vmatpush1.bf16.msra.mxu0 %v3047
      %3146 = vmatprep.subr.bf16.mxu0 %v3052
      %3147 = vmatpush1.bf16.msra.mxu0 %v3051
      %3148 = vmatprep.subr.bf16.mxu0 %v3056
      %3149 = vmatpush1.bf16.msra.mxu0 %v3055
      %3150 = vmatprep.subr.bf16.mxu0 %v3060
      %3151 = vmatpush1.bf16.msra.mxu0 %v3059
      %3152 = vmatprep.subr.bf16.mxu0 0
      %3153 = vmatpush1.bf16.msra.mxu0 0
      %3154 = vmatprep.subr.bf16.mxu0 0
      %3155 = vmatpush1.bf16.msra.mxu0 0
      %3156 = vmatprep.subr.bf16.mxu0 0
      %3157 = vmatpush1.bf16.msra.mxu0 0
      %3158 = vmatprep.subr.bf16.mxu0 0
      %3159 = vmatpush1.bf16.msra.mxu0 0
      %3160 = vmatprep.subr.bf16.mxu0 0
      %3161 = vmatpush1.bf16.msra.mxu0 0
      %3162 = vmatprep.subr.bf16.mxu0 0
      %3163 = vmatpush1.bf16.msra.mxu0 0
      %3164 = vmatprep.subr.bf16.mxu0 0
      %3165 = vmatpush1.bf16.msra.mxu0 0
      %3166 = vmatprep.subr.bf16.mxu0 0
      %3167 = vmatpush1.bf16.msra.mxu0 0
      %3168 = vmatprep.mubr.bf16.mxu0 0
      %3169 = vmatmul.mubr.bf16.gmra.mrb[0].mxu0 %v2932
      %v3170 = vpop.f32.mrb[0].mxu0
      %v3171 = vadd.f32 0.0, %v3170
      %v3172 = vpop.f32.mrb[0].mxu0
      %v3173 = vadd.f32 0.0, %v3172
      %v3174 = vpop.f32.mrb[0].mxu0
      %v3175 = vadd.f32 0.0, %v3174
      %v3176 = vpop.f32.mrb[0].mxu0
      %v3177 = vadd.f32 0.0, %v3176
      %3178 = vdwg.mxu0
      %v3179 = vadd.f32 %v2924, %v3128
      %v3180 = vadd.f32 %v2925, %v3130
      %v3181 = vadd.f32 %v2926, %v3171
      %v3182 = vadd.f32 %v2927, %v3173
      %v3183 = vadd.f32 %v2928, %v3132
      %v3184 = vadd.f32 %v2929, %v3134
      %v3185 = vadd.f32 %v2930, %v3175
      %v3186 = vadd.f32 %v2931, %v3177
      %v3187 = vxor.u32 %v3179, 2147483648
      %v3188 = vxor.u32 %v3183, 2147483648
      %v3189 = vmul.f32 %v3187, 1.442695
      %v3190 = vpow.pop %v3189
      %v3191 = vmul.f32 %v3188, 1.442695
      %v3192 = vpow.pop %v3191
      %v3193 = vadd.f32 %v3190, 1.0
      %v3194 = vadd.f32 %v3192, 1.0
      %v3195 = vrcp.pop %v3193
      %v3196 = vmul.f32 1.0, %v3195
      %v3197 = vrcp.pop %v3194
      %v3198 = vmul.f32 1.0, %v3197
      %v3199 = vxor.u32 %v3180, 2147483648
      %v3200 = vxor.u32 %v3184, 2147483648
      %v3201 = vmul.f32 %v3199, 1.442695
      %v3202 = vpow.pop %v3201
      %v3203 = vmul.f32 %v3200, 1.442695
      %v3204 = vpow.pop %v3203
      %v3205 = vadd.f32 %v3202, 1.0
      %v3206 = vadd.f32 %v3204, 1.0
      %v3207 = vrcp.pop %v3205
      %v3208 = vmul.f32 1.0, %v3207
      %v3209 = vrcp.pop %v3206
      %v3210 = vmul.f32 1.0, %v3209
      %v3211 = vtanh.pop %v3181
      %v3212 = vtanh.pop %v3185
      %v3213 = vxor.u32 %v3182, 2147483648
      %v3214 = vxor.u32 %v3186, 2147483648
      %v3215 = vmul.f32 %v3213, 1.442695
      %v3216 = vpow.pop %v3215
      %v3217 = vmul.f32 %v3214, 1.442695
      %v3218 = vpow.pop %v3217
      %v3219 = vadd.f32 %v3216, 1.0
      %v3220 = vadd.f32 %v3218, 1.0
      %v3221 = vrcp.pop %v3219
      %v3222 = vmul.f32 1.0, %v3221
      %v3223 = vrcp.pop %v3220
      %v3224 = vmul.f32 1.0, %v3223
      %v3225 = vmul.f32 %v3208, %v2858
      %v3226 = vmul.f32 %v3210, %v2859
      %v3227 = vmul.f32 %v3196, %v3211
      %v3228 = vmul.f32 %v3198, %v3212
      %v3229 = vadd.f32 %v3225, %v3227
      %v3230 = vadd.f32 %v3226, %v3228
      %v3231 = vtanh.pop %v3229
      %v3232 = vtanh.pop %v3230
      %v3233 = vmul.f32 %v3222, %v3231
      %v3234 = vmul.f32 %v3224, %v3232
      %v3235 = vstv %s2868
      %vm3236 = vcmp.lt.s32.totalorder %v3235, %v511
      %vm3237 = vcmp.lt.s32.totalorder %v3235, %v512
      %v3238 = vsel %vm3236, 1, 0
      %v3239 = vsel %vm3237, 1, 0
      %3240 = vset.pattern.permute.xlu0 0
      %3241 = vperm.xlu0 %3240, %v3238
      %v3242 = vpop.permute.xlu0 %3241
      %3243 = vset.pattern.permute.xlu0 0
      %3244 = vperm.xlu0 %3243, %v3239
      %v3245 = vpop.permute.xlu0 %3244
      %vm3246 = vcmp.eq.s32.totalorder %v3242, 1
      %vm3247 = vcmp.eq.s32.totalorder %v3245, 1
      %v3248 = vsel %vm3246, %v3233, %v2856
      %v3249 = vsel %vm3247, %v3234, %v2857
      %v3250 = vsel %vm3246, %v3229, %v2858
      %v3251 = vsel %vm3247, %v3230, %v2859
      %v3252 = vsel %vm3246, %v3233, 0.0
      %v3253 = vsel %vm3247, %v3234, 0.0
      %s3254 = smul.u32 %s2867, 16
      %s3255 = scalar_lea.vmem %s471, %s3254
      %3256 = vst [vmem:[%s3255] sm:$0xff] %v3252
      %3257 = vst [vmem:[%s3255 + $0x8] sm:$0xff] %v3253
      %s3258 = smul.u32 %s507, 7
      %s3259 = sadd.s32 %s3258, %s510
      %s3260 = sadd.s32 %s509, %s3259
      %v3261 = vld [vmem:[%s454] sm:$0xff]
      %v3262 = vld [vmem:[%s454 + $0x8] sm:$0xff]
      %v3263 = vld [vmem:[%s454 + $0x10] sm:$0xff]
      %v3264 = vld [vmem:[%s454 + $0x18] sm:$0xff]
      %v3265 = vld [vmem:[%s454 + $0x20] sm:$0xff]
      %v3266 = vld [vmem:[%s454 + $0x28] sm:$0xff]
      %v3267 = vld [vmem:[%s454 + $0x30] sm:$0xff]
      %v3268 = vld [vmem:[%s454 + $0x38] sm:$0xff]
      %v3269 = vld [vmem:[%s454 + $0x40] sm:$0xff]
      %v3270 = vld [vmem:[%s454 + $0x48] sm:$0xff]
      %v3271 = vld [vmem:[%s454 + $0x50] sm:$0xff]
      %v3272 = vld [vmem:[%s454 + $0x58] sm:$0xff]
      %v3273 = vld [vmem:[%s454 + $0x60] sm:$0xff]
      %v3274 = vld [vmem:[%s454 + $0x68] sm:$0xff]
      %v3275 = vld [vmem:[%s454 + $0x70] sm:$0xff]
      %v3276 = vld [vmem:[%s454 + $0x78] sm:$0xff]
      %v3277 = vld [vmem:[%s454 + $0x80] sm:$0xff]
      %v3278 = vld [vmem:[%s454 + $0x88] sm:$0xff]
      %v3279 = vld [vmem:[%s454 + $0x90] sm:$0xff]
      %v3280 = vld [vmem:[%s454 + $0x98] sm:$0xff]
      %v3281 = vld [vmem:[%s454 + $0xa0] sm:$0xff]
      %v3282 = vld [vmem:[%s454 + $0xa8] sm:$0xff]
      %v3283 = vld [vmem:[%s454 + $0xb0] sm:$0xff]
      %v3284 = vld [vmem:[%s454 + $0xb8] sm:$0xff]
      %v3285 = vld [vmem:[%s454 + $0xc0] sm:$0xff]
      %v3286 = vld [vmem:[%s454 + $0xc8] sm:$0xff]
      %v3287 = vld [vmem:[%s454 + $0xd0] sm:$0xff]
      %v3288 = vld [vmem:[%s454 + $0xd8] sm:$0xff]
      %v3289 = vld [vmem:[%s454 + $0xe0] sm:$0xff]
      %v3290 = vld [vmem:[%s454 + $0xe8] sm:$0xff]
      %v3291 = vld [vmem:[%s454 + $0xf0] sm:$0xff]
      %v3292 = vld [vmem:[%s454 + $0xf8] sm:$0xff]
      %s3293 = smul.u32 %s3259, 8
      %s3294 = smul.addr %s3293, 4
      %s3295 = scalar_lea.vmem %s427, %s3294
      %v3296 = vld [vmem:[%s3295] sm:$0xff]
      %v3297 = vld [vmem:[%s3295 + $0x8] sm:$0xff]
      %v3298 = vld [vmem:[%s3295 + $0x10] sm:$0xff]
      %v3299 = vld [vmem:[%s3295 + $0x18] sm:$0xff]
      %v3300 = vunpack.c.l.bf16 %v3296
      %v3301 = vunpack.c.h.bf16 %v3296
      %v3302 = vunpack.c.l.bf16 %v3297
      %v3303 = vunpack.c.h.bf16 %v3297
      %v3304 = vunpack.c.l.bf16 %v3298
      %v3305 = vunpack.c.h.bf16 %v3298
      %v3306 = vunpack.c.l.bf16 %v3299
      %v3307 = vunpack.c.h.bf16 %v3299
      %v3308 = vld [vmem:[%s448] sm:$0xff]
      %v3309 = vld [vmem:[%s448 + $0x8] sm:$0xff]
      %v3310 = vld [vmem:[%s448 + $0x10] sm:$0xff]
      %v3311 = vld [vmem:[%s448 + $0x18] sm:$0xff]
      %v3312 = vld [vmem:[%s448 + $0x20] sm:$0xff]
      %v3313 = vld [vmem:[%s448 + $0x28] sm:$0xff]
      %v3314 = vld [vmem:[%s448 + $0x30] sm:$0xff]
      %v3315 = vld [vmem:[%s448 + $0x38] sm:$0xff]
      %v3316 = vadd.f32 %v3300, %v3308
      %v3317 = vadd.f32 %v3301, %v3309
      %v3318 = vadd.f32 %v3302, %v3310
      %v3319 = vadd.f32 %v3303, %v3311
      %v3320 = vadd.f32 %v3304, %v3312
      %v3321 = vadd.f32 %v3305, %v3313
      %v3322 = vadd.f32 %v3306, %v3314
      %v3323 = vadd.f32 %v3307, %v3315
      %v3324 = vpack.c.bf16 %v3249, %v3248
      %v3357 = vunpack.c.l.b16 %v3261
      %v3358 = vunpack.c.h.b16 %v3261
      %v3359 = vunpack.c.l.b16 %v3262
      %v3360 = vunpack.c.h.b16 %v3262
      %v3361 = vunpack.c.l.b16 %v3263
      %v3362 = vunpack.c.h.b16 %v3263
      %v3363 = vunpack.c.l.b16 %v3264
      %v3364 = vunpack.c.h.b16 %v3264
      %v3365 = vunpack.c.l.b16 %v3265
      %v3366 = vunpack.c.h.b16 %v3265
      %v3367 = vunpack.c.l.b16 %v3266
      %v3368 = vunpack.c.h.b16 %v3266
      %v3369 = vunpack.c.l.b16 %v3267
      %v3370 = vunpack.c.h.b16 %v3267
      %v3371 = vunpack.c.l.b16 %v3268
      %v3372 = vunpack.c.h.b16 %v3268
      %v3373 = vunpack.c.l.b16 %v3269
      %v3374 = vunpack.c.h.b16 %v3269
      %v3375 = vunpack.c.l.b16 %v3270
      %v3376 = vunpack.c.h.b16 %v3270
      %v3377 = vunpack.c.l.b16 %v3271
      %v3378 = vunpack.c.h.b16 %v3271
      %v3379 = vunpack.c.l.b16 %v3272
      %v3380 = vunpack.c.h.b16 %v3272
      %v3381 = vunpack.c.l.b16 %v3273
      %v3382 = vunpack.c.h.b16 %v3273
      %v3383 = vunpack.c.l.b16 %v3274
      %v3384 = vunpack.c.h.b16 %v3274
      %v3385 = vunpack.c.l.b16 %v3275
      %v3386 = vunpack.c.h.b16 %v3275
      %v3387 = vunpack.c.l.b16 %v3276
      %v3388 = vunpack.c.h.b16 %v3276
      %v3389 = vunpack.c.l.b16 %v3277
      %v3390 = vunpack.c.h.b16 %v3277
      %v3391 = vunpack.c.l.b16 %v3278
      %v3392 = vunpack.c.h.b16 %v3278
      %v3393 = vunpack.c.l.b16 %v3279
      %v3394 = vunpack.c.h.b16 %v3279
      %v3395 = vunpack.c.l.b16 %v3280
      %v3396 = vunpack.c.h.b16 %v3280
      %v3397 = vunpack.c.l.b16 %v3281
      %v3398 = vunpack.c.h.b16 %v3281
      %v3399 = vunpack.c.l.b16 %v3282
      %v3400 = vunpack.c.h.b16 %v3282
      %v3401 = vunpack.c.l.b16 %v3283
      %v3402 = vunpack.c.h.b16 %v3283
      %v3403 = vunpack.c.l.b16 %v3284
      %v3404 = vunpack.c.h.b16 %v3284
      %v3405 = vunpack.c.l.b16 %v3285
      %v3406 = vunpack.c.h.b16 %v3285
      %v3407 = vunpack.c.l.b16 %v3286
      %v3408 = vunpack.c.h.b16 %v3286
      %v3409 = vunpack.c.l.b16 %v3287
      %v3410 = vunpack.c.h.b16 %v3287
      %v3411 = vunpack.c.l.b16 %v3288
      %v3412 = vunpack.c.h.b16 %v3288
      %v3413 = vunpack.c.l.b16 %v3289
      %v3414 = vunpack.c.h.b16 %v3289
      %v3415 = vunpack.c.l.b16 %v3290
      %v3416 = vunpack.c.h.b16 %v3290
      %v3417 = vunpack.c.l.b16 %v3291
      %v3418 = vunpack.c.h.b16 %v3291
      %v3419 = vunpack.c.l.b16 %v3292
      %v3420 = vunpack.c.h.b16 %v3292
      %v3421 = vpack.c.b16 %v3361, %v3357
      %v3422 = vpack.c.b16 %v3362, %v3358
      %v3423 = vpack.c.b16 %v3363, %v3359
      %v3424 = vpack.c.b16 %v3364, %v3360
      %v3425 = vpack.c.b16 %v3369, %v3365
      %v3426 = vpack.c.b16 %v3370, %v3366
      %v3427 = vpack.c.b16 %v3371, %v3367
      %v3428 = vpack.c.b16 %v3372, %v3368
      %v3429 = vpack.c.b16 %v3377, %v3373
      %v3430 = vpack.c.b16 %v3378, %v3374
      %v3431 = vpack.c.b16 %v3379, %v3375
      %v3432 = vpack.c.b16 %v3380, %v3376
      %v3433 = vpack.c.b16 %v3385, %v3381
      %v3434 = vpack.c.b16 %v3386, %v3382
      %v3435 = vpack.c.b16 %v3387, %v3383
      %v3436 = vpack.c.b16 %v3388, %v3384
      %v3437 = vpack.c.b16 %v3393, %v3389
      %v3438 = vpack.c.b16 %v3394, %v3390
      %v3439 = vpack.c.b16 %v3395, %v3391
      %v3440 = vpack.c.b16 %v3396, %v3392
      %v3441 = vpack.c.b16 %v3401, %v3397
      %v3442 = vpack.c.b16 %v3402, %v3398
      %v3443 = vpack.c.b16 %v3403, %v3399
      %v3444 = vpack.c.b16 %v3404, %v3400
      %v3445 = vpack.c.b16 %v3409, %v3405
      %v3446 = vpack.c.b16 %v3410, %v3406
      %v3447 = vpack.c.b16 %v3411, %v3407
      %v3448 = vpack.c.b16 %v3412, %v3408
      %v3449 = vpack.c.b16 %v3417, %v3413
      %v3450 = vpack.c.b16 %v3418, %v3414
      %v3451 = vpack.c.b16 %v3419, %v3415
      %v3452 = vpack.c.b16 %v3420, %v3416
      %3485 = vmatprep.subr.bf16.mxu0 %v3422
      %3486 = vmatpush1.bf16.msra.mxu0 %v3421
      %3487 = vmatprep.subr.bf16.mxu0 %v3426
      %3488 = vmatpush1.bf16.msra.mxu0 %v3425
      %3489 = vmatprep.subr.bf16.mxu0 %v3430
      %3490 = vmatpush1.bf16.msra.mxu0 %v3429
      %3491 = vmatprep.subr.bf16.mxu0 %v3434
      %3492 = vmatpush1.bf16.msra.mxu0 %v3433
      %3493 = vmatprep.subr.bf16.mxu0 %v3438
      %3494 = vmatpush1.bf16.msra.mxu0 %v3437
      %3495 = vmatprep.subr.bf16.mxu0 %v3442
      %3496 = vmatpush1.bf16.msra.mxu0 %v3441
      %3497 = vmatprep.subr.bf16.mxu0 %v3446
      %3498 = vmatpush1.bf16.msra.mxu0 %v3445
      %3499 = vmatprep.subr.bf16.mxu0 %v3450
      %3500 = vmatpush1.bf16.msra.mxu0 %v3449
      %3501 = vmatprep.subr.bf16.mxu0 0
      %3502 = vmatpush1.bf16.msra.mxu0 0
      %3503 = vmatprep.subr.bf16.mxu0 0
      %3504 = vmatpush1.bf16.msra.mxu0 0
      %3505 = vmatprep.subr.bf16.mxu0 0
      %3506 = vmatpush1.bf16.msra.mxu0 0
      %3507 = vmatprep.subr.bf16.mxu0 0
      %3508 = vmatpush1.bf16.msra.mxu0 0
      %3509 = vmatprep.subr.bf16.mxu0 0
      %3510 = vmatpush1.bf16.msra.mxu0 0
      %3511 = vmatprep.subr.bf16.mxu0 0
      %3512 = vmatpush1.bf16.msra.mxu0 0
      %3513 = vmatprep.subr.bf16.mxu0 0
      %3514 = vmatpush1.bf16.msra.mxu0 0
      %3515 = vmatprep.subr.bf16.mxu0 0
      %3516 = vmatpush1.bf16.msra.mxu0 0
      %3517 = vmatprep.mubr.bf16.mxu0 0
      %3518 = vmatmul.mubr.bf16.gmra.mrb[0].mxu0 %v3324
      %v3519 = vpop.f32.mrb[0].mxu0
      %v3520 = vadd.f32 0.0, %v3519
      %v3521 = vpop.f32.mrb[0].mxu0
      %v3522 = vadd.f32 0.0, %v3521
      %v3523 = vpop.f32.mrb[0].mxu0
      %v3524 = vadd.f32 0.0, %v3523
      %v3525 = vpop.f32.mrb[0].mxu0
      %v3526 = vadd.f32 0.0, %v3525
      %3527 = vdwg.mxu0
      %3528 = vmatprep.subr.bf16.mxu0 %v3424
      %3529 = vmatpush1.bf16.msra.mxu0 %v3423
      %3530 = vmatprep.subr.bf16.mxu0 %v3428
      %3531 = vmatpush1.bf16.msra.mxu0 %v3427
      %3532 = vmatprep.subr.bf16.mxu0 %v3432
      %3533 = vmatpush1.bf16.msra.mxu0 %v3431
      %3534 = vmatprep.subr.bf16.mxu0 %v3436
      %3535 = vmatpush1.bf16.msra.mxu0 %v3435
      %3536 = vmatprep.subr.bf16.mxu0 %v3440
      %3537 = vmatpush1.bf16.msra.mxu0 %v3439
      %3538 = vmatprep.subr.bf16.mxu0 %v3444
      %3539 = vmatpush1.bf16.msra.mxu0 %v3443
      %3540 = vmatprep.subr.bf16.mxu0 %v3448
      %3541 = vmatpush1.bf16.msra.mxu0 %v3447
      %3542 = vmatprep.subr.bf16.mxu0 %v3452
      %3543 = vmatpush1.bf16.msra.mxu0 %v3451
      %3544 = vmatprep.subr.bf16.mxu0 0
      %3545 = vmatpush1.bf16.msra.mxu0 0
      %3546 = vmatprep.subr.bf16.mxu0 0
      %3547 = vmatpush1.bf16.msra.mxu0 0
      %3548 = vmatprep.subr.bf16.mxu0 0
      %3549 = vmatpush1.bf16.msra.mxu0 0
      %3550 = vmatprep.subr.bf16.mxu0 0
      %3551 = vmatpush1.bf16.msra.mxu0 0
      %3552 = vmatprep.subr.bf16.mxu0 0
      %3553 = vmatpush1.bf16.msra.mxu0 0
      %3554 = vmatprep.subr.bf16.mxu0 0
      %3555 = vmatpush1.bf16.msra.mxu0 0
      %3556 = vmatprep.subr.bf16.mxu0 0
      %3557 = vmatpush1.bf16.msra.mxu0 0
      %3558 = vmatprep.subr.bf16.mxu0 0
      %3559 = vmatpush1.bf16.msra.mxu0 0
      %3560 = vmatprep.mubr.bf16.mxu0 0
      %3561 = vmatmul.mubr.bf16.gmra.mrb[0].mxu0 %v3324
      %v3562 = vpop.f32.mrb[0].mxu0
      %v3563 = vadd.f32 0.0, %v3562
      %v3564 = vpop.f32.mrb[0].mxu0
      %v3565 = vadd.f32 0.0, %v3564
      %v3566 = vpop.f32.mrb[0].mxu0
      %v3567 = vadd.f32 0.0, %v3566
      %v3568 = vpop.f32.mrb[0].mxu0
      %v3569 = vadd.f32 0.0, %v3568
      %3570 = vdwg.mxu0
      %v3571 = vadd.f32 %v3316, %v3520
      %v3572 = vadd.f32 %v3317, %v3522
      %v3573 = vadd.f32 %v3318, %v3563
      %v3574 = vadd.f32 %v3319, %v3565
      %v3575 = vadd.f32 %v3320, %v3524
      %v3576 = vadd.f32 %v3321, %v3526
      %v3577 = vadd.f32 %v3322, %v3567
      %v3578 = vadd.f32 %v3323, %v3569
      %v3579 = vxor.u32 %v3571, 2147483648
      %v3580 = vxor.u32 %v3575, 2147483648
      %v3581 = vmul.f32 %v3579, 1.442695
      %v3582 = vpow.pop %v3581
      %v3583 = vmul.f32 %v3580, 1.442695
      %v3584 = vpow.pop %v3583
      %v3585 = vadd.f32 %v3582, 1.0
      %v3586 = vadd.f32 %v3584, 1.0
      %v3587 = vrcp.pop %v3585
      %v3588 = vmul.f32 1.0, %v3587
      %v3589 = vrcp.pop %v3586
      %v3590 = vmul.f32 1.0, %v3589
      %v3591 = vxor.u32 %v3572, 2147483648
      %v3592 = vxor.u32 %v3576, 2147483648
      %v3593 = vmul.f32 %v3591, 1.442695
      %v3594 = vpow.pop %v3593
      %v3595 = vmul.f32 %v3592, 1.442695
      %v3596 = vpow.pop %v3595
      %v3597 = vadd.f32 %v3594, 1.0
      %v3598 = vadd.f32 %v3596, 1.0
      %v3599 = vrcp.pop %v3597
      %v3600 = vmul.f32 1.0, %v3599
      %v3601 = vrcp.pop %v3598
      %v3602 = vmul.f32 1.0, %v3601
      %v3603 = vtanh.pop %v3573
      %v3604 = vtanh.pop %v3577
      %v3605 = vxor.u32 %v3574, 2147483648
      %v3606 = vxor.u32 %v3578, 2147483648
      %v3607 = vmul.f32 %v3605, 1.442695
      %v3608 = vpow.pop %v3607
      %v3609 = vmul.f32 %v3606, 1.442695
      %v3610 = vpow.pop %v3609
      %v3611 = vadd.f32 %v3608, 1.0
      %v3612 = vadd.f32 %v3610, 1.0
      %v3613 = vrcp.pop %v3611
      %v3614 = vmul.f32 1.0, %v3613
      %v3615 = vrcp.pop %v3612
      %v3616 = vmul.f32 1.0, %v3615
      %v3617 = vmul.f32 %v3600, %v3250
      %v3618 = vmul.f32 %v3602, %v3251
      %v3619 = vmul.f32 %v3588, %v3603
      %v3620 = vmul.f32 %v3590, %v3604
      %v3621 = vadd.f32 %v3617, %v3619
      %v3622 = vadd.f32 %v3618, %v3620
      %v3623 = vtanh.pop %v3621
      %v3624 = vtanh.pop %v3622
      %v3625 = vmul.f32 %v3614, %v3623
      %v3626 = vmul.f32 %v3616, %v3624
      %v3627 = vstv %s3260
      %vm3628 = vcmp.lt.s32.totalorder %v3627, %v511
      %vm3629 = vcmp.lt.s32.totalorder %v3627, %v512
      %v3630 = vsel %vm3628, 1, 0
      %v3631 = vsel %vm3629, 1, 0
      %3632 = vset.pattern.permute.xlu0 0
      %3633 = vperm.xlu0 %3632, %v3630
      %v3634 = vpop.permute.xlu0 %3633
      %3635 = vset.pattern.permute.xlu0 0
      %3636 = vperm.xlu0 %3635, %v3631
      %v3637 = vpop.permute.xlu0 %3636
      %vm3638 = vcmp.eq.s32.totalorder %v3634, 1
      %vm3639 = vcmp.eq.s32.totalorder %v3637, 1
      %v3640 = vsel %vm3638, %v3625, %v3248
      %v3641 = vsel %vm3639, %v3626, %v3249
      %v3642 = vsel %vm3638, %v3621, %v3250
      %v3643 = vsel %vm3639, %v3622, %v3251
      %v3644 = vsel %vm3638, %v3625, 0.0
      %v3645 = vsel %vm3639, %v3626, 0.0
      %s3646 = smul.u32 %s3259, 16
      %s3647 = scalar_lea.vmem %s471, %s3646
      %3648 = vst [vmem:[%s3647] sm:$0xff] %v3644
      %3649 = vst [vmem:[%s3647 + $0x8] sm:$0xff] %v3645
      %3650 = vst [vmem:[#allocation2] sm:$0xff] %v3640
      %3651 = vst [vmem:[#allocation2 + $0x8] sm:$0xff] %v3641
      %3652 = vst [vmem:[#allocation3] sm:$0xff] %v3642
      %3653 = vst [vmem:[#allocation3 + $0x8] sm:$0xff] %v3643
      // Predicated region
      $region41: #{bilstm_forward.3} parent=35 // pred_check
        %p3654 = pneg %p498
      $region42: #{bilstm_forward.3} parent=35 // pred_check_branch
        %3656 = sbr.rel (%p3654) target = $region44
      $region43: #{bilstm_forward.3} parent=35 // pred_region
        %3657 = vst [vmem:[%s485] sm:$0xff] %v3640
        %3658 = vst [vmem:[%s485 + $0x8] sm:$0xff] %v3641
        %3659 = vst [vmem:[%s495] sm:$0xff] %v3642
        %3660 = vst [vmem:[%s495 + $0x8] sm:$0xff] %v3643
      $region44: #{bilstm_forward.3} parent=35 // pred_fallthru
        _
      %s3661 = smul.u32 %s23, 2
      %s3662 = ssub.s32 1, %s3661
      %s3663 = smul.u32 %s3662, %s25
      %s3664 = smul.u32 8, %s3663
      %s3665 = smul.u32 2, %s24
      %p3666 = scmp.lt.s32.totalorder %s23, 1
      %s3667 = scalar_select %p3666, %s23, 1
      %p3668 = scmp.lt.s32.totalorder %s3664, 7
      %s3669 = scalar_select %p3668, %s3664, 7
      %p3670 = scmp.lt.s32.totalorder %s3665, 1
      %s3671 = scalar_select %p3670, %s3665, 1
      %s3672 = smul.addr %s3669, 2
      %s3673 = sadd.s32 %s3671, %s3672
      %s3674 = smul.addr %s3667, 16
      %s3675 = sadd.s32 %s3673, %s3674
      %s3676 = smul.addr %s3675, 8
      %s3677 = scalar_lea.vmem %s4, %s3676
      %s3678 = smul.u32 2, %s24
      %p3679 = scmp.lt.s32.totalorder %s23, 1
      %s3680 = scalar_select %p3679, %s23, 1
      %p3681 = scmp.lt.s32.totalorder %s3678, 1
      %s3682 = scalar_select %p3681, %s3678, 1
      %s3683 = smul.addr %s3680, 2
      %s3684 = sadd.s32 %s3682, %s3683
      %s3685 = smul.addr %s3684, 8
      %s3686 = scalar_lea.vmem %s5, %s3685
      %s3687 = smul.u32 2, %s24
      %p3688 = scmp.lt.s32.totalorder %s23, 1
      %s3689 = scalar_select %p3688, %s23, 1
      %p3690 = scmp.lt.s32.totalorder %s3687, 1
      %s3691 = scalar_select %p3690, %s3687, 1
      %s3692 = smul.addr %s3689, 2
      %s3693 = sadd.s32 %s3691, %s3692
      %s3694 = smul.addr %s3693, 8
      %s3695 = scalar_lea.vmem %s6, %s3694
      // Predicated region
      $region45: #{bilstm_forward.3} parent=35 // pred_check
        %p3696 = pneg %p181
      $region46: #{bilstm_forward.3} parent=35 // pred_check_branch
        %3698 = sbr.rel (%p3696) target = $region48
      $region47: #{bilstm_forward.3} parent=35 // pred_region
        %s3699 = smul.u32 %s23, 2
        %s3700 = ssub.s32 1, %s3699
        %s3701 = smul.u32 %s3700, %s25
        %s3702 = smul.u32 8, %s3701
        %s3703 = smul.u32 2, %s24
      $region48: #{bilstm_forward.3} parent=35 // pred_fallthru
        _
      // Predicated region
      $region49: #{bilstm_forward.3} parent=35 // pred_check
        %p3704 = pneg %p209
      $region50: #{bilstm_forward.3} parent=35 // pred_check_branch
        %3706 = sbr.rel (%p3704) target = $region52
      $region51: #{bilstm_forward.3} parent=35 // pred_region
        %s3707 = smul.u32 2, %s24
      $region52: #{bilstm_forward.3} parent=35 // pred_fallthru
        _
      // Predicated region
      $region53: #{bilstm_forward.3} parent=35 // pred_check
        %p3708 = pneg %p237
      $region54: #{bilstm_forward.3} parent=35 // pred_check_branch
        %3710 = sbr.rel (%p3708) target = $region56
      $region55: #{bilstm_forward.3} parent=35 // pred_region
        %s3711 = smul.u32 2, %s24
      $region56: #{bilstm_forward.3} parent=35 // pred_fallthru
        _
    $region36: #{bilstm_forward.3} parent=5 // pred_fallthru
      _
    %p3712 = scmp.le.s32.totalorder 2, %s13
    // Predicated region
    $region57: #{bilstm_forward.3} parent=5 // pred_check
      %p3713 = pneg %p3712
    $region58: #{bilstm_forward.3} parent=5 // pred_check_branch
      %3715 = sbr.rel (%p3713) target = $region60
    $region59: #{bilstm_forward.3} parent=5 // pred_region
      %s3716 = ssub.s32 %s13, 2
      // Predicated region
      $region61: #{bilstm_forward.3} parent=59 // pred_check
        %p3717 = pneg %p187
      $region62: #{bilstm_forward.3} parent=59 // pred_check_branch
        %3719 = sbr.rel (%p3717) target = $region64
      $region63: #{bilstm_forward.3} parent=59 // pred_region
        %s3720 = smul.u32 %s26, 2
        %s3721 = ssub.s32 1, %s3720
        %s3722 = smul.u32 %s3721, %s28
        %s3723 = smul.u32 8, %s3722
        %s3724 = smul.u32 2, %s27
        %p3725 = scmp.lt.s32.totalorder %s26, 1
        %s3726 = scalar_select %p3725, %s26, 1
        %p3727 = scmp.lt.s32.totalorder %s3723, 7
        %s3728 = scalar_select %p3727, %s3723, 7
        %p3729 = scmp.lt.s32.totalorder %s3724, 1
        %s3730 = scalar_select %p3729, %s3724, 1
        %s3731 = smul.addr %s3728, 2
        %s3732 = sadd.s32 %s3730, %s3731
        %s3733 = smul.addr %s3726, 16
        %s3734 = sadd.s32 %s3732, %s3733
        %s3735 = smul.addr %s3734, 8
        %s3736 = scalar_lea.vmem %s4, %s3735
      $region64: #{bilstm_forward.3} parent=59 // pred_fallthru
        _
      // Predicated region
      $region65: #{bilstm_forward.3} parent=59 // pred_check
        %p3737 = pneg %p215
      $region66: #{bilstm_forward.3} parent=59 // pred_check_branch
        %3739 = sbr.rel (%p3737) target = $region68
      $region67: #{bilstm_forward.3} parent=59 // pred_region
        %s3740 = smul.u32 2, %s27
        %p3741 = scmp.lt.s32.totalorder %s26, 1
        %s3742 = scalar_select %p3741, %s26, 1
        %p3743 = scmp.lt.s32.totalorder %s3740, 1
        %s3744 = scalar_select %p3743, %s3740, 1
        %s3745 = smul.addr %s3742, 2
        %s3746 = sadd.s32 %s3744, %s3745
        %s3747 = smul.addr %s3746, 8
        %s3748 = scalar_lea.vmem %s5, %s3747
      $region68: #{bilstm_forward.3} parent=59 // pred_fallthru
        _
      // Predicated region
      $region69: #{bilstm_forward.3} parent=59 // pred_check
        %p3749 = pneg %p243
      $region70: #{bilstm_forward.3} parent=59 // pred_check_branch
        %3751 = sbr.rel (%p3749) target = $region72
      $region71: #{bilstm_forward.3} parent=59 // pred_region
        %s3752 = smul.u32 2, %s27
        %p3753 = scmp.lt.s32.totalorder %s26, 1
        %s3754 = scalar_select %p3753, %s26, 1
        %p3755 = scmp.lt.s32.totalorder %s3752, 1
        %s3756 = scalar_select %p3755, %s3752, 1
        %s3757 = smul.addr %s3754, 2
        %s3758 = sadd.s32 %s3756, %s3757
        %s3759 = smul.addr %s3758, 8
        %s3760 = scalar_lea.vmem %s6, %s3759
      $region72: #{bilstm_forward.3} parent=59 // pred_fallthru
        _
    $region60: #{bilstm_forward.3} parent=5 // pred_fallthru
      _
  $region6: #{bilstm_forward.3} parent=0 // loop_footer
    %s17 = sadd.s32 1, %s13
  $region7: #{bilstm_forward.3} parent=0 // loop_footer_branch
    %12 = sbr.rel target = $region3
  $region8: #{bilstm_forward.3} parent=0 // loop_exit
    _

// kernel: bilstm_forward.2
$region0: #{bilstm_forward.2}
  #allocation0 [shape = 'u32[]', space=smem, size = 0x4, offset = 0x4, fixed_abs, tag = 'smem constant byte address 0x4 - core index']
  #allocation1 [shape = 'u32[144,128]{1,0:T(1,128)}', space=vmem, size = 0x12000, scoped, tag = 'internal scratch']
  #allocation2 [shape = 'f32[16,128]{1,0:T(8,128)}', space=vmem, size = 0x2000, scoped, tag = 'scratch operand']
  #allocation3 [shape = 'f32[16,128]{1,0:T(8,128)}', space=vmem, size = 0x2000, scoped, tag = 'scratch operand']
  %s0 = inlined_call_operand.vmem [shape: bf16[2,8,16,512], index: 0, kind: input, shape index: {}]
  %s1 = inlined_call_operand.vmem [shape: s32[16,1], index: 1, kind: input, shape index: {}]
  %s2 = inlined_call_operand.vmem [shape: f32[2,16,512], index: 2, kind: input, shape index: {}]
  %s3 = inlined_call_operand.vmem [shape: bf16[2,128,512], index: 3, kind: input, shape index: {}]
  %s4 = inlined_call_operand.vmem [shape: bf16[2,8,16,128], index: 4, kind: output, shape index: {0}]
  %s5 = inlined_call_operand.hbm [shape: f32[2,16,128], index: 5, kind: output, shape index: {1}]
  %s6 = inlined_call_operand.hbm [shape: f32[2,16,128], index: 6, kind: output, shape index: {2}]
  %7 = xla_tuple %s4, %s5, %s6
  %s8 = sld [smem:[#allocation0]]
  $region73: #{bilstm_forward.2} parent=0
    _
  %s10 = ssub.s32 1, %s8
  %s11 = scalar_select 0, %s10, %s8
  $region1: #{bilstm_forward.2} parent=0
    #allocation4 [shape = 'u8[16384]{0}', space=vmem, size = 0x4000, scoped, tag = 'output window, operand 1']
    #allocation5 [shape = 's32[2]{0}', space=sflag, size = 0x8, scoped, tag = 'scoped memory for bilstm_forward.2']
    #allocation6 [shape = 'u8[16384]{0}', space=vmem, size = 0x4000, scoped, tag = 'output window, operand 2']
    #allocation7 [shape = 's32[2]{0}', space=sflag, size = 0x8, scoped, tag = 'scoped memory for bilstm_forward.2']
    %12 = vsyncpa [#allocation5], 0
    %s13 = scalar_lea.sflag [#allocation5], 1
    %14 = vsyncpa %s13, 0
    %15 = vsyncpa [#allocation7], 0
    %s16 = scalar_lea.sflag [#allocation7], 1
    %17 = vsyncpa %s16, 0
    loop: start=0, step=1, limit=4
    $region2: #{bilstm_forward.2} parent=1 // loop_pre_header
      _
    $region3: #{bilstm_forward.2} parent=1 // loop_header
      %s19 = sphi 0, %s23
      %p20 = scmp.ge.s32.totalorder %s19, 4
      %s26 = sphi 0, %s45
      %s27 = sphi 0, %s41
      %s28 = sphi 0, %s37
      %s29 = sphi 0, %s26
      %s30 = sphi 0, %s27
      %s31 = sphi 0, %s28
      %s32 = sphi 0, %s29
      %s33 = sphi 0, %s30
      %s34 = sphi 0, %s31
      %s58 = sphi 0, %s60
      %s61 = sphi 0, %s58
      %s62 = sphi 0, %s61
      %s78 = sphi 0, %s62
      %s84 = sphi 0, %s86
      %s87 = sphi 0, %s84
      %s88 = sphi 0, %s87
      %s104 = sphi 0, %s88
      %s112 = sphi 0, %s114
      %s115 = sphi 0, %s112
      %s116 = sphi 0, %s115
      %s132 = sphi 0, %s116
      %s138 = sphi 0, %s140
      %s141 = sphi 0, %s138
      %s142 = sphi 0, %s141
      %s158 = sphi 0, %s142
      %s174 = sphi 0, %s176
      %s177 = sphi 0, %s174
      %s178 = sphi 0, %s177
      %s194 = sphi 0, %s178
      %s202 = sphi 0, %s204
      %s205 = sphi 0, %s202
      %s206 = sphi 0, %s205
      %s222 = sphi 0, %s206
      %s230 = sphi 0, %s232
      %s233 = sphi 0, %s230
      %s234 = sphi 0, %s233
      %s250 = sphi 0, %s234
    $region4: #{bilstm_forward.2} parent=1 // loop_header_branch
      %22 = sbr.rel (%p20) target = $region8
    $region5: #{bilstm_forward.2} parent=1 // loop_body
      %s24 = ssub.s32 %s19, 1
      %s25 = ssub.s32 %s19, 2
      %s35 = sadd.s32 1, %s28
      %p36 = scmp.ge.s32.totalorder %s35, 1
      %s37 = scalar_select %p36, 0, %s35
      %s38 = sadd.s32 1, %s27
      %s39 = scalar_select %p36, %s38, %s27
      %p40 = scmp.ge.s32.totalorder %s39, 1
      %s41 = scalar_select %p40, 0, %s39
      %s42 = sadd.s32 1, %s26
      %s43 = scalar_select %p40, %s42, %s26
      %p44 = scmp.ge.s32.totalorder %s43, 2
      %s45 = scalar_select %p44, 0, %s43
      %s46 = smul.u32 %s26, 2
      %s47 = ssub.s32 1, %s46
      %s48 = smul.u32 %s47, %s28
      %s49 = smul.u32 %s45, 2
      %s50 = ssub.s32 1, %s49
      %s51 = smul.u32 %s50, %s37
      %s52 = ssub.s32 %s26, %s45
      %s53 = ssub.s32 %s48, %s51
      %s54 = sor.u32 %s52, %s53
      %s55 = ssub.s32 %s27, %s41
      %s56 = sor.u32 %s54, %s55
      %p57 = scmp.eq.s32.totalorder %s56, 0
      %s59 = sadd.s32 %s58, 1
      %s60 = scalar_select %p57, %s58, %s59
      %p63 = pneg %p57
      %p64 = scmp.eq.s32.totalorder %s19, 1
      %p65 = por %p63, %p64
      %p66 = scmp.ne.s32.totalorder %s58, %s61
      %p67 = scmp.eq.s32.totalorder %s19, 0
      %p68 = por %p66, %p67
      %p69 = scmp.ne.s32.totalorder %s58, %s61
      %p70 = scmp.eq.s32.totalorder %s24, 1
      %p71 = por %p69, %p70
      %p72 = scmp.ne.s32.totalorder %s61, %s62
      %p73 = scmp.eq.s32.totalorder %s24, 0
      %p74 = por %p72, %p73
      %p75 = scmp.ne.s32.totalorder %s61, %s62
      %p76 = scmp.eq.s32.totalorder %s25, 1
      %p77 = por %p75, %p76
      %p79 = scmp.ne.s32.totalorder %s62, %s78
      %p80 = scmp.eq.s32.totalorder %s25, 0
      %p81 = por %p79, %p80
      %s82 = ssub.s32 %s27, %s41
      %p83 = scmp.eq.s32.totalorder %s82, 0
      %s85 = sadd.s32 %s84, 1
      %s86 = scalar_select %p83, %s84, %s85
      %p89 = pneg %p83
      %p90 = scmp.eq.s32.totalorder %s19, 1
      %p91 = por %p89, %p90
      %p92 = scmp.ne.s32.totalorder %s84, %s87
      %p93 = scmp.eq.s32.totalorder %s19, 0
      %p94 = por %p92, %p93
      %p95 = scmp.ne.s32.totalorder %s84, %s87
      %p96 = scmp.eq.s32.totalorder %s24, 1
      %p97 = por %p95, %p96
      %p98 = scmp.ne.s32.totalorder %s87, %s88
      %p99 = scmp.eq.s32.totalorder %s24, 0
      %p100 = por %p98, %p99
      %p101 = scmp.ne.s32.totalorder %s87, %s88
      %p102 = scmp.eq.s32.totalorder %s25, 1
      %p103 = por %p101, %p102
      %p105 = scmp.ne.s32.totalorder %s88, %s104
      %p106 = scmp.eq.s32.totalorder %s25, 0
      %p107 = por %p105, %p106
      %s108 = ssub.s32 %s26, %s45
      %s109 = ssub.s32 %s27, %s41
      %s110 = sor.u32 %s108, %s109
      %p111 = scmp.eq.s32.totalorder %s110, 0
      %s113 = sadd.s32 %s112, 1
      %s114 = scalar_select %p111, %s112, %s113
      %p117 = pneg %p111
      %p118 = scmp.eq.s32.totalorder %s19, 1
      %p119 = por %p117, %p118
      %p120 = scmp.ne.s32.totalorder %s112, %s115
      %p121 = scmp.eq.s32.totalorder %s19, 0
      %p122 = por %p120, %p121
      %p123 = scmp.ne.s32.totalorder %s112, %s115
      %p124 = scmp.eq.s32.totalorder %s24, 1
      %p125 = por %p123, %p124
      %p126 = scmp.ne.s32.totalorder %s115, %s116
      %p127 = scmp.eq.s32.totalorder %s24, 0
      %p128 = por %p126, %p127
      %p129 = scmp.ne.s32.totalorder %s115, %s116
      %p130 = scmp.eq.s32.totalorder %s25, 1
      %p131 = por %p129, %p130
      %p133 = scmp.ne.s32.totalorder %s116, %s132
      %p134 = scmp.eq.s32.totalorder %s25, 0
      %p135 = por %p133, %p134
      %s136 = ssub.s32 %s26, %s45
      %p137 = scmp.eq.s32.totalorder %s136, 0
      %s139 = sadd.s32 %s138, 1
      %s140 = scalar_select %p137, %s138, %s139
      %p143 = pneg %p137
      %p144 = scmp.eq.s32.totalorder %s19, 1
      %p145 = por %p143, %p144
      %p146 = scmp.ne.s32.totalorder %s138, %s141
      %p147 = scmp.eq.s32.totalorder %s19, 0
      %p148 = por %p146, %p147
      %p149 = scmp.ne.s32.totalorder %s138, %s141
      %p150 = scmp.eq.s32.totalorder %s24, 1
      %p151 = por %p149, %p150
      %p152 = scmp.ne.s32.totalorder %s141, %s142
      %p153 = scmp.eq.s32.totalorder %s24, 0
      %p154 = por %p152, %p153
      %p155 = scmp.ne.s32.totalorder %s141, %s142
      %p156 = scmp.eq.s32.totalorder %s25, 1
      %p157 = por %p155, %p156
      %p159 = scmp.ne.s32.totalorder %s142, %s158
      %p160 = scmp.eq.s32.totalorder %s25, 0
      %p161 = por %p159, %p160
      %s162 = smul.u32 %s26, 2
      %s163 = ssub.s32 1, %s162
      %s164 = smul.u32 %s163, %s28
      %s165 = smul.u32 %s45, 2
      %s166 = ssub.s32 1, %s165
      %s167 = smul.u32 %s166, %s37
      %s168 = ssub.s32 %s26, %s45
      %s169 = ssub.s32 %s164, %s167
      %s170 = sor.u32 %s168, %s169
      %s171 = ssub.s32 %s27, %s41
      %s172 = sor.u32 %s170, %s171
      %p173 = scmp.eq.s32.totalorder %s172, 0
      %s175 = sadd.s32 %s174, 1
      %s176 = scalar_select %p173, %s174, %s175
      %p179 = pneg %p173
      %p180 = scmp.eq.s32.totalorder %s19, 1
      %p181 = por %p179, %p180
      %p182 = scmp.ne.s32.totalorder %s174, %s177
      %p183 = scmp.eq.s32.totalorder %s19, 0
      %p184 = por %p182, %p183
      %p185 = scmp.ne.s32.totalorder %s174, %s177
      %p186 = scmp.eq.s32.totalorder %s24, 1
      %p187 = por %p185, %p186
      %p188 = scmp.ne.s32.totalorder %s177, %s178
      %p189 = scmp.eq.s32.totalorder %s24, 0
      %p190 = por %p188, %p189
      %p191 = scmp.ne.s32.totalorder %s177, %s178
      %p192 = scmp.eq.s32.totalorder %s25, 1
      %p193 = por %p191, %p192
      %p195 = scmp.ne.s32.totalorder %s178, %s194
      %p196 = scmp.eq.s32.totalorder %s25, 0
      %p197 = por %p195, %p196
      %s198 = ssub.s32 %s26, %s45
      %s199 = ssub.s32 %s27, %s41
      %s200 = sor.u32 %s198, %s199
      %p201 = scmp.eq.s32.totalorder %s200, 0
      %s203 = sadd.s32 %s202, 1
      %s204 = scalar_select %p201, %s202, %s203
      %p207 = pneg %p201
      %p208 = scmp.eq.s32.totalorder %s19, 1
      %p209 = por %p207, %p208
      %p210 = scmp.ne.s32.totalorder %s202, %s205
      %p211 = scmp.eq.s32.totalorder %s19, 0
      %p212 = por %p210, %p211
      %p213 = scmp.ne.s32.totalorder %s202, %s205
      %p214 = scmp.eq.s32.totalorder %s24, 1
      %p215 = por %p213, %p214
      %p216 = scmp.ne.s32.totalorder %s205, %s206
      %p217 = scmp.eq.s32.totalorder %s24, 0
      %p218 = por %p216, %p217
      %p219 = scmp.ne.s32.totalorder %s205, %s206
      %p220 = scmp.eq.s32.totalorder %s25, 1
      %p221 = por %p219, %p220
      %p223 = scmp.ne.s32.totalorder %s206, %s222
      %p224 = scmp.eq.s32.totalorder %s25, 0
      %p225 = por %p223, %p224
      %s226 = ssub.s32 %s26, %s45
      %s227 = ssub.s32 %s27, %s41
      %s228 = sor.u32 %s226, %s227
      %p229 = scmp.eq.s32.totalorder %s228, 0
      %s231 = sadd.s32 %s230, 1
      %s232 = scalar_select %p229, %s230, %s231
      %p235 = pneg %p229
      %p236 = scmp.eq.s32.totalorder %s19, 1
      %p237 = por %p235, %p236
      %p238 = scmp.ne.s32.totalorder %s230, %s233
      %p239 = scmp.eq.s32.totalorder %s19, 0
      %p240 = por %p238, %p239
      %p241 = scmp.ne.s32.totalorder %s230, %s233
      %p242 = scmp.eq.s32.totalorder %s24, 1
      %p243 = por %p241, %p242
      %p244 = scmp.ne.s32.totalorder %s233, %s234
      %p245 = scmp.eq.s32.totalorder %s24, 0
      %p246 = por %p244, %p245
      %p247 = scmp.ne.s32.totalorder %s233, %s234
      %p248 = scmp.eq.s32.totalorder %s25, 1
      %p249 = por %p247, %p248
      %p251 = scmp.ne.s32.totalorder %s234, %s250
      %p252 = scmp.eq.s32.totalorder %s25, 0
      %p253 = por %p251, %p252
      %p254 = scmp.le.s32.totalorder 1, %s19
      %p255 = scmp.lt.s32.totalorder %s19, 3
      %p256 = pnand %p254, %p255
      %p257 = pneg %p256
      // Predicated region
      $region9: #{bilstm_forward.2} parent=5 // pred_check
        _
      $region10: #{bilstm_forward.2} parent=5 // pred_check_branch
        %259 = sbr.rel (%p256) target = $region12
      $region11: #{bilstm_forward.2} parent=5 // pred_region
        %s260 = ssub.s32 %s19, 1
        // Predicated region
        $region13: #{bilstm_forward.2} parent=11 // pred_check
          %p261 = pneg %p100
        $region14: #{bilstm_forward.2} parent=11 // pred_check_branch
          %263 = sbr.rel (%p261) target = $region16
        $region15: #{bilstm_forward.2} parent=11 // pred_region
          %s264 = smul.u32 2, %s30
          %p265 = scmp.lt.s32.totalorder %s264, 1
          %s266 = scalar_select %p265, %s264, 1
          %s267 = smul.addr %s266, 8
          %s268 = scalar_lea.vmem %s1, %s267
          %s269 = smul.u32 2, %s30
        $region16: #{bilstm_forward.2} parent=11 // pred_fallthru
          _
      $region12: #{bilstm_forward.2} parent=5 // pred_fallthru
        _
      %p270 = scmp.lt.s32.totalorder %s19, 2
      // Predicated region
      $region17: #{bilstm_forward.2} parent=5 // pred_check
        %p271 = pneg %p270
      $region18: #{bilstm_forward.2} parent=5 // pred_check_branch
        %273 = sbr.rel (%p271) target = $region20
      $region19: #{bilstm_forward.2} parent=5 // pred_region
        // Predicated region
        $region21: #{bilstm_forward.2} parent=19 // pred_check
          %p274 = pneg %p68
        $region22: #{bilstm_forward.2} parent=19 // pred_check_branch
          %276 = sbr.rel (%p274) target = $region24
        $region23: #{bilstm_forward.2} parent=19 // pred_region
          %s277 = smul.u32 %s26, 2
          %s278 = ssub.s32 1, %s277
          %s279 = smul.u32 %s278, %s28
          %s280 = smul.u32 8, %s279
          %s281 = smul.u32 2, %s27
          %p282 = scmp.lt.s32.totalorder %s26, 1
          %s283 = scalar_select %p282, %s26, 1
          %p284 = scmp.lt.s32.totalorder %s280, 7
          %s285 = scalar_select %p284, %s280, 7
          %p286 = scmp.lt.s32.totalorder %s281, 1
          %s287 = scalar_select %p286, %s281, 1
          %s288 = smul.addr %s287, 4
          %s289 = smul.addr %s285, 8
          %s290 = sadd.s32 %s288, %s289
          %s291 = smul.addr %s283, 64
          %s292 = sadd.s32 %s290, %s291
          %s293 = smul.addr %s292, 4
          %s294 = scalar_lea.vmem %s0, %s293
          %s295 = smul.u32 %s26, 2
          %s296 = ssub.s32 1, %s295
          %s297 = smul.u32 %s296, %s28
          %s298 = smul.u32 8, %s297
          %s299 = smul.u32 2, %s27
        $region24: #{bilstm_forward.2} parent=19 // pred_fallthru
          _
        // Predicated region
        $region25: #{bilstm_forward.2} parent=19 // pred_check
          %p300 = pneg %p122
        $region26: #{bilstm_forward.2} parent=19 // pred_check_branch
          %302 = sbr.rel (%p300) target = $region28
        $region27: #{bilstm_forward.2} parent=19 // pred_region
          %s303 = smul.u32 2, %s27
          %p304 = scmp.lt.s32.totalorder %s26, 1
          %s305 = scalar_select %p304, %s26, 1
          %p306 = scmp.lt.s32.totalorder %s303, 1
          %s307 = scalar_select %p306, %s303, 1
          %s308 = smul.addr %s307, 4
          %s309 = smul.addr %s305, 8
          %s310 = sadd.s32 %s308, %s309
          %s311 = smul.addr %s310, 8
          %s312 = scalar_lea.vmem %s2, %s311
          %s313 = smul.u32 2, %s27
        $region28: #{bilstm_forward.2} parent=19 // pred_fallthru
          _
        // Predicated region
        $region29: #{bilstm_forward.2} parent=19 // pred_check
          %p314 = pneg %p148
        $region30: #{bilstm_forward.2} parent=19 // pred_check_branch
          %316 = sbr.rel (%p314) target = $region32
        $region31: #{bilstm_forward.2} parent=19 // pred_region
          %p317 = scmp.lt.s32.totalorder %s26, 1
          %s318 = scalar_select %p317, %s26, 1
          %s319 = smul.addr %s318, 64
          %s320 = smul.addr %s319, 4
          %s321 = scalar_lea.vmem %s3, %s320
        $region32: #{bilstm_forward.2} parent=19 // pred_fallthru
          _
      $region20: #{bilstm_forward.2} parent=5 // pred_fallthru
        _
      %p322 = scmp.le.s32.totalorder 1, %s19
      %p323 = scmp.lt.s32.totalorder %s19, 3
      %p324 = pnand %p322, %p323
      %p325 = pneg %p324
      // Predicated region
      $region33: #{bilstm_forward.2} parent=5 // pred_check
        _
      $region34: #{bilstm_forward.2} parent=5 // pred_check_branch
        %327 = sbr.rel (%p324) target = $region36
      $region35: #{bilstm_forward.2} parent=5 // pred_region
        %s328 = ssub.s32 %s19, 1
        %s329 = smul.u32 %s29, 2
        %s330 = ssub.s32 1, %s329
        %s331 = smul.u32 %s330, %s31
        %s332 = smul.u32 8, %s331
        %s333 = smul.u32 2, %s30
        %p334 = scmp.lt.s32.totalorder %s29, 1
        %s335 = scalar_select %p334, %s29, 1
        %p336 = scmp.lt.s32.totalorder %s332, 7
        %s337 = scalar_select %p336, %s332, 7
        %p338 = scmp.lt.s32.totalorder %s333, 1
        %s339 = scalar_select %p338, %s333, 1
        %s340 = smul.addr %s339, 4
        %s341 = smul.addr %s337, 8
        %s342 = sadd.s32 %s340, %s341
        %s343 = smul.addr %s335, 64
        %s344 = sadd.s32 %s342, %s343
        %s345 = smul.addr %s344, 4
        %s346 = scalar_lea.vmem %s0, %s345
        %p347 = pneg %p74
        %p348 = pneg %p71
        %s349 = smul.u32 2, %s30
        %p350 = scmp.lt.s32.totalorder %s349, 1
        %s351 = scalar_select %p350, %s349, 1
        %s352 = smul.addr %s351, 8
        %s353 = scalar_lea.vmem %s1, %s352
        %p354 = pneg %p100
        %p355 = pneg %p97
        %s356 = smul.u32 2, %s30
        %p357 = scmp.lt.s32.totalorder %s29, 1
        %s358 = scalar_select %p357, %s29, 1
        %p359 = scmp.lt.s32.totalorder %s356, 1
        %s360 = scalar_select %p359, %s356, 1
        %s361 = smul.addr %s360, 4
        %s362 = smul.addr %s358, 8
        %s363 = sadd.s32 %s361, %s362
        %s364 = smul.addr %s363, 8
        %s365 = scalar_lea.vmem %s2, %s364
        %p366 = pneg %p128
        %p367 = pneg %p125
        %p368 = scmp.lt.s32.totalorder %s29, 1
        %s369 = scalar_select %p368, %s29, 1
        %s370 = smul.addr %s369, 64
        %s371 = smul.addr %s370, 4
        %s372 = scalar_lea.vmem %s3, %s371
        %p373 = pneg %p154
        %p374 = pneg %p151
        %p375 = pneg %p190
        %p376 = pneg %p187
        %s377 = smul.u32 %s29, 2
        %s378 = ssub.s32 1, %s377
        %s379 = smul.u32 %s378, %s31
        %s380 = smul.u32 8, %s379
        %p381 = scmp.lt.s32.totalorder %s29, 1
        %s382 = scalar_select %p381, %s29, 1
        %p383 = scmp.lt.s32.totalorder %s380, 7
        %s384 = scalar_select %p383, %s380, 7
        %p385 = scmp.lt.s32.totalorder %s30, 0
        %s386 = scalar_select %p385, %s30, 0
        %s387 = sadd.s32 %s386, %s384
        %s388 = smul.addr %s382, 8
        %s389 = sadd.s32 %s387, %s388
        %s390 = smul.addr %s389, 8
        %s391 = scalar_lea.vmem %s4, %s390
        %p392 = pneg %p218
        %p393 = pneg %p215
        %s394 = sand.u32 %s205, 1
        %s395 = scalar_lea.sflag [#allocation5], %s394
        %s396 = sand.u32 %s205, 1
        %s397 = smul.addr %s396, 16
        %s398 = scalar_lea.vmem [#allocation4], %s397
        %p399 = pneg %p246
        %p400 = pneg %p243
        %s401 = sand.u32 %s233, 1
        %s402 = scalar_lea.sflag [#allocation7], %s401
        %s403 = sand.u32 %s233, 1
        %s404 = smul.addr %s403, 16
        %s405 = scalar_lea.vmem [#allocation6], %s404
        %s406 = smul.u32 %s29, 2
        %s407 = ssub.s32 1, %s406
        %s408 = smul.u32 %s407, %s31
        %s409 = smul.u32 8, %s408
        %s410 = smul.u32 2, %s30
        %p411 = scmp.lt.s32.totalorder %s29, 1
        %s412 = scalar_select %p411, %s29, 1
        %p413 = scmp.lt.s32.totalorder %s409, 7
        %s414 = scalar_select %p413, %s409, 7
        %p415 = scmp.lt.s32.totalorder %s410, 1
        %s416 = scalar_select %p415, %s410, 1
        %s417 = smul.addr %s416, 4
        %s418 = smul.addr %s414, 8
        %s419 = sadd.s32 %s417, %s418
        %s420 = smul.addr %s412, 64
        %s421 = sadd.s32 %s419, %s420
        %s422 = smul.addr %s421, 4
        %s423 = scalar_lea.vmem %s0, %s422
        %s424 = smul.u32 %s29, 2
        %s425 = ssub.s32 1, %s424
        %s426 = smul.u32 %s425, %s31
        %s427 = smul.u32 8, %s426
        %s428 = smul.u32 2, %s30
        %s429 = smul.u32 2, %s30
        %p430 = scmp.lt.s32.totalorder %s429, 1
        %s431 = scalar_select %p430, %s429, 1
        %s432 = smul.addr %s431, 8
        %s433 = scalar_lea.vmem %s1, %s432
        %s434 = smul.u32 2, %s30
        %s435 = smul.u32 2, %s30
        %p436 = scmp.lt.s32.totalorder %s29, 1
        %s437 = scalar_select %p436, %s29, 1
        %p438 = scmp.lt.s32.totalorder %s435, 1
        %s439 = scalar_select %p438, %s435, 1
        %s440 = smul.addr %s439, 4
        %s441 = smul.addr %s437, 8
        %s442 = sadd.s32 %s440, %s441
        %s443 = smul.addr %s442, 8
        %s444 = scalar_lea.vmem %s2, %s443
        %s445 = smul.u32 2, %s30
        %p446 = scmp.lt.s32.totalorder %s29, 1
        %s447 = scalar_select %p446, %s29, 1
        %s448 = smul.addr %s447, 64
        %s449 = smul.addr %s448, 4
        %s450 = scalar_lea.vmem %s3, %s449
        %s451 = smul.u32 %s29, 2
        %s452 = ssub.s32 1, %s451
        %s453 = smul.u32 %s452, %s31
        %s454 = smul.u32 8, %s453
        %p455 = scmp.lt.s32.totalorder %s29, 1
        %s456 = scalar_select %p455, %s29, 1
        %p457 = scmp.lt.s32.totalorder %s454, 7
        %s458 = scalar_select %p457, %s454, 7
        %p459 = scmp.lt.s32.totalorder %s30, 0
        %s460 = scalar_select %p459, %s30, 0
        %s461 = sadd.s32 %s460, %s458
        %s462 = smul.addr %s456, 8
        %s463 = sadd.s32 %s461, %s462
        %s464 = smul.addr %s463, 8
        %s465 = scalar_lea.vmem %s4, %s464
        %s466 = smul.u32 %s29, 2
        %s467 = ssub.s32 1, %s466
        %s468 = smul.u32 %s467, %s31
        %s469 = smul.u32 8, %s468
        %s470 = smul.u32 2, %s30
        %s471 = smul.u32 2, %s30
        %p473 = scmp.eq.s32.totalorder %s31, 0
        // Predicated region
        $region37: #{bilstm_forward.2} parent=35 // pred_check
          %p474 = pneg %p473
        $region38: #{bilstm_forward.2} parent=35 // pred_check_branch
          %476 = sbr.rel (%p474) target = $region40
        $region39: #{bilstm_forward.2} parent=35 // pred_region
          %477 = vst [vmem:[#allocation2] sm:$0xff] 0.0
          %478 = vst [vmem:[#allocation2 + $0x8] sm:$0xff] 0.0
          %479 = vst [vmem:[#allocation3] sm:$0xff] 0.0
          %480 = vst [vmem:[#allocation3 + $0x8] sm:$0xff] 0.0
        $region40: #{bilstm_forward.2} parent=35 // pred_fallthru
          _
        %s481 = smul.u32 %s29, 2
        %s482 = ssub.s32 1, %s481
        %s483 = smul.u32 %s482, %s31
        %s484 = smul.u32 %s483, 8
        %s485 = smul.u32 %s29, 7
        %v486 = vld [vmem:[%s433] sm:$0xff]
        %v487 = vld [vmem:[%s433 + $0x8] sm:$0xff]
        %v488 = vld [vmem:[#allocation2] sm:$0xff]
        %v489 = vld [vmem:[#allocation2 + $0x8] sm:$0xff]
        %v490 = vld [vmem:[#allocation3] sm:$0xff]
        %v491 = vld [vmem:[#allocation3 + $0x8] sm:$0xff]
        %s492 = sadd.s32 %s484, %s485
        %v493 = vld [vmem:[%s450] sm:$0xff]
        %v494 = vld [vmem:[%s450 + $0x8] sm:$0xff]
        %v495 = vld [vmem:[%s450 + $0x10] sm:$0xff]
        %v496 = vld [vmem:[%s450 + $0x18] sm:$0xff]
        %v497 = vld [vmem:[%s450 + $0x20] sm:$0xff]
        %v498 = vld [vmem:[%s450 + $0x28] sm:$0xff]
        %v499 = vld [vmem:[%s450 + $0x30] sm:$0xff]
        %v500 = vld [vmem:[%s450 + $0x38] sm:$0xff]
        %v501 = vld [vmem:[%s450 + $0x40] sm:$0xff]
        %v502 = vld [vmem:[%s450 + $0x48] sm:$0xff]
        %v503 = vld [vmem:[%s450 + $0x50] sm:$0xff]
        %v504 = vld [vmem:[%s450 + $0x58] sm:$0xff]
        %v505 = vld [vmem:[%s450 + $0x60] sm:$0xff]
        %v506 = vld [vmem:[%s450 + $0x68] sm:$0xff]
        %v507 = vld [vmem:[%s450 + $0x70] sm:$0xff]
        %v508 = vld [vmem:[%s450 + $0x78] sm:$0xff]
        %v509 = vld [vmem:[%s450 + $0x80] sm:$0xff]
        %v510 = vld [vmem:[%s450 + $0x88] sm:$0xff]
        %v511 = vld [vmem:[%s450 + $0x90] sm:$0xff]
        %v512 = vld [vmem:[%s450 + $0x98] sm:$0xff]
        %v513 = vld [vmem:[%s450 + $0xa0] sm:$0xff]
        %v514 = vld [vmem:[%s450 + $0xa8] sm:$0xff]
        %v515 = vld [vmem:[%s450 + $0xb0] sm:$0xff]
        %v516 = vld [vmem:[%s450 + $0xb8] sm:$0xff]
        %v517 = vld [vmem:[%s450 + $0xc0] sm:$0xff]
        %v518 = vld [vmem:[%s450 + $0xc8] sm:$0xff]
        %v519 = vld [vmem:[%s450 + $0xd0] sm:$0xff]
        %v520 = vld [vmem:[%s450 + $0xd8] sm:$0xff]
        %v521 = vld [vmem:[%s450 + $0xe0] sm:$0xff]
        %v522 = vld [vmem:[%s450 + $0xe8] sm:$0xff]
        %v523 = vld [vmem:[%s450 + $0xf0] sm:$0xff]
        %v524 = vld [vmem:[%s450 + $0xf8] sm:$0xff]
        %s525 = smul.u32 %s485, 8
        %s526 = smul.addr %s525, 4
        %s527 = scalar_lea.vmem %s423, %s526
        %v528 = vld [vmem:[%s527] sm:$0xff]
        %v529 = vld [vmem:[%s527 + $0x8] sm:$0xff]
        %v530 = vld [vmem:[%s527 + $0x10] sm:$0xff]
        %v531 = vld [vmem:[%s527 + $0x18] sm:$0xff]
        %v532 = vunpack.c.l.bf16 %v528
        %v533 = vunpack.c.h.bf16 %v528
        %v534 = vunpack.c.l.bf16 %v529
        %v535 = vunpack.c.h.bf16 %v529
        %v536 = vunpack.c.l.bf16 %v530
        %v537 = vunpack.c.h.bf16 %v530
        %v538 = vunpack.c.l.bf16 %v531
        %v539 = vunpack.c.h.bf16 %v531
        %v540 = vld [vmem:[%s444] sm:$0xff]
        %v541 = vld [vmem:[%s444 + $0x8] sm:$0xff]
        %v542 = vld [vmem:[%s444 + $0x10] sm:$0xff]
        %v543 = vld [vmem:[%s444 + $0x18] sm:$0xff]
        %v544 = vld [vmem:[%s444 + $0x20] sm:$0xff]
        %v545 = vld [vmem:[%s444 + $0x28] sm:$0xff]
        %v546 = vld [vmem:[%s444 + $0x30] sm:$0xff]
        %v547 = vld [vmem:[%s444 + $0x38] sm:$0xff]
        %v548 = vadd.f32 %v532, %v540
        %v549 = vadd.f32 %v533, %v541
        %v550 = vadd.f32 %v534, %v542
        %v551 = vadd.f32 %v535, %v543
        %v552 = vadd.f32 %v536, %v544
        %v553 = vadd.f32 %v537, %v545
        %v554 = vadd.f32 %v538, %v546
        %v555 = vadd.f32 %v539, %v547
        %v556 = vpack.c.bf16 %v489, %v488
        %v589 = vunpack.c.l.b16 %v493
        %v590 = vunpack.c.h.b16 %v493
        %v591 = vunpack.c.l.b16 %v494
        %v592 = vunpack.c.h.b16 %v494
        %v593 = vunpack.c.l.b16 %v495
        %v594 = vunpack.c.h.b16 %v495
        %v595 = vunpack.c.l.b16 %v496
        %v596 = vunpack.c.h.b16 %v496
        %v597 = vunpack.c.l.b16 %v497
        %v598 = vunpack.c.h.b16 %v497
        %v599 = vunpack.c.l.b16 %v498
        %v600 = vunpack.c.h.b16 %v498
        %v601 = vunpack.c.l.b16 %v499
        %v602 = vunpack.c.h.b16 %v499
        %v603 = vunpack.c.l.b16 %v500
        %v604 = vunpack.c.h.b16 %v500
        %v605 = vunpack.c.l.b16 %v501
        %v606 = vunpack.c.h.b16 %v501
        %v607 = vunpack.c.l.b16 %v502
        %v608 = vunpack.c.h.b16 %v502
        %v609 = vunpack.c.l.b16 %v503
        %v610 = vunpack.c.h.b16 %v503
        %v611 = vunpack.c.l.b16 %v504
        %v612 = vunpack.c.h.b16 %v504
        %v613 = vunpack.c.l.b16 %v505
        %v614 = vunpack.c.h.b16 %v505
        %v615 = vunpack.c.l.b16 %v506
        %v616 = vunpack.c.h.b16 %v506
        %v617 = vunpack.c.l.b16 %v507
        %v618 = vunpack.c.h.b16 %v507
        %v619 = vunpack.c.l.b16 %v508
        %v620 = vunpack.c.h.b16 %v508
        %v621 = vunpack.c.l.b16 %v509
        %v622 = vunpack.c.h.b16 %v509
        %v623 = vunpack.c.l.b16 %v510
        %v624 = vunpack.c.h.b16 %v510
        %v625 = vunpack.c.l.b16 %v511
        %v626 = vunpack.c.h.b16 %v511
        %v627 = vunpack.c.l.b16 %v512
        %v628 = vunpack.c.h.b16 %v512
        %v629 = vunpack.c.l.b16 %v513
        %v630 = vunpack.c.h.b16 %v513
        %v631 = vunpack.c.l.b16 %v514
        %v632 = vunpack.c.h.b16 %v514
        %v633 = vunpack.c.l.b16 %v515
        %v634 = vunpack.c.h.b16 %v515
        %v635 = vunpack.c.l.b16 %v516
        %v636 = vunpack.c.h.b16 %v516
        %v637 = vunpack.c.l.b16 %v517
        %v638 = vunpack.c.h.b16 %v517
        %v639 = vunpack.c.l.b16 %v518
        %v640 = vunpack.c.h.b16 %v518
        %v641 = vunpack.c.l.b16 %v519
        %v642 = vunpack.c.h.b16 %v519
        %v643 = vunpack.c.l.b16 %v520
        %v644 = vunpack.c.h.b16 %v520
        %v645 = vunpack.c.l.b16 %v521
        %v646 = vunpack.c.h.b16 %v521
        %v647 = vunpack.c.l.b16 %v522
        %v648 = vunpack.c.h.b16 %v522
        %v649 = vunpack.c.l.b16 %v523
        %v650 = vunpack.c.h.b16 %v523
        %v651 = vunpack.c.l.b16 %v524
        %v652 = vunpack.c.h.b16 %v524
        %v653 = vpack.c.b16 %v593, %v589
        %v654 = vpack.c.b16 %v594, %v590
        %v655 = vpack.c.b16 %v595, %v591
        %v656 = vpack.c.b16 %v596, %v592
        %v657 = vpack.c.b16 %v601, %v597
        %v658 = vpack.c.b16 %v602, %v598
        %v659 = vpack.c.b16 %v603, %v599
        %v660 = vpack.c.b16 %v604, %v600
        %v661 = vpack.c.b16 %v609, %v605
        %v662 = vpack.c.b16 %v610, %v606
        %v663 = vpack.c.b16 %v611, %v607
        %v664 = vpack.c.b16 %v612, %v608
        %v665 = vpack.c.b16 %v617, %v613
        %v666 = vpack.c.b16 %v618, %v614
        %v667 = vpack.c.b16 %v619, %v615
        %v668 = vpack.c.b16 %v620, %v616
        %v669 = vpack.c.b16 %v625, %v621
        %v670 = vpack.c.b16 %v626, %v622
        %v671 = vpack.c.b16 %v627, %v623
        %v672 = vpack.c.b16 %v628, %v624
        %v673 = vpack.c.b16 %v633, %v629
        %v674 = vpack.c.b16 %v634, %v630
        %v675 = vpack.c.b16 %v635, %v631
        %v676 = vpack.c.b16 %v636, %v632
        %v677 = vpack.c.b16 %v641, %v637
        %v678 = vpack.c.b16 %v642, %v638
        %v679 = vpack.c.b16 %v643, %v639
        %v680 = vpack.c.b16 %v644, %v640
        %v681 = vpack.c.b16 %v649, %v645
        %v682 = vpack.c.b16 %v650, %v646
        %v683 = vpack.c.b16 %v651, %v647
        %v684 = vpack.c.b16 %v652, %v648
        %717 = vmatprep.subr.bf16.mxu0 %v654
        %718 = vmatpush1.bf16.msra.mxu0 %v653
        %719 = vmatprep.subr.bf16.mxu0 %v658
        %720 = vmatpush1.bf16.msra.mxu0 %v657
        %721 = vmatprep.subr.bf16.mxu0 %v662
        %722 = vmatpush1.bf16.msra.mxu0 %v661
        %723 = vmatprep.subr.bf16.mxu0 %v666
        %724 = vmatpush1.bf16.msra.mxu0 %v665
        %725 = vmatprep.subr.bf16.mxu0 %v670
        %726 = vmatpush1.bf16.msra.mxu0 %v669
        %727 = vmatprep.subr.bf16.mxu0 %v674
        %728 = vmatpush1.bf16.msra.mxu0 %v673
        %729 = vmatprep.subr.bf16.mxu0 %v678
        %730 = vmatpush1.bf16.msra.mxu0 %v677
        %731 = vmatprep.subr.bf16.mxu0 %v682
        %732 = vmatpush1.bf16.msra.mxu0 %v681
        %733 = vmatprep.subr.bf16.mxu0 0
        %734 = vmatpush1.bf16.msra.mxu0 0
        %735 = vmatprep.subr.bf16.mxu0 0
        %736 = vmatpush1.bf16.msra.mxu0 0
        %737 = vmatprep.subr.bf16.mxu0 0
        %738 = vmatpush1.bf16.msra.mxu0 0
        %739 = vmatprep.subr.bf16.mxu0 0
        %740 = vmatpush1.bf16.msra.mxu0 0
        %741 = vmatprep.subr.bf16.mxu0 0
        %742 = vmatpush1.bf16.msra.mxu0 0
        %743 = vmatprep.subr.bf16.mxu0 0
        %744 = vmatpush1.bf16.msra.mxu0 0
        %745 = vmatprep.subr.bf16.mxu0 0
        %746 = vmatpush1.bf16.msra.mxu0 0
        %747 = vmatprep.subr.bf16.mxu0 0
        %748 = vmatpush1.bf16.msra.mxu0 0
        %749 = vmatprep.mubr.bf16.mxu0 0
        %750 = vmatmul.mubr.bf16.gmra.mrb[0].mxu0 %v556
        %v751 = vpop.f32.mrb[0].mxu0
        %v752 = vadd.f32 0.0, %v751
        %v753 = vpop.f32.mrb[0].mxu0
        %v754 = vadd.f32 0.0, %v753
        %v755 = vpop.f32.mrb[0].mxu0
        %v756 = vadd.f32 0.0, %v755
        %v757 = vpop.f32.mrb[0].mxu0
        %v758 = vadd.f32 0.0, %v757
        %759 = vdwg.mxu0
        %760 = vmatprep.subr.bf16.mxu0 %v656
        %761 = vmatpush1.bf16.msra.mxu0 %v655
        %762 = vmatprep.subr.bf16.mxu0 %v660
        %763 = vmatpush1.bf16.msra.mxu0 %v659
        %764 = vmatprep.subr.bf16.mxu0 %v664
        %765 = vmatpush1.bf16.msra.mxu0 %v663
        %766 = vmatprep.subr.bf16.mxu0 %v668
        %767 = vmatpush1.bf16.msra.mxu0 %v667
        %768 = vmatprep.subr.bf16.mxu0 %v672
        %769 = vmatpush1.bf16.msra.mxu0 %v671
        %770 = vmatprep.subr.bf16.mxu0 %v676
        %771 = vmatpush1.bf16.msra.mxu0 %v675
        %772 = vmatprep.subr.bf16.mxu0 %v680
        %773 = vmatpush1.bf16.msra.mxu0 %v679
        %774 = vmatprep.subr.bf16.mxu0 %v684
        %775 = vmatpush1.bf16.msra.mxu0 %v683
        %776 = vmatprep.subr.bf16.mxu0 0
        %777 = vmatpush1.bf16.msra.mxu0 0
        %778 = vmatprep.subr.bf16.mxu0 0
        %779 = vmatpush1.bf16.msra.mxu0 0
        %780 = vmatprep.subr.bf16.mxu0 0
        %781 = vmatpush1.bf16.msra.mxu0 0
        %782 = vmatprep.subr.bf16.mxu0 0
        %783 = vmatpush1.bf16.msra.mxu0 0
        %784 = vmatprep.subr.bf16.mxu0 0
        %785 = vmatpush1.bf16.msra.mxu0 0
        %786 = vmatprep.subr.bf16.mxu0 0
        %787 = vmatpush1.bf16.msra.mxu0 0
        %788 = vmatprep.subr.bf16.mxu0 0
        %789 = vmatpush1.bf16.msra.mxu0 0
        %790 = vmatprep.subr.bf16.mxu0 0
        %791 = vmatpush1.bf16.msra.mxu0 0
        %792 = vmatprep.mubr.bf16.mxu0 0
        %793 = vmatmul.mubr.bf16.gmra.mrb[0].mxu0 %v556
        %v794 = vpop.f32.mrb[0].mxu0
        %v795 = vadd.f32 0.0, %v794
        %v796 = vpop.f32.mrb[0].mxu0
        %v797 = vadd.f32 0.0, %v796
        %v798 = vpop.f32.mrb[0].mxu0
        %v799 = vadd.f32 0.0, %v798
        %v800 = vpop.f32.mrb[0].mxu0
        %v801 = vadd.f32 0.0, %v800
        %802 = vdwg.mxu0
        %v803 = vadd.f32 %v548, %v752
        %v804 = vadd.f32 %v549, %v754
        %v805 = vadd.f32 %v550, %v795
        %v806 = vadd.f32 %v551, %v797
        %v807 = vadd.f32 %v552, %v756
        %v808 = vadd.f32 %v553, %v758
        %v809 = vadd.f32 %v554, %v799
        %v810 = vadd.f32 %v555, %v801
        %v811 = vxor.u32 %v803, 2147483648
        %v812 = vxor.u32 %v807, 2147483648
        %v813 = vmul.f32 %v811, 1.442695
        %v814 = vpow.pop %v813
        %v815 = vmul.f32 %v812, 1.442695
        %v816 = vpow.pop %v815
        %v817 = vadd.f32 %v814, 1.0
        %v818 = vadd.f32 %v816, 1.0
        %v819 = vrcp.pop %v817
        %v820 = vmul.f32 1.0, %v819
        %v821 = vrcp.pop %v818
        %v822 = vmul.f32 1.0, %v821
        %v823 = vxor.u32 %v804, 2147483648
        %v824 = vxor.u32 %v808, 2147483648
        %v825 = vmul.f32 %v823, 1.442695
        %v826 = vpow.pop %v825
        %v827 = vmul.f32 %v824, 1.442695
        %v828 = vpow.pop %v827
        %v829 = vadd.f32 %v826, 1.0
        %v830 = vadd.f32 %v828, 1.0
        %v831 = vrcp.pop %v829
        %v832 = vmul.f32 1.0, %v831
        %v833 = vrcp.pop %v830
        %v834 = vmul.f32 1.0, %v833
        %v835 = vtanh.pop %v805
        %v836 = vtanh.pop %v809
        %v837 = vxor.u32 %v806, 2147483648
        %v838 = vxor.u32 %v810, 2147483648
        %v839 = vmul.f32 %v837, 1.442695
        %v840 = vpow.pop %v839
        %v841 = vmul.f32 %v838, 1.442695
        %v842 = vpow.pop %v841
        %v843 = vadd.f32 %v840, 1.0
        %v844 = vadd.f32 %v842, 1.0
        %v845 = vrcp.pop %v843
        %v846 = vmul.f32 1.0, %v845
        %v847 = vrcp.pop %v844
        %v848 = vmul.f32 1.0, %v847
        %v849 = vmul.f32 %v832, %v490
        %v850 = vmul.f32 %v834, %v491
        %v851 = vmul.f32 %v820, %v835
        %v852 = vmul.f32 %v822, %v836
        %v853 = vadd.f32 %v849, %v851
        %v854 = vadd.f32 %v850, %v852
        %v855 = vtanh.pop %v853
        %v856 = vtanh.pop %v854
        %v857 = vmul.f32 %v846, %v855
        %v858 = vmul.f32 %v848, %v856
        %v859 = vstv %s492
        %vm860 = vcmp.lt.s32.totalorder %v859, %v486
        %vm861 = vcmp.lt.s32.totalorder %v859, %v487
        %v862 = vsel %vm860, 1, 0
        %v863 = vsel %vm861, 1, 0
        %864 = vset.pattern.permute.xlu0 0
        %865 = vperm.xlu0 %864, %v862
        %v866 = vpop.permute.xlu0 %865
        %867 = vset.pattern.permute.xlu0 0
        %868 = vperm.xlu0 %867, %v863
        %v869 = vpop.permute.xlu0 %868
        %vm870 = vcmp.eq.s32.totalorder %v866, 1
        %vm871 = vcmp.eq.s32.totalorder %v869, 1
        %v872 = vsel %vm870, %v857, %v488
        %v873 = vsel %vm871, %v858, %v489
        %v874 = vsel %vm870, %v853, %v490
        %v875 = vsel %vm871, %v854, %v491
        %v876 = vsel %vm870, %v857, 0.0
        %v877 = vsel %vm871, %v858, 0.0
        %v878 = vpack.c.bf16 %v877, %v876
        %s879 = smul.addr %s485, 8
        %s880 = scalar_lea.vmem %s465, %s879
        %881 = vst [vmem:[%s880] sm:$0xff] %v878
        %s882 = sadd.s32 %s482, %s485
        %s883 = sadd.s32 %s484, %s882
        %v884 = vld [vmem:[%s450] sm:$0xff]
        %v885 = vld [vmem:[%s450 + $0x8] sm:$0xff]
        %v886 = vld [vmem:[%s450 + $0x10] sm:$0xff]
        %v887 = vld [vmem:[%s450 + $0x18] sm:$0xff]
        %v888 = vld [vmem:[%s450 + $0x20] sm:$0xff]
        %v889 = vld [vmem:[%s450 + $0x28] sm:$0xff]
        %v890 = vld [vmem:[%s450 + $0x30] sm:$0xff]
        %v891 = vld [vmem:[%s450 + $0x38] sm:$0xff]
        %v892 = vld [vmem:[%s450 + $0x40] sm:$0xff]
        %v893 = vld [vmem:[%s450 + $0x48] sm:$0xff]
        %v894 = vld [vmem:[%s450 + $0x50] sm:$0xff]
        %v895 = vld [vmem:[%s450 + $0x58] sm:$0xff]
        %v896 = vld [vmem:[%s450 + $0x60] sm:$0xff]
        %v897 = vld [vmem:[%s450 + $0x68] sm:$0xff]
        %v898 = vld [vmem:[%s450 + $0x70] sm:$0xff]
        %v899 = vld [vmem:[%s450 + $0x78] sm:$0xff]
        %v900 = vld [vmem:[%s450 + $0x80] sm:$0xff]
        %v901 = vld [vmem:[%s450 + $0x88] sm:$0xff]
        %v902 = vld [vmem:[%s450 + $0x90] sm:$0xff]
        %v903 = vld [vmem:[%s450 + $0x98] sm:$0xff]
        %v904 = vld [vmem:[%s450 + $0xa0] sm:$0xff]
        %v905 = vld [vmem:[%s450 + $0xa8] sm:$0xff]
        %v906 = vld [vmem:[%s450 + $0xb0] sm:$0xff]
        %v907 = vld [vmem:[%s450 + $0xb8] sm:$0xff]
        %v908 = vld [vmem:[%s450 + $0xc0] sm:$0xff]
        %v909 = vld [vmem:[%s450 + $0xc8] sm:$0xff]
        %v910 = vld [vmem:[%s450 + $0xd0] sm:$0xff]
        %v911 = vld [vmem:[%s450 + $0xd8] sm:$0xff]
        %v912 = vld [vmem:[%s450 + $0xe0] sm:$0xff]
        %v913 = vld [vmem:[%s450 + $0xe8] sm:$0xff]
        %v914 = vld [vmem:[%s450 + $0xf0] sm:$0xff]
        %v915 = vld [vmem:[%s450 + $0xf8] sm:$0xff]
        %s916 = smul.u32 %s882, 8
        %s917 = smul.addr %s916, 4
        %s918 = scalar_lea.vmem %s423, %s917
        %v919 = vld [vmem:[%s918] sm:$0xff]
        %v920 = vld [vmem:[%s918 + $0x8] sm:$0xff]
        %v921 = vld [vmem:[%s918 + $0x10] sm:$0xff]
        %v922 = vld [vmem:[%s918 + $0x18] sm:$0xff]
        %v923 = vunpack.c.l.bf16 %v919
        %v924 = vunpack.c.h.bf16 %v919
        %v925 = vunpack.c.l.bf16 %v920
        %v926 = vunpack.c.h.bf16 %v920
        %v927 = vunpack.c.l.bf16 %v921
        %v928 = vunpack.c.h.bf16 %v921
        %v929 = vunpack.c.l.bf16 %v922
        %v930 = vunpack.c.h.bf16 %v922
        %v931 = vld [vmem:[%s444] sm:$0xff]
        %v932 = vld [vmem:[%s444 + $0x8] sm:$0xff]
        %v933 = vld [vmem:[%s444 + $0x10] sm:$0xff]
        %v934 = vld [vmem:[%s444 + $0x18] sm:$0xff]
        %v935 = vld [vmem:[%s444 + $0x20] sm:$0xff]
        %v936 = vld [vmem:[%s444 + $0x28] sm:$0xff]
        %v937 = vld [vmem:[%s444 + $0x30] sm:$0xff]
        %v938 = vld [vmem:[%s444 + $0x38] sm:$0xff]
        %v939 = vadd.f32 %v923, %v931
        %v940 = vadd.f32 %v924, %v932
        %v941 = vadd.f32 %v925, %v933
        %v942 = vadd.f32 %v926, %v934
        %v943 = vadd.f32 %v927, %v935
        %v944 = vadd.f32 %v928, %v936
        %v945 = vadd.f32 %v929, %v937
        %v946 = vadd.f32 %v930, %v938
        %v947 = vpack.c.bf16 %v873, %v872
        %v980 = vunpack.c.l.b16 %v884
        %v981 = vunpack.c.h.b16 %v884
        %v982 = vunpack.c.l.b16 %v885
        %v983 = vunpack.c.h.b16 %v885
        %v984 = vunpack.c.l.b16 %v886
        %v985 = vunpack.c.h.b16 %v886
        %v986 = vunpack.c.l.b16 %v887
        %v987 = vunpack.c.h.b16 %v887
        %v988 = vunpack.c.l.b16 %v888
        %v989 = vunpack.c.h.b16 %v888
        %v990 = vunpack.c.l.b16 %v889
        %v991 = vunpack.c.h.b16 %v889
        %v992 = vunpack.c.l.b16 %v890
        %v993 = vunpack.c.h.b16 %v890
        %v994 = vunpack.c.l.b16 %v891
        %v995 = vunpack.c.h.b16 %v891
        %v996 = vunpack.c.l.b16 %v892
        %v997 = vunpack.c.h.b16 %v892
        %v998 = vunpack.c.l.b16 %v893
        %v999 = vunpack.c.h.b16 %v893
        %v1000 = vunpack.c.l.b16 %v894
        %v1001 = vunpack.c.h.b16 %v894
        %v1002 = vunpack.c.l.b16 %v895
        %v1003 = vunpack.c.h.b16 %v895
        %v1004 = vunpack.c.l.b16 %v896
        %v1005 = vunpack.c.h.b16 %v896
        %v1006 = vunpack.c.l.b16 %v897
        %v1007 = vunpack.c.h.b16 %v897
        %v1008 = vunpack.c.l.b16 %v898
        %v1009 = vunpack.c.h.b16 %v898
        %v1010 = vunpack.c.l.b16 %v899
        %v1011 = vunpack.c.h.b16 %v899
        %v1012 = vunpack.c.l.b16 %v900
        %v1013 = vunpack.c.h.b16 %v900
        %v1014 = vunpack.c.l.b16 %v901
        %v1015 = vunpack.c.h.b16 %v901
        %v1016 = vunpack.c.l.b16 %v902
        %v1017 = vunpack.c.h.b16 %v902
        %v1018 = vunpack.c.l.b16 %v903
        %v1019 = vunpack.c.h.b16 %v903
        %v1020 = vunpack.c.l.b16 %v904
        %v1021 = vunpack.c.h.b16 %v904
        %v1022 = vunpack.c.l.b16 %v905
        %v1023 = vunpack.c.h.b16 %v905
        %v1024 = vunpack.c.l.b16 %v906
        %v1025 = vunpack.c.h.b16 %v906
        %v1026 = vunpack.c.l.b16 %v907
        %v1027 = vunpack.c.h.b16 %v907
        %v1028 = vunpack.c.l.b16 %v908
        %v1029 = vunpack.c.h.b16 %v908
        %v1030 = vunpack.c.l.b16 %v909
        %v1031 = vunpack.c.h.b16 %v909
        %v1032 = vunpack.c.l.b16 %v910
        %v1033 = vunpack.c.h.b16 %v910
        %v1034 = vunpack.c.l.b16 %v911
        %v1035 = vunpack.c.h.b16 %v911
        %v1036 = vunpack.c.l.b16 %v912
        %v1037 = vunpack.c.h.b16 %v912
        %v1038 = vunpack.c.l.b16 %v913
        %v1039 = vunpack.c.h.b16 %v913
        %v1040 = vunpack.c.l.b16 %v914
        %v1041 = vunpack.c.h.b16 %v914
        %v1042 = vunpack.c.l.b16 %v915
        %v1043 = vunpack.c.h.b16 %v915
        %v1044 = vpack.c.b16 %v984, %v980
        %v1045 = vpack.c.b16 %v985, %v981
        %v1046 = vpack.c.b16 %v986, %v982
        %v1047 = vpack.c.b16 %v987, %v983
        %v1048 = vpack.c.b16 %v992, %v988
        %v1049 = vpack.c.b16 %v993, %v989
        %v1050 = vpack.c.b16 %v994, %v990
        %v1051 = vpack.c.b16 %v995, %v991
        %v1052 = vpack.c.b16 %v1000, %v996
        %v1053 = vpack.c.b16 %v1001, %v997
        %v1054 = vpack.c.b16 %v1002, %v998
        %v1055 = vpack.c.b16 %v1003, %v999
        %v1056 = vpack.c.b16 %v1008, %v1004
        %v1057 = vpack.c.b16 %v1009, %v1005
        %v1058 = vpack.c.b16 %v1010, %v1006
        %v1059 = vpack.c.b16 %v1011, %v1007
        %v1060 = vpack.c.b16 %v1016, %v1012
        %v1061 = vpack.c.b16 %v1017, %v1013
        %v1062 = vpack.c.b16 %v1018, %v1014
        %v1063 = vpack.c.b16 %v1019, %v1015
        %v1064 = vpack.c.b16 %v1024, %v1020
        %v1065 = vpack.c.b16 %v1025, %v1021
        %v1066 = vpack.c.b16 %v1026, %v1022
        %v1067 = vpack.c.b16 %v1027, %v1023
        %v1068 = vpack.c.b16 %v1032, %v1028
        %v1069 = vpack.c.b16 %v1033, %v1029
        %v1070 = vpack.c.b16 %v1034, %v1030
        %v1071 = vpack.c.b16 %v1035, %v1031
        %v1072 = vpack.c.b16 %v1040, %v1036
        %v1073 = vpack.c.b16 %v1041, %v1037
        %v1074 = vpack.c.b16 %v1042, %v1038
        %v1075 = vpack.c.b16 %v1043, %v1039
        %1108 = vmatprep.subr.bf16.mxu0 %v1045
        %1109 = vmatpush1.bf16.msra.mxu0 %v1044
        %1110 = vmatprep.subr.bf16.mxu0 %v1049
        %1111 = vmatpush1.bf16.msra.mxu0 %v1048
        %1112 = vmatprep.subr.bf16.mxu0 %v1053
        %1113 = vmatpush1.bf16.msra.mxu0 %v1052
        %1114 = vmatprep.subr.bf16.mxu0 %v1057
        %1115 = vmatpush1.bf16.msra.mxu0 %v1056
        %1116 = vmatprep.subr.bf16.mxu0 %v1061
        %1117 = vmatpush1.bf16.msra.mxu0 %v1060
        %1118 = vmatprep.subr.bf16.mxu0 %v1065
        %1119 = vmatpush1.bf16.msra.mxu0 %v1064
        %1120 = vmatprep.subr.bf16.mxu0 %v1069
        %1121 = vmatpush1.bf16.msra.mxu0 %v1068
        %1122 = vmatprep.subr.bf16.mxu0 %v1073
        %1123 = vmatpush1.bf16.msra.mxu0 %v1072
        %1124 = vmatprep.subr.bf16.mxu0 0
        %1125 = vmatpush1.bf16.msra.mxu0 0
        %1126 = vmatprep.subr.bf16.mxu0 0
        %1127 = vmatpush1.bf16.msra.mxu0 0
        %1128 = vmatprep.subr.bf16.mxu0 0
        %1129 = vmatpush1.bf16.msra.mxu0 0
        %1130 = vmatprep.subr.bf16.mxu0 0
        %1131 = vmatpush1.bf16.msra.mxu0 0
        %1132 = vmatprep.subr.bf16.mxu0 0
        %1133 = vmatpush1.bf16.msra.mxu0 0
        %1134 = vmatprep.subr.bf16.mxu0 0
        %1135 = vmatpush1.bf16.msra.mxu0 0
        %1136 = vmatprep.subr.bf16.mxu0 0
        %1137 = vmatpush1.bf16.msra.mxu0 0
        %1138 = vmatprep.subr.bf16.mxu0 0
        %1139 = vmatpush1.bf16.msra.mxu0 0
        %1140 = vmatprep.mubr.bf16.mxu0 0
        %1141 = vmatmul.mubr.bf16.gmra.mrb[0].mxu0 %v947
        %v1142 = vpop.f32.mrb[0].mxu0
        %v1143 = vadd.f32 0.0, %v1142
        %v1144 = vpop.f32.mrb[0].mxu0
        %v1145 = vadd.f32 0.0, %v1144
        %v1146 = vpop.f32.mrb[0].mxu0
        %v1147 = vadd.f32 0.0, %v1146
        %v1148 = vpop.f32.mrb[0].mxu0
        %v1149 = vadd.f32 0.0, %v1148
        %1150 = vdwg.mxu0
        %1151 = vmatprep.subr.bf16.mxu0 %v1047
        %1152 = vmatpush1.bf16.msra.mxu0 %v1046
        %1153 = vmatprep.subr.bf16.mxu0 %v1051
        %1154 = vmatpush1.bf16.msra.mxu0 %v1050
        %1155 = vmatprep.subr.bf16.mxu0 %v1055
        %1156 = vmatpush1.bf16.msra.mxu0 %v1054
        %1157 = vmatprep.subr.bf16.mxu0 %v1059
        %1158 = vmatpush1.bf16.msra.mxu0 %v1058
        %1159 = vmatprep.subr.bf16.mxu0 %v1063
        %1160 = vmatpush1.bf16.msra.mxu0 %v1062
        %1161 = vmatprep.subr.bf16.mxu0 %v1067
        %1162 = vmatpush1.bf16.msra.mxu0 %v1066
        %1163 = vmatprep.subr.bf16.mxu0 %v1071
        %1164 = vmatpush1.bf16.msra.mxu0 %v1070
        %1165 = vmatprep.subr.bf16.mxu0 %v1075
        %1166 = vmatpush1.bf16.msra.mxu0 %v1074
        %1167 = vmatprep.subr.bf16.mxu0 0
        %1168 = vmatpush1.bf16.msra.mxu0 0
        %1169 = vmatprep.subr.bf16.mxu0 0
        %1170 = vmatpush1.bf16.msra.mxu0 0
        %1171 = vmatprep.subr.bf16.mxu0 0
        %1172 = vmatpush1.bf16.msra.mxu0 0
        %1173 = vmatprep.subr.bf16.mxu0 0
        %1174 = vmatpush1.bf16.msra.mxu0 0
        %1175 = vmatprep.subr.bf16.mxu0 0
        %1176 = vmatpush1.bf16.msra.mxu0 0
        %1177 = vmatprep.subr.bf16.mxu0 0
        %1178 = vmatpush1.bf16.msra.mxu0 0
        %1179 = vmatprep.subr.bf16.mxu0 0
        %1180 = vmatpush1.bf16.msra.mxu0 0
        %1181 = vmatprep.subr.bf16.mxu0 0
        %1182 = vmatpush1.bf16.msra.mxu0 0
        %1183 = vmatprep.mubr.bf16.mxu0 0
        %1184 = vmatmul.mubr.bf16.gmra.mrb[0].mxu0 %v947
        %v1185 = vpop.f32.mrb[0].mxu0
        %v1186 = vadd.f32 0.0, %v1185
        %v1187 = vpop.f32.mrb[0].mxu0
        %v1188 = vadd.f32 0.0, %v1187
        %v1189 = vpop.f32.mrb[0].mxu0
        %v1190 = vadd.f32 0.0, %v1189
        %v1191 = vpop.f32.mrb[0].mxu0
        %v1192 = vadd.f32 0.0, %v1191
        %1193 = vdwg.mxu0
        %v1194 = vadd.f32 %v939, %v1143
        %v1195 = vadd.f32 %v940, %v1145
        %v1196 = vadd.f32 %v941, %v1186
        %v1197 = vadd.f32 %v942, %v1188
        %v1198 = vadd.f32 %v943, %v1147
        %v1199 = vadd.f32 %v944, %v1149
        %v1200 = vadd.f32 %v945, %v1190
        %v1201 = vadd.f32 %v946, %v1192
        %v1202 = vxor.u32 %v1194, 2147483648
        %v1203 = vxor.u32 %v1198, 2147483648
        %v1204 = vmul.f32 %v1202, 1.442695
        %v1205 = vpow.pop %v1204
        %v1206 = vmul.f32 %v1203, 1.442695
        %v1207 = vpow.pop %v1206
        %v1208 = vadd.f32 %v1205, 1.0
        %v1209 = vadd.f32 %v1207, 1.0
        %v1210 = vrcp.pop %v1208
        %v1211 = vmul.f32 1.0, %v1210
        %v1212 = vrcp.pop %v1209
        %v1213 = vmul.f32 1.0, %v1212
        %v1214 = vxor.u32 %v1195, 2147483648
        %v1215 = vxor.u32 %v1199, 2147483648
        %v1216 = vmul.f32 %v1214, 1.442695
        %v1217 = vpow.pop %v1216
        %v1218 = vmul.f32 %v1215, 1.442695
        %v1219 = vpow.pop %v1218
        %v1220 = vadd.f32 %v1217, 1.0
        %v1221 = vadd.f32 %v1219, 1.0
        %v1222 = vrcp.pop %v1220
        %v1223 = vmul.f32 1.0, %v1222
        %v1224 = vrcp.pop %v1221
        %v1225 = vmul.f32 1.0, %v1224
        %v1226 = vtanh.pop %v1196
        %v1227 = vtanh.pop %v1200
        %v1228 = vxor.u32 %v1197, 2147483648
        %v1229 = vxor.u32 %v1201, 2147483648
        %v1230 = vmul.f32 %v1228, 1.442695
        %v1231 = vpow.pop %v1230
        %v1232 = vmul.f32 %v1229, 1.442695
        %v1233 = vpow.pop %v1232
        %v1234 = vadd.f32 %v1231, 1.0
        %v1235 = vadd.f32 %v1233, 1.0
        %v1236 = vrcp.pop %v1234
        %v1237 = vmul.f32 1.0, %v1236
        %v1238 = vrcp.pop %v1235
        %v1239 = vmul.f32 1.0, %v1238
        %v1240 = vmul.f32 %v1223, %v874
        %v1241 = vmul.f32 %v1225, %v875
        %v1242 = vmul.f32 %v1211, %v1226
        %v1243 = vmul.f32 %v1213, %v1227
        %v1244 = vadd.f32 %v1240, %v1242
        %v1245 = vadd.f32 %v1241, %v1243
        %v1246 = vtanh.pop %v1244
        %v1247 = vtanh.pop %v1245
        %v1248 = vmul.f32 %v1237, %v1246
        %v1249 = vmul.f32 %v1239, %v1247
        %v1250 = vstv %s883
        %vm1251 = vcmp.lt.s32.totalorder %v1250, %v486
        %vm1252 = vcmp.lt.s32.totalorder %v1250, %v487
        %v1253 = vsel %vm1251, 1, 0
        %v1254 = vsel %vm1252, 1, 0
        %1255 = vset.pattern.permute.xlu0 0
        %1256 = vperm.xlu0 %1255, %v1253
        %v1257 = vpop.permute.xlu0 %1256
        %1258 = vset.pattern.permute.xlu0 0
        %1259 = vperm.xlu0 %1258, %v1254
        %v1260 = vpop.permute.xlu0 %1259
        %vm1261 = vcmp.eq.s32.totalorder %v1257, 1
        %vm1262 = vcmp.eq.s32.totalorder %v1260, 1
        %v1263 = vsel %vm1261, %v1248, %v872
        %v1264 = vsel %vm1262, %v1249, %v873
        %v1265 = vsel %vm1261, %v1244, %v874
        %v1266 = vsel %vm1262, %v1245, %v875
        %v1267 = vsel %vm1261, %v1248, 0.0
        %v1268 = vsel %vm1262, %v1249, 0.0
        %v1269 = vpack.c.bf16 %v1268, %v1267
        %s1270 = smul.addr %s882, 8
        %s1271 = scalar_lea.vmem %s465, %s1270
        %1272 = vst [vmem:[%s1271] sm:$0xff] %v1269
        %s1273 = smul.u32 %s482, 2
        %s1274 = sadd.s32 %s1273, %s485
        %s1275 = sadd.s32 %s484, %s1274
        %v1276 = vld [vmem:[%s450] sm:$0xff]
        %v1277 = vld [vmem:[%s450 + $0x8] sm:$0xff]
        %v1278 = vld [vmem:[%s450 + $0x10] sm:$0xff]
        %v1279 = vld [vmem:[%s450 + $0x18] sm:$0xff]
        %v1280 = vld [vmem:[%s450 + $0x20] sm:$0xff]
        %v1281 = vld [vmem:[%s450 + $0x28] sm:$0xff]
        %v1282 = vld [vmem:[%s450 + $0x30] sm:$0xff]
        %v1283 = vld [vmem:[%s450 + $0x38] sm:$0xff]
        %v1284 = vld [vmem:[%s450 + $0x40] sm:$0xff]
        %v1285 = vld [vmem:[%s450 + $0x48] sm:$0xff]
        %v1286 = vld [vmem:[%s450 + $0x50] sm:$0xff]
        %v1287 = vld [vmem:[%s450 + $0x58] sm:$0xff]
        %v1288 = vld [vmem:[%s450 + $0x60] sm:$0xff]
        %v1289 = vld [vmem:[%s450 + $0x68] sm:$0xff]
        %v1290 = vld [vmem:[%s450 + $0x70] sm:$0xff]
        %v1291 = vld [vmem:[%s450 + $0x78] sm:$0xff]
        %v1292 = vld [vmem:[%s450 + $0x80] sm:$0xff]
        %v1293 = vld [vmem:[%s450 + $0x88] sm:$0xff]
        %v1294 = vld [vmem:[%s450 + $0x90] sm:$0xff]
        %v1295 = vld [vmem:[%s450 + $0x98] sm:$0xff]
        %v1296 = vld [vmem:[%s450 + $0xa0] sm:$0xff]
        %v1297 = vld [vmem:[%s450 + $0xa8] sm:$0xff]
        %v1298 = vld [vmem:[%s450 + $0xb0] sm:$0xff]
        %v1299 = vld [vmem:[%s450 + $0xb8] sm:$0xff]
        %v1300 = vld [vmem:[%s450 + $0xc0] sm:$0xff]
        %v1301 = vld [vmem:[%s450 + $0xc8] sm:$0xff]
        %v1302 = vld [vmem:[%s450 + $0xd0] sm:$0xff]
        %v1303 = vld [vmem:[%s450 + $0xd8] sm:$0xff]
        %v1304 = vld [vmem:[%s450 + $0xe0] sm:$0xff]
        %v1305 = vld [vmem:[%s450 + $0xe8] sm:$0xff]
        %v1306 = vld [vmem:[%s450 + $0xf0] sm:$0xff]
        %v1307 = vld [vmem:[%s450 + $0xf8] sm:$0xff]
        %s1308 = smul.u32 %s1274, 8
        %s1309 = smul.addr %s1308, 4
        %s1310 = scalar_lea.vmem %s423, %s1309
        %v1311 = vld [vmem:[%s1310] sm:$0xff]
        %v1312 = vld [vmem:[%s1310 + $0x8] sm:$0xff]
        %v1313 = vld [vmem:[%s1310 + $0x10] sm:$0xff]
        %v1314 = vld [vmem:[%s1310 + $0x18] sm:$0xff]
        %v1315 = vunpack.c.l.bf16 %v1311
        %v1316 = vunpack.c.h.bf16 %v1311
        %v1317 = vunpack.c.l.bf16 %v1312
        %v1318 = vunpack.c.h.bf16 %v1312
        %v1319 = vunpack.c.l.bf16 %v1313
        %v1320 = vunpack.c.h.bf16 %v1313
        %v1321 = vunpack.c.l.bf16 %v1314
        %v1322 = vunpack.c.h.bf16 %v1314
        %v1323 = vld [vmem:[%s444] sm:$0xff]
        %v1324 = vld [vmem:[%s444 + $0x8] sm:$0xff]
        %v1325 = vld [vmem:[%s444 + $0x10] sm:$0xff]
        %v1326 = vld [vmem:[%s444 + $0x18] sm:$0xff]
        %v1327 = vld [vmem:[%s444 + $0x20] sm:$0xff]
        %v1328 = vld [vmem:[%s444 + $0x28] sm:$0xff]
        %v1329 = vld [vmem:[%s444 + $0x30] sm:$0xff]
        %v1330 = vld [vmem:[%s444 + $0x38] sm:$0xff]
        %v1331 = vadd.f32 %v1315, %v1323
        %v1332 = vadd.f32 %v1316, %v1324
        %v1333 = vadd.f32 %v1317, %v1325
        %v1334 = vadd.f32 %v1318, %v1326
        %v1335 = vadd.f32 %v1319, %v1327
        %v1336 = vadd.f32 %v1320, %v1328
        %v1337 = vadd.f32 %v1321, %v1329
        %v1338 = vadd.f32 %v1322, %v1330
        %v1339 = vpack.c.bf16 %v1264, %v1263
        %v1372 = vunpack.c.l.b16 %v1276
        %v1373 = vunpack.c.h.b16 %v1276
        %v1374 = vunpack.c.l.b16 %v1277
        %v1375 = vunpack.c.h.b16 %v1277
        %v1376 = vunpack.c.l.b16 %v1278
        %v1377 = vunpack.c.h.b16 %v1278
        %v1378 = vunpack.c.l.b16 %v1279
        %v1379 = vunpack.c.h.b16 %v1279
        %v1380 = vunpack.c.l.b16 %v1280
        %v1381 = vunpack.c.h.b16 %v1280
        %v1382 = vunpack.c.l.b16 %v1281
        %v1383 = vunpack.c.h.b16 %v1281
        %v1384 = vunpack.c.l.b16 %v1282
        %v1385 = vunpack.c.h.b16 %v1282
        %v1386 = vunpack.c.l.b16 %v1283
        %v1387 = vunpack.c.h.b16 %v1283
        %v1388 = vunpack.c.l.b16 %v1284
        %v1389 = vunpack.c.h.b16 %v1284
        %v1390 = vunpack.c.l.b16 %v1285
        %v1391 = vunpack.c.h.b16 %v1285
        %v1392 = vunpack.c.l.b16 %v1286
        %v1393 = vunpack.c.h.b16 %v1286
        %v1394 = vunpack.c.l.b16 %v1287
        %v1395 = vunpack.c.h.b16 %v1287
        %v1396 = vunpack.c.l.b16 %v1288
        %v1397 = vunpack.c.h.b16 %v1288
        %v1398 = vunpack.c.l.b16 %v1289
        %v1399 = vunpack.c.h.b16 %v1289
        %v1400 = vunpack.c.l.b16 %v1290
        %v1401 = vunpack.c.h.b16 %v1290
        %v1402 = vunpack.c.l.b16 %v1291
        %v1403 = vunpack.c.h.b16 %v1291
        %v1404 = vunpack.c.l.b16 %v1292
        %v1405 = vunpack.c.h.b16 %v1292
        %v1406 = vunpack.c.l.b16 %v1293
        %v1407 = vunpack.c.h.b16 %v1293
        %v1408 = vunpack.c.l.b16 %v1294
        %v1409 = vunpack.c.h.b16 %v1294
        %v1410 = vunpack.c.l.b16 %v1295
        %v1411 = vunpack.c.h.b16 %v1295
        %v1412 = vunpack.c.l.b16 %v1296
        %v1413 = vunpack.c.h.b16 %v1296
        %v1414 = vunpack.c.l.b16 %v1297
        %v1415 = vunpack.c.h.b16 %v1297
        %v1416 = vunpack.c.l.b16 %v1298
        %v1417 = vunpack.c.h.b16 %v1298
        %v1418 = vunpack.c.l.b16 %v1299
        %v1419 = vunpack.c.h.b16 %v1299
        %v1420 = vunpack.c.l.b16 %v1300
        %v1421 = vunpack.c.h.b16 %v1300
        %v1422 = vunpack.c.l.b16 %v1301
        %v1423 = vunpack.c.h.b16 %v1301
        %v1424 = vunpack.c.l.b16 %v1302
        %v1425 = vunpack.c.h.b16 %v1302
        %v1426 = vunpack.c.l.b16 %v1303
        %v1427 = vunpack.c.h.b16 %v1303
        %v1428 = vunpack.c.l.b16 %v1304
        %v1429 = vunpack.c.h.b16 %v1304
        %v1430 = vunpack.c.l.b16 %v1305
        %v1431 = vunpack.c.h.b16 %v1305
        %v1432 = vunpack.c.l.b16 %v1306
        %v1433 = vunpack.c.h.b16 %v1306
        %v1434 = vunpack.c.l.b16 %v1307
        %v1435 = vunpack.c.h.b16 %v1307
        %v1436 = vpack.c.b16 %v1376, %v1372
        %v1437 = vpack.c.b16 %v1377, %v1373
        %v1438 = vpack.c.b16 %v1378, %v1374
        %v1439 = vpack.c.b16 %v1379, %v1375
        %v1440 = vpack.c.b16 %v1384, %v1380
        %v1441 = vpack.c.b16 %v1385, %v1381
        %v1442 = vpack.c.b16 %v1386, %v1382
        %v1443 = vpack.c.b16 %v1387, %v1383
        %v1444 = vpack.c.b16 %v1392, %v1388
        %v1445 = vpack.c.b16 %v1393, %v1389
        %v1446 = vpack.c.b16 %v1394, %v1390
        %v1447 = vpack.c.b16 %v1395, %v1391
        %v1448 = vpack.c.b16 %v1400, %v1396
        %v1449 = vpack.c.b16 %v1401, %v1397
        %v1450 = vpack.c.b16 %v1402, %v1398
        %v1451 = vpack.c.b16 %v1403, %v1399
        %v1452 = vpack.c.b16 %v1408, %v1404
        %v1453 = vpack.c.b16 %v1409, %v1405
        %v1454 = vpack.c.b16 %v1410, %v1406
        %v1455 = vpack.c.b16 %v1411, %v1407
        %v1456 = vpack.c.b16 %v1416, %v1412
        %v1457 = vpack.c.b16 %v1417, %v1413
        %v1458 = vpack.c.b16 %v1418, %v1414
        %v1459 = vpack.c.b16 %v1419, %v1415
        %v1460 = vpack.c.b16 %v1424, %v1420
        %v1461 = vpack.c.b16 %v1425, %v1421
        %v1462 = vpack.c.b16 %v1426, %v1422
        %v1463 = vpack.c.b16 %v1427, %v1423
        %v1464 = vpack.c.b16 %v1432, %v1428
        %v1465 = vpack.c.b16 %v1433, %v1429
        %v1466 = vpack.c.b16 %v1434, %v1430
        %v1467 = vpack.c.b16 %v1435, %v1431
        %1500 = vmatprep.subr.bf16.mxu0 %v1437
        %1501 = vmatpush1.bf16.msra.mxu0 %v1436
        %1502 = vmatprep.subr.bf16.mxu0 %v1441
        %1503 = vmatpush1.bf16.msra.mxu0 %v1440
        %1504 = vmatprep.subr.bf16.mxu0 %v1445
        %1505 = vmatpush1.bf16.msra.mxu0 %v1444
        %1506 = vmatprep.subr.bf16.mxu0 %v1449
        %1507 = vmatpush1.bf16.msra.mxu0 %v1448
        %1508 = vmatprep.subr.bf16.mxu0 %v1453
        %1509 = vmatpush1.bf16.msra.mxu0 %v1452
        %1510 = vmatprep.subr.bf16.mxu0 %v1457
        %1511 = vmatpush1.bf16.msra.mxu0 %v1456
        %1512 = vmatprep.subr.bf16.mxu0 %v1461
        %1513 = vmatpush1.bf16.msra.mxu0 %v1460
        %1514 = vmatprep.subr.bf16.mxu0 %v1465
        %1515 = vmatpush1.bf16.msra.mxu0 %v1464
        %1516 = vmatprep.subr.bf16.mxu0 0
        %1517 = vmatpush1.bf16.msra.mxu0 0
        %1518 = vmatprep.subr.bf16.mxu0 0
        %1519 = vmatpush1.bf16.msra.mxu0 0
        %1520 = vmatprep.subr.bf16.mxu0 0
        %1521 = vmatpush1.bf16.msra.mxu0 0
        %1522 = vmatprep.subr.bf16.mxu0 0
        %1523 = vmatpush1.bf16.msra.mxu0 0
        %1524 = vmatprep.subr.bf16.mxu0 0
        %1525 = vmatpush1.bf16.msra.mxu0 0
        %1526 = vmatprep.subr.bf16.mxu0 0
        %1527 = vmatpush1.bf16.msra.mxu0 0
        %1528 = vmatprep.subr.bf16.mxu0 0
        %1529 = vmatpush1.bf16.msra.mxu0 0
        %1530 = vmatprep.subr.bf16.mxu0 0
        %1531 = vmatpush1.bf16.msra.mxu0 0
        %1532 = vmatprep.mubr.bf16.mxu0 0
        %1533 = vmatmul.mubr.bf16.gmra.mrb[0].mxu0 %v1339
        %v1534 = vpop.f32.mrb[0].mxu0
        %v1535 = vadd.f32 0.0, %v1534
        %v1536 = vpop.f32.mrb[0].mxu0
        %v1537 = vadd.f32 0.0, %v1536
        %v1538 = vpop.f32.mrb[0].mxu0
        %v1539 = vadd.f32 0.0, %v1538
        %v1540 = vpop.f32.mrb[0].mxu0
        %v1541 = vadd.f32 0.0, %v1540
        %1542 = vdwg.mxu0
        %1543 = vmatprep.subr.bf16.mxu0 %v1439
        %1544 = vmatpush1.bf16.msra.mxu0 %v1438
        %1545 = vmatprep.subr.bf16.mxu0 %v1443
        %1546 = vmatpush1.bf16.msra.mxu0 %v1442
        %1547 = vmatprep.subr.bf16.mxu0 %v1447
        %1548 = vmatpush1.bf16.msra.mxu0 %v1446
        %1549 = vmatprep.subr.bf16.mxu0 %v1451
        %1550 = vmatpush1.bf16.msra.mxu0 %v1450
        %1551 = vmatprep.subr.bf16.mxu0 %v1455
        %1552 = vmatpush1.bf16.msra.mxu0 %v1454
        %1553 = vmatprep.subr.bf16.mxu0 %v1459
        %1554 = vmatpush1.bf16.msra.mxu0 %v1458
        %1555 = vmatprep.subr.bf16.mxu0 %v1463
        %1556 = vmatpush1.bf16.msra.mxu0 %v1462
        %1557 = vmatprep.subr.bf16.mxu0 %v1467
        %1558 = vmatpush1.bf16.msra.mxu0 %v1466
        %1559 = vmatprep.subr.bf16.mxu0 0
        %1560 = vmatpush1.bf16.msra.mxu0 0
        %1561 = vmatprep.subr.bf16.mxu0 0
        %1562 = vmatpush1.bf16.msra.mxu0 0
        %1563 = vmatprep.subr.bf16.mxu0 0
        %1564 = vmatpush1.bf16.msra.mxu0 0
        %1565 = vmatprep.subr.bf16.mxu0 0
        %1566 = vmatpush1.bf16.msra.mxu0 0
        %1567 = vmatprep.subr.bf16.mxu0 0
        %1568 = vmatpush1.bf16.msra.mxu0 0
        %1569 = vmatprep.subr.bf16.mxu0 0
        %1570 = vmatpush1.bf16.msra.mxu0 0
        %1571 = vmatprep.subr.bf16.mxu0 0
        %1572 = vmatpush1.bf16.msra.mxu0 0
        %1573 = vmatprep.subr.bf16.mxu0 0
        %1574 = vmatpush1.bf16.msra.mxu0 0
        %1575 = vmatprep.mubr.bf16.mxu0 0
        %1576 = vmatmul.mubr.bf16.gmra.mrb[0].mxu0 %v1339
        %v1577 = vpop.f32.mrb[0].mxu0
        %v1578 = vadd.f32 0.0, %v1577
        %v1579 = vpop.f32.mrb[0].mxu0
        %v1580 = vadd.f32 0.0, %v1579
        %v1581 = vpop.f32.mrb[0].mxu0
        %v1582 = vadd.f32 0.0, %v1581
        %v1583 = vpop.f32.mrb[0].mxu0
        %v1584 = vadd.f32 0.0, %v1583
        %1585 = vdwg.mxu0
        %v1586 = vadd.f32 %v1331, %v1535
        %v1587 = vadd.f32 %v1332, %v1537
        %v1588 = vadd.f32 %v1333, %v1578
        %v1589 = vadd.f32 %v1334, %v1580
        %v1590 = vadd.f32 %v1335, %v1539
        %v1591 = vadd.f32 %v1336, %v1541
        %v1592 = vadd.f32 %v1337, %v1582
        %v1593 = vadd.f32 %v1338, %v1584
        %v1594 = vxor.u32 %v1586, 2147483648
        %v1595 = vxor.u32 %v1590, 2147483648
        %v1596 = vmul.f32 %v1594, 1.442695
        %v1597 = vpow.pop %v1596
        %v1598 = vmul.f32 %v1595, 1.442695
        %v1599 = vpow.pop %v1598
        %v1600 = vadd.f32 %v1597, 1.0
        %v1601 = vadd.f32 %v1599, 1.0
        %v1602 = vrcp.pop %v1600
        %v1603 = vmul.f32 1.0, %v1602
        %v1604 = vrcp.pop %v1601
        %v1605 = vmul.f32 1.0, %v1604
        %v1606 = vxor.u32 %v1587, 2147483648
        %v1607 = vxor.u32 %v1591, 2147483648
        %v1608 = vmul.f32 %v1606, 1.442695
        %v1609 = vpow.pop %v1608
        %v1610 = vmul.f32 %v1607, 1.442695
        %v1611 = vpow.pop %v1610
        %v1612 = vadd.f32 %v1609, 1.0
        %v1613 = vadd.f32 %v1611, 1.0
        %v1614 = vrcp.pop %v1612
        %v1615 = vmul.f32 1.0, %v1614
        %v1616 = vrcp.pop %v1613
        %v1617 = vmul.f32 1.0, %v1616
        %v1618 = vtanh.pop %v1588
        %v1619 = vtanh.pop %v1592
        %v1620 = vxor.u32 %v1589, 2147483648
        %v1621 = vxor.u32 %v1593, 2147483648
        %v1622 = vmul.f32 %v1620, 1.442695
        %v1623 = vpow.pop %v1622
        %v1624 = vmul.f32 %v1621, 1.442695
        %v1625 = vpow.pop %v1624
        %v1626 = vadd.f32 %v1623, 1.0
        %v1627 = vadd.f32 %v1625, 1.0
        %v1628 = vrcp.pop %v1626
        %v1629 = vmul.f32 1.0, %v1628
        %v1630 = vrcp.pop %v1627
        %v1631 = vmul.f32 1.0, %v1630
        %v1632 = vmul.f32 %v1615, %v1265
        %v1633 = vmul.f32 %v1617, %v1266
        %v1634 = vmul.f32 %v1603, %v1618
        %v1635 = vmul.f32 %v1605, %v1619
        %v1636 = vadd.f32 %v1632, %v1634
        %v1637 = vadd.f32 %v1633, %v1635
        %v1638 = vtanh.pop %v1636
        %v1639 = vtanh.pop %v1637
        %v1640 = vmul.f32 %v1629, %v1638
        %v1641 = vmul.f32 %v1631, %v1639
        %v1642 = vstv %s1275
        %vm1643 = vcmp.lt.s32.totalorder %v1642, %v486
        %vm1644 = vcmp.lt.s32.totalorder %v1642, %v487
        %v1645 = vsel %vm1643, 1, 0
        %v1646 = vsel %vm1644, 1, 0
        %1647 = vset.pattern.permute.xlu0 0
        %1648 = vperm.xlu0 %1647, %v1645
        %v1649 = vpop.permute.xlu0 %1648
        %1650 = vset.pattern.permute.xlu0 0
        %1651 = vperm.xlu0 %1650, %v1646
        %v1652 = vpop.permute.xlu0 %1651
        %vm1653 = vcmp.eq.s32.totalorder %v1649, 1
        %vm1654 = vcmp.eq.s32.totalorder %v1652, 1
        %v1655 = vsel %vm1653, %v1640, %v1263
        %v1656 = vsel %vm1654, %v1641, %v1264
        %v1657 = vsel %vm1653, %v1636, %v1265
        %v1658 = vsel %vm1654, %v1637, %v1266
        %v1659 = vsel %vm1653, %v1640, 0.0
        %v1660 = vsel %vm1654, %v1641, 0.0
        %v1661 = vpack.c.bf16 %v1660, %v1659
        %s1662 = smul.addr %s1274, 8
        %s1663 = scalar_lea.vmem %s465, %s1662
        %1664 = vst [vmem:[%s1663] sm:$0xff] %v1661
        %s1665 = smul.u32 %s482, 3
        %s1666 = sadd.s32 %s1665, %s485
        %s1667 = sadd.s32 %s484, %s1666
        %v1668 = vld [vmem:[%s450] sm:$0xff]
        %v1669 = vld [vmem:[%s450 + $0x8] sm:$0xff]
        %v1670 = vld [vmem:[%s450 + $0x10] sm:$0xff]
        %v1671 = vld [vmem:[%s450 + $0x18] sm:$0xff]
        %v1672 = vld [vmem:[%s450 + $0x20] sm:$0xff]
        %v1673 = vld [vmem:[%s450 + $0x28] sm:$0xff]
        %v1674 = vld [vmem:[%s450 + $0x30] sm:$0xff]
        %v1675 = vld [vmem:[%s450 + $0x38] sm:$0xff]
        %v1676 = vld [vmem:[%s450 + $0x40] sm:$0xff]
        %v1677 = vld [vmem:[%s450 + $0x48] sm:$0xff]
        %v1678 = vld [vmem:[%s450 + $0x50] sm:$0xff]
        %v1679 = vld [vmem:[%s450 + $0x58] sm:$0xff]
        %v1680 = vld [vmem:[%s450 + $0x60] sm:$0xff]
        %v1681 = vld [vmem:[%s450 + $0x68] sm:$0xff]
        %v1682 = vld [vmem:[%s450 + $0x70] sm:$0xff]
        %v1683 = vld [vmem:[%s450 + $0x78] sm:$0xff]
        %v1684 = vld [vmem:[%s450 + $0x80] sm:$0xff]
        %v1685 = vld [vmem:[%s450 + $0x88] sm:$0xff]
        %v1686 = vld [vmem:[%s450 + $0x90] sm:$0xff]
        %v1687 = vld [vmem:[%s450 + $0x98] sm:$0xff]
        %v1688 = vld [vmem:[%s450 + $0xa0] sm:$0xff]
        %v1689 = vld [vmem:[%s450 + $0xa8] sm:$0xff]
        %v1690 = vld [vmem:[%s450 + $0xb0] sm:$0xff]
        %v1691 = vld [vmem:[%s450 + $0xb8] sm:$0xff]
        %v1692 = vld [vmem:[%s450 + $0xc0] sm:$0xff]
        %v1693 = vld [vmem:[%s450 + $0xc8] sm:$0xff]
        %v1694 = vld [vmem:[%s450 + $0xd0] sm:$0xff]
        %v1695 = vld [vmem:[%s450 + $0xd8] sm:$0xff]
        %v1696 = vld [vmem:[%s450 + $0xe0] sm:$0xff]
        %v1697 = vld [vmem:[%s450 + $0xe8] sm:$0xff]
        %v1698 = vld [vmem:[%s450 + $0xf0] sm:$0xff]
        %v1699 = vld [vmem:[%s450 + $0xf8] sm:$0xff]
        %s1700 = smul.u32 %s1666, 8
        %s1701 = smul.addr %s1700, 4
        %s1702 = scalar_lea.vmem %s423, %s1701
        %v1703 = vld [vmem:[%s1702] sm:$0xff]
        %v1704 = vld [vmem:[%s1702 + $0x8] sm:$0xff]
        %v1705 = vld [vmem:[%s1702 + $0x10] sm:$0xff]
        %v1706 = vld [vmem:[%s1702 + $0x18] sm:$0xff]
        %v1707 = vunpack.c.l.bf16 %v1703
        %v1708 = vunpack.c.h.bf16 %v1703
        %v1709 = vunpack.c.l.bf16 %v1704
        %v1710 = vunpack.c.h.bf16 %v1704
        %v1711 = vunpack.c.l.bf16 %v1705
        %v1712 = vunpack.c.h.bf16 %v1705
        %v1713 = vunpack.c.l.bf16 %v1706
        %v1714 = vunpack.c.h.bf16 %v1706
        %v1715 = vld [vmem:[%s444] sm:$0xff]
        %v1716 = vld [vmem:[%s444 + $0x8] sm:$0xff]
        %v1717 = vld [vmem:[%s444 + $0x10] sm:$0xff]
        %v1718 = vld [vmem:[%s444 + $0x18] sm:$0xff]
        %v1719 = vld [vmem:[%s444 + $0x20] sm:$0xff]
        %v1720 = vld [vmem:[%s444 + $0x28] sm:$0xff]
        %v1721 = vld [vmem:[%s444 + $0x30] sm:$0xff]
        %v1722 = vld [vmem:[%s444 + $0x38] sm:$0xff]
        %v1723 = vadd.f32 %v1707, %v1715
        %v1724 = vadd.f32 %v1708, %v1716
        %v1725 = vadd.f32 %v1709, %v1717
        %v1726 = vadd.f32 %v1710, %v1718
        %v1727 = vadd.f32 %v1711, %v1719
        %v1728 = vadd.f32 %v1712, %v1720
        %v1729 = vadd.f32 %v1713, %v1721
        %v1730 = vadd.f32 %v1714, %v1722
        %v1731 = vpack.c.bf16 %v1656, %v1655
        %v1764 = vunpack.c.l.b16 %v1668
        %v1765 = vunpack.c.h.b16 %v1668
        %v1766 = vunpack.c.l.b16 %v1669
        %v1767 = vunpack.c.h.b16 %v1669
        %v1768 = vunpack.c.l.b16 %v1670
        %v1769 = vunpack.c.h.b16 %v1670
        %v1770 = vunpack.c.l.b16 %v1671
        %v1771 = vunpack.c.h.b16 %v1671
        %v1772 = vunpack.c.l.b16 %v1672
        %v1773 = vunpack.c.h.b16 %v1672
        %v1774 = vunpack.c.l.b16 %v1673
        %v1775 = vunpack.c.h.b16 %v1673
        %v1776 = vunpack.c.l.b16 %v1674
        %v1777 = vunpack.c.h.b16 %v1674
        %v1778 = vunpack.c.l.b16 %v1675
        %v1779 = vunpack.c.h.b16 %v1675
        %v1780 = vunpack.c.l.b16 %v1676
        %v1781 = vunpack.c.h.b16 %v1676
        %v1782 = vunpack.c.l.b16 %v1677
        %v1783 = vunpack.c.h.b16 %v1677
        %v1784 = vunpack.c.l.b16 %v1678
        %v1785 = vunpack.c.h.b16 %v1678
        %v1786 = vunpack.c.l.b16 %v1679
        %v1787 = vunpack.c.h.b16 %v1679
        %v1788 = vunpack.c.l.b16 %v1680
        %v1789 = vunpack.c.h.b16 %v1680
        %v1790 = vunpack.c.l.b16 %v1681
        %v1791 = vunpack.c.h.b16 %v1681
        %v1792 = vunpack.c.l.b16 %v1682
        %v1793 = vunpack.c.h.b16 %v1682
        %v1794 = vunpack.c.l.b16 %v1683
        %v1795 = vunpack.c.h.b16 %v1683
        %v1796 = vunpack.c.l.b16 %v1684
        %v1797 = vunpack.c.h.b16 %v1684
        %v1798 = vunpack.c.l.b16 %v1685
        %v1799 = vunpack.c.h.b16 %v1685
        %v1800 = vunpack.c.l.b16 %v1686
        %v1801 = vunpack.c.h.b16 %v1686
        %v1802 = vunpack.c.l.b16 %v1687
        %v1803 = vunpack.c.h.b16 %v1687
        %v1804 = vunpack.c.l.b16 %v1688
        %v1805 = vunpack.c.h.b16 %v1688
        %v1806 = vunpack.c.l.b16 %v1689
        %v1807 = vunpack.c.h.b16 %v1689
        %v1808 = vunpack.c.l.b16 %v1690
        %v1809 = vunpack.c.h.b16 %v1690
        %v1810 = vunpack.c.l.b16 %v1691
        %v1811 = vunpack.c.h.b16 %v1691
        %v1812 = vunpack.c.l.b16 %v1692
        %v1813 = vunpack.c.h.b16 %v1692
        %v1814 = vunpack.c.l.b16 %v1693
        %v1815 = vunpack.c.h.b16 %v1693
        %v1816 = vunpack.c.l.b16 %v1694
        %v1817 = vunpack.c.h.b16 %v1694
        %v1818 = vunpack.c.l.b16 %v1695
        %v1819 = vunpack.c.h.b16 %v1695
        %v1820 = vunpack.c.l.b16 %v1696
        %v1821 = vunpack.c.h.b16 %v1696
        %v1822 = vunpack.c.l.b16 %v1697
        %v1823 = vunpack.c.h.b16 %v1697
        %v1824 = vunpack.c.l.b16 %v1698
        %v1825 = vunpack.c.h.b16 %v1698
        %v1826 = vunpack.c.l.b16 %v1699
        %v1827 = vunpack.c.h.b16 %v1699
        %v1828 = vpack.c.b16 %v1768, %v1764
        %v1829 = vpack.c.b16 %v1769, %v1765
        %v1830 = vpack.c.b16 %v1770, %v1766
        %v1831 = vpack.c.b16 %v1771, %v1767
        %v1832 = vpack.c.b16 %v1776, %v1772
        %v1833 = vpack.c.b16 %v1777, %v1773
        %v1834 = vpack.c.b16 %v1778, %v1774
        %v1835 = vpack.c.b16 %v1779, %v1775
        %v1836 = vpack.c.b16 %v1784, %v1780
        %v1837 = vpack.c.b16 %v1785, %v1781
        %v1838 = vpack.c.b16 %v1786, %v1782
        %v1839 = vpack.c.b16 %v1787, %v1783
        %v1840 = vpack.c.b16 %v1792, %v1788
        %v1841 = vpack.c.b16 %v1793, %v1789
        %v1842 = vpack.c.b16 %v1794, %v1790
        %v1843 = vpack.c.b16 %v1795, %v1791
        %v1844 = vpack.c.b16 %v1800, %v1796
        %v1845 = vpack.c.b16 %v1801, %v1797
        %v1846 = vpack.c.b16 %v1802, %v1798
        %v1847 = vpack.c.b16 %v1803, %v1799
        %v1848 = vpack.c.b16 %v1808, %v1804
        %v1849 = vpack.c.b16 %v1809, %v1805
        %v1850 = vpack.c.b16 %v1810, %v1806
        %v1851 = vpack.c.b16 %v1811, %v1807
        %v1852 = vpack.c.b16 %v1816, %v1812
        %v1853 = vpack.c.b16 %v1817, %v1813
        %v1854 = vpack.c.b16 %v1818, %v1814
        %v1855 = vpack.c.b16 %v1819, %v1815
        %v1856 = vpack.c.b16 %v1824, %v1820
        %v1857 = vpack.c.b16 %v1825, %v1821
        %v1858 = vpack.c.b16 %v1826, %v1822
        %v1859 = vpack.c.b16 %v1827, %v1823
        %1892 = vmatprep.subr.bf16.mxu0 %v1829
        %1893 = vmatpush1.bf16.msra.mxu0 %v1828
        %1894 = vmatprep.subr.bf16.mxu0 %v1833
        %1895 = vmatpush1.bf16.msra.mxu0 %v1832
        %1896 = vmatprep.subr.bf16.mxu0 %v1837
        %1897 = vmatpush1.bf16.msra.mxu0 %v1836
        %1898 = vmatprep.subr.bf16.mxu0 %v1841
        %1899 = vmatpush1.bf16.msra.mxu0 %v1840
        %1900 = vmatprep.subr.bf16.mxu0 %v1845
        %1901 = vmatpush1.bf16.msra.mxu0 %v1844
        %1902 = vmatprep.subr.bf16.mxu0 %v1849
        %1903 = vmatpush1.bf16.msra.mxu0 %v1848
        %1904 = vmatprep.subr.bf16.mxu0 %v1853
        %1905 = vmatpush1.bf16.msra.mxu0 %v1852
        %1906 = vmatprep.subr.bf16.mxu0 %v1857
        %1907 = vmatpush1.bf16.msra.mxu0 %v1856
        %1908 = vmatprep.subr.bf16.mxu0 0
        %1909 = vmatpush1.bf16.msra.mxu0 0
        %1910 = vmatprep.subr.bf16.mxu0 0
        %1911 = vmatpush1.bf16.msra.mxu0 0
        %1912 = vmatprep.subr.bf16.mxu0 0
        %1913 = vmatpush1.bf16.msra.mxu0 0
        %1914 = vmatprep.subr.bf16.mxu0 0
        %1915 = vmatpush1.bf16.msra.mxu0 0
        %1916 = vmatprep.subr.bf16.mxu0 0
        %1917 = vmatpush1.bf16.msra.mxu0 0
        %1918 = vmatprep.subr.bf16.mxu0 0
        %1919 = vmatpush1.bf16.msra.mxu0 0
        %1920 = vmatprep.subr.bf16.mxu0 0
        %1921 = vmatpush1.bf16.msra.mxu0 0
        %1922 = vmatprep.subr.bf16.mxu0 0
        %1923 = vmatpush1.bf16.msra.mxu0 0
        %1924 = vmatprep.mubr.bf16.mxu0 0
        %1925 = vmatmul.mubr.bf16.gmra.mrb[0].mxu0 %v1731
        %v1926 = vpop.f32.mrb[0].mxu0
        %v1927 = vadd.f32 0.0, %v1926
        %v1928 = vpop.f32.mrb[0].mxu0
        %v1929 = vadd.f32 0.0, %v1928
        %v1930 = vpop.f32.mrb[0].mxu0
        %v1931 = vadd.f32 0.0, %v1930
        %v1932 = vpop.f32.mrb[0].mxu0
        %v1933 = vadd.f32 0.0, %v1932
        %1934 = vdwg.mxu0
        %1935 = vmatprep.subr.bf16.mxu0 %v1831
        %1936 = vmatpush1.bf16.msra.mxu0 %v1830
        %1937 = vmatprep.subr.bf16.mxu0 %v1835
        %1938 = vmatpush1.bf16.msra.mxu0 %v1834
        %1939 = vmatprep.subr.bf16.mxu0 %v1839
        %1940 = vmatpush1.bf16.msra.mxu0 %v1838
        %1941 = vmatprep.subr.bf16.mxu0 %v1843
        %1942 = vmatpush1.bf16.msra.mxu0 %v1842
        %1943 = vmatprep.subr.bf16.mxu0 %v1847
        %1944 = vmatpush1.bf16.msra.mxu0 %v1846
        %1945 = vmatprep.subr.bf16.mxu0 %v1851
        %1946 = vmatpush1.bf16.msra.mxu0 %v1850
        %1947 = vmatprep.subr.bf16.mxu0 %v1855
        %1948 = vmatpush1.bf16.msra.mxu0 %v1854
        %1949 = vmatprep.subr.bf16.mxu0 %v1859
        %1950 = vmatpush1.bf16.msra.mxu0 %v1858
        %1951 = vmatprep.subr.bf16.mxu0 0
        %1952 = vmatpush1.bf16.msra.mxu0 0
        %1953 = vmatprep.subr.bf16.mxu0 0
        %1954 = vmatpush1.bf16.msra.mxu0 0
        %1955 = vmatprep.subr.bf16.mxu0 0
        %1956 = vmatpush1.bf16.msra.mxu0 0
        %1957 = vmatprep.subr.bf16.mxu0 0
        %1958 = vmatpush1.bf16.msra.mxu0 0
        %1959 = vmatprep.subr.bf16.mxu0 0
        %1960 = vmatpush1.bf16.msra.mxu0 0
        %1961 = vmatprep.subr.bf16.mxu0 0
        %1962 = vmatpush1.bf16.msra.mxu0 0
        %1963 = vmatprep.subr.bf16.mxu0 0
        %1964 = vmatpush1.bf16.msra.mxu0 0
        %1965 = vmatprep.subr.bf16.mxu0 0
        %1966 = vmatpush1.bf16.msra.mxu0 0
        %1967 = vmatprep.mubr.bf16.mxu0 0
        %1968 = vmatmul.mubr.bf16.gmra.mrb[0].mxu0 %v1731
        %v1969 = vpop.f32.mrb[0].mxu0
        %v1970 = vadd.f32 0.0, %v1969
        %v1971 = vpop.f32.mrb[0].mxu0
        %v1972 = vadd.f32 0.0, %v1971
        %v1973 = vpop.f32.mrb[0].mxu0
        %v1974 = vadd.f32 0.0, %v1973
        %v1975 = vpop.f32.mrb[0].mxu0
        %v1976 = vadd.f32 0.0, %v1975
        %1977 = vdwg.mxu0
        %v1978 = vadd.f32 %v1723, %v1927
        %v1979 = vadd.f32 %v1724, %v1929
        %v1980 = vadd.f32 %v1725, %v1970
        %v1981 = vadd.f32 %v1726, %v1972
        %v1982 = vadd.f32 %v1727, %v1931
        %v1983 = vadd.f32 %v1728, %v1933
        %v1984 = vadd.f32 %v1729, %v1974
        %v1985 = vadd.f32 %v1730, %v1976
        %v1986 = vxor.u32 %v1978, 2147483648
        %v1987 = vxor.u32 %v1982, 2147483648
        %v1988 = vmul.f32 %v1986, 1.442695
        %v1989 = vpow.pop %v1988
        %v1990 = vmul.f32 %v1987, 1.442695
        %v1991 = vpow.pop %v1990
        %v1992 = vadd.f32 %v1989, 1.0
        %v1993 = vadd.f32 %v1991, 1.0
        %v1994 = vrcp.pop %v1992
        %v1995 = vmul.f32 1.0, %v1994
        %v1996 = vrcp.pop %v1993
        %v1997 = vmul.f32 1.0, %v1996
        %v1998 = vxor.u32 %v1979, 2147483648
        %v1999 = vxor.u32 %v1983, 2147483648
        %v2000 = vmul.f32 %v1998, 1.442695
        %v2001 = vpow.pop %v2000
        %v2002 = vmul.f32 %v1999, 1.442695
        %v2003 = vpow.pop %v2002
        %v2004 = vadd.f32 %v2001, 1.0
        %v2005 = vadd.f32 %v2003, 1.0
        %v2006 = vrcp.pop %v2004
        %v2007 = vmul.f32 1.0, %v2006
        %v2008 = vrcp.pop %v2005
        %v2009 = vmul.f32 1.0, %v2008
        %v2010 = vtanh.pop %v1980
        %v2011 = vtanh.pop %v1984
        %v2012 = vxor.u32 %v1981, 2147483648
        %v2013 = vxor.u32 %v1985, 2147483648
        %v2014 = vmul.f32 %v2012, 1.442695
        %v2015 = vpow.pop %v2014
        %v2016 = vmul.f32 %v2013, 1.442695
        %v2017 = vpow.pop %v2016
        %v2018 = vadd.f32 %v2015, 1.0
        %v2019 = vadd.f32 %v2017, 1.0
        %v2020 = vrcp.pop %v2018
        %v2021 = vmul.f32 1.0, %v2020
        %v2022 = vrcp.pop %v2019
        %v2023 = vmul.f32 1.0, %v2022
        %v2024 = vmul.f32 %v2007, %v1657
        %v2025 = vmul.f32 %v2009, %v1658
        %v2026 = vmul.f32 %v1995, %v2010
        %v2027 = vmul.f32 %v1997, %v2011
        %v2028 = vadd.f32 %v2024, %v2026
        %v2029 = vadd.f32 %v2025, %v2027
        %v2030 = vtanh.pop %v2028
        %v2031 = vtanh.pop %v2029
        %v2032 = vmul.f32 %v2021, %v2030
        %v2033 = vmul.f32 %v2023, %v2031
        %v2034 = vstv %s1667
        %vm2035 = vcmp.lt.s32.totalorder %v2034, %v486
        %vm2036 = vcmp.lt.s32.totalorder %v2034, %v487
        %v2037 = vsel %vm2035, 1, 0
        %v2038 = vsel %vm2036, 1, 0
        %2039 = vset.pattern.permute.xlu0 0
        %2040 = vperm.xlu0 %2039, %v2037
        %v2041 = vpop.permute.xlu0 %2040
        %2042 = vset.pattern.permute.xlu0 0
        %2043 = vperm.xlu0 %2042, %v2038
        %v2044 = vpop.permute.xlu0 %2043
        %vm2045 = vcmp.eq.s32.totalorder %v2041, 1
        %vm2046 = vcmp.eq.s32.totalorder %v2044, 1
        %v2047 = vsel %vm2045, %v2032, %v1655
        %v2048 = vsel %vm2046, %v2033, %v1656
        %v2049 = vsel %vm2045, %v2028, %v1657
        %v2050 = vsel %vm2046, %v2029, %v1658
        %v2051 = vsel %vm2045, %v2032, 0.0
        %v2052 = vsel %vm2046, %v2033, 0.0
        %v2053 = vpack.c.bf16 %v2052, %v2051
        %s2054 = smul.addr %s1666, 8
        %s2055 = scalar_lea.vmem %s465, %s2054
        %2056 = vst [vmem:[%s2055] sm:$0xff] %v2053
        %s2057 = smul.u32 %s482, 4
        %s2058 = sadd.s32 %s2057, %s485
        %s2059 = sadd.s32 %s484, %s2058
        %v2060 = vld [vmem:[%s450] sm:$0xff]
        %v2061 = vld [vmem:[%s450 + $0x8] sm:$0xff]
        %v2062 = vld [vmem:[%s450 + $0x10] sm:$0xff]
        %v2063 = vld [vmem:[%s450 + $0x18] sm:$0xff]
        %v2064 = vld [vmem:[%s450 + $0x20] sm:$0xff]
        %v2065 = vld [vmem:[%s450 + $0x28] sm:$0xff]
        %v2066 = vld [vmem:[%s450 + $0x30] sm:$0xff]
        %v2067 = vld [vmem:[%s450 + $0x38] sm:$0xff]
        %v2068 = vld [vmem:[%s450 + $0x40] sm:$0xff]
        %v2069 = vld [vmem:[%s450 + $0x48] sm:$0xff]
        %v2070 = vld [vmem:[%s450 + $0x50] sm:$0xff]
        %v2071 = vld [vmem:[%s450 + $0x58] sm:$0xff]
        %v2072 = vld [vmem:[%s450 + $0x60] sm:$0xff]
        %v2073 = vld [vmem:[%s450 + $0x68] sm:$0xff]
        %v2074 = vld [vmem:[%s450 + $0x70] sm:$0xff]
        %v2075 = vld [vmem:[%s450 + $0x78] sm:$0xff]
        %v2076 = vld [vmem:[%s450 + $0x80] sm:$0xff]
        %v2077 = vld [vmem:[%s450 + $0x88] sm:$0xff]
        %v2078 = vld [vmem:[%s450 + $0x90] sm:$0xff]
        %v2079 = vld [vmem:[%s450 + $0x98] sm:$0xff]
        %v2080 = vld [vmem:[%s450 + $0xa0] sm:$0xff]
        %v2081 = vld [vmem:[%s450 + $0xa8] sm:$0xff]
        %v2082 = vld [vmem:[%s450 + $0xb0] sm:$0xff]
        %v2083 = vld [vmem:[%s450 + $0xb8] sm:$0xff]
        %v2084 = vld [vmem:[%s450 + $0xc0] sm:$0xff]
        %v2085 = vld [vmem:[%s450 + $0xc8] sm:$0xff]
        %v2086 = vld [vmem:[%s450 + $0xd0] sm:$0xff]
        %v2087 = vld [vmem:[%s450 + $0xd8] sm:$0xff]
        %v2088 = vld [vmem:[%s450 + $0xe0] sm:$0xff]
        %v2089 = vld [vmem:[%s450 + $0xe8] sm:$0xff]
        %v2090 = vld [vmem:[%s450 + $0xf0] sm:$0xff]
        %v2091 = vld [vmem:[%s450 + $0xf8] sm:$0xff]
        %s2092 = smul.u32 %s2058, 8
        %s2093 = smul.addr %s2092, 4
        %s2094 = scalar_lea.vmem %s423, %s2093
        %v2095 = vld [vmem:[%s2094] sm:$0xff]
        %v2096 = vld [vmem:[%s2094 + $0x8] sm:$0xff]
        %v2097 = vld [vmem:[%s2094 + $0x10] sm:$0xff]
        %v2098 = vld [vmem:[%s2094 + $0x18] sm:$0xff]
        %v2099 = vunpack.c.l.bf16 %v2095
        %v2100 = vunpack.c.h.bf16 %v2095
        %v2101 = vunpack.c.l.bf16 %v2096
        %v2102 = vunpack.c.h.bf16 %v2096
        %v2103 = vunpack.c.l.bf16 %v2097
        %v2104 = vunpack.c.h.bf16 %v2097
        %v2105 = vunpack.c.l.bf16 %v2098
        %v2106 = vunpack.c.h.bf16 %v2098
        %v2107 = vld [vmem:[%s444] sm:$0xff]
        %v2108 = vld [vmem:[%s444 + $0x8] sm:$0xff]
        %v2109 = vld [vmem:[%s444 + $0x10] sm:$0xff]
        %v2110 = vld [vmem:[%s444 + $0x18] sm:$0xff]
        %v2111 = vld [vmem:[%s444 + $0x20] sm:$0xff]
        %v2112 = vld [vmem:[%s444 + $0x28] sm:$0xff]
        %v2113 = vld [vmem:[%s444 + $0x30] sm:$0xff]
        %v2114 = vld [vmem:[%s444 + $0x38] sm:$0xff]
        %v2115 = vadd.f32 %v2099, %v2107
        %v2116 = vadd.f32 %v2100, %v2108
        %v2117 = vadd.f32 %v2101, %v2109
        %v2118 = vadd.f32 %v2102, %v2110
        %v2119 = vadd.f32 %v2103, %v2111
        %v2120 = vadd.f32 %v2104, %v2112
        %v2121 = vadd.f32 %v2105, %v2113
        %v2122 = vadd.f32 %v2106, %v2114
        %v2123 = vpack.c.bf16 %v2048, %v2047
        %v2156 = vunpack.c.l.b16 %v2060
        %v2157 = vunpack.c.h.b16 %v2060
        %v2158 = vunpack.c.l.b16 %v2061
        %v2159 = vunpack.c.h.b16 %v2061
        %v2160 = vunpack.c.l.b16 %v2062
        %v2161 = vunpack.c.h.b16 %v2062
        %v2162 = vunpack.c.l.b16 %v2063
        %v2163 = vunpack.c.h.b16 %v2063
        %v2164 = vunpack.c.l.b16 %v2064
        %v2165 = vunpack.c.h.b16 %v2064
        %v2166 = vunpack.c.l.b16 %v2065
        %v2167 = vunpack.c.h.b16 %v2065
        %v2168 = vunpack.c.l.b16 %v2066
        %v2169 = vunpack.c.h.b16 %v2066
        %v2170 = vunpack.c.l.b16 %v2067
        %v2171 = vunpack.c.h.b16 %v2067
        %v2172 = vunpack.c.l.b16 %v2068
        %v2173 = vunpack.c.h.b16 %v2068
        %v2174 = vunpack.c.l.b16 %v2069
        %v2175 = vunpack.c.h.b16 %v2069
        %v2176 = vunpack.c.l.b16 %v2070
        %v2177 = vunpack.c.h.b16 %v2070
        %v2178 = vunpack.c.l.b16 %v2071
        %v2179 = vunpack.c.h.b16 %v2071
        %v2180 = vunpack.c.l.b16 %v2072
        %v2181 = vunpack.c.h.b16 %v2072
        %v2182 = vunpack.c.l.b16 %v2073
        %v2183 = vunpack.c.h.b16 %v2073
        %v2184 = vunpack.c.l.b16 %v2074
        %v2185 = vunpack.c.h.b16 %v2074
        %v2186 = vunpack.c.l.b16 %v2075
        %v2187 = vunpack.c.h.b16 %v2075
        %v2188 = vunpack.c.l.b16 %v2076
        %v2189 = vunpack.c.h.b16 %v2076
        %v2190 = vunpack.c.l.b16 %v2077
        %v2191 = vunpack.c.h.b16 %v2077
        %v2192 = vunpack.c.l.b16 %v2078
        %v2193 = vunpack.c.h.b16 %v2078
        %v2194 = vunpack.c.l.b16 %v2079
        %v2195 = vunpack.c.h.b16 %v2079
        %v2196 = vunpack.c.l.b16 %v2080
        %v2197 = vunpack.c.h.b16 %v2080
        %v2198 = vunpack.c.l.b16 %v2081
        %v2199 = vunpack.c.h.b16 %v2081
        %v2200 = vunpack.c.l.b16 %v2082
        %v2201 = vunpack.c.h.b16 %v2082
        %v2202 = vunpack.c.l.b16 %v2083
        %v2203 = vunpack.c.h.b16 %v2083
        %v2204 = vunpack.c.l.b16 %v2084
        %v2205 = vunpack.c.h.b16 %v2084
        %v2206 = vunpack.c.l.b16 %v2085
        %v2207 = vunpack.c.h.b16 %v2085
        %v2208 = vunpack.c.l.b16 %v2086
        %v2209 = vunpack.c.h.b16 %v2086
        %v2210 = vunpack.c.l.b16 %v2087
        %v2211 = vunpack.c.h.b16 %v2087
        %v2212 = vunpack.c.l.b16 %v2088
        %v2213 = vunpack.c.h.b16 %v2088
        %v2214 = vunpack.c.l.b16 %v2089
        %v2215 = vunpack.c.h.b16 %v2089
        %v2216 = vunpack.c.l.b16 %v2090
        %v2217 = vunpack.c.h.b16 %v2090
        %v2218 = vunpack.c.l.b16 %v2091
        %v2219 = vunpack.c.h.b16 %v2091
        %v2220 = vpack.c.b16 %v2160, %v2156
        %v2221 = vpack.c.b16 %v2161, %v2157
        %v2222 = vpack.c.b16 %v2162, %v2158
        %v2223 = vpack.c.b16 %v2163, %v2159
        %v2224 = vpack.c.b16 %v2168, %v2164
        %v2225 = vpack.c.b16 %v2169, %v2165
        %v2226 = vpack.c.b16 %v2170, %v2166
        %v2227 = vpack.c.b16 %v2171, %v2167
        %v2228 = vpack.c.b16 %v2176, %v2172
        %v2229 = vpack.c.b16 %v2177, %v2173
        %v2230 = vpack.c.b16 %v2178, %v2174
        %v2231 = vpack.c.b16 %v2179, %v2175
        %v2232 = vpack.c.b16 %v2184, %v2180
        %v2233 = vpack.c.b16 %v2185, %v2181
        %v2234 = vpack.c.b16 %v2186, %v2182
        %v2235 = vpack.c.b16 %v2187, %v2183
        %v2236 = vpack.c.b16 %v2192, %v2188
        %v2237 = vpack.c.b16 %v2193, %v2189
        %v2238 = vpack.c.b16 %v2194, %v2190
        %v2239 = vpack.c.b16 %v2195, %v2191
        %v2240 = vpack.c.b16 %v2200, %v2196
        %v2241 = vpack.c.b16 %v2201, %v2197
        %v2242 = vpack.c.b16 %v2202, %v2198
        %v2243 = vpack.c.b16 %v2203, %v2199
        %v2244 = vpack.c.b16 %v2208, %v2204
        %v2245 = vpack.c.b16 %v2209, %v2205
        %v2246 = vpack.c.b16 %v2210, %v2206
        %v2247 = vpack.c.b16 %v2211, %v2207
        %v2248 = vpack.c.b16 %v2216, %v2212
        %v2249 = vpack.c.b16 %v2217, %v2213
        %v2250 = vpack.c.b16 %v2218, %v2214
        %v2251 = vpack.c.b16 %v2219, %v2215
        %2284 = vmatprep.subr.bf16.mxu0 %v2221
        %2285 = vmatpush1.bf16.msra.mxu0 %v2220
        %2286 = vmatprep.subr.bf16.mxu0 %v2225
        %2287 = vmatpush1.bf16.msra.mxu0 %v2224
        %2288 = vmatprep.subr.bf16.mxu0 %v2229
        %2289 = vmatpush1.bf16.msra.mxu0 %v2228
        %2290 = vmatprep.subr.bf16.mxu0 %v2233
        %2291 = vmatpush1.bf16.msra.mxu0 %v2232
        %2292 = vmatprep.subr.bf16.mxu0 %v2237
        %2293 = vmatpush1.bf16.msra.mxu0 %v2236
        %2294 = vmatprep.subr.bf16.mxu0 %v2241
        %2295 = vmatpush1.bf16.msra.mxu0 %v2240
        %2296 = vmatprep.subr.bf16.mxu0 %v2245
        %2297 = vmatpush1.bf16.msra.mxu0 %v2244
        %2298 = vmatprep.subr.bf16.mxu0 %v2249
        %2299 = vmatpush1.bf16.msra.mxu0 %v2248
        %2300 = vmatprep.subr.bf16.mxu0 0
        %2301 = vmatpush1.bf16.msra.mxu0 0
        %2302 = vmatprep.subr.bf16.mxu0 0
        %2303 = vmatpush1.bf16.msra.mxu0 0
        %2304 = vmatprep.subr.bf16.mxu0 0
        %2305 = vmatpush1.bf16.msra.mxu0 0
        %2306 = vmatprep.subr.bf16.mxu0 0
        %2307 = vmatpush1.bf16.msra.mxu0 0
        %2308 = vmatprep.subr.bf16.mxu0 0
        %2309 = vmatpush1.bf16.msra.mxu0 0
        %2310 = vmatprep.subr.bf16.mxu0 0
        %2311 = vmatpush1.bf16.msra.mxu0 0
        %2312 = vmatprep.subr.bf16.mxu0 0
        %2313 = vmatpush1.bf16.msra.mxu0 0
        %2314 = vmatprep.subr.bf16.mxu0 0
        %2315 = vmatpush1.bf16.msra.mxu0 0
        %2316 = vmatprep.mubr.bf16.mxu0 0
        %2317 = vmatmul.mubr.bf16.gmra.mrb[0].mxu0 %v2123
        %v2318 = vpop.f32.mrb[0].mxu0
        %v2319 = vadd.f32 0.0, %v2318
        %v2320 = vpop.f32.mrb[0].mxu0
        %v2321 = vadd.f32 0.0, %v2320
        %v2322 = vpop.f32.mrb[0].mxu0
        %v2323 = vadd.f32 0.0, %v2322
        %v2324 = vpop.f32.mrb[0].mxu0
        %v2325 = vadd.f32 0.0, %v2324
        %2326 = vdwg.mxu0
        %2327 = vmatprep.subr.bf16.mxu0 %v2223
        %2328 = vmatpush1.bf16.msra.mxu0 %v2222
        %2329 = vmatprep.subr.bf16.mxu0 %v2227
        %2330 = vmatpush1.bf16.msra.mxu0 %v2226
        %2331 = vmatprep.subr.bf16.mxu0 %v2231
        %2332 = vmatpush1.bf16.msra.mxu0 %v2230
        %2333 = vmatprep.subr.bf16.mxu0 %v2235
        %2334 = vmatpush1.bf16.msra.mxu0 %v2234
        %2335 = vmatprep.subr.bf16.mxu0 %v2239
        %2336 = vmatpush1.bf16.msra.mxu0 %v2238
        %2337 = vmatprep.subr.bf16.mxu0 %v2243
        %2338 = vmatpush1.bf16.msra.mxu0 %v2242
        %2339 = vmatprep.subr.bf16.mxu0 %v2247
        %2340 = vmatpush1.bf16.msra.mxu0 %v2246
        %2341 = vmatprep.subr.bf16.mxu0 %v2251
        %2342 = vmatpush1.bf16.msra.mxu0 %v2250
        %2343 = vmatprep.subr.bf16.mxu0 0
        %2344 = vmatpush1.bf16.msra.mxu0 0
        %2345 = vmatprep.subr.bf16.mxu0 0
        %2346 = vmatpush1.bf16.msra.mxu0 0
        %2347 = vmatprep.subr.bf16.mxu0 0
        %2348 = vmatpush1.bf16.msra.mxu0 0
        %2349 = vmatprep.subr.bf16.mxu0 0
        %2350 = vmatpush1.bf16.msra.mxu0 0
        %2351 = vmatprep.subr.bf16.mxu0 0
        %2352 = vmatpush1.bf16.msra.mxu0 0
        %2353 = vmatprep.subr.bf16.mxu0 0
        %2354 = vmatpush1.bf16.msra.mxu0 0
        %2355 = vmatprep.subr.bf16.mxu0 0
        %2356 = vmatpush1.bf16.msra.mxu0 0
        %2357 = vmatprep.subr.bf16.mxu0 0
        %2358 = vmatpush1.bf16.msra.mxu0 0
        %2359 = vmatprep.mubr.bf16.mxu0 0
        %2360 = vmatmul.mubr.bf16.gmra.mrb[0].mxu0 %v2123
        %v2361 = vpop.f32.mrb[0].mxu0
        %v2362 = vadd.f32 0.0, %v2361
        %v2363 = vpop.f32.mrb[0].mxu0
        %v2364 = vadd.f32 0.0, %v2363
        %v2365 = vpop.f32.mrb[0].mxu0
        %v2366 = vadd.f32 0.0, %v2365
        %v2367 = vpop.f32.mrb[0].mxu0
        %v2368 = vadd.f32 0.0, %v2367
        %2369 = vdwg.mxu0
        %v2370 = vadd.f32 %v2115, %v2319
        %v2371 = vadd.f32 %v2116, %v2321
        %v2372 = vadd.f32 %v2117, %v2362
        %v2373 = vadd.f32 %v2118, %v2364
        %v2374 = vadd.f32 %v2119, %v2323
        %v2375 = vadd.f32 %v2120, %v2325
        %v2376 = vadd.f32 %v2121, %v2366
        %v2377 = vadd.f32 %v2122, %v2368
        %v2378 = vxor.u32 %v2370, 2147483648
        %v2379 = vxor.u32 %v2374, 2147483648
        %v2380 = vmul.f32 %v2378, 1.442695
        %v2381 = vpow.pop %v2380
        %v2382 = vmul.f32 %v2379, 1.442695
        %v2383 = vpow.pop %v2382
        %v2384 = vadd.f32 %v2381, 1.0
        %v2385 = vadd.f32 %v2383, 1.0
        %v2386 = vrcp.pop %v2384
        %v2387 = vmul.f32 1.0, %v2386
        %v2388 = vrcp.pop %v2385
        %v2389 = vmul.f32 1.0, %v2388
        %v2390 = vxor.u32 %v2371, 2147483648
        %v2391 = vxor.u32 %v2375, 2147483648
        %v2392 = vmul.f32 %v2390, 1.442695
        %v2393 = vpow.pop %v2392
        %v2394 = vmul.f32 %v2391, 1.442695
        %v2395 = vpow.pop %v2394
        %v2396 = vadd.f32 %v2393, 1.0
        %v2397 = vadd.f32 %v2395, 1.0
        %v2398 = vrcp.pop %v2396
        %v2399 = vmul.f32 1.0, %v2398
        %v2400 = vrcp.pop %v2397
        %v2401 = vmul.f32 1.0, %v2400
        %v2402 = vtanh.pop %v2372
        %v2403 = vtanh.pop %v2376
        %v2404 = vxor.u32 %v2373, 2147483648
        %v2405 = vxor.u32 %v2377, 2147483648
        %v2406 = vmul.f32 %v2404, 1.442695
        %v2407 = vpow.pop %v2406
        %v2408 = vmul.f32 %v2405, 1.442695
        %v2409 = vpow.pop %v2408
        %v2410 = vadd.f32 %v2407, 1.0
        %v2411 = vadd.f32 %v2409, 1.0
        %v2412 = vrcp.pop %v2410
        %v2413 = vmul.f32 1.0, %v2412
        %v2414 = vrcp.pop %v2411
        %v2415 = vmul.f32 1.0, %v2414
        %v2416 = vmul.f32 %v2399, %v2049
        %v2417 = vmul.f32 %v2401, %v2050
        %v2418 = vmul.f32 %v2387, %v2402
        %v2419 = vmul.f32 %v2389, %v2403
        %v2420 = vadd.f32 %v2416, %v2418
        %v2421 = vadd.f32 %v2417, %v2419
        %v2422 = vtanh.pop %v2420
        %v2423 = vtanh.pop %v2421
        %v2424 = vmul.f32 %v2413, %v2422
        %v2425 = vmul.f32 %v2415, %v2423
        %v2426 = vstv %s2059
        %vm2427 = vcmp.lt.s32.totalorder %v2426, %v486
        %vm2428 = vcmp.lt.s32.totalorder %v2426, %v487
        %v2429 = vsel %vm2427, 1, 0
        %v2430 = vsel %vm2428, 1, 0
        %2431 = vset.pattern.permute.xlu0 0
        %2432 = vperm.xlu0 %2431, %v2429
        %v2433 = vpop.permute.xlu0 %2432
        %2434 = vset.pattern.permute.xlu0 0
        %2435 = vperm.xlu0 %2434, %v2430
        %v2436 = vpop.permute.xlu0 %2435
        %vm2437 = vcmp.eq.s32.totalorder %v2433, 1
        %vm2438 = vcmp.eq.s32.totalorder %v2436, 1
        %v2439 = vsel %vm2437, %v2424, %v2047
        %v2440 = vsel %vm2438, %v2425, %v2048
        %v2441 = vsel %vm2437, %v2420, %v2049
        %v2442 = vsel %vm2438, %v2421, %v2050
        %v2443 = vsel %vm2437, %v2424, 0.0
        %v2444 = vsel %vm2438, %v2425, 0.0
        %v2445 = vpack.c.bf16 %v2444, %v2443
        %s2446 = smul.addr %s2058, 8
        %s2447 = scalar_lea.vmem %s465, %s2446
        %2448 = vst [vmem:[%s2447] sm:$0xff] %v2445
        %s2449 = smul.u32 %s482, 5
        %s2450 = sadd.s32 %s2449, %s485
        %s2451 = sadd.s32 %s484, %s2450
        %v2452 = vld [vmem:[%s450] sm:$0xff]
        %v2453 = vld [vmem:[%s450 + $0x8] sm:$0xff]
        %v2454 = vld [vmem:[%s450 + $0x10] sm:$0xff]
        %v2455 = vld [vmem:[%s450 + $0x18] sm:$0xff]
        %v2456 = vld [vmem:[%s450 + $0x20] sm:$0xff]
        %v2457 = vld [vmem:[%s450 + $0x28] sm:$0xff]
        %v2458 = vld [vmem:[%s450 + $0x30] sm:$0xff]
        %v2459 = vld [vmem:[%s450 + $0x38] sm:$0xff]
        %v2460 = vld [vmem:[%s450 + $0x40] sm:$0xff]
        %v2461 = vld [vmem:[%s450 + $0x48] sm:$0xff]
        %v2462 = vld [vmem:[%s450 + $0x50] sm:$0xff]
        %v2463 = vld [vmem:[%s450 + $0x58] sm:$0xff]
        %v2464 = vld [vmem:[%s450 + $0x60] sm:$0xff]
        %v2465 = vld [vmem:[%s450 + $0x68] sm:$0xff]
        %v2466 = vld [vmem:[%s450 + $0x70] sm:$0xff]
        %v2467 = vld [vmem:[%s450 + $0x78] sm:$0xff]
        %v2468 = vld [vmem:[%s450 + $0x80] sm:$0xff]
        %v2469 = vld [vmem:[%s450 + $0x88] sm:$0xff]
        %v2470 = vld [vmem:[%s450 + $0x90] sm:$0xff]
        %v2471 = vld [vmem:[%s450 + $0x98] sm:$0xff]
        %v2472 = vld [vmem:[%s450 + $0xa0] sm:$0xff]
        %v2473 = vld [vmem:[%s450 + $0xa8] sm:$0xff]
        %v2474 = vld [vmem:[%s450 + $0xb0] sm:$0xff]
        %v2475 = vld [vmem:[%s450 + $0xb8] sm:$0xff]
        %v2476 = vld [vmem:[%s450 + $0xc0] sm:$0xff]
        %v2477 = vld [vmem:[%s450 + $0xc8] sm:$0xff]
        %v2478 = vld [vmem:[%s450 + $0xd0] sm:$0xff]
        %v2479 = vld [vmem:[%s450 + $0xd8] sm:$0xff]
        %v2480 = vld [vmem:[%s450 + $0xe0] sm:$0xff]
        %v2481 = vld [vmem:[%s450 + $0xe8] sm:$0xff]
        %v2482 = vld [vmem:[%s450 + $0xf0] sm:$0xff]
        %v2483 = vld [vmem:[%s450 + $0xf8] sm:$0xff]
        %s2484 = smul.u32 %s2450, 8
        %s2485 = smul.addr %s2484, 4
        %s2486 = scalar_lea.vmem %s423, %s2485
        %v2487 = vld [vmem:[%s2486] sm:$0xff]
        %v2488 = vld [vmem:[%s2486 + $0x8] sm:$0xff]
        %v2489 = vld [vmem:[%s2486 + $0x10] sm:$0xff]
        %v2490 = vld [vmem:[%s2486 + $0x18] sm:$0xff]
        %v2491 = vunpack.c.l.bf16 %v2487
        %v2492 = vunpack.c.h.bf16 %v2487
        %v2493 = vunpack.c.l.bf16 %v2488
        %v2494 = vunpack.c.h.bf16 %v2488
        %v2495 = vunpack.c.l.bf16 %v2489
        %v2496 = vunpack.c.h.bf16 %v2489
        %v2497 = vunpack.c.l.bf16 %v2490
        %v2498 = vunpack.c.h.bf16 %v2490
        %v2499 = vld [vmem:[%s444] sm:$0xff]
        %v2500 = vld [vmem:[%s444 + $0x8] sm:$0xff]
        %v2501 = vld [vmem:[%s444 + $0x10] sm:$0xff]
        %v2502 = vld [vmem:[%s444 + $0x18] sm:$0xff]
        %v2503 = vld [vmem:[%s444 + $0x20] sm:$0xff]
        %v2504 = vld [vmem:[%s444 + $0x28] sm:$0xff]
        %v2505 = vld [vmem:[%s444 + $0x30] sm:$0xff]
        %v2506 = vld [vmem:[%s444 + $0x38] sm:$0xff]
        %v2507 = vadd.f32 %v2491, %v2499
        %v2508 = vadd.f32 %v2492, %v2500
        %v2509 = vadd.f32 %v2493, %v2501
        %v2510 = vadd.f32 %v2494, %v2502
        %v2511 = vadd.f32 %v2495, %v2503
        %v2512 = vadd.f32 %v2496, %v2504
        %v2513 = vadd.f32 %v2497, %v2505
        %v2514 = vadd.f32 %v2498, %v2506
        %v2515 = vpack.c.bf16 %v2440, %v2439
        %v2548 = vunpack.c.l.b16 %v2452
        %v2549 = vunpack.c.h.b16 %v2452
        %v2550 = vunpack.c.l.b16 %v2453
        %v2551 = vunpack.c.h.b16 %v2453
        %v2552 = vunpack.c.l.b16 %v2454
        %v2553 = vunpack.c.h.b16 %v2454
        %v2554 = vunpack.c.l.b16 %v2455
        %v2555 = vunpack.c.h.b16 %v2455
        %v2556 = vunpack.c.l.b16 %v2456
        %v2557 = vunpack.c.h.b16 %v2456
        %v2558 = vunpack.c.l.b16 %v2457
        %v2559 = vunpack.c.h.b16 %v2457
        %v2560 = vunpack.c.l.b16 %v2458
        %v2561 = vunpack.c.h.b16 %v2458
        %v2562 = vunpack.c.l.b16 %v2459
        %v2563 = vunpack.c.h.b16 %v2459
        %v2564 = vunpack.c.l.b16 %v2460
        %v2565 = vunpack.c.h.b16 %v2460
        %v2566 = vunpack.c.l.b16 %v2461
        %v2567 = vunpack.c.h.b16 %v2461
        %v2568 = vunpack.c.l.b16 %v2462
        %v2569 = vunpack.c.h.b16 %v2462
        %v2570 = vunpack.c.l.b16 %v2463
        %v2571 = vunpack.c.h.b16 %v2463
        %v2572 = vunpack.c.l.b16 %v2464
        %v2573 = vunpack.c.h.b16 %v2464
        %v2574 = vunpack.c.l.b16 %v2465
        %v2575 = vunpack.c.h.b16 %v2465
        %v2576 = vunpack.c.l.b16 %v2466
        %v2577 = vunpack.c.h.b16 %v2466
        %v2578 = vunpack.c.l.b16 %v2467
        %v2579 = vunpack.c.h.b16 %v2467
        %v2580 = vunpack.c.l.b16 %v2468
        %v2581 = vunpack.c.h.b16 %v2468
        %v2582 = vunpack.c.l.b16 %v2469
        %v2583 = vunpack.c.h.b16 %v2469
        %v2584 = vunpack.c.l.b16 %v2470
        %v2585 = vunpack.c.h.b16 %v2470
        %v2586 = vunpack.c.l.b16 %v2471
        %v2587 = vunpack.c.h.b16 %v2471
        %v2588 = vunpack.c.l.b16 %v2472
        %v2589 = vunpack.c.h.b16 %v2472
        %v2590 = vunpack.c.l.b16 %v2473
        %v2591 = vunpack.c.h.b16 %v2473
        %v2592 = vunpack.c.l.b16 %v2474
        %v2593 = vunpack.c.h.b16 %v2474
        %v2594 = vunpack.c.l.b16 %v2475
        %v2595 = vunpack.c.h.b16 %v2475
        %v2596 = vunpack.c.l.b16 %v2476
        %v2597 = vunpack.c.h.b16 %v2476
        %v2598 = vunpack.c.l.b16 %v2477
        %v2599 = vunpack.c.h.b16 %v2477
        %v2600 = vunpack.c.l.b16 %v2478
        %v2601 = vunpack.c.h.b16 %v2478
        %v2602 = vunpack.c.l.b16 %v2479
        %v2603 = vunpack.c.h.b16 %v2479
        %v2604 = vunpack.c.l.b16 %v2480
        %v2605 = vunpack.c.h.b16 %v2480
        %v2606 = vunpack.c.l.b16 %v2481
        %v2607 = vunpack.c.h.b16 %v2481
        %v2608 = vunpack.c.l.b16 %v2482
        %v2609 = vunpack.c.h.b16 %v2482
        %v2610 = vunpack.c.l.b16 %v2483
        %v2611 = vunpack.c.h.b16 %v2483
        %v2612 = vpack.c.b16 %v2552, %v2548
        %v2613 = vpack.c.b16 %v2553, %v2549
        %v2614 = vpack.c.b16 %v2554, %v2550
        %v2615 = vpack.c.b16 %v2555, %v2551
        %v2616 = vpack.c.b16 %v2560, %v2556
        %v2617 = vpack.c.b16 %v2561, %v2557
        %v2618 = vpack.c.b16 %v2562, %v2558
        %v2619 = vpack.c.b16 %v2563, %v2559
        %v2620 = vpack.c.b16 %v2568, %v2564
        %v2621 = vpack.c.b16 %v2569, %v2565
        %v2622 = vpack.c.b16 %v2570, %v2566
        %v2623 = vpack.c.b16 %v2571, %v2567
        %v2624 = vpack.c.b16 %v2576, %v2572
        %v2625 = vpack.c.b16 %v2577, %v2573
        %v2626 = vpack.c.b16 %v2578, %v2574
        %v2627 = vpack.c.b16 %v2579, %v2575
        %v2628 = vpack.c.b16 %v2584, %v2580
        %v2629 = vpack.c.b16 %v2585, %v2581
        %v2630 = vpack.c.b16 %v2586, %v2582
        %v2631 = vpack.c.b16 %v2587, %v2583
        %v2632 = vpack.c.b16 %v2592, %v2588
        %v2633 = vpack.c.b16 %v2593, %v2589
        %v2634 = vpack.c.b16 %v2594, %v2590
        %v2635 = vpack.c.b16 %v2595, %v2591
        %v2636 = vpack.c.b16 %v2600, %v2596
        %v2637 = vpack.c.b16 %v2601, %v2597
        %v2638 = vpack.c.b16 %v2602, %v2598
        %v2639 = vpack.c.b16 %v2603, %v2599
        %v2640 = vpack.c.b16 %v2608, %v2604
        %v2641 = vpack.c.b16 %v2609, %v2605
        %v2642 = vpack.c.b16 %v2610, %v2606
        %v2643 = vpack.c.b16 %v2611, %v2607
        %2676 = vmatprep.subr.bf16.mxu0 %v2613
        %2677 = vmatpush1.bf16.msra.mxu0 %v2612
        %2678 = vmatprep.subr.bf16.mxu0 %v2617
        %2679 = vmatpush1.bf16.msra.mxu0 %v2616
        %2680 = vmatprep.subr.bf16.mxu0 %v2621
        %2681 = vmatpush1.bf16.msra.mxu0 %v2620
        %2682 = vmatprep.subr.bf16.mxu0 %v2625
        %2683 = vmatpush1.bf16.msra.mxu0 %v2624
        %2684 = vmatprep.subr.bf16.mxu0 %v2629
        %2685 = vmatpush1.bf16.msra.mxu0 %v2628
        %2686 = vmatprep.subr.bf16.mxu0 %v2633
        %2687 = vmatpush1.bf16.msra.mxu0 %v2632
        %2688 = vmatprep.subr.bf16.mxu0 %v2637
        %2689 = vmatpush1.bf16.msra.mxu0 %v2636
        %2690 = vmatprep.subr.bf16.mxu0 %v2641
        %2691 = vmatpush1.bf16.msra.mxu0 %v2640
        %2692 = vmatprep.subr.bf16.mxu0 0
        %2693 = vmatpush1.bf16.msra.mxu0 0
        %2694 = vmatprep.subr.bf16.mxu0 0
        %2695 = vmatpush1.bf16.msra.mxu0 0
        %2696 = vmatprep.subr.bf16.mxu0 0
        %2697 = vmatpush1.bf16.msra.mxu0 0
        %2698 = vmatprep.subr.bf16.mxu0 0
        %2699 = vmatpush1.bf16.msra.mxu0 0
        %2700 = vmatprep.subr.bf16.mxu0 0
        %2701 = vmatpush1.bf16.msra.mxu0 0
        %2702 = vmatprep.subr.bf16.mxu0 0
        %2703 = vmatpush1.bf16.msra.mxu0 0
        %2704 = vmatprep.subr.bf16.mxu0 0
        %2705 = vmatpush1.bf16.msra.mxu0 0
        %2706 = vmatprep.subr.bf16.mxu0 0
        %2707 = vmatpush1.bf16.msra.mxu0 0
        %2708 = vmatprep.mubr.bf16.mxu0 0
        %2709 = vmatmul.mubr.bf16.gmra.mrb[0].mxu0 %v2515
        %v2710 = vpop.f32.mrb[0].mxu0
        %v2711 = vadd.f32 0.0, %v2710
        %v2712 = vpop.f32.mrb[0].mxu0
        %v2713 = vadd.f32 0.0, %v2712
        %v2714 = vpop.f32.mrb[0].mxu0
        %v2715 = vadd.f32 0.0, %v2714
        %v2716 = vpop.f32.mrb[0].mxu0
        %v2717 = vadd.f32 0.0, %v2716
        %2718 = vdwg.mxu0
        %2719 = vmatprep.subr.bf16.mxu0 %v2615
        %2720 = vmatpush1.bf16.msra.mxu0 %v2614
        %2721 = vmatprep.subr.bf16.mxu0 %v2619
        %2722 = vmatpush1.bf16.msra.mxu0 %v2618
        %2723 = vmatprep.subr.bf16.mxu0 %v2623
        %2724 = vmatpush1.bf16.msra.mxu0 %v2622
        %2725 = vmatprep.subr.bf16.mxu0 %v2627
        %2726 = vmatpush1.bf16.msra.mxu0 %v2626
        %2727 = vmatprep.subr.bf16.mxu0 %v2631
        %2728 = vmatpush1.bf16.msra.mxu0 %v2630
        %2729 = vmatprep.subr.bf16.mxu0 %v2635
        %2730 = vmatpush1.bf16.msra.mxu0 %v2634
        %2731 = vmatprep.subr.bf16.mxu0 %v2639
        %2732 = vmatpush1.bf16.msra.mxu0 %v2638
        %2733 = vmatprep.subr.bf16.mxu0 %v2643
        %2734 = vmatpush1.bf16.msra.mxu0 %v2642
        %2735 = vmatprep.subr.bf16.mxu0 0
        %2736 = vmatpush1.bf16.msra.mxu0 0
        %2737 = vmatprep.subr.bf16.mxu0 0
        %2738 = vmatpush1.bf16.msra.mxu0 0
        %2739 = vmatprep.subr.bf16.mxu0 0
        %2740 = vmatpush1.bf16.msra.mxu0 0
        %2741 = vmatprep.subr.bf16.mxu0 0
        %2742 = vmatpush1.bf16.msra.mxu0 0
        %2743 = vmatprep.subr.bf16.mxu0 0
        %2744 = vmatpush1.bf16.msra.mxu0 0
        %2745 = vmatprep.subr.bf16.mxu0 0
        %2746 = vmatpush1.bf16.msra.mxu0 0
        %2747 = vmatprep.subr.bf16.mxu0 0
        %2748 = vmatpush1.bf16.msra.mxu0 0
        %2749 = vmatprep.subr.bf16.mxu0 0
        %2750 = vmatpush1.bf16.msra.mxu0 0
        %2751 = vmatprep.mubr.bf16.mxu0 0
        %2752 = vmatmul.mubr.bf16.gmra.mrb[0].mxu0 %v2515
        %v2753 = vpop.f32.mrb[0].mxu0
        %v2754 = vadd.f32 0.0, %v2753
        %v2755 = vpop.f32.mrb[0].mxu0
        %v2756 = vadd.f32 0.0, %v2755
        %v2757 = vpop.f32.mrb[0].mxu0
        %v2758 = vadd.f32 0.0, %v2757
        %v2759 = vpop.f32.mrb[0].mxu0
        %v2760 = vadd.f32 0.0, %v2759
        %2761 = vdwg.mxu0
        %v2762 = vadd.f32 %v2507, %v2711
        %v2763 = vadd.f32 %v2508, %v2713
        %v2764 = vadd.f32 %v2509, %v2754
        %v2765 = vadd.f32 %v2510, %v2756
        %v2766 = vadd.f32 %v2511, %v2715
        %v2767 = vadd.f32 %v2512, %v2717
        %v2768 = vadd.f32 %v2513, %v2758
        %v2769 = vadd.f32 %v2514, %v2760
        %v2770 = vxor.u32 %v2762, 2147483648
        %v2771 = vxor.u32 %v2766, 2147483648
        %v2772 = vmul.f32 %v2770, 1.442695
        %v2773 = vpow.pop %v2772
        %v2774 = vmul.f32 %v2771, 1.442695
        %v2775 = vpow.pop %v2774
        %v2776 = vadd.f32 %v2773, 1.0
        %v2777 = vadd.f32 %v2775, 1.0
        %v2778 = vrcp.pop %v2776
        %v2779 = vmul.f32 1.0, %v2778
        %v2780 = vrcp.pop %v2777
        %v2781 = vmul.f32 1.0, %v2780
        %v2782 = vxor.u32 %v2763, 2147483648
        %v2783 = vxor.u32 %v2767, 2147483648
        %v2784 = vmul.f32 %v2782, 1.442695
        %v2785 = vpow.pop %v2784
        %v2786 = vmul.f32 %v2783, 1.442695
        %v2787 = vpow.pop %v2786
        %v2788 = vadd.f32 %v2785, 1.0
        %v2789 = vadd.f32 %v2787, 1.0
        %v2790 = vrcp.pop %v2788
        %v2791 = vmul.f32 1.0, %v2790
        %v2792 = vrcp.pop %v2789
        %v2793 = vmul.f32 1.0, %v2792
        %v2794 = vtanh.pop %v2764
        %v2795 = vtanh.pop %v2768
        %v2796 = vxor.u32 %v2765, 2147483648
        %v2797 = vxor.u32 %v2769, 2147483648
        %v2798 = vmul.f32 %v2796, 1.442695
        %v2799 = vpow.pop %v2798
        %v2800 = vmul.f32 %v2797, 1.442695
        %v2801 = vpow.pop %v2800
        %v2802 = vadd.f32 %v2799, 1.0
        %v2803 = vadd.f32 %v2801, 1.0
        %v2804 = vrcp.pop %v2802
        %v2805 = vmul.f32 1.0, %v2804
        %v2806 = vrcp.pop %v2803
        %v2807 = vmul.f32 1.0, %v2806
        %v2808 = vmul.f32 %v2791, %v2441
        %v2809 = vmul.f32 %v2793, %v2442
        %v2810 = vmul.f32 %v2779, %v2794
        %v2811 = vmul.f32 %v2781, %v2795
        %v2812 = vadd.f32 %v2808, %v2810
        %v2813 = vadd.f32 %v2809, %v2811
        %v2814 = vtanh.pop %v2812
        %v2815 = vtanh.pop %v2813
        %v2816 = vmul.f32 %v2805, %v2814
        %v2817 = vmul.f32 %v2807, %v2815
        %v2818 = vstv %s2451
        %vm2819 = vcmp.lt.s32.totalorder %v2818, %v486
        %vm2820 = vcmp.lt.s32.totalorder %v2818, %v487
        %v2821 = vsel %vm2819, 1, 0
        %v2822 = vsel %vm2820, 1, 0
        %2823 = vset.pattern.permute.xlu0 0
        %2824 = vperm.xlu0 %2823, %v2821
        %v2825 = vpop.permute.xlu0 %2824
        %2826 = vset.pattern.permute.xlu0 0
        %2827 = vperm.xlu0 %2826, %v2822
        %v2828 = vpop.permute.xlu0 %2827
        %vm2829 = vcmp.eq.s32.totalorder %v2825, 1
        %vm2830 = vcmp.eq.s32.totalorder %v2828, 1
        %v2831 = vsel %vm2829, %v2816, %v2439
        %v2832 = vsel %vm2830, %v2817, %v2440
        %v2833 = vsel %vm2829, %v2812, %v2441
        %v2834 = vsel %vm2830, %v2813, %v2442
        %v2835 = vsel %vm2829, %v2816, 0.0
        %v2836 = vsel %vm2830, %v2817, 0.0
        %v2837 = vpack.c.bf16 %v2836, %v2835
        %s2838 = smul.addr %s2450, 8
        %s2839 = scalar_lea.vmem %s465, %s2838
        %2840 = vst [vmem:[%s2839] sm:$0xff] %v2837
        %s2841 = smul.u32 %s482, 6
        %s2842 = sadd.s32 %s2841, %s485
        %s2843 = sadd.s32 %s484, %s2842
        %v2844 = vld [vmem:[%s450] sm:$0xff]
        %v2845 = vld [vmem:[%s450 + $0x8] sm:$0xff]
        %v2846 = vld [vmem:[%s450 + $0x10] sm:$0xff]
        %v2847 = vld [vmem:[%s450 + $0x18] sm:$0xff]
        %v2848 = vld [vmem:[%s450 + $0x20] sm:$0xff]
        %v2849 = vld [vmem:[%s450 + $0x28] sm:$0xff]
        %v2850 = vld [vmem:[%s450 + $0x30] sm:$0xff]
        %v2851 = vld [vmem:[%s450 + $0x38] sm:$0xff]
        %v2852 = vld [vmem:[%s450 + $0x40] sm:$0xff]
        %v2853 = vld [vmem:[%s450 + $0x48] sm:$0xff]
        %v2854 = vld [vmem:[%s450 + $0x50] sm:$0xff]
        %v2855 = vld [vmem:[%s450 + $0x58] sm:$0xff]
        %v2856 = vld [vmem:[%s450 + $0x60] sm:$0xff]
        %v2857 = vld [vmem:[%s450 + $0x68] sm:$0xff]
        %v2858 = vld [vmem:[%s450 + $0x70] sm:$0xff]
        %v2859 = vld [vmem:[%s450 + $0x78] sm:$0xff]
        %v2860 = vld [vmem:[%s450 + $0x80] sm:$0xff]
        %v2861 = vld [vmem:[%s450 + $0x88] sm:$0xff]
        %v2862 = vld [vmem:[%s450 + $0x90] sm:$0xff]
        %v2863 = vld [vmem:[%s450 + $0x98] sm:$0xff]
        %v2864 = vld [vmem:[%s450 + $0xa0] sm:$0xff]
        %v2865 = vld [vmem:[%s450 + $0xa8] sm:$0xff]
        %v2866 = vld [vmem:[%s450 + $0xb0] sm:$0xff]
        %v2867 = vld [vmem:[%s450 + $0xb8] sm:$0xff]
        %v2868 = vld [vmem:[%s450 + $0xc0] sm:$0xff]
        %v2869 = vld [vmem:[%s450 + $0xc8] sm:$0xff]
        %v2870 = vld [vmem:[%s450 + $0xd0] sm:$0xff]
        %v2871 = vld [vmem:[%s450 + $0xd8] sm:$0xff]
        %v2872 = vld [vmem:[%s450 + $0xe0] sm:$0xff]
        %v2873 = vld [vmem:[%s450 + $0xe8] sm:$0xff]
        %v2874 = vld [vmem:[%s450 + $0xf0] sm:$0xff]
        %v2875 = vld [vmem:[%s450 + $0xf8] sm:$0xff]
        %s2876 = smul.u32 %s2842, 8
        %s2877 = smul.addr %s2876, 4
        %s2878 = scalar_lea.vmem %s423, %s2877
        %v2879 = vld [vmem:[%s2878] sm:$0xff]
        %v2880 = vld [vmem:[%s2878 + $0x8] sm:$0xff]
        %v2881 = vld [vmem:[%s2878 + $0x10] sm:$0xff]
        %v2882 = vld [vmem:[%s2878 + $0x18] sm:$0xff]
        %v2883 = vunpack.c.l.bf16 %v2879
        %v2884 = vunpack.c.h.bf16 %v2879
        %v2885 = vunpack.c.l.bf16 %v2880
        %v2886 = vunpack.c.h.bf16 %v2880
        %v2887 = vunpack.c.l.bf16 %v2881
        %v2888 = vunpack.c.h.bf16 %v2881
        %v2889 = vunpack.c.l.bf16 %v2882
        %v2890 = vunpack.c.h.bf16 %v2882
        %v2891 = vld [vmem:[%s444] sm:$0xff]
        %v2892 = vld [vmem:[%s444 + $0x8] sm:$0xff]
        %v2893 = vld [vmem:[%s444 + $0x10] sm:$0xff]
        %v2894 = vld [vmem:[%s444 + $0x18] sm:$0xff]
        %v2895 = vld [vmem:[%s444 + $0x20] sm:$0xff]
        %v2896 = vld [vmem:[%s444 + $0x28] sm:$0xff]
        %v2897 = vld [vmem:[%s444 + $0x30] sm:$0xff]
        %v2898 = vld [vmem:[%s444 + $0x38] sm:$0xff]
        %v2899 = vadd.f32 %v2883, %v2891
        %v2900 = vadd.f32 %v2884, %v2892
        %v2901 = vadd.f32 %v2885, %v2893
        %v2902 = vadd.f32 %v2886, %v2894
        %v2903 = vadd.f32 %v2887, %v2895
        %v2904 = vadd.f32 %v2888, %v2896
        %v2905 = vadd.f32 %v2889, %v2897
        %v2906 = vadd.f32 %v2890, %v2898
        %v2907 = vpack.c.bf16 %v2832, %v2831
        %v2940 = vunpack.c.l.b16 %v2844
        %v2941 = vunpack.c.h.b16 %v2844
        %v2942 = vunpack.c.l.b16 %v2845
        %v2943 = vunpack.c.h.b16 %v2845
        %v2944 = vunpack.c.l.b16 %v2846
        %v2945 = vunpack.c.h.b16 %v2846
        %v2946 = vunpack.c.l.b16 %v2847
        %v2947 = vunpack.c.h.b16 %v2847
        %v2948 = vunpack.c.l.b16 %v2848
        %v2949 = vunpack.c.h.b16 %v2848
        %v2950 = vunpack.c.l.b16 %v2849
        %v2951 = vunpack.c.h.b16 %v2849
        %v2952 = vunpack.c.l.b16 %v2850
        %v2953 = vunpack.c.h.b16 %v2850
        %v2954 = vunpack.c.l.b16 %v2851
        %v2955 = vunpack.c.h.b16 %v2851
        %v2956 = vunpack.c.l.b16 %v2852
        %v2957 = vunpack.c.h.b16 %v2852
        %v2958 = vunpack.c.l.b16 %v2853
        %v2959 = vunpack.c.h.b16 %v2853
        %v2960 = vunpack.c.l.b16 %v2854
        %v2961 = vunpack.c.h.b16 %v2854
        %v2962 = vunpack.c.l.b16 %v2855
        %v2963 = vunpack.c.h.b16 %v2855
        %v2964 = vunpack.c.l.b16 %v2856
        %v2965 = vunpack.c.h.b16 %v2856
        %v2966 = vunpack.c.l.b16 %v2857
        %v2967 = vunpack.c.h.b16 %v2857
        %v2968 = vunpack.c.l.b16 %v2858
        %v2969 = vunpack.c.h.b16 %v2858
        %v2970 = vunpack.c.l.b16 %v2859
        %v2971 = vunpack.c.h.b16 %v2859
        %v2972 = vunpack.c.l.b16 %v2860
        %v2973 = vunpack.c.h.b16 %v2860
        %v2974 = vunpack.c.l.b16 %v2861
        %v2975 = vunpack.c.h.b16 %v2861
        %v2976 = vunpack.c.l.b16 %v2862
        %v2977 = vunpack.c.h.b16 %v2862
        %v2978 = vunpack.c.l.b16 %v2863
        %v2979 = vunpack.c.h.b16 %v2863
        %v2980 = vunpack.c.l.b16 %v2864
        %v2981 = vunpack.c.h.b16 %v2864
        %v2982 = vunpack.c.l.b16 %v2865
        %v2983 = vunpack.c.h.b16 %v2865
        %v2984 = vunpack.c.l.b16 %v2866
        %v2985 = vunpack.c.h.b16 %v2866
        %v2986 = vunpack.c.l.b16 %v2867
        %v2987 = vunpack.c.h.b16 %v2867
        %v2988 = vunpack.c.l.b16 %v2868
        %v2989 = vunpack.c.h.b16 %v2868
        %v2990 = vunpack.c.l.b16 %v2869
        %v2991 = vunpack.c.h.b16 %v2869
        %v2992 = vunpack.c.l.b16 %v2870
        %v2993 = vunpack.c.h.b16 %v2870
        %v2994 = vunpack.c.l.b16 %v2871
        %v2995 = vunpack.c.h.b16 %v2871
        %v2996 = vunpack.c.l.b16 %v2872
        %v2997 = vunpack.c.h.b16 %v2872
        %v2998 = vunpack.c.l.b16 %v2873
        %v2999 = vunpack.c.h.b16 %v2873
        %v3000 = vunpack.c.l.b16 %v2874
        %v3001 = vunpack.c.h.b16 %v2874
        %v3002 = vunpack.c.l.b16 %v2875
        %v3003 = vunpack.c.h.b16 %v2875
        %v3004 = vpack.c.b16 %v2944, %v2940
        %v3005 = vpack.c.b16 %v2945, %v2941
        %v3006 = vpack.c.b16 %v2946, %v2942
        %v3007 = vpack.c.b16 %v2947, %v2943
        %v3008 = vpack.c.b16 %v2952, %v2948
        %v3009 = vpack.c.b16 %v2953, %v2949
        %v3010 = vpack.c.b16 %v2954, %v2950
        %v3011 = vpack.c.b16 %v2955, %v2951
        %v3012 = vpack.c.b16 %v2960, %v2956
        %v3013 = vpack.c.b16 %v2961, %v2957
        %v3014 = vpack.c.b16 %v2962, %v2958
        %v3015 = vpack.c.b16 %v2963, %v2959
        %v3016 = vpack.c.b16 %v2968, %v2964
        %v3017 = vpack.c.b16 %v2969, %v2965
        %v3018 = vpack.c.b16 %v2970, %v2966
        %v3019 = vpack.c.b16 %v2971, %v2967
        %v3020 = vpack.c.b16 %v2976, %v2972
        %v3021 = vpack.c.b16 %v2977, %v2973
        %v3022 = vpack.c.b16 %v2978, %v2974
        %v3023 = vpack.c.b16 %v2979, %v2975
        %v3024 = vpack.c.b16 %v2984, %v2980
        %v3025 = vpack.c.b16 %v2985, %v2981
        %v3026 = vpack.c.b16 %v2986, %v2982
        %v3027 = vpack.c.b16 %v2987, %v2983
        %v3028 = vpack.c.b16 %v2992, %v2988
        %v3029 = vpack.c.b16 %v2993, %v2989
        %v3030 = vpack.c.b16 %v2994, %v2990
        %v3031 = vpack.c.b16 %v2995, %v2991
        %v3032 = vpack.c.b16 %v3000, %v2996
        %v3033 = vpack.c.b16 %v3001, %v2997
        %v3034 = vpack.c.b16 %v3002, %v2998
        %v3035 = vpack.c.b16 %v3003, %v2999
        %3068 = vmatprep.subr.bf16.mxu0 %v3005
        %3069 = vmatpush1.bf16.msra.mxu0 %v3004
        %3070 = vmatprep.subr.bf16.mxu0 %v3009
        %3071 = vmatpush1.bf16.msra.mxu0 %v3008
        %3072 = vmatprep.subr.bf16.mxu0 %v3013
        %3073 = vmatpush1.bf16.msra.mxu0 %v3012
        %3074 = vmatprep.subr.bf16.mxu0 %v3017
        %3075 = vmatpush1.bf16.msra.mxu0 %v3016
        %3076 = vmatprep.subr.bf16.mxu0 %v3021
        %3077 = vmatpush1.bf16.msra.mxu0 %v3020
        %3078 = vmatprep.subr.bf16.mxu0 %v3025
        %3079 = vmatpush1.bf16.msra.mxu0 %v3024
        %3080 = vmatprep.subr.bf16.mxu0 %v3029
        %3081 = vmatpush1.bf16.msra.mxu0 %v3028
        %3082 = vmatprep.subr.bf16.mxu0 %v3033
        %3083 = vmatpush1.bf16.msra.mxu0 %v3032
        %3084 = vmatprep.subr.bf16.mxu0 0
        %3085 = vmatpush1.bf16.msra.mxu0 0
        %3086 = vmatprep.subr.bf16.mxu0 0
        %3087 = vmatpush1.bf16.msra.mxu0 0
        %3088 = vmatprep.subr.bf16.mxu0 0
        %3089 = vmatpush1.bf16.msra.mxu0 0
        %3090 = vmatprep.subr.bf16.mxu0 0
        %3091 = vmatpush1.bf16.msra.mxu0 0
        %3092 = vmatprep.subr.bf16.mxu0 0
        %3093 = vmatpush1.bf16.msra.mxu0 0
        %3094 = vmatprep.subr.bf16.mxu0 0
        %3095 = vmatpush1.bf16.msra.mxu0 0
        %3096 = vmatprep.subr.bf16.mxu0 0
        %3097 = vmatpush1.bf16.msra.mxu0 0
        %3098 = vmatprep.subr.bf16.mxu0 0
        %3099 = vmatpush1.bf16.msra.mxu0 0
        %3100 = vmatprep.mubr.bf16.mxu0 0
        %3101 = vmatmul.mubr.bf16.gmra.mrb[0].mxu0 %v2907
        %v3102 = vpop.f32.mrb[0].mxu0
        %v3103 = vadd.f32 0.0, %v3102
        %v3104 = vpop.f32.mrb[0].mxu0
        %v3105 = vadd.f32 0.0, %v3104
        %v3106 = vpop.f32.mrb[0].mxu0
        %v3107 = vadd.f32 0.0, %v3106
        %v3108 = vpop.f32.mrb[0].mxu0
        %v3109 = vadd.f32 0.0, %v3108
        %3110 = vdwg.mxu0
        %3111 = vmatprep.subr.bf16.mxu0 %v3007
        %3112 = vmatpush1.bf16.msra.mxu0 %v3006
        %3113 = vmatprep.subr.bf16.mxu0 %v3011
        %3114 = vmatpush1.bf16.msra.mxu0 %v3010
        %3115 = vmatprep.subr.bf16.mxu0 %v3015
        %3116 = vmatpush1.bf16.msra.mxu0 %v3014
        %3117 = vmatprep.subr.bf16.mxu0 %v3019
        %3118 = vmatpush1.bf16.msra.mxu0 %v3018
        %3119 = vmatprep.subr.bf16.mxu0 %v3023
        %3120 = vmatpush1.bf16.msra.mxu0 %v3022
        %3121 = vmatprep.subr.bf16.mxu0 %v3027
        %3122 = vmatpush1.bf16.msra.mxu0 %v3026
        %3123 = vmatprep.subr.bf16.mxu0 %v3031
        %3124 = vmatpush1.bf16.msra.mxu0 %v3030
        %3125 = vmatprep.subr.bf16.mxu0 %v3035
        %3126 = vmatpush1.bf16.msra.mxu0 %v3034
        %3127 = vmatprep.subr.bf16.mxu0 0
        %3128 = vmatpush1.bf16.msra.mxu0 0
        %3129 = vmatprep.subr.bf16.mxu0 0
        %3130 = vmatpush1.bf16.msra.mxu0 0
        %3131 = vmatprep.subr.bf16.mxu0 0
        %3132 = vmatpush1.bf16.msra.mxu0 0
        %3133 = vmatprep.subr.bf16.mxu0 0
        %3134 = vmatpush1.bf16.msra.mxu0 0
        %3135 = vmatprep.subr.bf16.mxu0 0
        %3136 = vmatpush1.bf16.msra.mxu0 0
        %3137 = vmatprep.subr.bf16.mxu0 0
        %3138 = vmatpush1.bf16.msra.mxu0 0
        %3139 = vmatprep.subr.bf16.mxu0 0
        %3140 = vmatpush1.bf16.msra.mxu0 0
        %3141 = vmatprep.subr.bf16.mxu0 0
        %3142 = vmatpush1.bf16.msra.mxu0 0
        %3143 = vmatprep.mubr.bf16.mxu0 0
        %3144 = vmatmul.mubr.bf16.gmra.mrb[0].mxu0 %v2907
        %v3145 = vpop.f32.mrb[0].mxu0
        %v3146 = vadd.f32 0.0, %v3145
        %v3147 = vpop.f32.mrb[0].mxu0
        %v3148 = vadd.f32 0.0, %v3147
        %v3149 = vpop.f32.mrb[0].mxu0
        %v3150 = vadd.f32 0.0, %v3149
        %v3151 = vpop.f32.mrb[0].mxu0
        %v3152 = vadd.f32 0.0, %v3151
        %3153 = vdwg.mxu0
        %v3154 = vadd.f32 %v2899, %v3103
        %v3155 = vadd.f32 %v2900, %v3105
        %v3156 = vadd.f32 %v2901, %v3146
        %v3157 = vadd.f32 %v2902, %v3148
        %v3158 = vadd.f32 %v2903, %v3107
        %v3159 = vadd.f32 %v2904, %v3109
        %v3160 = vadd.f32 %v2905, %v3150
        %v3161 = vadd.f32 %v2906, %v3152
        %v3162 = vxor.u32 %v3154, 2147483648
        %v3163 = vxor.u32 %v3158, 2147483648
        %v3164 = vmul.f32 %v3162, 1.442695
        %v3165 = vpow.pop %v3164
        %v3166 = vmul.f32 %v3163, 1.442695
        %v3167 = vpow.pop %v3166
        %v3168 = vadd.f32 %v3165, 1.0
        %v3169 = vadd.f32 %v3167, 1.0
        %v3170 = vrcp.pop %v3168
        %v3171 = vmul.f32 1.0, %v3170
        %v3172 = vrcp.pop %v3169
        %v3173 = vmul.f32 1.0, %v3172
        %v3174 = vxor.u32 %v3155, 2147483648
        %v3175 = vxor.u32 %v3159, 2147483648
        %v3176 = vmul.f32 %v3174, 1.442695
        %v3177 = vpow.pop %v3176
        %v3178 = vmul.f32 %v3175, 1.442695
        %v3179 = vpow.pop %v3178
        %v3180 = vadd.f32 %v3177, 1.0
        %v3181 = vadd.f32 %v3179, 1.0
        %v3182 = vrcp.pop %v3180
        %v3183 = vmul.f32 1.0, %v3182
        %v3184 = vrcp.pop %v3181
        %v3185 = vmul.f32 1.0, %v3184
        %v3186 = vtanh.pop %v3156
        %v3187 = vtanh.pop %v3160
        %v3188 = vxor.u32 %v3157, 2147483648
        %v3189 = vxor.u32 %v3161, 2147483648
        %v3190 = vmul.f32 %v3188, 1.442695
        %v3191 = vpow.pop %v3190
        %v3192 = vmul.f32 %v3189, 1.442695
        %v3193 = vpow.pop %v3192
        %v3194 = vadd.f32 %v3191, 1.0
        %v3195 = vadd.f32 %v3193, 1.0
        %v3196 = vrcp.pop %v3194
        %v3197 = vmul.f32 1.0, %v3196
        %v3198 = vrcp.pop %v3195
        %v3199 = vmul.f32 1.0, %v3198
        %v3200 = vmul.f32 %v3183, %v2833
        %v3201 = vmul.f32 %v3185, %v2834
        %v3202 = vmul.f32 %v3171, %v3186
        %v3203 = vmul.f32 %v3173, %v3187
        %v3204 = vadd.f32 %v3200, %v3202
        %v3205 = vadd.f32 %v3201, %v3203
        %v3206 = vtanh.pop %v3204
        %v3207 = vtanh.pop %v3205
        %v3208 = vmul.f32 %v3197, %v3206
        %v3209 = vmul.f32 %v3199, %v3207
        %v3210 = vstv %s2843
        %vm3211 = vcmp.lt.s32.totalorder %v3210, %v486
        %vm3212 = vcmp.lt.s32.totalorder %v3210, %v487
        %v3213 = vsel %vm3211, 1, 0
        %v3214 = vsel %vm3212, 1, 0
        %3215 = vset.pattern.permute.xlu0 0
        %3216 = vperm.xlu0 %3215, %v3213
        %v3217 = vpop.permute.xlu0 %3216
        %3218 = vset.pattern.permute.xlu0 0
        %3219 = vperm.xlu0 %3218, %v3214
        %v3220 = vpop.permute.xlu0 %3219
        %vm3221 = vcmp.eq.s32.totalorder %v3217, 1
        %vm3222 = vcmp.eq.s32.totalorder %v3220, 1
        %v3223 = vsel %vm3221, %v3208, %v2831
        %v3224 = vsel %vm3222, %v3209, %v2832
        %v3225 = vsel %vm3221, %v3204, %v2833
        %v3226 = vsel %vm3222, %v3205, %v2834
        %v3227 = vsel %vm3221, %v3208, 0.0
        %v3228 = vsel %vm3222, %v3209, 0.0
        %v3229 = vpack.c.bf16 %v3228, %v3227
        %s3230 = smul.addr %s2842, 8
        %s3231 = scalar_lea.vmem %s465, %s3230
        %3232 = vst [vmem:[%s3231] sm:$0xff] %v3229
        %s3233 = smul.u32 %s482, 7
        %s3234 = sadd.s32 %s3233, %s485
        %s3235 = sadd.s32 %s484, %s3234
        %v3236 = vld [vmem:[%s450] sm:$0xff]
        %v3237 = vld [vmem:[%s450 + $0x8] sm:$0xff]
        %v3238 = vld [vmem:[%s450 + $0x10] sm:$0xff]
        %v3239 = vld [vmem:[%s450 + $0x18] sm:$0xff]
        %v3240 = vld [vmem:[%s450 + $0x20] sm:$0xff]
        %v3241 = vld [vmem:[%s450 + $0x28] sm:$0xff]
        %v3242 = vld [vmem:[%s450 + $0x30] sm:$0xff]
        %v3243 = vld [vmem:[%s450 + $0x38] sm:$0xff]
        %v3244 = vld [vmem:[%s450 + $0x40] sm:$0xff]
        %v3245 = vld [vmem:[%s450 + $0x48] sm:$0xff]
        %v3246 = vld [vmem:[%s450 + $0x50] sm:$0xff]
        %v3247 = vld [vmem:[%s450 + $0x58] sm:$0xff]
        %v3248 = vld [vmem:[%s450 + $0x60] sm:$0xff]
        %v3249 = vld [vmem:[%s450 + $0x68] sm:$0xff]
        %v3250 = vld [vmem:[%s450 + $0x70] sm:$0xff]
        %v3251 = vld [vmem:[%s450 + $0x78] sm:$0xff]
        %v3252 = vld [vmem:[%s450 + $0x80] sm:$0xff]
        %v3253 = vld [vmem:[%s450 + $0x88] sm:$0xff]
        %v3254 = vld [vmem:[%s450 + $0x90] sm:$0xff]
        %v3255 = vld [vmem:[%s450 + $0x98] sm:$0xff]
        %v3256 = vld [vmem:[%s450 + $0xa0] sm:$0xff]
        %v3257 = vld [vmem:[%s450 + $0xa8] sm:$0xff]
        %v3258 = vld [vmem:[%s450 + $0xb0] sm:$0xff]
        %v3259 = vld [vmem:[%s450 + $0xb8] sm:$0xff]
        %v3260 = vld [vmem:[%s450 + $0xc0] sm:$0xff]
        %v3261 = vld [vmem:[%s450 + $0xc8] sm:$0xff]
        %v3262 = vld [vmem:[%s450 + $0xd0] sm:$0xff]
        %v3263 = vld [vmem:[%s450 + $0xd8] sm:$0xff]
        %v3264 = vld [vmem:[%s450 + $0xe0] sm:$0xff]
        %v3265 = vld [vmem:[%s450 + $0xe8] sm:$0xff]
        %v3266 = vld [vmem:[%s450 + $0xf0] sm:$0xff]
        %v3267 = vld [vmem:[%s450 + $0xf8] sm:$0xff]
        %s3268 = smul.u32 %s3234, 8
        %s3269 = smul.addr %s3268, 4
        %s3270 = scalar_lea.vmem %s423, %s3269
        %v3271 = vld [vmem:[%s3270] sm:$0xff]
        %v3272 = vld [vmem:[%s3270 + $0x8] sm:$0xff]
        %v3273 = vld [vmem:[%s3270 + $0x10] sm:$0xff]
        %v3274 = vld [vmem:[%s3270 + $0x18] sm:$0xff]
        %v3275 = vunpack.c.l.bf16 %v3271
        %v3276 = vunpack.c.h.bf16 %v3271
        %v3277 = vunpack.c.l.bf16 %v3272
        %v3278 = vunpack.c.h.bf16 %v3272
        %v3279 = vunpack.c.l.bf16 %v3273
        %v3280 = vunpack.c.h.bf16 %v3273
        %v3281 = vunpack.c.l.bf16 %v3274
        %v3282 = vunpack.c.h.bf16 %v3274
        %v3283 = vld [vmem:[%s444] sm:$0xff]
        %v3284 = vld [vmem:[%s444 + $0x8] sm:$0xff]
        %v3285 = vld [vmem:[%s444 + $0x10] sm:$0xff]
        %v3286 = vld [vmem:[%s444 + $0x18] sm:$0xff]
        %v3287 = vld [vmem:[%s444 + $0x20] sm:$0xff]
        %v3288 = vld [vmem:[%s444 + $0x28] sm:$0xff]
        %v3289 = vld [vmem:[%s444 + $0x30] sm:$0xff]
        %v3290 = vld [vmem:[%s444 + $0x38] sm:$0xff]
        %v3291 = vadd.f32 %v3275, %v3283
        %v3292 = vadd.f32 %v3276, %v3284
        %v3293 = vadd.f32 %v3277, %v3285
        %v3294 = vadd.f32 %v3278, %v3286
        %v3295 = vadd.f32 %v3279, %v3287
        %v3296 = vadd.f32 %v3280, %v3288
        %v3297 = vadd.f32 %v3281, %v3289
        %v3298 = vadd.f32 %v3282, %v3290
        %v3299 = vpack.c.bf16 %v3224, %v3223
        %v3332 = vunpack.c.l.b16 %v3236
        %v3333 = vunpack.c.h.b16 %v3236
        %v3334 = vunpack.c.l.b16 %v3237
        %v3335 = vunpack.c.h.b16 %v3237
        %v3336 = vunpack.c.l.b16 %v3238
        %v3337 = vunpack.c.h.b16 %v3238
        %v3338 = vunpack.c.l.b16 %v3239
        %v3339 = vunpack.c.h.b16 %v3239
        %v3340 = vunpack.c.l.b16 %v3240
        %v3341 = vunpack.c.h.b16 %v3240
        %v3342 = vunpack.c.l.b16 %v3241
        %v3343 = vunpack.c.h.b16 %v3241
        %v3344 = vunpack.c.l.b16 %v3242
        %v3345 = vunpack.c.h.b16 %v3242
        %v3346 = vunpack.c.l.b16 %v3243
        %v3347 = vunpack.c.h.b16 %v3243
        %v3348 = vunpack.c.l.b16 %v3244
        %v3349 = vunpack.c.h.b16 %v3244
        %v3350 = vunpack.c.l.b16 %v3245
        %v3351 = vunpack.c.h.b16 %v3245
        %v3352 = vunpack.c.l.b16 %v3246
        %v3353 = vunpack.c.h.b16 %v3246
        %v3354 = vunpack.c.l.b16 %v3247
        %v3355 = vunpack.c.h.b16 %v3247
        %v3356 = vunpack.c.l.b16 %v3248
        %v3357 = vunpack.c.h.b16 %v3248
        %v3358 = vunpack.c.l.b16 %v3249
        %v3359 = vunpack.c.h.b16 %v3249
        %v3360 = vunpack.c.l.b16 %v3250
        %v3361 = vunpack.c.h.b16 %v3250
        %v3362 = vunpack.c.l.b16 %v3251
        %v3363 = vunpack.c.h.b16 %v3251
        %v3364 = vunpack.c.l.b16 %v3252
        %v3365 = vunpack.c.h.b16 %v3252
        %v3366 = vunpack.c.l.b16 %v3253
        %v3367 = vunpack.c.h.b16 %v3253
        %v3368 = vunpack.c.l.b16 %v3254
        %v3369 = vunpack.c.h.b16 %v3254
        %v3370 = vunpack.c.l.b16 %v3255
        %v3371 = vunpack.c.h.b16 %v3255
        %v3372 = vunpack.c.l.b16 %v3256
        %v3373 = vunpack.c.h.b16 %v3256
        %v3374 = vunpack.c.l.b16 %v3257
        %v3375 = vunpack.c.h.b16 %v3257
        %v3376 = vunpack.c.l.b16 %v3258
        %v3377 = vunpack.c.h.b16 %v3258
        %v3378 = vunpack.c.l.b16 %v3259
        %v3379 = vunpack.c.h.b16 %v3259
        %v3380 = vunpack.c.l.b16 %v3260
        %v3381 = vunpack.c.h.b16 %v3260
        %v3382 = vunpack.c.l.b16 %v3261
        %v3383 = vunpack.c.h.b16 %v3261
        %v3384 = vunpack.c.l.b16 %v3262
        %v3385 = vunpack.c.h.b16 %v3262
        %v3386 = vunpack.c.l.b16 %v3263
        %v3387 = vunpack.c.h.b16 %v3263
        %v3388 = vunpack.c.l.b16 %v3264
        %v3389 = vunpack.c.h.b16 %v3264
        %v3390 = vunpack.c.l.b16 %v3265
        %v3391 = vunpack.c.h.b16 %v3265
        %v3392 = vunpack.c.l.b16 %v3266
        %v3393 = vunpack.c.h.b16 %v3266
        %v3394 = vunpack.c.l.b16 %v3267
        %v3395 = vunpack.c.h.b16 %v3267
        %v3396 = vpack.c.b16 %v3336, %v3332
        %v3397 = vpack.c.b16 %v3337, %v3333
        %v3398 = vpack.c.b16 %v3338, %v3334
        %v3399 = vpack.c.b16 %v3339, %v3335
        %v3400 = vpack.c.b16 %v3344, %v3340
        %v3401 = vpack.c.b16 %v3345, %v3341
        %v3402 = vpack.c.b16 %v3346, %v3342
        %v3403 = vpack.c.b16 %v3347, %v3343
        %v3404 = vpack.c.b16 %v3352, %v3348
        %v3405 = vpack.c.b16 %v3353, %v3349
        %v3406 = vpack.c.b16 %v3354, %v3350
        %v3407 = vpack.c.b16 %v3355, %v3351
        %v3408 = vpack.c.b16 %v3360, %v3356
        %v3409 = vpack.c.b16 %v3361, %v3357
        %v3410 = vpack.c.b16 %v3362, %v3358
        %v3411 = vpack.c.b16 %v3363, %v3359
        %v3412 = vpack.c.b16 %v3368, %v3364
        %v3413 = vpack.c.b16 %v3369, %v3365
        %v3414 = vpack.c.b16 %v3370, %v3366
        %v3415 = vpack.c.b16 %v3371, %v3367
        %v3416 = vpack.c.b16 %v3376, %v3372
        %v3417 = vpack.c.b16 %v3377, %v3373
        %v3418 = vpack.c.b16 %v3378, %v3374
        %v3419 = vpack.c.b16 %v3379, %v3375
        %v3420 = vpack.c.b16 %v3384, %v3380
        %v3421 = vpack.c.b16 %v3385, %v3381
        %v3422 = vpack.c.b16 %v3386, %v3382
        %v3423 = vpack.c.b16 %v3387, %v3383
        %v3424 = vpack.c.b16 %v3392, %v3388
        %v3425 = vpack.c.b16 %v3393, %v3389
        %v3426 = vpack.c.b16 %v3394, %v3390
        %v3427 = vpack.c.b16 %v3395, %v3391
        %3460 = vmatprep.subr.bf16.mxu0 %v3397
        %3461 = vmatpush1.bf16.msra.mxu0 %v3396
        %3462 = vmatprep.subr.bf16.mxu0 %v3401
        %3463 = vmatpush1.bf16.msra.mxu0 %v3400
        %3464 = vmatprep.subr.bf16.mxu0 %v3405
        %3465 = vmatpush1.bf16.msra.mxu0 %v3404
        %3466 = vmatprep.subr.bf16.mxu0 %v3409
        %3467 = vmatpush1.bf16.msra.mxu0 %v3408
        %3468 = vmatprep.subr.bf16.mxu0 %v3413
        %3469 = vmatpush1.bf16.msra.mxu0 %v3412
        %3470 = vmatprep.subr.bf16.mxu0 %v3417
        %3471 = vmatpush1.bf16.msra.mxu0 %v3416
        %3472 = vmatprep.subr.bf16.mxu0 %v3421
        %3473 = vmatpush1.bf16.msra.mxu0 %v3420
        %3474 = vmatprep.subr.bf16.mxu0 %v3425
        %3475 = vmatpush1.bf16.msra.mxu0 %v3424
        %3476 = vmatprep.subr.bf16.mxu0 0
        %3477 = vmatpush1.bf16.msra.mxu0 0
        %3478 = vmatprep.subr.bf16.mxu0 0
        %3479 = vmatpush1.bf16.msra.mxu0 0
        %3480 = vmatprep.subr.bf16.mxu0 0
        %3481 = vmatpush1.bf16.msra.mxu0 0
        %3482 = vmatprep.subr.bf16.mxu0 0
        %3483 = vmatpush1.bf16.msra.mxu0 0
        %3484 = vmatprep.subr.bf16.mxu0 0
        %3485 = vmatpush1.bf16.msra.mxu0 0
        %3486 = vmatprep.subr.bf16.mxu0 0
        %3487 = vmatpush1.bf16.msra.mxu0 0
        %3488 = vmatprep.subr.bf16.mxu0 0
        %3489 = vmatpush1.bf16.msra.mxu0 0
        %3490 = vmatprep.subr.bf16.mxu0 0
        %3491 = vmatpush1.bf16.msra.mxu0 0
        %3492 = vmatprep.mubr.bf16.mxu0 0
        %3493 = vmatmul.mubr.bf16.gmra.mrb[0].mxu0 %v3299
        %v3494 = vpop.f32.mrb[0].mxu0
        %v3495 = vadd.f32 0.0, %v3494
        %v3496 = vpop.f32.mrb[0].mxu0
        %v3497 = vadd.f32 0.0, %v3496
        %v3498 = vpop.f32.mrb[0].mxu0
        %v3499 = vadd.f32 0.0, %v3498
        %v3500 = vpop.f32.mrb[0].mxu0
        %v3501 = vadd.f32 0.0, %v3500
        %3502 = vdwg.mxu0
        %3503 = vmatprep.subr.bf16.mxu0 %v3399
        %3504 = vmatpush1.bf16.msra.mxu0 %v3398
        %3505 = vmatprep.subr.bf16.mxu0 %v3403
        %3506 = vmatpush1.bf16.msra.mxu0 %v3402
        %3507 = vmatprep.subr.bf16.mxu0 %v3407
        %3508 = vmatpush1.bf16.msra.mxu0 %v3406
        %3509 = vmatprep.subr.bf16.mxu0 %v3411
        %3510 = vmatpush1.bf16.msra.mxu0 %v3410
        %3511 = vmatprep.subr.bf16.mxu0 %v3415
        %3512 = vmatpush1.bf16.msra.mxu0 %v3414
        %3513 = vmatprep.subr.bf16.mxu0 %v3419
        %3514 = vmatpush1.bf16.msra.mxu0 %v3418
        %3515 = vmatprep.subr.bf16.mxu0 %v3423
        %3516 = vmatpush1.bf16.msra.mxu0 %v3422
        %3517 = vmatprep.subr.bf16.mxu0 %v3427
        %3518 = vmatpush1.bf16.msra.mxu0 %v3426
        %3519 = vmatprep.subr.bf16.mxu0 0
        %3520 = vmatpush1.bf16.msra.mxu0 0
        %3521 = vmatprep.subr.bf16.mxu0 0
        %3522 = vmatpush1.bf16.msra.mxu0 0
        %3523 = vmatprep.subr.bf16.mxu0 0
        %3524 = vmatpush1.bf16.msra.mxu0 0
        %3525 = vmatprep.subr.bf16.mxu0 0
        %3526 = vmatpush1.bf16.msra.mxu0 0
        %3527 = vmatprep.subr.bf16.mxu0 0
        %3528 = vmatpush1.bf16.msra.mxu0 0
        %3529 = vmatprep.subr.bf16.mxu0 0
        %3530 = vmatpush1.bf16.msra.mxu0 0
        %3531 = vmatprep.subr.bf16.mxu0 0
        %3532 = vmatpush1.bf16.msra.mxu0 0
        %3533 = vmatprep.subr.bf16.mxu0 0
        %3534 = vmatpush1.bf16.msra.mxu0 0
        %3535 = vmatprep.mubr.bf16.mxu0 0
        %3536 = vmatmul.mubr.bf16.gmra.mrb[0].mxu0 %v3299
        %v3537 = vpop.f32.mrb[0].mxu0
        %v3538 = vadd.f32 0.0, %v3537
        %v3539 = vpop.f32.mrb[0].mxu0
        %v3540 = vadd.f32 0.0, %v3539
        %v3541 = vpop.f32.mrb[0].mxu0
        %v3542 = vadd.f32 0.0, %v3541
        %v3543 = vpop.f32.mrb[0].mxu0
        %v3544 = vadd.f32 0.0, %v3543
        %3545 = vdwg.mxu0
        %v3546 = vadd.f32 %v3291, %v3495
        %v3547 = vadd.f32 %v3292, %v3497
        %v3548 = vadd.f32 %v3293, %v3538
        %v3549 = vadd.f32 %v3294, %v3540
        %v3550 = vadd.f32 %v3295, %v3499
        %v3551 = vadd.f32 %v3296, %v3501
        %v3552 = vadd.f32 %v3297, %v3542
        %v3553 = vadd.f32 %v3298, %v3544
        %v3554 = vxor.u32 %v3546, 2147483648
        %v3555 = vxor.u32 %v3550, 2147483648
        %v3556 = vmul.f32 %v3554, 1.442695
        %v3557 = vpow.pop %v3556
        %v3558 = vmul.f32 %v3555, 1.442695
        %v3559 = vpow.pop %v3558
        %v3560 = vadd.f32 %v3557, 1.0
        %v3561 = vadd.f32 %v3559, 1.0
        %v3562 = vrcp.pop %v3560
        %v3563 = vmul.f32 1.0, %v3562
        %v3564 = vrcp.pop %v3561
        %v3565 = vmul.f32 1.0, %v3564
        %v3566 = vxor.u32 %v3547, 2147483648
        %v3567 = vxor.u32 %v3551, 2147483648
        %v3568 = vmul.f32 %v3566, 1.442695
        %v3569 = vpow.pop %v3568
        %v3570 = vmul.f32 %v3567, 1.442695
        %v3571 = vpow.pop %v3570
        %v3572 = vadd.f32 %v3569, 1.0
        %v3573 = vadd.f32 %v3571, 1.0
        %v3574 = vrcp.pop %v3572
        %v3575 = vmul.f32 1.0, %v3574
        %v3576 = vrcp.pop %v3573
        %v3577 = vmul.f32 1.0, %v3576
        %v3578 = vtanh.pop %v3548
        %v3579 = vtanh.pop %v3552
        %v3580 = vxor.u32 %v3549, 2147483648
        %v3581 = vxor.u32 %v3553, 2147483648
        %v3582 = vmul.f32 %v3580, 1.442695
        %v3583 = vpow.pop %v3582
        %v3584 = vmul.f32 %v3581, 1.442695
        %v3585 = vpow.pop %v3584
        %v3586 = vadd.f32 %v3583, 1.0
        %v3587 = vadd.f32 %v3585, 1.0
        %v3588 = vrcp.pop %v3586
        %v3589 = vmul.f32 1.0, %v3588
        %v3590 = vrcp.pop %v3587
        %v3591 = vmul.f32 1.0, %v3590
        %v3592 = vmul.f32 %v3575, %v3225
        %v3593 = vmul.f32 %v3577, %v3226
        %v3594 = vmul.f32 %v3563, %v3578
        %v3595 = vmul.f32 %v3565, %v3579
        %v3596 = vadd.f32 %v3592, %v3594
        %v3597 = vadd.f32 %v3593, %v3595
        %v3598 = vtanh.pop %v3596
        %v3599 = vtanh.pop %v3597
        %v3600 = vmul.f32 %v3589, %v3598
        %v3601 = vmul.f32 %v3591, %v3599
        %v3602 = vstv %s3235
        %vm3603 = vcmp.lt.s32.totalorder %v3602, %v486
        %vm3604 = vcmp.lt.s32.totalorder %v3602, %v487
        %v3605 = vsel %vm3603, 1, 0
        %v3606 = vsel %vm3604, 1, 0
        %3607 = vset.pattern.permute.xlu0 0
        %3608 = vperm.xlu0 %3607, %v3605
        %v3609 = vpop.permute.xlu0 %3608
        %3610 = vset.pattern.permute.xlu0 0
        %3611 = vperm.xlu0 %3610, %v3606
        %v3612 = vpop.permute.xlu0 %3611
        %vm3613 = vcmp.eq.s32.totalorder %v3609, 1
        %vm3614 = vcmp.eq.s32.totalorder %v3612, 1
        %v3615 = vsel %vm3613, %v3600, %v3223
        %v3616 = vsel %vm3614, %v3601, %v3224
        %v3617 = vsel %vm3613, %v3596, %v3225
        %v3618 = vsel %vm3614, %v3597, %v3226
        %v3619 = vsel %vm3613, %v3600, 0.0
        %v3620 = vsel %vm3614, %v3601, 0.0
        %v3621 = vpack.c.bf16 %v3620, %v3619
        %s3622 = smul.addr %s3234, 8
        %s3623 = scalar_lea.vmem %s465, %s3622
        %3624 = vst [vmem:[%s3623] sm:$0xff] %v3621
        %3625 = vst [vmem:[#allocation2] sm:$0xff] %v3615
        %3626 = vst [vmem:[#allocation2 + $0x8] sm:$0xff] %v3616
        %3627 = vst [vmem:[#allocation3] sm:$0xff] %v3617
        %3628 = vst [vmem:[#allocation3 + $0x8] sm:$0xff] %v3618
        // Predicated region
        $region41: #{bilstm_forward.2} parent=35 // pred_check
          %p3629 = pneg %p473
        $region42: #{bilstm_forward.2} parent=35 // pred_check_branch
          %3631 = sbr.rel (%p3629) target = $region44
        $region43: #{bilstm_forward.2} parent=35 // pred_region
          %3632 = vst [vmem:[%s398] sm:$0xff] %v3615
          %3633 = vst [vmem:[%s398 + $0x8] sm:$0xff] %v3616
          %3634 = vst [vmem:[%s405] sm:$0xff] %v3617
          %3635 = vst [vmem:[%s405 + $0x8] sm:$0xff] %v3618
        $region44: #{bilstm_forward.2} parent=35 // pred_fallthru
          _
        %s3636 = smul.u32 %s29, 2
        %s3637 = ssub.s32 1, %s3636
        %s3638 = smul.u32 %s3637, %s31
        %s3639 = smul.u32 8, %s3638
        %p3640 = scmp.lt.s32.totalorder %s29, 1
        %s3641 = scalar_select %p3640, %s29, 1
        %p3642 = scmp.lt.s32.totalorder %s3639, 7
        %s3643 = scalar_select %p3642, %s3639, 7
        %p3644 = scmp.lt.s32.totalorder %s30, 0
        %s3645 = scalar_select %p3644, %s30, 0
        %s3646 = sadd.s32 %s3645, %s3643
        %s3647 = smul.addr %s3641, 8
        %s3648 = sadd.s32 %s3646, %s3647
        %s3649 = smul.addr %s3648, 8
        %s3650 = scalar_lea.vmem %s4, %s3649
        %s3651 = sand.u32 %s205, 1
        %s3652 = scalar_lea.sflag [#allocation5], %s3651
        %s3653 = sand.u32 %s205, 1
        %s3654 = smul.addr %s3653, 16
        %s3655 = scalar_lea.vmem [#allocation4], %s3654
        %s3656 = sand.u32 %s233, 1
        %s3657 = scalar_lea.sflag [#allocation7], %s3656
        %s3658 = sand.u32 %s233, 1
        %s3659 = smul.addr %s3658, 16
        %s3660 = scalar_lea.vmem [#allocation6], %s3659
        // Predicated region
        $region45: #{bilstm_forward.2} parent=35 // pred_check
          %p3661 = pneg %p187
        $region46: #{bilstm_forward.2} parent=35 // pred_check_branch
          %3663 = sbr.rel (%p3661) target = $region48
        $region47: #{bilstm_forward.2} parent=35 // pred_region
          %s3664 = smul.u32 %s29, 2
          %s3665 = ssub.s32 1, %s3664
          %s3666 = smul.u32 %s3665, %s31
          %s3667 = smul.u32 8, %s3666
        $region48: #{bilstm_forward.2} parent=35 // pred_fallthru
          _
        // Predicated region
        $region49: #{bilstm_forward.2} parent=35 // pred_check
          %p3668 = pneg %p215
        $region50: #{bilstm_forward.2} parent=35 // pred_check_branch
          %3670 = sbr.rel (%p3668) target = $region52
        $region51: #{bilstm_forward.2} parent=35 // pred_region
          %s3671 = smul.u32 2, %s30
          %s3673 = ssub.s32 256, 256
          %3674 = vsyncadd %s3652, %s3673
          %s3675 = smul.addr %s29, 2
          %s3676 = sadd.s32 %s3671, %s3675
          %s3677 = smul.addr %s3676, 128
          %s3678 = scalar_lea.hbm %s5, %s3677
          %s3679 = sshll.u32 %s3655, 4
          %s3680 = int_to_ptr.vmem [resolvable:$true] %s3679
          %3685 = dma.vmem_to_hbm [thread:$0]  %s3680, 256, %s3678, %s3652, 128, 128, 8
        $region52: #{bilstm_forward.2} parent=35 // pred_fallthru
          _
        // Predicated region
        $region53: #{bilstm_forward.2} parent=35 // pred_check
          %p3686 = pneg %p243
        $region54: #{bilstm_forward.2} parent=35 // pred_check_branch
          %3688 = sbr.rel (%p3686) target = $region56
        $region55: #{bilstm_forward.2} parent=35 // pred_region
          %s3689 = smul.u32 2, %s30
          %s3691 = ssub.s32 256, 256
          %3692 = vsyncadd %s3657, %s3691
          %s3693 = smul.addr %s29, 2
          %s3694 = sadd.s32 %s3689, %s3693
          %s3695 = smul.addr %s3694, 128
          %s3696 = scalar_lea.hbm %s6, %s3695
          %s3697 = sshll.u32 %s3660, 4
          %s3698 = int_to_ptr.vmem [resolvable:$true] %s3697
          %3703 = dma.vmem_to_hbm [thread:$0]  %s3698, 256, %s3696, %s3657, 128, 128, 8
        $region56: #{bilstm_forward.2} parent=35 // pred_fallthru
          _
      $region36: #{bilstm_forward.2} parent=5 // pred_fallthru
        _
      %p3704 = scmp.le.s32.totalorder 2, %s19
      // Predicated region
      $region57: #{bilstm_forward.2} parent=5 // pred_check
        %p3705 = pneg %p3704
      $region58: #{bilstm_forward.2} parent=5 // pred_check_branch
        %3707 = sbr.rel (%p3705) target = $region60
      $region59: #{bilstm_forward.2} parent=5 // pred_region
        %s3708 = ssub.s32 %s19, 2
        // Predicated region
        $region61: #{bilstm_forward.2} parent=59 // pred_check
          %p3709 = pneg %p193
        $region62: #{bilstm_forward.2} parent=59 // pred_check_branch
          %3711 = sbr.rel (%p3709) target = $region64
        $region63: #{bilstm_forward.2} parent=59 // pred_region
          %s3712 = smul.u32 %s32, 2
          %s3713 = ssub.s32 1, %s3712
          %s3714 = smul.u32 %s3713, %s34
          %s3715 = smul.u32 8, %s3714
          %p3716 = scmp.lt.s32.totalorder %s32, 1
          %s3717 = scalar_select %p3716, %s32, 1
          %p3718 = scmp.lt.s32.totalorder %s3715, 7
          %s3719 = scalar_select %p3718, %s3715, 7
          %p3720 = scmp.lt.s32.totalorder %s33, 0
          %s3721 = scalar_select %p3720, %s33, 0
          %s3722 = sadd.s32 %s3721, %s3719
          %s3723 = smul.addr %s3717, 8
          %s3724 = sadd.s32 %s3722, %s3723
          %s3725 = smul.addr %s3724, 8
          %s3726 = scalar_lea.vmem %s4, %s3725
        $region64: #{bilstm_forward.2} parent=59 // pred_fallthru
          _
        // Predicated region
        $region65: #{bilstm_forward.2} parent=59 // pred_check
          %p3727 = pneg %p221
        $region66: #{bilstm_forward.2} parent=59 // pred_check_branch
          %3729 = sbr.rel (%p3727) target = $region68
        $region67: #{bilstm_forward.2} parent=59 // pred_region
          %s3730 = sand.u32 %s206, 1
          %s3731 = scalar_lea.sflag [#allocation5], %s3730
          %s3732 = sand.u32 %s206, 1
          %s3733 = smul.addr %s3732, 16
          %s3734 = scalar_lea.vmem [#allocation4], %s3733
          %3735 = dma.done %s3731, 256
        $region68: #{bilstm_forward.2} parent=59 // pred_fallthru
          _
        // Predicated region
        $region69: #{bilstm_forward.2} parent=59 // pred_check
          %p3736 = pneg %p249
        $region70: #{bilstm_forward.2} parent=59 // pred_check_branch
          %3738 = sbr.rel (%p3736) target = $region72
        $region71: #{bilstm_forward.2} parent=59 // pred_region
          %s3739 = sand.u32 %s234, 1
          %s3740 = scalar_lea.sflag [#allocation7], %s3739
          %s3741 = sand.u32 %s234, 1
          %s3742 = smul.addr %s3741, 16
          %s3743 = scalar_lea.vmem [#allocation6], %s3742
          %3744 = dma.done %s3740, 256
        $region72: #{bilstm_forward.2} parent=59 // pred_fallthru
          _
      $region60: #{bilstm_forward.2} parent=5 // pred_fallthru
        _
    $region6: #{bilstm_forward.2} parent=1 // loop_footer
      %s23 = sadd.s32 1, %s19
    $region7: #{bilstm_forward.2} parent=1 // loop_footer_branch
      %18 = sbr.rel target = $region3
    $region8: #{bilstm_forward.2} parent=1 // loop_exit
      _
    %3745 = vsyncpa [#allocation5], 1
    %s3746 = scalar_lea.sflag [#allocation5], 1
    %3747 = vsyncpa %s3746, 1
    %3748 = vsyncpa [#allocation7], 1
    %s3749 = scalar_lea.sflag [#allocation7], 1
    %3750 = vsyncpa %s3749, 1

</llo_original>
